<compile_context>
chip_gen: v5e
topology: v5e:2x2
jax: 0.10.0
libtpu: 0.0.40
codegen_flags: <defaults>
</compile_context>

<pallas_src>
import math

import jax
import jax.numpy as jnp
from jax.experimental import pallas as pl
from jax.experimental.pallas import tpu as pltpu

EPS = 1e-5        # nn.BatchNorm1d default eps
OUT_PAD = 128     # lane-dense head width (true `outputs` sliced outside)


def dqn_kernel(x_ref, w1_ref, w2_ref, w3_ref, wh_ref,
               p1_ref, p23_ref, bh_ref, out_ref):
    """One forward step: 3x (Linear -> BN(train) -> ReLU) -> Linear (padded head)."""

    def bn_relu(h, b, g, be):
        # Linear bias folded in; BN(train) with biased batch variance computed
        # in a single pass, folded into one scale/shift FMA, then ReLU.
        hb = h + b
        mean = jnp.mean(hb, axis=0, keepdims=True)
        mean_sq = jnp.mean(hb * hb, axis=0, keepdims=True)
        var = mean_sq - mean * mean
        scale = g * jax.lax.rsqrt(var + EPS)
        shift = be - mean * scale
        return jnp.maximum(hb * scale + shift, 0.0)

    def mxu(h, w):
        return jnp.dot(h.astype(jnp.bfloat16), w,
                       preferred_element_type=jnp.float32)

    x = x_ref[...]          # (B, inputs) f32
    w1 = w1_ref[...]        # (inputs, 256) f32 (tiny)
    n_in = x.shape[1]

    # Layer 1: K = inputs (4) -> do it as VPU FMAs, skip the padded MXU pass.
    h = x[:, 0:1] * w1[0:1, :]
    for k in range(1, n_in):
        h = h + x[:, k:k + 1] * w1[k:k + 1, :]
    h = bn_relu(h, p1_ref[0:1, :], p1_ref[1:2, :], p1_ref[2:3, :])

    # Layer 2: (B, 256) @ (256, 1024)
    h = mxu(h, w2_ref[...])
    h = bn_relu(h, p23_ref[0:1, :], p23_ref[1:2, :], p23_ref[2:3, :])

    # Layer 3: (B, 1024) @ (1024, 1024)  (w3 resident in VMEM across all steps)
    h = mxu(h, w3_ref[...])
    h = bn_relu(h, p23_ref[3:4, :], p23_ref[4:5, :], p23_ref[5:6, :])

    # Head: (B, 1024) @ (1024, OUT_PAD) + bias -> lane-dense store.
    out_ref[...] = (mxu(h, wh_ref[...]) + bh_ref[...]).astype(out_ref.dtype)


def dqn_forward(x, params, outputs):
    """x: (steps, batch, inputs). Weights resident across the steps grid."""
    steps, batch, n_in = x.shape

    def resident(shape):
        # Full-array block with a constant index_map: DMA'd once, then reused
        # for every grid step (no re-fetch when the block index is unchanged).
        return pl.BlockSpec(shape, lambda s: (0,) * len(shape))

    in_specs = [
        pl.BlockSpec((None, batch, n_in), lambda s: (s, 0, 0)),   # per-step x
        resident(params["w1"].shape),
        resident(params["w2"].shape),
        resident(params["w3"].shape),
        resident(params["wh"].shape),
        resident(params["p1"].shape),
        resident(params["p23"].shape),
        resident(params["bh"].shape),
    ]
    out_specs = pl.BlockSpec((None, batch, OUT_PAD), lambda s: (s, 0, 0))

    out = pl.pallas_call(
        dqn_kernel,
        out_shape=jax.ShapeDtypeStruct((steps, batch, OUT_PAD), jnp.float32),
        grid=(steps,),
        in_specs=in_specs,
        out_specs=out_specs,
        compiler_params=pltpu.CompilerParams(
            dimension_semantics=("parallel",),     # v7x: both TensorCores
            vmem_limit_bytes=32 << 20),            # footprint ~8 MB, safe on v5e..v7x
    )(x, params["w1"], params["w2"], params["w3"], params["wh"],
      params["p1"], params["p23"], params["bh"])

    return out[..., :outputs]


def init_params(key, inputs, outputs):
    """Deterministic synthetic params matching DQN.__init__ shapes.

    Big weights stored bf16 (MXU-native); w1 is tiny and kept f32 for the VPU
    FMA path.  Biases / BN affine params packed into two small f32 arrays:
    p1 = [b1; gamma1; beta1] (3,256), p23 = [b2;g2;be2; b3;g3;be3] (6,1024).
    Head weight/bias zero-padded to OUT_PAD lanes for a lane-dense output.
    """
    ks = jax.random.split(key, 8)

    def lin(kw, kb, fan_in, fan_out):
        bound = 1.0 / math.sqrt(fan_in)
        w = jax.random.uniform(kw, (fan_in, fan_out), jnp.float32, -bound, bound)
        b = jax.random.uniform(kb, (fan_out,), jnp.float32, -bound, bound)
        return w, b

    w1, b1 = lin(ks[0], ks[1], inputs, 256)
    w2, b2 = lin(ks[2], ks[3], 256, 1024)
    w3, b3 = lin(ks[4], ks[5], 1024, 1024)
    wh, bh = lin(ks[6], ks[7], 1024, outputs)

    wh_pad = jnp.zeros((1024, OUT_PAD), jnp.float32).at[:, :outputs].set(wh)
    bh_pad = jnp.zeros((1, OUT_PAD), jnp.float32).at[0, :outputs].set(bh)

    one, zero = jnp.ones, jnp.zeros  # BatchNorm defaults: gamma=1, beta=0
    p1 = jnp.stack([b1, one(256, jnp.float32), zero(256, jnp.float32)])
    p23 = jnp.stack([b2, one(1024, jnp.float32), zero(1024, jnp.float32),
                     b3, one(1024, jnp.float32), zero(1024, jnp.float32)])

    return dict(
        w1=w1,                                   # f32, tiny (FMA path)
        w2=w2.astype(jnp.bfloat16),
        w3=w3.astype(jnp.bfloat16),
        wh=wh_pad.astype(jnp.bfloat16),
        p1=p1, p23=p23,
        bh=bh_pad,
    )


def dqn_reference(x, params, outputs):
    """Pure-JAX reference with numerics identical to the kernel."""

    def bn_relu(h, b, g, be):
        hb = h + b
        mean = jnp.mean(hb, axis=0, keepdims=True)
        mean_sq = jnp.mean(hb * hb, axis=0, keepdims=True)
        var = mean_sq - mean * mean
        scale = g * jax.lax.rsqrt(var + EPS)
        shift = be - mean * scale
        return jnp.maximum(hb * scale + shift, 0.0)

    def mxu(h, w):
        return jnp.dot(h.astype(jnp.bfloat16), w,
                       preferred_element_type=jnp.float32)

    p1, p23 = params["p1"], params["p23"]
    w1 = params["w1"]

    def one_step(xs):
        h = xs[:, 0:1] * w1[0:1, :]
        for k in range(1, xs.shape[1]):
            h = h + xs[:, k:k + 1] * w1[k:k + 1, :]
        h = bn_relu(h, p1[0:1], p1[1:2], p1[2:3])
        h = mxu(h, params["w2"])
        h = bn_relu(h, p23[0:1], p23[1:2], p23[2:3])
        h = mxu(h, params["w3"])
        h = bn_relu(h, p23[3:4], p23[4:5], p23[5:6])
        return mxu(h, params["wh"]) + params["bh"]

    return jax.vmap(one_step)(x)[..., :outputs]


if __name__ == "__main__":
    # Inverted pendulum: state dim 4, 2 discrete actions.
    # 4 fused forward steps x batch 128 (fills the MXU M dim; weights DMA'd once).
    STEPS, BATCH, INPUTS, OUTPUTS = 4, 128, 4, 2
    key = jax.random.PRNGKey(0)
    kx, kp = jax.random.split(key)
    x = jax.random.normal(kx, (STEPS, BATCH, INPUTS), jnp.float32)
    params = init_params(kp, INPUTS, OUTPUTS)

    out = dqn_forward(x, params, OUTPUTS)
    out = jax.block_until_ready(out)

    ref = dqn_reference(x, params, OUTPUTS)
    assert out.shape == (STEPS, BATCH, OUTPUTS)
    assert jnp.allclose(out, ref, atol=2e-3, rtol=2e-3), "mismatch vs reference"
    print("KERNEL_OK")
</pallas_src>

<mosaic_0001>
module attributes {stable_mosaic.version = 11 : i64} {
  func.func @dqn_kernel(%arg0: i32, %arg1: memref<1x128x4xf32, #tpu.memory_space<vmem>>, %arg2: memref<4x256xf32, #tpu.memory_space<vmem>>, %arg3: memref<256x1024xbf16, #tpu.memory_space<vmem>>, %arg4: memref<1024x1024xbf16, #tpu.memory_space<vmem>>, %arg5: memref<1024x128xbf16, #tpu.memory_space<vmem>>, %arg6: memref<3x256xf32, #tpu.memory_space<vmem>>, %arg7: memref<6x1024xf32, #tpu.memory_space<vmem>>, %arg8: memref<1x128xf32, #tpu.memory_space<vmem>>, %arg9: memref<1x128x128xf32, #tpu.memory_space<vmem>>) attributes {dimension_semantics = [#tpu.dimension_semantics<parallel>], iteration_bounds = array<i64: 4>, scalar_prefetch = 0 : i64, scratch_operands = 0 : i64, tpu.core_type = #tpu.core_type<tc>, window_params = [{transform_indices = @transform_0, window_bounds = array<i64: 1, 128, 4>}, {pipeline_mode = #tpu.pipeline_mode<synchronous>, transform_indices = @transform_1, window_bounds = array<i64: 4, 256>}, {pipeline_mode = #tpu.pipeline_mode<synchronous>, transform_indices = @transform_2, window_bounds = array<i64: 256, 1024>}, {pipeline_mode = #tpu.pipeline_mode<synchronous>, transform_indices = @transform_3, window_bounds = array<i64: 1024, 1024>}, {pipeline_mode = #tpu.pipeline_mode<synchronous>, transform_indices = @transform_4, window_bounds = array<i64: 1024, 128>}, {pipeline_mode = #tpu.pipeline_mode<synchronous>, transform_indices = @transform_5, window_bounds = array<i64: 3, 256>}, {pipeline_mode = #tpu.pipeline_mode<synchronous>, transform_indices = @transform_6, window_bounds = array<i64: 6, 1024>}, {pipeline_mode = #tpu.pipeline_mode<synchronous>, transform_indices = @transform_7, window_bounds = array<i64: 1, 128>}, {transform_indices = @transform_8, window_bounds = array<i64: 1, 128, 128>}]} {
    %c0 = arith.constant 0 : index
    %c0_0 = arith.constant 0 : index
    %c0_1 = arith.constant 0 : index
    %0 = vector.load %arg1[%c0, %c0_0, %c0_1] : memref<1x128x4xf32, #tpu.memory_space<vmem>>, vector<1x128x4xf32>
    %1 = vector.shape_cast %0 : vector<1x128x4xf32> to vector<128x4xf32>
    %c0_2 = arith.constant 0 : index
    %c0_3 = arith.constant 0 : index
    %2 = vector.load %arg2[%c0_2, %c0_3] : memref<4x256xf32, #tpu.memory_space<vmem>>, vector<4x256xf32>
    %3 = vector.extract_strided_slice %1 {offsets = [0, 0], sizes = [128, 1], strides = [1, 1]} : vector<128x4xf32> to vector<128x1xf32>
    %4 = vector.extract_strided_slice %2 {offsets = [0, 0], sizes = [1, 256], strides = [1, 1]} : vector<4x256xf32> to vector<1x256xf32>
    %5 = vector.broadcast %3 : vector<128x1xf32> to vector<128x256xf32>
    %6 = vector.broadcast %4 : vector<1x256xf32> to vector<128x256xf32>
    %7 = arith.mulf %5, %6 : vector<128x256xf32>
    %8 = vector.extract_strided_slice %1 {offsets = [0, 1], sizes = [128, 1], strides = [1, 1]} : vector<128x4xf32> to vector<128x1xf32>
    %9 = vector.extract_strided_slice %2 {offsets = [1, 0], sizes = [1, 256], strides = [1, 1]} : vector<4x256xf32> to vector<1x256xf32>
    %10 = vector.broadcast %8 : vector<128x1xf32> to vector<128x256xf32>
    %11 = vector.broadcast %9 : vector<1x256xf32> to vector<128x256xf32>
    %12 = arith.mulf %10, %11 : vector<128x256xf32>
    %13 = arith.addf %7, %12 : vector<128x256xf32>
    %14 = vector.extract_strided_slice %1 {offsets = [0, 2], sizes = [128, 1], strides = [1, 1]} : vector<128x4xf32> to vector<128x1xf32>
    %15 = vector.extract_strided_slice %2 {offsets = [2, 0], sizes = [1, 256], strides = [1, 1]} : vector<4x256xf32> to vector<1x256xf32>
    %16 = vector.broadcast %14 : vector<128x1xf32> to vector<128x256xf32>
    %17 = vector.broadcast %15 : vector<1x256xf32> to vector<128x256xf32>
    %18 = arith.mulf %16, %17 : vector<128x256xf32>
    %19 = arith.addf %13, %18 : vector<128x256xf32>
    %20 = vector.extract_strided_slice %1 {offsets = [0, 3], sizes = [128, 1], strides = [1, 1]} : vector<128x4xf32> to vector<128x1xf32>
    %21 = vector.extract_strided_slice %2 {offsets = [3, 0], sizes = [1, 256], strides = [1, 1]} : vector<4x256xf32> to vector<1x256xf32>
    %22 = vector.broadcast %20 : vector<128x1xf32> to vector<128x256xf32>
    %23 = vector.broadcast %21 : vector<1x256xf32> to vector<128x256xf32>
    %24 = arith.mulf %22, %23 : vector<128x256xf32>
    %25 = arith.addf %19, %24 : vector<128x256xf32>
    %c0_4 = arith.constant 0 : index
    %c0_5 = arith.constant 0 : index
    %26 = vector.load %arg6[%c0_4, %c0_5] : memref<3x256xf32, #tpu.memory_space<vmem>>, vector<1x256xf32>
    %c1 = arith.constant 1 : index
    %c0_6 = arith.constant 0 : index
    %27 = vector.load %arg6[%c1, %c0_6] : memref<3x256xf32, #tpu.memory_space<vmem>>, vector<1x256xf32>
    %c2 = arith.constant 2 : index
    %c0_7 = arith.constant 0 : index
    %28 = vector.load %arg6[%c2, %c0_7] : memref<3x256xf32, #tpu.memory_space<vmem>>, vector<1x256xf32>
    %29 = vector.broadcast %26 : vector<1x256xf32> to vector<128x256xf32>
    %30 = arith.addf %25, %29 : vector<128x256xf32>
    %cst = arith.constant dense<0.000000e+00> : vector<256xf32>
    %31 = vector.multi_reduction <add>, %30, %cst [0] : vector<128x256xf32> to vector<256xf32>
    %32 = vector.shape_cast %31 : vector<256xf32> to vector<1x256xf32>
    %cst_8 = arith.constant 1.280000e+02 : f32
    %33 = vector.broadcast %cst_8 : f32 to vector<1x256xf32>
    %34 = arith.divf %32, %33 : vector<1x256xf32>
    %35 = arith.mulf %30, %30 : vector<128x256xf32>
    %cst_9 = arith.constant dense<0.000000e+00> : vector<256xf32>
    %36 = vector.multi_reduction <add>, %35, %cst_9 [0] : vector<128x256xf32> to vector<256xf32>
    %37 = vector.shape_cast %36 : vector<256xf32> to vector<1x256xf32>
    %cst_10 = arith.constant 1.280000e+02 : f32
    %38 = vector.broadcast %cst_10 : f32 to vector<1x256xf32>
    %39 = arith.divf %37, %38 : vector<1x256xf32>
    %40 = arith.mulf %34, %34 : vector<1x256xf32>
    %41 = arith.subf %39, %40 : vector<1x256xf32>
    %cst_11 = arith.constant 9.99999974E-6 : f32
    %42 = vector.broadcast %cst_11 : f32 to vector<1x256xf32>
    %43 = arith.addf %41, %42 : vector<1x256xf32>
    %44 = math.rsqrt %43 : vector<1x256xf32>
    %45 = arith.mulf %27, %44 : vector<1x256xf32>
    %46 = arith.mulf %34, %45 : vector<1x256xf32>
    %47 = arith.subf %28, %46 : vector<1x256xf32>
    %48 = vector.broadcast %45 : vector<1x256xf32> to vector<128x256xf32>
    %49 = arith.mulf %30, %48 : vector<128x256xf32>
    %50 = vector.broadcast %47 : vector<1x256xf32> to vector<128x256xf32>
    %51 = arith.addf %49, %50 : vector<128x256xf32>
    %cst_12 = arith.constant 0.000000e+00 : f32
    %52 = vector.broadcast %cst_12 : f32 to vector<128x256xf32>
    %53 = arith.maximumf %51, %52 : vector<128x256xf32>
    %c0_13 = arith.constant 0 : index
    %c0_14 = arith.constant 0 : index
    %54 = vector.load %arg3[%c0_13, %c0_14] : memref<256x1024xbf16, #tpu.memory_space<vmem>>, vector<256x1024xbf16>
    %55 = arith.truncf %53 : vector<128x256xf32> to vector<128x256xbf16>
    %cst_15 = arith.constant dense<0.000000e+00> : vector<128x1024xf32>
    %56 = tpu.matmul %55, %54, %cst_15 {dimension_numbers = #tpu.dot_dimension_numbers<[1], [0], [0], [1], [0, 0, 1, 1], [], []>} : vector<128x256xbf16>, vector<256x1024xbf16>, vector<128x1024xf32> -> vector<128x1024xf32>
    %c0_16 = arith.constant 0 : index
    %c0_17 = arith.constant 0 : index
    %57 = vector.load %arg7[%c0_16, %c0_17] : memref<6x1024xf32, #tpu.memory_space<vmem>>, vector<1x1024xf32>
    %c1_18 = arith.constant 1 : index
    %c0_19 = arith.constant 0 : index
    %58 = vector.load %arg7[%c1_18, %c0_19] : memref<6x1024xf32, #tpu.memory_space<vmem>>, vector<1x1024xf32>
    %c2_20 = arith.constant 2 : index
    %c0_21 = arith.constant 0 : index
    %59 = vector.load %arg7[%c2_20, %c0_21] : memref<6x1024xf32, #tpu.memory_space<vmem>>, vector<1x1024xf32>
    %60 = vector.broadcast %57 : vector<1x1024xf32> to vector<128x1024xf32>
    %61 = arith.addf %56, %60 : vector<128x1024xf32>
    %cst_22 = arith.constant dense<0.000000e+00> : vector<1024xf32>
    %62 = vector.multi_reduction <add>, %61, %cst_22 [0] : vector<128x1024xf32> to vector<1024xf32>
    %63 = vector.shape_cast %62 : vector<1024xf32> to vector<1x1024xf32>
    %cst_23 = arith.constant 1.280000e+02 : f32
    %64 = vector.broadcast %cst_23 : f32 to vector<1x1024xf32>
    %65 = arith.divf %63, %64 : vector<1x1024xf32>
    %66 = arith.mulf %61, %61 : vector<128x1024xf32>
    %cst_24 = arith.constant dense<0.000000e+00> : vector<1024xf32>
    %67 = vector.multi_reduction <add>, %66, %cst_24 [0] : vector<128x1024xf32> to vector<1024xf32>
    %68 = vector.shape_cast %67 : vector<1024xf32> to vector<1x1024xf32>
    %cst_25 = arith.constant 1.280000e+02 : f32
    %69 = vector.broadcast %cst_25 : f32 to vector<1x1024xf32>
    %70 = arith.divf %68, %69 : vector<1x1024xf32>
    %71 = arith.mulf %65, %65 : vector<1x1024xf32>
    %72 = arith.subf %70, %71 : vector<1x1024xf32>
    %cst_26 = arith.constant 9.99999974E-6 : f32
    %73 = vector.broadcast %cst_26 : f32 to vector<1x1024xf32>
    %74 = arith.addf %72, %73 : vector<1x1024xf32>
    %75 = math.rsqrt %74 : vector<1x1024xf32>
    %76 = arith.mulf %58, %75 : vector<1x1024xf32>
    %77 = arith.mulf %65, %76 : vector<1x1024xf32>
    %78 = arith.subf %59, %77 : vector<1x1024xf32>
    %79 = vector.broadcast %76 : vector<1x1024xf32> to vector<128x1024xf32>
    %80 = arith.mulf %61, %79 : vector<128x1024xf32>
    %81 = vector.broadcast %78 : vector<1x1024xf32> to vector<128x1024xf32>
    %82 = arith.addf %80, %81 : vector<128x1024xf32>
    %cst_27 = arith.constant 0.000000e+00 : f32
    %83 = vector.broadcast %cst_27 : f32 to vector<128x1024xf32>
    %84 = arith.maximumf %82, %83 : vector<128x1024xf32>
    %c0_28 = arith.constant 0 : index
    %c0_29 = arith.constant 0 : index
    %85 = vector.load %arg4[%c0_28, %c0_29] : memref<1024x1024xbf16, #tpu.memory_space<vmem>>, vector<1024x1024xbf16>
    %86 = arith.truncf %84 : vector<128x1024xf32> to vector<128x1024xbf16>
    %cst_30 = arith.constant dense<0.000000e+00> : vector<128x1024xf32>
    %87 = tpu.matmul %86, %85, %cst_30 {dimension_numbers = #tpu.dot_dimension_numbers<[1], [0], [0], [1], [0, 0, 1, 1], [], []>} : vector<128x1024xbf16>, vector<1024x1024xbf16>, vector<128x1024xf32> -> vector<128x1024xf32>
    %c3 = arith.constant 3 : index
    %c0_31 = arith.constant 0 : index
    %88 = vector.load %arg7[%c3, %c0_31] : memref<6x1024xf32, #tpu.memory_space<vmem>>, vector<1x1024xf32>
    %c4 = arith.constant 4 : index
    %c0_32 = arith.constant 0 : index
    %89 = vector.load %arg7[%c4, %c0_32] : memref<6x1024xf32, #tpu.memory_space<vmem>>, vector<1x1024xf32>
    %c5 = arith.constant 5 : index
    %c0_33 = arith.constant 0 : index
    %90 = vector.load %arg7[%c5, %c0_33] : memref<6x1024xf32, #tpu.memory_space<vmem>>, vector<1x1024xf32>
    %91 = vector.broadcast %88 : vector<1x1024xf32> to vector<128x1024xf32>
    %92 = arith.addf %87, %91 : vector<128x1024xf32>
    %cst_34 = arith.constant dense<0.000000e+00> : vector<1024xf32>
    %93 = vector.multi_reduction <add>, %92, %cst_34 [0] : vector<128x1024xf32> to vector<1024xf32>
    %94 = vector.shape_cast %93 : vector<1024xf32> to vector<1x1024xf32>
    %cst_35 = arith.constant 1.280000e+02 : f32
    %95 = vector.broadcast %cst_35 : f32 to vector<1x1024xf32>
    %96 = arith.divf %94, %95 : vector<1x1024xf32>
    %97 = arith.mulf %92, %92 : vector<128x1024xf32>
    %cst_36 = arith.constant dense<0.000000e+00> : vector<1024xf32>
    %98 = vector.multi_reduction <add>, %97, %cst_36 [0] : vector<128x1024xf32> to vector<1024xf32>
    %99 = vector.shape_cast %98 : vector<1024xf32> to vector<1x1024xf32>
    %cst_37 = arith.constant 1.280000e+02 : f32
    %100 = vector.broadcast %cst_37 : f32 to vector<1x1024xf32>
    %101 = arith.divf %99, %100 : vector<1x1024xf32>
    %102 = arith.mulf %96, %96 : vector<1x1024xf32>
    %103 = arith.subf %101, %102 : vector<1x1024xf32>
    %cst_38 = arith.constant 9.99999974E-6 : f32
    %104 = vector.broadcast %cst_38 : f32 to vector<1x1024xf32>
    %105 = arith.addf %103, %104 : vector<1x1024xf32>
    %106 = math.rsqrt %105 : vector<1x1024xf32>
    %107 = arith.mulf %89, %106 : vector<1x1024xf32>
    %108 = arith.mulf %96, %107 : vector<1x1024xf32>
    %109 = arith.subf %90, %108 : vector<1x1024xf32>
    %110 = vector.broadcast %107 : vector<1x1024xf32> to vector<128x1024xf32>
    %111 = arith.mulf %92, %110 : vector<128x1024xf32>
    %112 = vector.broadcast %109 : vector<1x1024xf32> to vector<128x1024xf32>
    %113 = arith.addf %111, %112 : vector<128x1024xf32>
    %cst_39 = arith.constant 0.000000e+00 : f32
    %114 = vector.broadcast %cst_39 : f32 to vector<128x1024xf32>
    %115 = arith.maximumf %113, %114 : vector<128x1024xf32>
    %c0_40 = arith.constant 0 : index
    %c0_41 = arith.constant 0 : index
    %116 = vector.load %arg5[%c0_40, %c0_41] : memref<1024x128xbf16, #tpu.memory_space<vmem>>, vector<1024x128xbf16>
    %117 = arith.truncf %115 : vector<128x1024xf32> to vector<128x1024xbf16>
    %cst_42 = arith.constant dense<0.000000e+00> : vector<128x128xf32>
    %118 = tpu.matmul %117, %116, %cst_42 {dimension_numbers = #tpu.dot_dimension_numbers<[1], [0], [0], [1], [0, 0, 1, 1], [], []>} : vector<128x1024xbf16>, vector<1024x128xbf16>, vector<128x128xf32> -> vector<128x128xf32>
    %c0_43 = arith.constant 0 : index
    %c0_44 = arith.constant 0 : index
    %119 = vector.load %arg8[%c0_43, %c0_44] : memref<1x128xf32, #tpu.memory_space<vmem>>, vector<1x128xf32>
    %120 = vector.broadcast %119 : vector<1x128xf32> to vector<128x128xf32>
    %121 = arith.addf %118, %120 : vector<128x128xf32>
    %c0_45 = arith.constant 0 : index
    %c0_46 = arith.constant 0 : index
    %c0_47 = arith.constant 0 : index
    %122 = vector.load %arg9[%c0_45, %c0_46, %c0_47] : memref<1x128x128xf32, #tpu.memory_space<vmem>>, vector<1x128x128xf32>
    %123 = vector.shape_cast %122 : vector<1x128x128xf32> to vector<128x128xf32>
    %124 = vector.shape_cast %121 : vector<128x128xf32> to vector<1x128x128xf32>
    tpu.vector_store %arg9[%c0_45, %c0_46, %c0_47], %124 {strides = array<i32>} : memref<1x128x128xf32, #tpu.memory_space<vmem>>, vector<1x128x128xf32>,
    return
  }
  func.func @transform_0(%arg0: i32) -> (i32, i32, i32) {
    %c0_i32 = arith.constant 0 : i32
    %c0_i32_0 = arith.constant 0 : i32
    %c0_i32_1 = arith.constant 0 : i32
    return %arg0, %c0_i32, %c0_i32_0 : i32, i32, i32
  }
  func.func @transform_1(%arg0: i32) -> (i32, i32) {
    %c0_i32 = arith.constant 0 : i32
    %c0_i32_0 = arith.constant 0 : i32
    %c0_i32_1 = arith.constant 0 : i32
    return %c0_i32, %c0_i32_0 : i32, i32
  }
  func.func @transform_2(%arg0: i32) -> (i32, i32) {
    %c0_i32 = arith.constant 0 : i32
    %c0_i32_0 = arith.constant 0 : i32
    %c0_i32_1 = arith.constant 0 : i32
    return %c0_i32, %c0_i32_0 : i32, i32
  }
  func.func @transform_3(%arg0: i32) -> (i32, i32) {
    %c0_i32 = arith.constant 0 : i32
    %c0_i32_0 = arith.constant 0 : i32
    %c0_i32_1 = arith.constant 0 : i32
    return %c0_i32, %c0_i32_0 : i32, i32
  }
  func.func @transform_4(%arg0: i32) -> (i32, i32) {
    %c0_i32 = arith.constant 0 : i32
    %c0_i32_0 = arith.constant 0 : i32
    %c0_i32_1 = arith.constant 0 : i32
    return %c0_i32, %c0_i32_0 : i32, i32
  }
  func.func @transform_5(%arg0: i32) -> (i32, i32) {
    %c0_i32 = arith.constant 0 : i32
    %c0_i32_0 = arith.constant 0 : i32
    %c0_i32_1 = arith.constant 0 : i32
    return %c0_i32, %c0_i32_0 : i32, i32
  }
  func.func @transform_6(%arg0: i32) -> (i32, i32) {
    %c0_i32 = arith.constant 0 : i32
    %c0_i32_0 = arith.constant 0 : i32
    %c0_i32_1 = arith.constant 0 : i32
    return %c0_i32, %c0_i32_0 : i32, i32
  }
  func.func @transform_7(%arg0: i32) -> (i32, i32) {
    %c0_i32 = arith.constant 0 : i32
    %c0_i32_0 = arith.constant 0 : i32
    %c0_i32_1 = arith.constant 0 : i32
    return %c0_i32, %c0_i32_0 : i32, i32
  }
  func.func @transform_8(%arg0: i32) -> (i32, i32, i32) {
    %c0_i32 = arith.constant 0 : i32
    %c0_i32_0 = arith.constant 0 : i32
    %c0_i32_1 = arith.constant 0 : i32
    return %arg0, %c0_i32, %c0_i32_0 : i32, i32, i32
  }
}

</mosaic_0001>

<llo_original>
// kernel: tpu_custom_call.1
$region0: #{tpu_custom_call.1}
  #allocation0 [shape = 'u32[]', space=smem, size = 0x4, offset = 0x4, fixed_abs, tag = 'smem constant byte address 0x4 - core index']
  #allocation1 [shape = 'u32[72,128]{1,0:T(1,128)}', space=vmem, size = 0x9000, scoped, tag = 'internal scratch']
  %s0 = inlined_call_operand.vmem [shape: f32[4,128,4], index: 0, kind: input, shape index: {}]
  %s1 = inlined_call_operand.hbm [shape: f32[4,256], index: 1, kind: input, shape index: {}]
  %s2 = inlined_call_operand.hbm [shape: bf16[256,1024], index: 2, kind: input, shape index: {}]
  %s3 = inlined_call_operand.hbm [shape: bf16[1024,1024], index: 3, kind: input, shape index: {}]
  %s4 = inlined_call_operand.hbm [shape: bf16[1024,128], index: 4, kind: input, shape index: {}]
  %s5 = inlined_call_operand.hbm [shape: f32[3,256], index: 5, kind: input, shape index: {}]
  %s6 = inlined_call_operand.hbm [shape: f32[6,1024], index: 6, kind: input, shape index: {}]
  %s7 = inlined_call_operand.hbm [shape: f32[1,128], index: 7, kind: input, shape index: {}]
  %s8 = inlined_call_operand.hbm [shape: f32[4,128,128], index: 8, kind: output, shape index: {}]
  %s9 = sld [smem:[#allocation0]]
  $region93: #{tpu_custom_call.1} parent=0
    _
  %s11 = ssub.s32 1, %s9
  %s12 = scalar_select 0, %s11, %s9
  $region1: #{tpu_custom_call.1} parent=0
    #allocation2 [shape = 'u8[4096]{0}', space=vmem, size = 0x1000, scoped, tag = 'input window, operand 1, single buffered']
    #allocation3 [shape = 's32[2]{0}', space=sflag, size = 0x8, scoped, tag = 'scoped memory for tpu_custom_call.1']
    #allocation4 [shape = 's32[2]{0}', space=sflag, size = 0x8, scoped, tag = 'scoped memory for tpu_custom_call.1']
    #allocation5 [shape = 'u8[524288]{0}', space=vmem, size = 0x80000, scoped, tag = 'input window, operand 2, single buffered']
    #allocation6 [shape = 's32[1]{0}', space=sflag, size = 0x4, scoped, tag = 'scoped memory for tpu_custom_call.1']
    #allocation7 [shape = 'u8[2097152]{0}', space=vmem, size = 0x200000, scoped, tag = 'input window, operand 3, single buffered']
    #allocation8 [shape = 'u8[262144]{0}', space=vmem, size = 0x40000, scoped, tag = 'input window, operand 4, single buffered']
    #allocation9 [shape = 's32[1]{0}', space=sflag, size = 0x4, scoped, tag = 'scoped memory for tpu_custom_call.1']
    #allocation10 [shape = 'u8[4096]{0}', space=vmem, size = 0x1000, scoped, tag = 'input window, operand 5, single buffered']
    #allocation11 [shape = 'u8[32768]{0}', space=vmem, size = 0x8000, scoped, tag = 'input window, operand 6, single buffered']
    #allocation12 [shape = 's32[1]{0}', space=sflag, size = 0x4, scoped, tag = 'scoped memory for tpu_custom_call.1']
    #allocation13 [shape = 'u8[512]{0}', space=vmem, size = 0x400, scoped, tag = 'input window, operand 7, single buffered']
    #allocation14 [shape = 'u8[131072]{0}', space=vmem, size = 0x20000, scoped, tag = 'output window, operand 0']
    %13 = vsyncpa [#allocation3], 0
    %14 = vsyncpa [#allocation6], 0
    %15 = vsyncpa [#allocation9], 0
    %16 = vsyncpa [#allocation12], 0
    %17 = vsyncpa [#allocation4], 0
    %s18 = scalar_lea.sflag [#allocation4], 1
    %19 = vsyncpa %s18, 0
    loop: start=0, step=1, limit=6
    $region2: #{tpu_custom_call.1} parent=1 // loop_pre_header
      _
    $region3: #{tpu_custom_call.1} parent=1 // loop_header
      %s21 = sphi 0, %s25
      %p22 = scmp.ge.s32.totalorder %s21, 6
      %s31 = sphi 0, %s33
      %s34 = sphi 0, %s31
      %s35 = sphi 0, %s34
      %s51 = sphi 0, %s35
      %s55 = sphi 0, %s55
      %s57 = sphi 0, %s55
      %s58 = sphi 0, %s57
      %s72 = sphi 0, %s58
      %s76 = sphi 0, %s76
      %s78 = sphi 0, %s76
      %s79 = sphi 0, %s78
      %s93 = sphi 0, %s79
      %s97 = sphi 0, %s97
      %s99 = sphi 0, %s97
      %s100 = sphi 0, %s99
      %s114 = sphi 0, %s100
      %s118 = sphi 0, %s118
      %s120 = sphi 0, %s118
      %s121 = sphi 0, %s120
      %s135 = sphi 0, %s121
      %s139 = sphi 0, %s139
      %s141 = sphi 0, %s139
      %s142 = sphi 0, %s141
      %s156 = sphi 0, %s142
      %s160 = sphi 0, %s160
      %s162 = sphi 0, %s160
      %s163 = sphi 0, %s162
      %s177 = sphi 0, %s163
      %s181 = sphi 0, %s181
      %s183 = sphi 0, %s181
      %s184 = sphi 0, %s183
      %s198 = sphi 0, %s184
      %s204 = sphi 0, %s206
      %s207 = sphi 0, %s204
      %s208 = sphi 0, %s207
      %s224 = sphi 0, %s208
    $region4: #{tpu_custom_call.1} parent=1 // loop_header_branch
      %24 = sbr.rel (%p22) target = $region8
    $region5: #{tpu_custom_call.1} parent=1 // loop_body
      %s26 = ssub.s32 %s21, 1
      %s27 = ssub.s32 %s21, 2
      %s28 = sadd.s32 %s21, 1
      %s29 = ssub.s32 %s21, %s28
      %p30 = scmp.eq.s32.totalorder %s29, 0
      %s32 = sadd.s32 %s31, 1
      %s33 = scalar_select %p30, %s31, %s32
      %p36 = pneg %p30
      %p37 = scmp.eq.s32.totalorder %s21, 3
      %p38 = por %p36, %p37
      %p39 = scmp.ne.s32.totalorder %s31, %s34
      %p40 = scmp.eq.s32.totalorder %s21, 0
      %p41 = por %p39, %p40
      %p42 = scmp.ne.s32.totalorder %s31, %s34
      %p43 = scmp.eq.s32.totalorder %s26, 3
      %p44 = por %p42, %p43
      %p45 = scmp.ne.s32.totalorder %s34, %s35
      %p46 = scmp.eq.s32.totalorder %s26, 0
      %p47 = por %p45, %p46
      %p48 = scmp.ne.s32.totalorder %s34, %s35
      %p49 = scmp.eq.s32.totalorder %s27, 3
      %p50 = por %p48, %p49
      %p52 = scmp.ne.s32.totalorder %s35, %s51
      %p53 = scmp.eq.s32.totalorder %s27, 0
      %p54 = por %p52, %p53
      %s56 = sadd.s32 %s55, 1
      %p59 = scmp.eq.s32.totalorder %s21, 3
      %p60 = scmp.ne.s32.totalorder %s55, %s57
      %p61 = scmp.eq.s32.totalorder %s21, 0
      %p62 = por %p60, %p61
      %p63 = scmp.ne.s32.totalorder %s55, %s57
      %p64 = scmp.eq.s32.totalorder %s26, 3
      %p65 = por %p63, %p64
      %p66 = scmp.ne.s32.totalorder %s57, %s58
      %p67 = scmp.eq.s32.totalorder %s26, 0
      %p68 = por %p66, %p67
      %p69 = scmp.ne.s32.totalorder %s57, %s58
      %p70 = scmp.eq.s32.totalorder %s27, 3
      %p71 = por %p69, %p70
      %p73 = scmp.ne.s32.totalorder %s58, %s72
      %p74 = scmp.eq.s32.totalorder %s27, 0
      %p75 = por %p73, %p74
      %s77 = sadd.s32 %s76, 1
      %p80 = scmp.eq.s32.totalorder %s21, 3
      %p81 = scmp.ne.s32.totalorder %s76, %s78
      %p82 = scmp.eq.s32.totalorder %s21, 0
      %p83 = por %p81, %p82
      %p84 = scmp.ne.s32.totalorder %s76, %s78
      %p85 = scmp.eq.s32.totalorder %s26, 3
      %p86 = por %p84, %p85
      %p87 = scmp.ne.s32.totalorder %s78, %s79
      %p88 = scmp.eq.s32.totalorder %s26, 0
      %p89 = por %p87, %p88
      %p90 = scmp.ne.s32.totalorder %s78, %s79
      %p91 = scmp.eq.s32.totalorder %s27, 3
      %p92 = por %p90, %p91
      %p94 = scmp.ne.s32.totalorder %s79, %s93
      %p95 = scmp.eq.s32.totalorder %s27, 0
      %p96 = por %p94, %p95
      %s98 = sadd.s32 %s97, 1
      %p101 = scmp.eq.s32.totalorder %s21, 3
      %p102 = scmp.ne.s32.totalorder %s97, %s99
      %p103 = scmp.eq.s32.totalorder %s21, 0
      %p104 = por %p102, %p103
      %p105 = scmp.ne.s32.totalorder %s97, %s99
      %p106 = scmp.eq.s32.totalorder %s26, 3
      %p107 = por %p105, %p106
      %p108 = scmp.ne.s32.totalorder %s99, %s100
      %p109 = scmp.eq.s32.totalorder %s26, 0
      %p110 = por %p108, %p109
      %p111 = scmp.ne.s32.totalorder %s99, %s100
      %p112 = scmp.eq.s32.totalorder %s27, 3
      %p113 = por %p111, %p112
      %p115 = scmp.ne.s32.totalorder %s100, %s114
      %p116 = scmp.eq.s32.totalorder %s27, 0
      %p117 = por %p115, %p116
      %s119 = sadd.s32 %s118, 1
      %p122 = scmp.eq.s32.totalorder %s21, 3
      %p123 = scmp.ne.s32.totalorder %s118, %s120
      %p124 = scmp.eq.s32.totalorder %s21, 0
      %p125 = por %p123, %p124
      %p126 = scmp.ne.s32.totalorder %s118, %s120
      %p127 = scmp.eq.s32.totalorder %s26, 3
      %p128 = por %p126, %p127
      %p129 = scmp.ne.s32.totalorder %s120, %s121
      %p130 = scmp.eq.s32.totalorder %s26, 0
      %p131 = por %p129, %p130
      %p132 = scmp.ne.s32.totalorder %s120, %s121
      %p133 = scmp.eq.s32.totalorder %s27, 3
      %p134 = por %p132, %p133
      %p136 = scmp.ne.s32.totalorder %s121, %s135
      %p137 = scmp.eq.s32.totalorder %s27, 0
      %p138 = por %p136, %p137
      %s140 = sadd.s32 %s139, 1
      %p143 = scmp.eq.s32.totalorder %s21, 3
      %p144 = scmp.ne.s32.totalorder %s139, %s141
      %p145 = scmp.eq.s32.totalorder %s21, 0
      %p146 = por %p144, %p145
      %p147 = scmp.ne.s32.totalorder %s139, %s141
      %p148 = scmp.eq.s32.totalorder %s26, 3
      %p149 = por %p147, %p148
      %p150 = scmp.ne.s32.totalorder %s141, %s142
      %p151 = scmp.eq.s32.totalorder %s26, 0
      %p152 = por %p150, %p151
      %p153 = scmp.ne.s32.totalorder %s141, %s142
      %p154 = scmp.eq.s32.totalorder %s27, 3
      %p155 = por %p153, %p154
      %p157 = scmp.ne.s32.totalorder %s142, %s156
      %p158 = scmp.eq.s32.totalorder %s27, 0
      %p159 = por %p157, %p158
      %s161 = sadd.s32 %s160, 1
      %p164 = scmp.eq.s32.totalorder %s21, 3
      %p165 = scmp.ne.s32.totalorder %s160, %s162
      %p166 = scmp.eq.s32.totalorder %s21, 0
      %p167 = por %p165, %p166
      %p168 = scmp.ne.s32.totalorder %s160, %s162
      %p169 = scmp.eq.s32.totalorder %s26, 3
      %p170 = por %p168, %p169
      %p171 = scmp.ne.s32.totalorder %s162, %s163
      %p172 = scmp.eq.s32.totalorder %s26, 0
      %p173 = por %p171, %p172
      %p174 = scmp.ne.s32.totalorder %s162, %s163
      %p175 = scmp.eq.s32.totalorder %s27, 3
      %p176 = por %p174, %p175
      %p178 = scmp.ne.s32.totalorder %s163, %s177
      %p179 = scmp.eq.s32.totalorder %s27, 0
      %p180 = por %p178, %p179
      %s182 = sadd.s32 %s181, 1
      %p185 = scmp.eq.s32.totalorder %s21, 3
      %p186 = scmp.ne.s32.totalorder %s181, %s183
      %p187 = scmp.eq.s32.totalorder %s21, 0
      %p188 = por %p186, %p187
      %p189 = scmp.ne.s32.totalorder %s181, %s183
      %p190 = scmp.eq.s32.totalorder %s26, 3
      %p191 = por %p189, %p190
      %p192 = scmp.ne.s32.totalorder %s183, %s184
      %p193 = scmp.eq.s32.totalorder %s26, 0
      %p194 = por %p192, %p193
      %p195 = scmp.ne.s32.totalorder %s183, %s184
      %p196 = scmp.eq.s32.totalorder %s27, 3
      %p197 = por %p195, %p196
      %p199 = scmp.ne.s32.totalorder %s184, %s198
      %p200 = scmp.eq.s32.totalorder %s27, 0
      %p201 = por %p199, %p200
      %s202 = ssub.s32 %s21, %s28
      %p203 = scmp.eq.s32.totalorder %s202, 0
      %s205 = sadd.s32 %s204, 1
      %s206 = scalar_select %p203, %s204, %s205
      %p209 = pneg %p203
      %p210 = scmp.eq.s32.totalorder %s21, 3
      %p211 = por %p209, %p210
      %p212 = scmp.ne.s32.totalorder %s204, %s207
      %p213 = scmp.eq.s32.totalorder %s21, 0
      %p214 = por %p212, %p213
      %p215 = scmp.ne.s32.totalorder %s204, %s207
      %p216 = scmp.eq.s32.totalorder %s26, 3
      %p217 = por %p215, %p216
      %p218 = scmp.ne.s32.totalorder %s207, %s208
      %p219 = scmp.eq.s32.totalorder %s26, 0
      %p220 = por %p218, %p219
      %p221 = scmp.ne.s32.totalorder %s207, %s208
      %p222 = scmp.eq.s32.totalorder %s27, 3
      %p223 = por %p221, %p222
      %p225 = scmp.ne.s32.totalorder %s208, %s224
      %p226 = scmp.eq.s32.totalorder %s27, 0
      %p227 = por %p225, %p226
      %p228 = scmp.le.s32.totalorder 1, %s21
      %p229 = scmp.lt.s32.totalorder %s21, 5
      %p230 = pnand %p228, %p229
      %p231 = pneg %p230
      // Predicated region
      $region9: #{tpu_custom_call.1} parent=5 // pred_check
        _
      $region10: #{tpu_custom_call.1} parent=5 // pred_check_branch
        %233 = sbr.rel (%p230) target = $region12
      $region11: #{tpu_custom_call.1} parent=5 // pred_region
        %s234 = ssub.s32 %s21, 1
        // Predicated region
        $region13: #{tpu_custom_call.1} parent=11 // pred_check
          %p235 = pneg %p68
        $region14: #{tpu_custom_call.1} parent=11 // pred_check_branch
          %237 = sbr.rel (%p235) target = $region16
        $region15: #{tpu_custom_call.1} parent=11 // pred_region
          %239 = vsyncadd [#allocation3], 0
          %s241 = sshll.u32 %s1, 4
          %s242 = int_to_ptr.hbm [resolvable:$true] %s241
          %s243 = sshll.u32 [#allocation2], 4
          %s244 = int_to_ptr.vmem [resolvable:$true] %s243
          %246 = dma.hbm_to_vmem [thread:$0]  %s242, 128, %s244, [#allocation3]
        $region16: #{tpu_custom_call.1} parent=11 // pred_fallthru
          _
        // Predicated region
        $region17: #{tpu_custom_call.1} parent=11 // pred_check
          %p247 = pneg %p89
        $region18: #{tpu_custom_call.1} parent=11 // pred_check_branch
          %249 = sbr.rel (%p247) target = $region20
        $region19: #{tpu_custom_call.1} parent=11 // pred_region
          %251 = vsyncadd [#allocation6], 0
          %s252 = sshll.u32 %s2, 4
          %s253 = int_to_ptr.hbm [resolvable:$true] %s252
          %s254 = sshll.u32 [#allocation5], 4
          %s255 = int_to_ptr.vmem [resolvable:$true] %s254
          %260 = dma.hbm_to_vmem [thread:$0]  %s253, 16384, %s255, [#allocation6], 512, 512, 32
        $region20: #{tpu_custom_call.1} parent=11 // pred_fallthru
          _
        // Predicated region
        $region21: #{tpu_custom_call.1} parent=11 // pred_check
          %p261 = pneg %p110
        $region22: #{tpu_custom_call.1} parent=11 // pred_check_branch
          %263 = sbr.rel (%p261) target = $region24
        $region23: #{tpu_custom_call.1} parent=11 // pred_region
          %265 = vsyncadd [#allocation6], 0
          %s266 = sshll.u32 %s3, 4
          %s267 = int_to_ptr.hbm [resolvable:$true] %s266
          %s268 = sshll.u32 [#allocation7], 4
          %s269 = int_to_ptr.vmem [resolvable:$true] %s268
          %274 = dma.hbm_to_vmem [thread:$0]  %s267, 65536, %s269, [#allocation6], 512, 512, 32
        $region24: #{tpu_custom_call.1} parent=11 // pred_fallthru
          _
        // Predicated region
        $region25: #{tpu_custom_call.1} parent=11 // pred_check
          %p275 = pneg %p131
        $region26: #{tpu_custom_call.1} parent=11 // pred_check_branch
          %277 = sbr.rel (%p275) target = $region28
        $region27: #{tpu_custom_call.1} parent=11 // pred_region
          %279 = vsyncadd [#allocation9], 0
          %s280 = sshll.u32 %s4, 4
          %s281 = int_to_ptr.hbm [resolvable:$true] %s280
          %s282 = sshll.u32 [#allocation8], 4
          %s283 = int_to_ptr.vmem [resolvable:$true] %s282
          %288 = dma.hbm_to_vmem [thread:$0]  %s281, 8192, %s283, [#allocation9], 64, 64, 4
        $region28: #{tpu_custom_call.1} parent=11 // pred_fallthru
          _
        // Predicated region
        $region29: #{tpu_custom_call.1} parent=11 // pred_check
          %p289 = pneg %p152
        $region30: #{tpu_custom_call.1} parent=11 // pred_check_branch
          %291 = sbr.rel (%p289) target = $region32
        $region31: #{tpu_custom_call.1} parent=11 // pred_region
          %293 = vsyncadd [#allocation9], 0
          %s295 = sshll.u32 %s5, 4
          %s296 = int_to_ptr.hbm [resolvable:$true] %s295
          %s297 = sshll.u32 [#allocation10], 4
          %s298 = int_to_ptr.vmem [resolvable:$true] %s297
          %300 = dma.hbm_to_vmem [thread:$0]  %s296, 128, %s298, [#allocation9]
        $region32: #{tpu_custom_call.1} parent=11 // pred_fallthru
          _
        // Predicated region
        $region33: #{tpu_custom_call.1} parent=11 // pred_check
          %p301 = pneg %p173
        $region34: #{tpu_custom_call.1} parent=11 // pred_check_branch
          %303 = sbr.rel (%p301) target = $region36
        $region35: #{tpu_custom_call.1} parent=11 // pred_region
          %305 = vsyncadd [#allocation12], 0
          %s307 = sshll.u32 %s6, 4
          %s308 = int_to_ptr.hbm [resolvable:$true] %s307
          %s309 = sshll.u32 [#allocation11], 4
          %s310 = int_to_ptr.vmem [resolvable:$true] %s309
          %312 = dma.hbm_to_vmem [thread:$0]  %s308, 1024, %s310, [#allocation12]
        $region36: #{tpu_custom_call.1} parent=11 // pred_fallthru
          _
        // Predicated region
        $region37: #{tpu_custom_call.1} parent=11 // pred_check
          %p313 = pneg %p194
        $region38: #{tpu_custom_call.1} parent=11 // pred_check_branch
          %315 = sbr.rel (%p313) target = $region40
        $region39: #{tpu_custom_call.1} parent=11 // pred_region
          %317 = vsyncadd [#allocation12], 0
          %s319 = sshll.u32 %s7, 4
          %s320 = int_to_ptr.hbm [resolvable:$true] %s319
          %s321 = sshll.u32 [#allocation13], 4
          %s322 = int_to_ptr.vmem [resolvable:$true] %s321
          %324 = dma.hbm_to_vmem [thread:$0]  %s320, 16, %s322, [#allocation12]
        $region40: #{tpu_custom_call.1} parent=11 // pred_fallthru
          _
      $region12: #{tpu_custom_call.1} parent=5 // pred_fallthru
        _
      %p325 = scmp.lt.s32.totalorder %s21, 4
      // Predicated region
      $region41: #{tpu_custom_call.1} parent=5 // pred_check
        %p326 = pneg %p325
      $region42: #{tpu_custom_call.1} parent=5 // pred_check_branch
        %328 = sbr.rel (%p326) target = $region44
      $region43: #{tpu_custom_call.1} parent=5 // pred_region
        // Predicated region
        $region45: #{tpu_custom_call.1} parent=43 // pred_check
          %p329 = pneg %p41
        $region46: #{tpu_custom_call.1} parent=43 // pred_check_branch
          %331 = sbr.rel (%p329) target = $region48
        $region47: #{tpu_custom_call.1} parent=43 // pred_region
          %p332 = scmp.lt.s32.totalorder %s21, 3
          %s333 = scalar_select %p332, %s21, 3
          %s334 = smul.addr %s333, 16
          %s335 = smul.addr %s334, 8
          %s336 = scalar_lea.vmem %s0, %s335
        $region48: #{tpu_custom_call.1} parent=43 // pred_fallthru
          _
      $region44: #{tpu_custom_call.1} parent=5 // pred_fallthru
        _
      %p337 = scmp.le.s32.totalorder 1, %s21
      %p338 = scmp.lt.s32.totalorder %s21, 5
      %p339 = pnand %p337, %p338
      %p340 = pneg %p339
      // Predicated region
      $region49: #{tpu_custom_call.1} parent=5 // pred_check
        _
      $region50: #{tpu_custom_call.1} parent=5 // pred_check_branch
        %342 = sbr.rel (%p339) target = $region52
      $region51: #{tpu_custom_call.1} parent=5 // pred_region
        %s343 = ssub.s32 %s21, 1
        // Predicated region
        $region53: #{tpu_custom_call.1} parent=51 // pred_check
          %p344 = pneg %p68
        $region54: #{tpu_custom_call.1} parent=51 // pred_check_branch
          %346 = sbr.rel (%p344) target = $region56
        $region55: #{tpu_custom_call.1} parent=51 // pred_region
          %348 = dma.done [#allocation3], 128
        $region56: #{tpu_custom_call.1} parent=51 // pred_fallthru
          _
        // Predicated region
        $region57: #{tpu_custom_call.1} parent=51 // pred_check
          %p349 = pneg %p89
        $region58: #{tpu_custom_call.1} parent=51 // pred_check_branch
          %351 = sbr.rel (%p349) target = $region60
        $region59: #{tpu_custom_call.1} parent=51 // pred_region
          %353 = dma.done [#allocation6], 16384
        $region60: #{tpu_custom_call.1} parent=51 // pred_fallthru
          _
        // Predicated region
        $region61: #{tpu_custom_call.1} parent=51 // pred_check
          %p354 = pneg %p110
        $region62: #{tpu_custom_call.1} parent=51 // pred_check_branch
          %356 = sbr.rel (%p354) target = $region64
        $region63: #{tpu_custom_call.1} parent=51 // pred_region
          %358 = dma.done [#allocation6], 65536
        $region64: #{tpu_custom_call.1} parent=51 // pred_fallthru
          _
        // Predicated region
        $region65: #{tpu_custom_call.1} parent=51 // pred_check
          %p359 = pneg %p131
        $region66: #{tpu_custom_call.1} parent=51 // pred_check_branch
          %361 = sbr.rel (%p359) target = $region68
        $region67: #{tpu_custom_call.1} parent=51 // pred_region
          %363 = dma.done [#allocation9], 8192
        $region68: #{tpu_custom_call.1} parent=51 // pred_fallthru
          _
        // Predicated region
        $region69: #{tpu_custom_call.1} parent=51 // pred_check
          %p364 = pneg %p152
        $region70: #{tpu_custom_call.1} parent=51 // pred_check_branch
          %366 = sbr.rel (%p364) target = $region72
        $region71: #{tpu_custom_call.1} parent=51 // pred_region
          %368 = dma.done [#allocation9], 128
        $region72: #{tpu_custom_call.1} parent=51 // pred_fallthru
          _
        // Predicated region
        $region73: #{tpu_custom_call.1} parent=51 // pred_check
          %p369 = pneg %p173
        $region74: #{tpu_custom_call.1} parent=51 // pred_check_branch
          %371 = sbr.rel (%p369) target = $region76
        $region75: #{tpu_custom_call.1} parent=51 // pred_region
          %373 = dma.done [#allocation12], 1024
        $region76: #{tpu_custom_call.1} parent=51 // pred_fallthru
          _
        // Predicated region
        $region77: #{tpu_custom_call.1} parent=51 // pred_check
          %p374 = pneg %p194
        $region78: #{tpu_custom_call.1} parent=51 // pred_check_branch
          %376 = sbr.rel (%p374) target = $region80
        $region79: #{tpu_custom_call.1} parent=51 // pred_region
          %378 = dma.done [#allocation12], 16
        $region80: #{tpu_custom_call.1} parent=51 // pred_fallthru
          _
        %p379 = scmp.lt.s32.totalorder %s26, 3
        %s380 = scalar_select %p379, %s26, 3
        %s381 = smul.addr %s380, 16
        %s382 = smul.addr %s381, 8
        %s383 = scalar_lea.vmem %s0, %s382
        %p384 = pneg %p47
        %p385 = pneg %p44
        %p386 = pneg %p68
        %p387 = pneg %p65
        %p388 = pneg %p89
        %p389 = pneg %p86
        %p390 = pneg %p110
        %p391 = pneg %p107
        %p392 = pneg %p131
        %p393 = pneg %p128
        %p394 = pneg %p152
        %p395 = pneg %p149
        %p396 = pneg %p173
        %p397 = pneg %p170
        %p398 = pneg %p194
        %p399 = pneg %p191
        %p400 = pneg %p220
        %p401 = pneg %p217
        %s402 = sand.u32 %s207, 1
        %s403 = scalar_lea.sflag [#allocation4], %s402
        %s404 = sand.u32 %s207, 1
        %s405 = smul.addr %s404, 128
        %s406 = scalar_lea.vmem [#allocation14], %s405
        %p407 = scmp.lt.s32.totalorder %s26, 3
        %s408 = scalar_select %p407, %s26, 3
        %s409 = smul.addr %s408, 16
        %s410 = smul.addr %s409, 8
        %s411 = scalar_lea.vmem %s0, %s410
        %v412 = vld [vmem:[%s411] sm:$0xff]
        %v413 = vld [vmem:[%s411 + $0x8] sm:$0xff]
        %v414 = vld [vmem:[%s411 + $0x10] sm:$0xff]
        %v415 = vld [vmem:[%s411 + $0x18] sm:$0xff]
        %v416 = vld [vmem:[%s411 + $0x20] sm:$0xff]
        %v417 = vld [vmem:[%s411 + $0x28] sm:$0xff]
        %v418 = vld [vmem:[%s411 + $0x30] sm:$0xff]
        %v419 = vld [vmem:[%s411 + $0x38] sm:$0xff]
        %v420 = vld [vmem:[%s411 + $0x40] sm:$0xff]
        %v421 = vld [vmem:[%s411 + $0x48] sm:$0xff]
        %v422 = vld [vmem:[%s411 + $0x50] sm:$0xff]
        %v423 = vld [vmem:[%s411 + $0x58] sm:$0xff]
        %v424 = vld [vmem:[%s411 + $0x60] sm:$0xff]
        %v425 = vld [vmem:[%s411 + $0x68] sm:$0xff]
        %v426 = vld [vmem:[%s411 + $0x70] sm:$0xff]
        %v427 = vld [vmem:[%s411 + $0x78] sm:$0xff]
        %v428 = vld [vmem:[#allocation2] sm:$0xff]
        %430 = vset.pattern.permute.xlu0 0
        %431 = vperm.xlu0 %430, %v412
        %v432 = vpop.permute.xlu0 %431
        %435 = vset.pattern.permute.xlu0 0
        %436 = vperm.xlu0 %435, %v413
        %v437 = vpop.permute.xlu0 %436
        %440 = vset.pattern.permute.xlu0 0
        %441 = vperm.xlu0 %440, %v414
        %v442 = vpop.permute.xlu0 %441
        %445 = vset.pattern.permute.xlu0 0
        %446 = vperm.xlu0 %445, %v415
        %v447 = vpop.permute.xlu0 %446
        %450 = vset.pattern.permute.xlu0 0
        %451 = vperm.xlu0 %450, %v416
        %v452 = vpop.permute.xlu0 %451
        %455 = vset.pattern.permute.xlu0 0
        %456 = vperm.xlu0 %455, %v417
        %v457 = vpop.permute.xlu0 %456
        %460 = vset.pattern.permute.xlu0 0
        %461 = vperm.xlu0 %460, %v418
        %v462 = vpop.permute.xlu0 %461
        %465 = vset.pattern.permute.xlu0 0
        %466 = vperm.xlu0 %465, %v419
        %v467 = vpop.permute.xlu0 %466
        %470 = vset.pattern.permute.xlu0 0
        %471 = vperm.xlu0 %470, %v420
        %v472 = vpop.permute.xlu0 %471
        %475 = vset.pattern.permute.xlu0 0
        %476 = vperm.xlu0 %475, %v421
        %v477 = vpop.permute.xlu0 %476
        %480 = vset.pattern.permute.xlu0 0
        %481 = vperm.xlu0 %480, %v422
        %v482 = vpop.permute.xlu0 %481
        %485 = vset.pattern.permute.xlu0 0
        %486 = vperm.xlu0 %485, %v423
        %v487 = vpop.permute.xlu0 %486
        %490 = vset.pattern.permute.xlu0 0
        %491 = vperm.xlu0 %490, %v424
        %v492 = vpop.permute.xlu0 %491
        %495 = vset.pattern.permute.xlu0 0
        %496 = vperm.xlu0 %495, %v425
        %v497 = vpop.permute.xlu0 %496
        %500 = vset.pattern.permute.xlu0 0
        %501 = vperm.xlu0 %500, %v426
        %v502 = vpop.permute.xlu0 %501
        %505 = vset.pattern.permute.xlu0 0
        %506 = vperm.xlu0 %505, %v427
        %v507 = vpop.permute.xlu0 %506
        %v510 = vperm.slane %v428, 0
        %v511 = vperm.slane %v428, 4
        %v514 = vperm.slane %v510, 0
        %v515 = vperm.slane %v511, 0
        %v516 = vmul.f32 %v432, %v514
        %v517 = vmul.f32 %v432, %v515
        %v518 = vmul.f32 %v437, %v514
        %v519 = vmul.f32 %v437, %v515
        %v520 = vmul.f32 %v442, %v514
        %v521 = vmul.f32 %v442, %v515
        %v522 = vmul.f32 %v447, %v514
        %v523 = vmul.f32 %v447, %v515
        %v524 = vmul.f32 %v452, %v514
        %v525 = vmul.f32 %v452, %v515
        %v526 = vmul.f32 %v457, %v514
        %v527 = vmul.f32 %v457, %v515
        %v528 = vmul.f32 %v462, %v514
        %v529 = vmul.f32 %v462, %v515
        %v530 = vmul.f32 %v467, %v514
        %v531 = vmul.f32 %v467, %v515
        %v532 = vmul.f32 %v472, %v514
        %v533 = vmul.f32 %v472, %v515
        %v534 = vmul.f32 %v477, %v514
        %v535 = vmul.f32 %v477, %v515
        %v536 = vmul.f32 %v482, %v514
        %v537 = vmul.f32 %v482, %v515
        %v538 = vmul.f32 %v487, %v514
        %v539 = vmul.f32 %v487, %v515
        %v540 = vmul.f32 %v492, %v514
        %v541 = vmul.f32 %v492, %v515
        %v542 = vmul.f32 %v497, %v514
        %v543 = vmul.f32 %v497, %v515
        %v544 = vmul.f32 %v502, %v514
        %v545 = vmul.f32 %v502, %v515
        %v546 = vmul.f32 %v507, %v514
        %v547 = vmul.f32 %v507, %v515
        %548 = vset.pattern.permute.xlu0 1
        %549 = vperm.xlu0 %548, %v412
        %v550 = vpop.permute.xlu0 %549
        %552 = vset.pattern.permute.xlu0 1
        %553 = vperm.xlu0 %552, %v413
        %v554 = vpop.permute.xlu0 %553
        %556 = vset.pattern.permute.xlu0 1
        %557 = vperm.xlu0 %556, %v414
        %v558 = vpop.permute.xlu0 %557
        %560 = vset.pattern.permute.xlu0 1
        %561 = vperm.xlu0 %560, %v415
        %v562 = vpop.permute.xlu0 %561
        %564 = vset.pattern.permute.xlu0 1
        %565 = vperm.xlu0 %564, %v416
        %v566 = vpop.permute.xlu0 %565
        %568 = vset.pattern.permute.xlu0 1
        %569 = vperm.xlu0 %568, %v417
        %v570 = vpop.permute.xlu0 %569
        %572 = vset.pattern.permute.xlu0 1
        %573 = vperm.xlu0 %572, %v418
        %v574 = vpop.permute.xlu0 %573
        %576 = vset.pattern.permute.xlu0 1
        %577 = vperm.xlu0 %576, %v419
        %v578 = vpop.permute.xlu0 %577
        %580 = vset.pattern.permute.xlu0 1
        %581 = vperm.xlu0 %580, %v420
        %v582 = vpop.permute.xlu0 %581
        %584 = vset.pattern.permute.xlu0 1
        %585 = vperm.xlu0 %584, %v421
        %v586 = vpop.permute.xlu0 %585
        %588 = vset.pattern.permute.xlu0 1
        %589 = vperm.xlu0 %588, %v422
        %v590 = vpop.permute.xlu0 %589
        %592 = vset.pattern.permute.xlu0 1
        %593 = vperm.xlu0 %592, %v423
        %v594 = vpop.permute.xlu0 %593
        %596 = vset.pattern.permute.xlu0 1
        %597 = vperm.xlu0 %596, %v424
        %v598 = vpop.permute.xlu0 %597
        %600 = vset.pattern.permute.xlu0 1
        %601 = vperm.xlu0 %600, %v425
        %v602 = vpop.permute.xlu0 %601
        %604 = vset.pattern.permute.xlu0 1
        %605 = vperm.xlu0 %604, %v426
        %v606 = vpop.permute.xlu0 %605
        %608 = vset.pattern.permute.xlu0 1
        %609 = vperm.xlu0 %608, %v427
        %v610 = vpop.permute.xlu0 %609
        %v612 = vperm.slane %v428, 1
        %v613 = vperm.slane %v428, 5
        %v616 = vperm.slane %v612, 1
        %v617 = vperm.slane %v613, 1
        %v618 = vmul.f32 %v550, %v616
        %v619 = vmul.f32 %v550, %v617
        %v620 = vmul.f32 %v554, %v616
        %v621 = vmul.f32 %v554, %v617
        %v622 = vmul.f32 %v558, %v616
        %v623 = vmul.f32 %v558, %v617
        %v624 = vmul.f32 %v562, %v616
        %v625 = vmul.f32 %v562, %v617
        %v626 = vmul.f32 %v566, %v616
        %v627 = vmul.f32 %v566, %v617
        %v628 = vmul.f32 %v570, %v616
        %v629 = vmul.f32 %v570, %v617
        %v630 = vmul.f32 %v574, %v616
        %v631 = vmul.f32 %v574, %v617
        %v632 = vmul.f32 %v578, %v616
        %v633 = vmul.f32 %v578, %v617
        %v634 = vmul.f32 %v582, %v616
        %v635 = vmul.f32 %v582, %v617
        %v636 = vmul.f32 %v586, %v616
        %v637 = vmul.f32 %v586, %v617
        %v638 = vmul.f32 %v590, %v616
        %v639 = vmul.f32 %v590, %v617
        %v640 = vmul.f32 %v594, %v616
        %v641 = vmul.f32 %v594, %v617
        %v642 = vmul.f32 %v598, %v616
        %v643 = vmul.f32 %v598, %v617
        %v644 = vmul.f32 %v602, %v616
        %v645 = vmul.f32 %v602, %v617
        %v646 = vmul.f32 %v606, %v616
        %v647 = vmul.f32 %v606, %v617
        %v648 = vmul.f32 %v610, %v616
        %v649 = vmul.f32 %v610, %v617
        %v650 = vadd.f32 %v516, %v618
        %v651 = vadd.f32 %v517, %v619
        %v652 = vadd.f32 %v518, %v620
        %v653 = vadd.f32 %v519, %v621
        %v654 = vadd.f32 %v520, %v622
        %v655 = vadd.f32 %v521, %v623
        %v656 = vadd.f32 %v522, %v624
        %v657 = vadd.f32 %v523, %v625
        %v658 = vadd.f32 %v524, %v626
        %v659 = vadd.f32 %v525, %v627
        %v660 = vadd.f32 %v526, %v628
        %v661 = vadd.f32 %v527, %v629
        %v662 = vadd.f32 %v528, %v630
        %v663 = vadd.f32 %v529, %v631
        %v664 = vadd.f32 %v530, %v632
        %v665 = vadd.f32 %v531, %v633
        %v666 = vadd.f32 %v532, %v634
        %v667 = vadd.f32 %v533, %v635
        %v668 = vadd.f32 %v534, %v636
        %v669 = vadd.f32 %v535, %v637
        %v670 = vadd.f32 %v536, %v638
        %v671 = vadd.f32 %v537, %v639
        %v672 = vadd.f32 %v538, %v640
        %v673 = vadd.f32 %v539, %v641
        %v674 = vadd.f32 %v540, %v642
        %v675 = vadd.f32 %v541, %v643
        %v676 = vadd.f32 %v542, %v644
        %v677 = vadd.f32 %v543, %v645
        %v678 = vadd.f32 %v544, %v646
        %v679 = vadd.f32 %v545, %v647
        %v680 = vadd.f32 %v546, %v648
        %v681 = vadd.f32 %v547, %v649
        %682 = vset.pattern.permute.xlu0 2
        %683 = vperm.xlu0 %682, %v412
        %v684 = vpop.permute.xlu0 %683
        %686 = vset.pattern.permute.xlu0 2
        %687 = vperm.xlu0 %686, %v413
        %v688 = vpop.permute.xlu0 %687
        %690 = vset.pattern.permute.xlu0 2
        %691 = vperm.xlu0 %690, %v414
        %v692 = vpop.permute.xlu0 %691
        %694 = vset.pattern.permute.xlu0 2
        %695 = vperm.xlu0 %694, %v415
        %v696 = vpop.permute.xlu0 %695
        %698 = vset.pattern.permute.xlu0 2
        %699 = vperm.xlu0 %698, %v416
        %v700 = vpop.permute.xlu0 %699
        %702 = vset.pattern.permute.xlu0 2
        %703 = vperm.xlu0 %702, %v417
        %v704 = vpop.permute.xlu0 %703
        %706 = vset.pattern.permute.xlu0 2
        %707 = vperm.xlu0 %706, %v418
        %v708 = vpop.permute.xlu0 %707
        %710 = vset.pattern.permute.xlu0 2
        %711 = vperm.xlu0 %710, %v419
        %v712 = vpop.permute.xlu0 %711
        %714 = vset.pattern.permute.xlu0 2
        %715 = vperm.xlu0 %714, %v420
        %v716 = vpop.permute.xlu0 %715
        %718 = vset.pattern.permute.xlu0 2
        %719 = vperm.xlu0 %718, %v421
        %v720 = vpop.permute.xlu0 %719
        %722 = vset.pattern.permute.xlu0 2
        %723 = vperm.xlu0 %722, %v422
        %v724 = vpop.permute.xlu0 %723
        %726 = vset.pattern.permute.xlu0 2
        %727 = vperm.xlu0 %726, %v423
        %v728 = vpop.permute.xlu0 %727
        %730 = vset.pattern.permute.xlu0 2
        %731 = vperm.xlu0 %730, %v424
        %v732 = vpop.permute.xlu0 %731
        %734 = vset.pattern.permute.xlu0 2
        %735 = vperm.xlu0 %734, %v425
        %v736 = vpop.permute.xlu0 %735
        %738 = vset.pattern.permute.xlu0 2
        %739 = vperm.xlu0 %738, %v426
        %v740 = vpop.permute.xlu0 %739
        %742 = vset.pattern.permute.xlu0 2
        %743 = vperm.xlu0 %742, %v427
        %v744 = vpop.permute.xlu0 %743
        %v746 = vperm.slane %v428, 2
        %v747 = vperm.slane %v428, 6
        %v750 = vperm.slane %v746, 2
        %v751 = vperm.slane %v747, 2
        %v752 = vmul.f32 %v684, %v750
        %v753 = vmul.f32 %v684, %v751
        %v754 = vmul.f32 %v688, %v750
        %v755 = vmul.f32 %v688, %v751
        %v756 = vmul.f32 %v692, %v750
        %v757 = vmul.f32 %v692, %v751
        %v758 = vmul.f32 %v696, %v750
        %v759 = vmul.f32 %v696, %v751
        %v760 = vmul.f32 %v700, %v750
        %v761 = vmul.f32 %v700, %v751
        %v762 = vmul.f32 %v704, %v750
        %v763 = vmul.f32 %v704, %v751
        %v764 = vmul.f32 %v708, %v750
        %v765 = vmul.f32 %v708, %v751
        %v766 = vmul.f32 %v712, %v750
        %v767 = vmul.f32 %v712, %v751
        %v768 = vmul.f32 %v716, %v750
        %v769 = vmul.f32 %v716, %v751
        %v770 = vmul.f32 %v720, %v750
        %v771 = vmul.f32 %v720, %v751
        %v772 = vmul.f32 %v724, %v750
        %v773 = vmul.f32 %v724, %v751
        %v774 = vmul.f32 %v728, %v750
        %v775 = vmul.f32 %v728, %v751
        %v776 = vmul.f32 %v732, %v750
        %v777 = vmul.f32 %v732, %v751
        %v778 = vmul.f32 %v736, %v750
        %v779 = vmul.f32 %v736, %v751
        %v780 = vmul.f32 %v740, %v750
        %v781 = vmul.f32 %v740, %v751
        %v782 = vmul.f32 %v744, %v750
        %v783 = vmul.f32 %v744, %v751
        %v784 = vadd.f32 %v650, %v752
        %v785 = vadd.f32 %v651, %v753
        %v786 = vadd.f32 %v652, %v754
        %v787 = vadd.f32 %v653, %v755
        %v788 = vadd.f32 %v654, %v756
        %v789 = vadd.f32 %v655, %v757
        %v790 = vadd.f32 %v656, %v758
        %v791 = vadd.f32 %v657, %v759
        %v792 = vadd.f32 %v658, %v760
        %v793 = vadd.f32 %v659, %v761
        %v794 = vadd.f32 %v660, %v762
        %v795 = vadd.f32 %v661, %v763
        %v796 = vadd.f32 %v662, %v764
        %v797 = vadd.f32 %v663, %v765
        %v798 = vadd.f32 %v664, %v766
        %v799 = vadd.f32 %v665, %v767
        %v800 = vadd.f32 %v666, %v768
        %v801 = vadd.f32 %v667, %v769
        %v802 = vadd.f32 %v668, %v770
        %v803 = vadd.f32 %v669, %v771
        %v804 = vadd.f32 %v670, %v772
        %v805 = vadd.f32 %v671, %v773
        %v806 = vadd.f32 %v672, %v774
        %v807 = vadd.f32 %v673, %v775
        %v808 = vadd.f32 %v674, %v776
        %v809 = vadd.f32 %v675, %v777
        %v810 = vadd.f32 %v676, %v778
        %v811 = vadd.f32 %v677, %v779
        %v812 = vadd.f32 %v678, %v780
        %v813 = vadd.f32 %v679, %v781
        %v814 = vadd.f32 %v680, %v782
        %v815 = vadd.f32 %v681, %v783
        %816 = vset.pattern.permute.xlu0 3
        %817 = vperm.xlu0 %816, %v412
        %v818 = vpop.permute.xlu0 %817
        %820 = vset.pattern.permute.xlu0 3
        %821 = vperm.xlu0 %820, %v413
        %v822 = vpop.permute.xlu0 %821
        %824 = vset.pattern.permute.xlu0 3
        %825 = vperm.xlu0 %824, %v414
        %v826 = vpop.permute.xlu0 %825
        %828 = vset.pattern.permute.xlu0 3
        %829 = vperm.xlu0 %828, %v415
        %v830 = vpop.permute.xlu0 %829
        %832 = vset.pattern.permute.xlu0 3
        %833 = vperm.xlu0 %832, %v416
        %v834 = vpop.permute.xlu0 %833
        %836 = vset.pattern.permute.xlu0 3
        %837 = vperm.xlu0 %836, %v417
        %v838 = vpop.permute.xlu0 %837
        %840 = vset.pattern.permute.xlu0 3
        %841 = vperm.xlu0 %840, %v418
        %v842 = vpop.permute.xlu0 %841
        %844 = vset.pattern.permute.xlu0 3
        %845 = vperm.xlu0 %844, %v419
        %v846 = vpop.permute.xlu0 %845
        %848 = vset.pattern.permute.xlu0 3
        %849 = vperm.xlu0 %848, %v420
        %v850 = vpop.permute.xlu0 %849
        %852 = vset.pattern.permute.xlu0 3
        %853 = vperm.xlu0 %852, %v421
        %v854 = vpop.permute.xlu0 %853
        %856 = vset.pattern.permute.xlu0 3
        %857 = vperm.xlu0 %856, %v422
        %v858 = vpop.permute.xlu0 %857
        %860 = vset.pattern.permute.xlu0 3
        %861 = vperm.xlu0 %860, %v423
        %v862 = vpop.permute.xlu0 %861
        %864 = vset.pattern.permute.xlu0 3
        %865 = vperm.xlu0 %864, %v424
        %v866 = vpop.permute.xlu0 %865
        %868 = vset.pattern.permute.xlu0 3
        %869 = vperm.xlu0 %868, %v425
        %v870 = vpop.permute.xlu0 %869
        %872 = vset.pattern.permute.xlu0 3
        %873 = vperm.xlu0 %872, %v426
        %v874 = vpop.permute.xlu0 %873
        %876 = vset.pattern.permute.xlu0 3
        %877 = vperm.xlu0 %876, %v427
        %v878 = vpop.permute.xlu0 %877
        %v880 = vperm.slane %v428, 3
        %v881 = vperm.slane %v428, 7
        %v884 = vperm.slane %v880, 3
        %v885 = vperm.slane %v881, 3
        %v886 = vmul.f32 %v818, %v884
        %v887 = vmul.f32 %v818, %v885
        %v888 = vmul.f32 %v822, %v884
        %v889 = vmul.f32 %v822, %v885
        %v890 = vmul.f32 %v826, %v884
        %v891 = vmul.f32 %v826, %v885
        %v892 = vmul.f32 %v830, %v884
        %v893 = vmul.f32 %v830, %v885
        %v894 = vmul.f32 %v834, %v884
        %v895 = vmul.f32 %v834, %v885
        %v896 = vmul.f32 %v838, %v884
        %v897 = vmul.f32 %v838, %v885
        %v898 = vmul.f32 %v842, %v884
        %v899 = vmul.f32 %v842, %v885
        %v900 = vmul.f32 %v846, %v884
        %v901 = vmul.f32 %v846, %v885
        %v902 = vmul.f32 %v850, %v884
        %v903 = vmul.f32 %v850, %v885
        %v904 = vmul.f32 %v854, %v884
        %v905 = vmul.f32 %v854, %v885
        %v906 = vmul.f32 %v858, %v884
        %v907 = vmul.f32 %v858, %v885
        %v908 = vmul.f32 %v862, %v884
        %v909 = vmul.f32 %v862, %v885
        %v910 = vmul.f32 %v866, %v884
        %v911 = vmul.f32 %v866, %v885
        %v912 = vmul.f32 %v870, %v884
        %v913 = vmul.f32 %v870, %v885
        %v914 = vmul.f32 %v874, %v884
        %v915 = vmul.f32 %v874, %v885
        %v916 = vmul.f32 %v878, %v884
        %v917 = vmul.f32 %v878, %v885
        %v918 = vadd.f32 %v784, %v886
        %v919 = vadd.f32 %v785, %v887
        %v920 = vadd.f32 %v786, %v888
        %v921 = vadd.f32 %v787, %v889
        %v922 = vadd.f32 %v788, %v890
        %v923 = vadd.f32 %v789, %v891
        %v924 = vadd.f32 %v790, %v892
        %v925 = vadd.f32 %v791, %v893
        %v926 = vadd.f32 %v792, %v894
        %v927 = vadd.f32 %v793, %v895
        %v928 = vadd.f32 %v794, %v896
        %v929 = vadd.f32 %v795, %v897
        %v930 = vadd.f32 %v796, %v898
        %v931 = vadd.f32 %v797, %v899
        %v932 = vadd.f32 %v798, %v900
        %v933 = vadd.f32 %v799, %v901
        %v934 = vadd.f32 %v800, %v902
        %v935 = vadd.f32 %v801, %v903
        %v936 = vadd.f32 %v802, %v904
        %v937 = vadd.f32 %v803, %v905
        %v938 = vadd.f32 %v804, %v906
        %v939 = vadd.f32 %v805, %v907
        %v940 = vadd.f32 %v806, %v908
        %v941 = vadd.f32 %v807, %v909
        %v942 = vadd.f32 %v808, %v910
        %v943 = vadd.f32 %v809, %v911
        %v944 = vadd.f32 %v810, %v912
        %v945 = vadd.f32 %v811, %v913
        %v946 = vadd.f32 %v812, %v914
        %v947 = vadd.f32 %v813, %v915
        %v948 = vadd.f32 %v814, %v916
        %v949 = vadd.f32 %v815, %v917
        %v950 = vld [vmem:[#allocation10] ss:$4 sm:$0x3]
        %s951 = scalar_lea.vmem [#allocation10], 1
        %v952 = vld [vmem:[%s951] ss:$4 sm:$0x3]
        %s953 = scalar_lea.vmem [#allocation10], 2
        %v954 = vld [vmem:[%s953] ss:$4 sm:$0x3]
        %v956 = vperm.slane %v950, 0
        %v957 = vperm.slane %v950, 1
        %v960 = vadd.f32 %v918, %v956
        %v961 = vadd.f32 %v919, %v957
        %v962 = vadd.f32 %v920, %v956
        %v963 = vadd.f32 %v921, %v957
        %v964 = vadd.f32 %v922, %v956
        %v965 = vadd.f32 %v923, %v957
        %v966 = vadd.f32 %v924, %v956
        %v967 = vadd.f32 %v925, %v957
        %v968 = vadd.f32 %v926, %v956
        %v969 = vadd.f32 %v927, %v957
        %v970 = vadd.f32 %v928, %v956
        %v971 = vadd.f32 %v929, %v957
        %v972 = vadd.f32 %v930, %v956
        %v973 = vadd.f32 %v931, %v957
        %v974 = vadd.f32 %v932, %v956
        %v975 = vadd.f32 %v933, %v957
        %v976 = vadd.f32 %v934, %v956
        %v977 = vadd.f32 %v935, %v957
        %v978 = vadd.f32 %v936, %v956
        %v979 = vadd.f32 %v937, %v957
        %v980 = vadd.f32 %v938, %v956
        %v981 = vadd.f32 %v939, %v957
        %v982 = vadd.f32 %v940, %v956
        %v983 = vadd.f32 %v941, %v957
        %v984 = vadd.f32 %v942, %v956
        %v985 = vadd.f32 %v943, %v957
        %v986 = vadd.f32 %v944, %v956
        %v987 = vadd.f32 %v945, %v957
        %v988 = vadd.f32 %v946, %v956
        %v989 = vadd.f32 %v947, %v957
        %v990 = vadd.f32 %v948, %v956
        %v991 = vadd.f32 %v949, %v957
        %v992 = vadd.f32 %v960, %v962
        %v993 = vadd.f32 %v992, %v964
        %v994 = vadd.f32 %v993, %v966
        %v995 = vadd.f32 %v994, %v968
        %v996 = vadd.f32 %v995, %v970
        %v997 = vadd.f32 %v996, %v972
        %v998 = vadd.f32 %v997, %v974
        %v999 = vadd.f32 %v998, %v976
        %v1000 = vadd.f32 %v999, %v978
        %v1001 = vadd.f32 %v1000, %v980
        %v1002 = vadd.f32 %v1001, %v982
        %v1003 = vadd.f32 %v1002, %v984
        %v1004 = vadd.f32 %v1003, %v986
        %v1005 = vadd.f32 %v1004, %v988
        %v1006 = vadd.f32 %v1005, %v990
        %v1007 = vrot.slane %v1006, 4
        %v1008 = vadd.f32 %v1006, %v1007
        %v1009 = vrot.slane %v1008, 2
        %v1010 = vadd.f32 %v1008, %v1009
        %v1011 = vrot.slane %v1010, 1
        %v1012 = vadd.f32 %v1010, %v1011
        %v1013 = vadd.f32 %v961, %v963
        %v1014 = vadd.f32 %v1013, %v965
        %v1015 = vadd.f32 %v1014, %v967
        %v1016 = vadd.f32 %v1015, %v969
        %v1017 = vadd.f32 %v1016, %v971
        %v1018 = vadd.f32 %v1017, %v973
        %v1019 = vadd.f32 %v1018, %v975
        %v1020 = vadd.f32 %v1019, %v977
        %v1021 = vadd.f32 %v1020, %v979
        %v1022 = vadd.f32 %v1021, %v981
        %v1023 = vadd.f32 %v1022, %v983
        %v1024 = vadd.f32 %v1023, %v985
        %v1025 = vadd.f32 %v1024, %v987
        %v1026 = vadd.f32 %v1025, %v989
        %v1027 = vadd.f32 %v1026, %v991
        %v1028 = vrot.slane %v1027, 4
        %v1029 = vadd.f32 %v1027, %v1028
        %v1030 = vrot.slane %v1029, 2
        %v1031 = vadd.f32 %v1029, %v1030
        %v1032 = vrot.slane %v1031, 1
        %v1033 = vadd.f32 %v1031, %v1032
        %v1034 = vrcp.pop 128.0
        %v1035 = vmul.f32 128.0, %v1034
        %v1036 = vsub.f32 1.0, %v1035
        %v1037 = vmul.f32 %v1034, %v1036
        %v1038 = vadd.f32 %v1034, %v1037
        %vm1039 = vweird.f32 %v1034
        %v1040 = vsel %vm1039, %v1034, %v1038
        %v1041 = vmul.f32 %v1012, %v1040
        %v1042 = vmul.f32 %v1033, %v1040
        %v1043 = vmul.f32 %v960, %v960
        %v1044 = vmul.f32 %v961, %v961
        %v1045 = vmul.f32 %v962, %v962
        %v1046 = vmul.f32 %v963, %v963
        %v1047 = vmul.f32 %v964, %v964
        %v1048 = vmul.f32 %v965, %v965
        %v1049 = vmul.f32 %v966, %v966
        %v1050 = vmul.f32 %v967, %v967
        %v1051 = vmul.f32 %v968, %v968
        %v1052 = vmul.f32 %v969, %v969
        %v1053 = vmul.f32 %v970, %v970
        %v1054 = vmul.f32 %v971, %v971
        %v1055 = vmul.f32 %v972, %v972
        %v1056 = vmul.f32 %v973, %v973
        %v1057 = vmul.f32 %v974, %v974
        %v1058 = vmul.f32 %v975, %v975
        %v1059 = vmul.f32 %v976, %v976
        %v1060 = vmul.f32 %v977, %v977
        %v1061 = vmul.f32 %v978, %v978
        %v1062 = vmul.f32 %v979, %v979
        %v1063 = vmul.f32 %v980, %v980
        %v1064 = vmul.f32 %v981, %v981
        %v1065 = vmul.f32 %v982, %v982
        %v1066 = vmul.f32 %v983, %v983
        %v1067 = vmul.f32 %v984, %v984
        %v1068 = vmul.f32 %v985, %v985
        %v1069 = vmul.f32 %v986, %v986
        %v1070 = vmul.f32 %v987, %v987
        %v1071 = vmul.f32 %v988, %v988
        %v1072 = vmul.f32 %v989, %v989
        %v1073 = vmul.f32 %v990, %v990
        %v1074 = vmul.f32 %v991, %v991
        %v1075 = vadd.f32 %v1043, %v1045
        %v1076 = vadd.f32 %v1075, %v1047
        %v1077 = vadd.f32 %v1076, %v1049
        %v1078 = vadd.f32 %v1077, %v1051
        %v1079 = vadd.f32 %v1078, %v1053
        %v1080 = vadd.f32 %v1079, %v1055
        %v1081 = vadd.f32 %v1080, %v1057
        %v1082 = vadd.f32 %v1081, %v1059
        %v1083 = vadd.f32 %v1082, %v1061
        %v1084 = vadd.f32 %v1083, %v1063
        %v1085 = vadd.f32 %v1084, %v1065
        %v1086 = vadd.f32 %v1085, %v1067
        %v1087 = vadd.f32 %v1086, %v1069
        %v1088 = vadd.f32 %v1087, %v1071
        %v1089 = vadd.f32 %v1088, %v1073
        %v1090 = vrot.slane %v1089, 4
        %v1091 = vadd.f32 %v1089, %v1090
        %v1092 = vrot.slane %v1091, 2
        %v1093 = vadd.f32 %v1091, %v1092
        %v1094 = vrot.slane %v1093, 1
        %v1095 = vadd.f32 %v1093, %v1094
        %v1096 = vadd.f32 %v1044, %v1046
        %v1097 = vadd.f32 %v1096, %v1048
        %v1098 = vadd.f32 %v1097, %v1050
        %v1099 = vadd.f32 %v1098, %v1052
        %v1100 = vadd.f32 %v1099, %v1054
        %v1101 = vadd.f32 %v1100, %v1056
        %v1102 = vadd.f32 %v1101, %v1058
        %v1103 = vadd.f32 %v1102, %v1060
        %v1104 = vadd.f32 %v1103, %v1062
        %v1105 = vadd.f32 %v1104, %v1064
        %v1106 = vadd.f32 %v1105, %v1066
        %v1107 = vadd.f32 %v1106, %v1068
        %v1108 = vadd.f32 %v1107, %v1070
        %v1109 = vadd.f32 %v1108, %v1072
        %v1110 = vadd.f32 %v1109, %v1074
        %v1111 = vrot.slane %v1110, 4
        %v1112 = vadd.f32 %v1110, %v1111
        %v1113 = vrot.slane %v1112, 2
        %v1114 = vadd.f32 %v1112, %v1113
        %v1115 = vrot.slane %v1114, 1
        %v1116 = vadd.f32 %v1114, %v1115
        %v1117 = vmul.f32 %v1095, %v1040
        %v1118 = vmul.f32 %v1116, %v1040
        %v1119 = vmul.f32 %v1041, %v1041
        %v1120 = vmul.f32 %v1042, %v1042
        %v1121 = vsub.f32 %v1117, %v1119
        %v1122 = vsub.f32 %v1118, %v1120
        %v1123 = vadd.f32 %v1121, 1e-05
        %v1124 = vadd.f32 %v1122, 1e-05
        %v1125 = vrsqrt.pop %v1123
        %v1126 = vmul.f32 %v1125, %v1123
        %v1127 = vmul.f32 %v1126, %v1125
        %v1128 = vmul.f32 0.5, %v1127
        %v1129 = vsub.f32 1.5, %v1128
        %v1130 = vmul.f32 %v1125, %v1129
        %vm1131 = vweird.f32 %v1123
        %vm1132 = vweird.f32 %v1125
        %vm1133 = vmor %vm1131, %vm1132
        %v1134 = vsel %vm1133, %v1125, %v1130
        %v1135 = vrsqrt.pop %v1124
        %v1136 = vmul.f32 %v1135, %v1124
        %v1137 = vmul.f32 %v1136, %v1135
        %v1138 = vmul.f32 0.5, %v1137
        %v1139 = vsub.f32 1.5, %v1138
        %v1140 = vmul.f32 %v1135, %v1139
        %vm1141 = vweird.f32 %v1124
        %vm1142 = vweird.f32 %v1135
        %vm1143 = vmor %vm1141, %vm1142
        %v1144 = vsel %vm1143, %v1135, %v1140
        %v1147 = vrot.slane %v1144, 7
        %vm1148 = vcmask 1040384
        %v1149 = vsel %vm1148, %v1134, %v1147
        %v1151 = vmul.f32 %v952, %v1149
        %v1153 = vperm.slane %v1151, 0
        %v1154 = vperm.slane %v1151, 1
        %v1157 = vmul.f32 %v1041, %v1153
        %v1158 = vmul.f32 %v1042, %v1154
        %v1161 = vrot.slane %v1158, 7
        %v1162 = vsel %vm1148, %v1157, %v1161
        %v1164 = vsub.f32 %v954, %v1162
        %v1165 = vmul.f32 %v960, %v1153
        %v1166 = vmul.f32 %v961, %v1154
        %v1167 = vmul.f32 %v962, %v1153
        %v1168 = vmul.f32 %v963, %v1154
        %v1169 = vmul.f32 %v964, %v1153
        %v1170 = vmul.f32 %v965, %v1154
        %v1171 = vmul.f32 %v966, %v1153
        %v1172 = vmul.f32 %v967, %v1154
        %v1173 = vmul.f32 %v968, %v1153
        %v1174 = vmul.f32 %v969, %v1154
        %v1175 = vmul.f32 %v970, %v1153
        %v1176 = vmul.f32 %v971, %v1154
        %v1177 = vmul.f32 %v972, %v1153
        %v1178 = vmul.f32 %v973, %v1154
        %v1179 = vmul.f32 %v974, %v1153
        %v1180 = vmul.f32 %v975, %v1154
        %v1181 = vmul.f32 %v976, %v1153
        %v1182 = vmul.f32 %v977, %v1154
        %v1183 = vmul.f32 %v978, %v1153
        %v1184 = vmul.f32 %v979, %v1154
        %v1185 = vmul.f32 %v980, %v1153
        %v1186 = vmul.f32 %v981, %v1154
        %v1187 = vmul.f32 %v982, %v1153
        %v1188 = vmul.f32 %v983, %v1154
        %v1189 = vmul.f32 %v984, %v1153
        %v1190 = vmul.f32 %v985, %v1154
        %v1191 = vmul.f32 %v986, %v1153
        %v1192 = vmul.f32 %v987, %v1154
        %v1193 = vmul.f32 %v988, %v1153
        %v1194 = vmul.f32 %v989, %v1154
        %v1195 = vmul.f32 %v990, %v1153
        %v1196 = vmul.f32 %v991, %v1154
        %v1198 = vperm.slane %v1164, 0
        %v1199 = vperm.slane %v1164, 1
        %v1202 = vadd.f32 %v1165, %v1198
        %v1203 = vadd.f32 %v1166, %v1199
        %v1204 = vadd.f32 %v1167, %v1198
        %v1205 = vadd.f32 %v1168, %v1199
        %v1206 = vadd.f32 %v1169, %v1198
        %v1207 = vadd.f32 %v1170, %v1199
        %v1208 = vadd.f32 %v1171, %v1198
        %v1209 = vadd.f32 %v1172, %v1199
        %v1210 = vadd.f32 %v1173, %v1198
        %v1211 = vadd.f32 %v1174, %v1199
        %v1212 = vadd.f32 %v1175, %v1198
        %v1213 = vadd.f32 %v1176, %v1199
        %v1214 = vadd.f32 %v1177, %v1198
        %v1215 = vadd.f32 %v1178, %v1199
        %v1216 = vadd.f32 %v1179, %v1198
        %v1217 = vadd.f32 %v1180, %v1199
        %v1218 = vadd.f32 %v1181, %v1198
        %v1219 = vadd.f32 %v1182, %v1199
        %v1220 = vadd.f32 %v1183, %v1198
        %v1221 = vadd.f32 %v1184, %v1199
        %v1222 = vadd.f32 %v1185, %v1198
        %v1223 = vadd.f32 %v1186, %v1199
        %v1224 = vadd.f32 %v1187, %v1198
        %v1225 = vadd.f32 %v1188, %v1199
        %v1226 = vadd.f32 %v1189, %v1198
        %v1227 = vadd.f32 %v1190, %v1199
        %v1228 = vadd.f32 %v1191, %v1198
        %v1229 = vadd.f32 %v1192, %v1199
        %v1230 = vadd.f32 %v1193, %v1198
        %v1231 = vadd.f32 %v1194, %v1199
        %v1232 = vadd.f32 %v1195, %v1198
        %v1233 = vadd.f32 %v1196, %v1199
        %v1234 = vmax.f32 %v1202, 0.0
        %v1235 = vmax.f32 %v1203, 0.0
        %v1236 = vmax.f32 %v1204, 0.0
        %v1237 = vmax.f32 %v1205, 0.0
        %v1238 = vmax.f32 %v1206, 0.0
        %v1239 = vmax.f32 %v1207, 0.0
        %v1240 = vmax.f32 %v1208, 0.0
        %v1241 = vmax.f32 %v1209, 0.0
        %v1242 = vmax.f32 %v1210, 0.0
        %v1243 = vmax.f32 %v1211, 0.0
        %v1244 = vmax.f32 %v1212, 0.0
        %v1245 = vmax.f32 %v1213, 0.0
        %v1246 = vmax.f32 %v1214, 0.0
        %v1247 = vmax.f32 %v1215, 0.0
        %v1248 = vmax.f32 %v1216, 0.0
        %v1249 = vmax.f32 %v1217, 0.0
        %v1250 = vmax.f32 %v1218, 0.0
        %v1251 = vmax.f32 %v1219, 0.0
        %v1252 = vmax.f32 %v1220, 0.0
        %v1253 = vmax.f32 %v1221, 0.0
        %v1254 = vmax.f32 %v1222, 0.0
        %v1255 = vmax.f32 %v1223, 0.0
        %v1256 = vmax.f32 %v1224, 0.0
        %v1257 = vmax.f32 %v1225, 0.0
        %v1258 = vmax.f32 %v1226, 0.0
        %v1259 = vmax.f32 %v1227, 0.0
        %v1260 = vmax.f32 %v1228, 0.0
        %v1261 = vmax.f32 %v1229, 0.0
        %v1262 = vmax.f32 %v1230, 0.0
        %v1263 = vmax.f32 %v1231, 0.0
        %v1264 = vmax.f32 %v1232, 0.0
        %v1265 = vmax.f32 %v1233, 0.0
        %v1266 = vld [vmem:[#allocation5] sm:$0xff]
        %v1267 = vld [vmem:[#allocation5 + $0x8] sm:$0xff]
        %v1268 = vld [vmem:[#allocation5 + $0x10] sm:$0xff]
        %v1269 = vld [vmem:[#allocation5 + $0x18] sm:$0xff]
        %v1270 = vld [vmem:[#allocation5 + $0x20] sm:$0xff]
        %v1271 = vld [vmem:[#allocation5 + $0x28] sm:$0xff]
        %v1272 = vld [vmem:[#allocation5 + $0x30] sm:$0xff]
        %v1273 = vld [vmem:[#allocation5 + $0x38] sm:$0xff]
        %v1274 = vld [vmem:[#allocation5 + $0x40] sm:$0xff]
        %v1275 = vld [vmem:[#allocation5 + $0x48] sm:$0xff]
        %v1276 = vld [vmem:[#allocation5 + $0x50] sm:$0xff]
        %v1277 = vld [vmem:[#allocation5 + $0x58] sm:$0xff]
        %v1278 = vld [vmem:[#allocation5 + $0x60] sm:$0xff]
        %v1279 = vld [vmem:[#allocation5 + $0x68] sm:$0xff]
        %v1280 = vld [vmem:[#allocation5 + $0x70] sm:$0xff]
        %v1281 = vld [vmem:[#allocation5 + $0x78] sm:$0xff]
        %v1282 = vld [vmem:[#allocation5 + $0x80] sm:$0xff]
        %v1283 = vld [vmem:[#allocation5 + $0x88] sm:$0xff]
        %v1284 = vld [vmem:[#allocation5 + $0x90] sm:$0xff]
        %v1285 = vld [vmem:[#allocation5 + $0x98] sm:$0xff]
        %v1286 = vld [vmem:[#allocation5 + $0xa0] sm:$0xff]
        %v1287 = vld [vmem:[#allocation5 + $0xa8] sm:$0xff]
        %v1288 = vld [vmem:[#allocation5 + $0xb0] sm:$0xff]
        %v1289 = vld [vmem:[#allocation5 + $0xb8] sm:$0xff]
        %v1290 = vld [vmem:[#allocation5 + $0xc0] sm:$0xff]
        %v1291 = vld [vmem:[#allocation5 + $0xc8] sm:$0xff]
        %v1292 = vld [vmem:[#allocation5 + $0xd0] sm:$0xff]
        %v1293 = vld [vmem:[#allocation5 + $0xd8] sm:$0xff]
        %v1294 = vld [vmem:[#allocation5 + $0xe0] sm:$0xff]
        %v1295 = vld [vmem:[#allocation5 + $0xe8] sm:$0xff]
        %v1296 = vld [vmem:[#allocation5 + $0xf0] sm:$0xff]
        %v1297 = vld [vmem:[#allocation5 + $0xf8] sm:$0xff]
        %v1298 = vld [vmem:[#allocation5 + $0x100] sm:$0xff]
        %v1299 = vld [vmem:[#allocation5 + $0x108] sm:$0xff]
        %v1300 = vld [vmem:[#allocation5 + $0x110] sm:$0xff]
        %v1301 = vld [vmem:[#allocation5 + $0x118] sm:$0xff]
        %v1302 = vld [vmem:[#allocation5 + $0x120] sm:$0xff]
        %v1303 = vld [vmem:[#allocation5 + $0x128] sm:$0xff]
        %v1304 = vld [vmem:[#allocation5 + $0x130] sm:$0xff]
        %v1305 = vld [vmem:[#allocation5 + $0x138] sm:$0xff]
        %v1306 = vld [vmem:[#allocation5 + $0x140] sm:$0xff]
        %v1307 = vld [vmem:[#allocation5 + $0x148] sm:$0xff]
        %v1308 = vld [vmem:[#allocation5 + $0x150] sm:$0xff]
        %v1309 = vld [vmem:[#allocation5 + $0x158] sm:$0xff]
        %v1310 = vld [vmem:[#allocation5 + $0x160] sm:$0xff]
        %v1311 = vld [vmem:[#allocation5 + $0x168] sm:$0xff]
        %v1312 = vld [vmem:[#allocation5 + $0x170] sm:$0xff]
        %v1313 = vld [vmem:[#allocation5 + $0x178] sm:$0xff]
        %v1314 = vld [vmem:[#allocation5 + $0x180] sm:$0xff]
        %v1315 = vld [vmem:[#allocation5 + $0x188] sm:$0xff]
        %v1316 = vld [vmem:[#allocation5 + $0x190] sm:$0xff]
        %v1317 = vld [vmem:[#allocation5 + $0x198] sm:$0xff]
        %v1318 = vld [vmem:[#allocation5 + $0x1a0] sm:$0xff]
        %v1319 = vld [vmem:[#allocation5 + $0x1a8] sm:$0xff]
        %v1320 = vld [vmem:[#allocation5 + $0x1b0] sm:$0xff]
        %v1321 = vld [vmem:[#allocation5 + $0x1b8] sm:$0xff]
        %v1322 = vld [vmem:[#allocation5 + $0x1c0] sm:$0xff]
        %v1323 = vld [vmem:[#allocation5 + $0x1c8] sm:$0xff]
        %v1324 = vld [vmem:[#allocation5 + $0x1d0] sm:$0xff]
        %v1325 = vld [vmem:[#allocation5 + $0x1d8] sm:$0xff]
        %v1326 = vld [vmem:[#allocation5 + $0x1e0] sm:$0xff]
        %v1327 = vld [vmem:[#allocation5 + $0x1e8] sm:$0xff]
        %v1328 = vld [vmem:[#allocation5 + $0x1f0] sm:$0xff]
        %v1329 = vld [vmem:[#allocation5 + $0x1f8] sm:$0xff]
        %v1330 = vld [vmem:[#allocation5 + $0x200] sm:$0xff]
        %v1331 = vld [vmem:[#allocation5 + $0x208] sm:$0xff]
        %v1332 = vld [vmem:[#allocation5 + $0x210] sm:$0xff]
        %v1333 = vld [vmem:[#allocation5 + $0x218] sm:$0xff]
        %v1334 = vld [vmem:[#allocation5 + $0x220] sm:$0xff]
        %v1335 = vld [vmem:[#allocation5 + $0x228] sm:$0xff]
        %v1336 = vld [vmem:[#allocation5 + $0x230] sm:$0xff]
        %v1337 = vld [vmem:[#allocation5 + $0x238] sm:$0xff]
        %v1338 = vld [vmem:[#allocation5 + $0x240] sm:$0xff]
        %v1339 = vld [vmem:[#allocation5 + $0x248] sm:$0xff]
        %v1340 = vld [vmem:[#allocation5 + $0x250] sm:$0xff]
        %v1341 = vld [vmem:[#allocation5 + $0x258] sm:$0xff]
        %v1342 = vld [vmem:[#allocation5 + $0x260] sm:$0xff]
        %v1343 = vld [vmem:[#allocation5 + $0x268] sm:$0xff]
        %v1344 = vld [vmem:[#allocation5 + $0x270] sm:$0xff]
        %v1345 = vld [vmem:[#allocation5 + $0x278] sm:$0xff]
        %v1346 = vld [vmem:[#allocation5 + $0x280] sm:$0xff]
        %v1347 = vld [vmem:[#allocation5 + $0x288] sm:$0xff]
        %v1348 = vld [vmem:[#allocation5 + $0x290] sm:$0xff]
        %v1349 = vld [vmem:[#allocation5 + $0x298] sm:$0xff]
        %v1350 = vld [vmem:[#allocation5 + $0x2a0] sm:$0xff]
        %v1351 = vld [vmem:[#allocation5 + $0x2a8] sm:$0xff]
        %v1352 = vld [vmem:[#allocation5 + $0x2b0] sm:$0xff]
        %v1353 = vld [vmem:[#allocation5 + $0x2b8] sm:$0xff]
        %v1354 = vld [vmem:[#allocation5 + $0x2c0] sm:$0xff]
        %v1355 = vld [vmem:[#allocation5 + $0x2c8] sm:$0xff]
        %v1356 = vld [vmem:[#allocation5 + $0x2d0] sm:$0xff]
        %v1357 = vld [vmem:[#allocation5 + $0x2d8] sm:$0xff]
        %v1358 = vld [vmem:[#allocation5 + $0x2e0] sm:$0xff]
        %v1359 = vld [vmem:[#allocation5 + $0x2e8] sm:$0xff]
        %v1360 = vld [vmem:[#allocation5 + $0x2f0] sm:$0xff]
        %v1361 = vld [vmem:[#allocation5 + $0x2f8] sm:$0xff]
        %v1362 = vld [vmem:[#allocation5 + $0x300] sm:$0xff]
        %v1363 = vld [vmem:[#allocation5 + $0x308] sm:$0xff]
        %v1364 = vld [vmem:[#allocation5 + $0x310] sm:$0xff]
        %v1365 = vld [vmem:[#allocation5 + $0x318] sm:$0xff]
        %v1366 = vld [vmem:[#allocation5 + $0x320] sm:$0xff]
        %v1367 = vld [vmem:[#allocation5 + $0x328] sm:$0xff]
        %v1368 = vld [vmem:[#allocation5 + $0x330] sm:$0xff]
        %v1369 = vld [vmem:[#allocation5 + $0x338] sm:$0xff]
        %v1370 = vld [vmem:[#allocation5 + $0x340] sm:$0xff]
        %v1371 = vld [vmem:[#allocation5 + $0x348] sm:$0xff]
        %v1372 = vld [vmem:[#allocation5 + $0x350] sm:$0xff]
        %v1373 = vld [vmem:[#allocation5 + $0x358] sm:$0xff]
        %v1374 = vld [vmem:[#allocation5 + $0x360] sm:$0xff]
        %v1375 = vld [vmem:[#allocation5 + $0x368] sm:$0xff]
        %v1376 = vld [vmem:[#allocation5 + $0x370] sm:$0xff]
        %v1377 = vld [vmem:[#allocation5 + $0x378] sm:$0xff]
        %v1378 = vld [vmem:[#allocation5 + $0x380] sm:$0xff]
        %v1379 = vld [vmem:[#allocation5 + $0x388] sm:$0xff]
        %v1380 = vld [vmem:[#allocation5 + $0x390] sm:$0xff]
        %v1381 = vld [vmem:[#allocation5 + $0x398] sm:$0xff]
        %v1382 = vld [vmem:[#allocation5 + $0x3a0] sm:$0xff]
        %v1383 = vld [vmem:[#allocation5 + $0x3a8] sm:$0xff]
        %v1384 = vld [vmem:[#allocation5 + $0x3b0] sm:$0xff]
        %v1385 = vld [vmem:[#allocation5 + $0x3b8] sm:$0xff]
        %v1386 = vld [vmem:[#allocation5 + $0x3c0] sm:$0xff]
        %v1387 = vld [vmem:[#allocation5 + $0x3c8] sm:$0xff]
        %v1388 = vld [vmem:[#allocation5 + $0x3d0] sm:$0xff]
        %v1389 = vld [vmem:[#allocation5 + $0x3d8] sm:$0xff]
        %v1390 = vld [vmem:[#allocation5 + $0x3e0] sm:$0xff]
        %v1391 = vld [vmem:[#allocation5 + $0x3e8] sm:$0xff]
        %v1392 = vld [vmem:[#allocation5 + $0x3f0] sm:$0xff]
        %v1393 = vld [vmem:[#allocation5 + $0x3f8] sm:$0xff]
        %v1394 = vpack.c.bf16 %v1236, %v1234
        %v1395 = vpack.c.bf16 %v1237, %v1235
        %v1396 = vpack.c.bf16 %v1240, %v1238
        %v1397 = vpack.c.bf16 %v1241, %v1239
        %v1398 = vpack.c.bf16 %v1244, %v1242
        %v1399 = vpack.c.bf16 %v1245, %v1243
        %v1400 = vpack.c.bf16 %v1248, %v1246
        %v1401 = vpack.c.bf16 %v1249, %v1247
        %v1402 = vpack.c.bf16 %v1252, %v1250
        %v1403 = vpack.c.bf16 %v1253, %v1251
        %v1404 = vpack.c.bf16 %v1256, %v1254
        %v1405 = vpack.c.bf16 %v1257, %v1255
        %v1406 = vpack.c.bf16 %v1260, %v1258
        %v1407 = vpack.c.bf16 %v1261, %v1259
        %v1408 = vpack.c.bf16 %v1264, %v1262
        %v1409 = vpack.c.bf16 %v1265, %v1263
        %v1410 = vld [vmem:[#allocation11] ss:$8 sm:$0xf]
        %v1411 = vld [vmem:[#allocation11] ss:$8 sm:$0xf0]
        %v1412 = vor.u32 %v1410, %v1411
        %s1413 = scalar_lea.vmem [#allocation11], 1
        %v1414 = vld [vmem:[%s1413] ss:$8 sm:$0xf]
        %v1415 = vld [vmem:[%s1413] ss:$8 sm:$0xf0]
        %v1416 = vor.u32 %v1414, %v1415
        %s1417 = scalar_lea.vmem [#allocation11], 2
        %v1418 = vld [vmem:[%s1417] ss:$8 sm:$0xf]
        %v1419 = vld [vmem:[%s1417] ss:$8 sm:$0xf0]
        %v1420 = vor.u32 %v1418, %v1419
        %v1422 = vperm.slane %v1412, 0
        %v1423 = vperm.slane %v1412, 1
        %v1424 = vperm.slane %v1412, 2
        %v1425 = vperm.slane %v1412, 3
        %v1426 = vperm.slane %v1412, 4
        %v1427 = vperm.slane %v1412, 5
        %v1428 = vperm.slane %v1412, 6
        %v1429 = vperm.slane %v1412, 7
        %v1566 = vunpack.c.l.b16 %v1266
        %v1567 = vunpack.c.h.b16 %v1266
        %v1568 = vunpack.c.l.b16 %v1267
        %v1569 = vunpack.c.h.b16 %v1267
        %v1570 = vunpack.c.l.b16 %v1268
        %v1571 = vunpack.c.h.b16 %v1268
        %v1572 = vunpack.c.l.b16 %v1269
        %v1573 = vunpack.c.h.b16 %v1269
        %v1574 = vunpack.c.l.b16 %v1270
        %v1575 = vunpack.c.h.b16 %v1270
        %v1576 = vunpack.c.l.b16 %v1271
        %v1577 = vunpack.c.h.b16 %v1271
        %v1578 = vunpack.c.l.b16 %v1272
        %v1579 = vunpack.c.h.b16 %v1272
        %v1580 = vunpack.c.l.b16 %v1273
        %v1581 = vunpack.c.h.b16 %v1273
        %v1582 = vunpack.c.l.b16 %v1274
        %v1583 = vunpack.c.h.b16 %v1274
        %v1584 = vunpack.c.l.b16 %v1275
        %v1585 = vunpack.c.h.b16 %v1275
        %v1586 = vunpack.c.l.b16 %v1276
        %v1587 = vunpack.c.h.b16 %v1276
        %v1588 = vunpack.c.l.b16 %v1277
        %v1589 = vunpack.c.h.b16 %v1277
        %v1590 = vunpack.c.l.b16 %v1278
        %v1591 = vunpack.c.h.b16 %v1278
        %v1592 = vunpack.c.l.b16 %v1279
        %v1593 = vunpack.c.h.b16 %v1279
        %v1594 = vunpack.c.l.b16 %v1280
        %v1595 = vunpack.c.h.b16 %v1280
        %v1596 = vunpack.c.l.b16 %v1281
        %v1597 = vunpack.c.h.b16 %v1281
        %v1598 = vunpack.c.l.b16 %v1282
        %v1599 = vunpack.c.h.b16 %v1282
        %v1600 = vunpack.c.l.b16 %v1283
        %v1601 = vunpack.c.h.b16 %v1283
        %v1602 = vunpack.c.l.b16 %v1284
        %v1603 = vunpack.c.h.b16 %v1284
        %v1604 = vunpack.c.l.b16 %v1285
        %v1605 = vunpack.c.h.b16 %v1285
        %v1606 = vunpack.c.l.b16 %v1286
        %v1607 = vunpack.c.h.b16 %v1286
        %v1608 = vunpack.c.l.b16 %v1287
        %v1609 = vunpack.c.h.b16 %v1287
        %v1610 = vunpack.c.l.b16 %v1288
        %v1611 = vunpack.c.h.b16 %v1288
        %v1612 = vunpack.c.l.b16 %v1289
        %v1613 = vunpack.c.h.b16 %v1289
        %v1614 = vunpack.c.l.b16 %v1290
        %v1615 = vunpack.c.h.b16 %v1290
        %v1616 = vunpack.c.l.b16 %v1291
        %v1617 = vunpack.c.h.b16 %v1291
        %v1618 = vunpack.c.l.b16 %v1292
        %v1619 = vunpack.c.h.b16 %v1292
        %v1620 = vunpack.c.l.b16 %v1293
        %v1621 = vunpack.c.h.b16 %v1293
        %v1622 = vunpack.c.l.b16 %v1294
        %v1623 = vunpack.c.h.b16 %v1294
        %v1624 = vunpack.c.l.b16 %v1295
        %v1625 = vunpack.c.h.b16 %v1295
        %v1626 = vunpack.c.l.b16 %v1296
        %v1627 = vunpack.c.h.b16 %v1296
        %v1628 = vunpack.c.l.b16 %v1297
        %v1629 = vunpack.c.h.b16 %v1297
        %v1630 = vunpack.c.l.b16 %v1298
        %v1631 = vunpack.c.h.b16 %v1298
        %v1632 = vunpack.c.l.b16 %v1299
        %v1633 = vunpack.c.h.b16 %v1299
        %v1634 = vunpack.c.l.b16 %v1300
        %v1635 = vunpack.c.h.b16 %v1300
        %v1636 = vunpack.c.l.b16 %v1301
        %v1637 = vunpack.c.h.b16 %v1301
        %v1638 = vunpack.c.l.b16 %v1302
        %v1639 = vunpack.c.h.b16 %v1302
        %v1640 = vunpack.c.l.b16 %v1303
        %v1641 = vunpack.c.h.b16 %v1303
        %v1642 = vunpack.c.l.b16 %v1304
        %v1643 = vunpack.c.h.b16 %v1304
        %v1644 = vunpack.c.l.b16 %v1305
        %v1645 = vunpack.c.h.b16 %v1305
        %v1646 = vunpack.c.l.b16 %v1306
        %v1647 = vunpack.c.h.b16 %v1306
        %v1648 = vunpack.c.l.b16 %v1307
        %v1649 = vunpack.c.h.b16 %v1307
        %v1650 = vunpack.c.l.b16 %v1308
        %v1651 = vunpack.c.h.b16 %v1308
        %v1652 = vunpack.c.l.b16 %v1309
        %v1653 = vunpack.c.h.b16 %v1309
        %v1654 = vunpack.c.l.b16 %v1310
        %v1655 = vunpack.c.h.b16 %v1310
        %v1656 = vunpack.c.l.b16 %v1311
        %v1657 = vunpack.c.h.b16 %v1311
        %v1658 = vunpack.c.l.b16 %v1312
        %v1659 = vunpack.c.h.b16 %v1312
        %v1660 = vunpack.c.l.b16 %v1313
        %v1661 = vunpack.c.h.b16 %v1313
        %v1662 = vunpack.c.l.b16 %v1314
        %v1663 = vunpack.c.h.b16 %v1314
        %v1664 = vunpack.c.l.b16 %v1315
        %v1665 = vunpack.c.h.b16 %v1315
        %v1666 = vunpack.c.l.b16 %v1316
        %v1667 = vunpack.c.h.b16 %v1316
        %v1668 = vunpack.c.l.b16 %v1317
        %v1669 = vunpack.c.h.b16 %v1317
        %v1670 = vunpack.c.l.b16 %v1318
        %v1671 = vunpack.c.h.b16 %v1318
        %v1672 = vunpack.c.l.b16 %v1319
        %v1673 = vunpack.c.h.b16 %v1319
        %v1674 = vunpack.c.l.b16 %v1320
        %v1675 = vunpack.c.h.b16 %v1320
        %v1676 = vunpack.c.l.b16 %v1321
        %v1677 = vunpack.c.h.b16 %v1321
        %v1678 = vunpack.c.l.b16 %v1322
        %v1679 = vunpack.c.h.b16 %v1322
        %v1680 = vunpack.c.l.b16 %v1323
        %v1681 = vunpack.c.h.b16 %v1323
        %v1682 = vunpack.c.l.b16 %v1324
        %v1683 = vunpack.c.h.b16 %v1324
        %v1684 = vunpack.c.l.b16 %v1325
        %v1685 = vunpack.c.h.b16 %v1325
        %v1686 = vunpack.c.l.b16 %v1326
        %v1687 = vunpack.c.h.b16 %v1326
        %v1688 = vunpack.c.l.b16 %v1327
        %v1689 = vunpack.c.h.b16 %v1327
        %v1690 = vunpack.c.l.b16 %v1328
        %v1691 = vunpack.c.h.b16 %v1328
        %v1692 = vunpack.c.l.b16 %v1329
        %v1693 = vunpack.c.h.b16 %v1329
        %v1694 = vunpack.c.l.b16 %v1330
        %v1695 = vunpack.c.h.b16 %v1330
        %v1696 = vunpack.c.l.b16 %v1331
        %v1697 = vunpack.c.h.b16 %v1331
        %v1698 = vunpack.c.l.b16 %v1332
        %v1699 = vunpack.c.h.b16 %v1332
        %v1700 = vunpack.c.l.b16 %v1333
        %v1701 = vunpack.c.h.b16 %v1333
        %v1702 = vunpack.c.l.b16 %v1334
        %v1703 = vunpack.c.h.b16 %v1334
        %v1704 = vunpack.c.l.b16 %v1335
        %v1705 = vunpack.c.h.b16 %v1335
        %v1706 = vunpack.c.l.b16 %v1336
        %v1707 = vunpack.c.h.b16 %v1336
        %v1708 = vunpack.c.l.b16 %v1337
        %v1709 = vunpack.c.h.b16 %v1337
        %v1710 = vunpack.c.l.b16 %v1338
        %v1711 = vunpack.c.h.b16 %v1338
        %v1712 = vunpack.c.l.b16 %v1339
        %v1713 = vunpack.c.h.b16 %v1339
        %v1714 = vunpack.c.l.b16 %v1340
        %v1715 = vunpack.c.h.b16 %v1340
        %v1716 = vunpack.c.l.b16 %v1341
        %v1717 = vunpack.c.h.b16 %v1341
        %v1718 = vunpack.c.l.b16 %v1342
        %v1719 = vunpack.c.h.b16 %v1342
        %v1720 = vunpack.c.l.b16 %v1343
        %v1721 = vunpack.c.h.b16 %v1343
        %v1722 = vunpack.c.l.b16 %v1344
        %v1723 = vunpack.c.h.b16 %v1344
        %v1724 = vunpack.c.l.b16 %v1345
        %v1725 = vunpack.c.h.b16 %v1345
        %v1726 = vunpack.c.l.b16 %v1346
        %v1727 = vunpack.c.h.b16 %v1346
        %v1728 = vunpack.c.l.b16 %v1347
        %v1729 = vunpack.c.h.b16 %v1347
        %v1730 = vunpack.c.l.b16 %v1348
        %v1731 = vunpack.c.h.b16 %v1348
        %v1732 = vunpack.c.l.b16 %v1349
        %v1733 = vunpack.c.h.b16 %v1349
        %v1734 = vunpack.c.l.b16 %v1350
        %v1735 = vunpack.c.h.b16 %v1350
        %v1736 = vunpack.c.l.b16 %v1351
        %v1737 = vunpack.c.h.b16 %v1351
        %v1738 = vunpack.c.l.b16 %v1352
        %v1739 = vunpack.c.h.b16 %v1352
        %v1740 = vunpack.c.l.b16 %v1353
        %v1741 = vunpack.c.h.b16 %v1353
        %v1742 = vunpack.c.l.b16 %v1354
        %v1743 = vunpack.c.h.b16 %v1354
        %v1744 = vunpack.c.l.b16 %v1355
        %v1745 = vunpack.c.h.b16 %v1355
        %v1746 = vunpack.c.l.b16 %v1356
        %v1747 = vunpack.c.h.b16 %v1356
        %v1748 = vunpack.c.l.b16 %v1357
        %v1749 = vunpack.c.h.b16 %v1357
        %v1750 = vunpack.c.l.b16 %v1358
        %v1751 = vunpack.c.h.b16 %v1358
        %v1752 = vunpack.c.l.b16 %v1359
        %v1753 = vunpack.c.h.b16 %v1359
        %v1754 = vunpack.c.l.b16 %v1360
        %v1755 = vunpack.c.h.b16 %v1360
        %v1756 = vunpack.c.l.b16 %v1361
        %v1757 = vunpack.c.h.b16 %v1361
        %v1758 = vunpack.c.l.b16 %v1362
        %v1759 = vunpack.c.h.b16 %v1362
        %v1760 = vunpack.c.l.b16 %v1363
        %v1761 = vunpack.c.h.b16 %v1363
        %v1762 = vunpack.c.l.b16 %v1364
        %v1763 = vunpack.c.h.b16 %v1364
        %v1764 = vunpack.c.l.b16 %v1365
        %v1765 = vunpack.c.h.b16 %v1365
        %v1766 = vunpack.c.l.b16 %v1366
        %v1767 = vunpack.c.h.b16 %v1366
        %v1768 = vunpack.c.l.b16 %v1367
        %v1769 = vunpack.c.h.b16 %v1367
        %v1770 = vunpack.c.l.b16 %v1368
        %v1771 = vunpack.c.h.b16 %v1368
        %v1772 = vunpack.c.l.b16 %v1369
        %v1773 = vunpack.c.h.b16 %v1369
        %v1774 = vunpack.c.l.b16 %v1370
        %v1775 = vunpack.c.h.b16 %v1370
        %v1776 = vunpack.c.l.b16 %v1371
        %v1777 = vunpack.c.h.b16 %v1371
        %v1778 = vunpack.c.l.b16 %v1372
        %v1779 = vunpack.c.h.b16 %v1372
        %v1780 = vunpack.c.l.b16 %v1373
        %v1781 = vunpack.c.h.b16 %v1373
        %v1782 = vunpack.c.l.b16 %v1374
        %v1783 = vunpack.c.h.b16 %v1374
        %v1784 = vunpack.c.l.b16 %v1375
        %v1785 = vunpack.c.h.b16 %v1375
        %v1786 = vunpack.c.l.b16 %v1376
        %v1787 = vunpack.c.h.b16 %v1376
        %v1788 = vunpack.c.l.b16 %v1377
        %v1789 = vunpack.c.h.b16 %v1377
        %v1790 = vunpack.c.l.b16 %v1378
        %v1791 = vunpack.c.h.b16 %v1378
        %v1792 = vunpack.c.l.b16 %v1379
        %v1793 = vunpack.c.h.b16 %v1379
        %v1794 = vunpack.c.l.b16 %v1380
        %v1795 = vunpack.c.h.b16 %v1380
        %v1796 = vunpack.c.l.b16 %v1381
        %v1797 = vunpack.c.h.b16 %v1381
        %v1798 = vunpack.c.l.b16 %v1382
        %v1799 = vunpack.c.h.b16 %v1382
        %v1800 = vunpack.c.l.b16 %v1383
        %v1801 = vunpack.c.h.b16 %v1383
        %v1802 = vunpack.c.l.b16 %v1384
        %v1803 = vunpack.c.h.b16 %v1384
        %v1804 = vunpack.c.l.b16 %v1385
        %v1805 = vunpack.c.h.b16 %v1385
        %v1806 = vunpack.c.l.b16 %v1386
        %v1807 = vunpack.c.h.b16 %v1386
        %v1808 = vunpack.c.l.b16 %v1387
        %v1809 = vunpack.c.h.b16 %v1387
        %v1810 = vunpack.c.l.b16 %v1388
        %v1811 = vunpack.c.h.b16 %v1388
        %v1812 = vunpack.c.l.b16 %v1389
        %v1813 = vunpack.c.h.b16 %v1389
        %v1814 = vunpack.c.l.b16 %v1390
        %v1815 = vunpack.c.h.b16 %v1390
        %v1816 = vunpack.c.l.b16 %v1391
        %v1817 = vunpack.c.h.b16 %v1391
        %v1818 = vunpack.c.l.b16 %v1392
        %v1819 = vunpack.c.h.b16 %v1392
        %v1820 = vunpack.c.l.b16 %v1393
        %v1821 = vunpack.c.h.b16 %v1393
        %v1822 = vpack.c.b16 %v1574, %v1566
        %v1823 = vpack.c.b16 %v1575, %v1567
        %v1824 = vpack.c.b16 %v1576, %v1568
        %v1825 = vpack.c.b16 %v1577, %v1569
        %v1826 = vpack.c.b16 %v1578, %v1570
        %v1827 = vpack.c.b16 %v1579, %v1571
        %v1828 = vpack.c.b16 %v1580, %v1572
        %v1829 = vpack.c.b16 %v1581, %v1573
        %v1830 = vpack.c.b16 %v1590, %v1582
        %v1831 = vpack.c.b16 %v1591, %v1583
        %v1832 = vpack.c.b16 %v1592, %v1584
        %v1833 = vpack.c.b16 %v1593, %v1585
        %v1834 = vpack.c.b16 %v1594, %v1586
        %v1835 = vpack.c.b16 %v1595, %v1587
        %v1836 = vpack.c.b16 %v1596, %v1588
        %v1837 = vpack.c.b16 %v1597, %v1589
        %v1838 = vpack.c.b16 %v1606, %v1598
        %v1839 = vpack.c.b16 %v1607, %v1599
        %v1840 = vpack.c.b16 %v1608, %v1600
        %v1841 = vpack.c.b16 %v1609, %v1601
        %v1842 = vpack.c.b16 %v1610, %v1602
        %v1843 = vpack.c.b16 %v1611, %v1603
        %v1844 = vpack.c.b16 %v1612, %v1604
        %v1845 = vpack.c.b16 %v1613, %v1605
        %v1846 = vpack.c.b16 %v1622, %v1614
        %v1847 = vpack.c.b16 %v1623, %v1615
        %v1848 = vpack.c.b16 %v1624, %v1616
        %v1849 = vpack.c.b16 %v1625, %v1617
        %v1850 = vpack.c.b16 %v1626, %v1618
        %v1851 = vpack.c.b16 %v1627, %v1619
        %v1852 = vpack.c.b16 %v1628, %v1620
        %v1853 = vpack.c.b16 %v1629, %v1621
        %v1854 = vpack.c.b16 %v1638, %v1630
        %v1855 = vpack.c.b16 %v1639, %v1631
        %v1856 = vpack.c.b16 %v1640, %v1632
        %v1857 = vpack.c.b16 %v1641, %v1633
        %v1858 = vpack.c.b16 %v1642, %v1634
        %v1859 = vpack.c.b16 %v1643, %v1635
        %v1860 = vpack.c.b16 %v1644, %v1636
        %v1861 = vpack.c.b16 %v1645, %v1637
        %v1862 = vpack.c.b16 %v1654, %v1646
        %v1863 = vpack.c.b16 %v1655, %v1647
        %v1864 = vpack.c.b16 %v1656, %v1648
        %v1865 = vpack.c.b16 %v1657, %v1649
        %v1866 = vpack.c.b16 %v1658, %v1650
        %v1867 = vpack.c.b16 %v1659, %v1651
        %v1868 = vpack.c.b16 %v1660, %v1652
        %v1869 = vpack.c.b16 %v1661, %v1653
        %v1870 = vpack.c.b16 %v1670, %v1662
        %v1871 = vpack.c.b16 %v1671, %v1663
        %v1872 = vpack.c.b16 %v1672, %v1664
        %v1873 = vpack.c.b16 %v1673, %v1665
        %v1874 = vpack.c.b16 %v1674, %v1666
        %v1875 = vpack.c.b16 %v1675, %v1667
        %v1876 = vpack.c.b16 %v1676, %v1668
        %v1877 = vpack.c.b16 %v1677, %v1669
        %v1878 = vpack.c.b16 %v1686, %v1678
        %v1879 = vpack.c.b16 %v1687, %v1679
        %v1880 = vpack.c.b16 %v1688, %v1680
        %v1881 = vpack.c.b16 %v1689, %v1681
        %v1882 = vpack.c.b16 %v1690, %v1682
        %v1883 = vpack.c.b16 %v1691, %v1683
        %v1884 = vpack.c.b16 %v1692, %v1684
        %v1885 = vpack.c.b16 %v1693, %v1685
        %v1886 = vpack.c.b16 %v1702, %v1694
        %v1887 = vpack.c.b16 %v1703, %v1695
        %v1888 = vpack.c.b16 %v1704, %v1696
        %v1889 = vpack.c.b16 %v1705, %v1697
        %v1890 = vpack.c.b16 %v1706, %v1698
        %v1891 = vpack.c.b16 %v1707, %v1699
        %v1892 = vpack.c.b16 %v1708, %v1700
        %v1893 = vpack.c.b16 %v1709, %v1701
        %v1894 = vpack.c.b16 %v1718, %v1710
        %v1895 = vpack.c.b16 %v1719, %v1711
        %v1896 = vpack.c.b16 %v1720, %v1712
        %v1897 = vpack.c.b16 %v1721, %v1713
        %v1898 = vpack.c.b16 %v1722, %v1714
        %v1899 = vpack.c.b16 %v1723, %v1715
        %v1900 = vpack.c.b16 %v1724, %v1716
        %v1901 = vpack.c.b16 %v1725, %v1717
        %v1902 = vpack.c.b16 %v1734, %v1726
        %v1903 = vpack.c.b16 %v1735, %v1727
        %v1904 = vpack.c.b16 %v1736, %v1728
        %v1905 = vpack.c.b16 %v1737, %v1729
        %v1906 = vpack.c.b16 %v1738, %v1730
        %v1907 = vpack.c.b16 %v1739, %v1731
        %v1908 = vpack.c.b16 %v1740, %v1732
        %v1909 = vpack.c.b16 %v1741, %v1733
        %v1910 = vpack.c.b16 %v1750, %v1742
        %v1911 = vpack.c.b16 %v1751, %v1743
        %v1912 = vpack.c.b16 %v1752, %v1744
        %v1913 = vpack.c.b16 %v1753, %v1745
        %v1914 = vpack.c.b16 %v1754, %v1746
        %v1915 = vpack.c.b16 %v1755, %v1747
        %v1916 = vpack.c.b16 %v1756, %v1748
        %v1917 = vpack.c.b16 %v1757, %v1749
        %v1918 = vpack.c.b16 %v1766, %v1758
        %v1919 = vpack.c.b16 %v1767, %v1759
        %v1920 = vpack.c.b16 %v1768, %v1760
        %v1921 = vpack.c.b16 %v1769, %v1761
        %v1922 = vpack.c.b16 %v1770, %v1762
        %v1923 = vpack.c.b16 %v1771, %v1763
        %v1924 = vpack.c.b16 %v1772, %v1764
        %v1925 = vpack.c.b16 %v1773, %v1765
        %v1926 = vpack.c.b16 %v1782, %v1774
        %v1927 = vpack.c.b16 %v1783, %v1775
        %v1928 = vpack.c.b16 %v1784, %v1776
        %v1929 = vpack.c.b16 %v1785, %v1777
        %v1930 = vpack.c.b16 %v1786, %v1778
        %v1931 = vpack.c.b16 %v1787, %v1779
        %v1932 = vpack.c.b16 %v1788, %v1780
        %v1933 = vpack.c.b16 %v1789, %v1781
        %v1934 = vpack.c.b16 %v1798, %v1790
        %v1935 = vpack.c.b16 %v1799, %v1791
        %v1936 = vpack.c.b16 %v1800, %v1792
        %v1937 = vpack.c.b16 %v1801, %v1793
        %v1938 = vpack.c.b16 %v1802, %v1794
        %v1939 = vpack.c.b16 %v1803, %v1795
        %v1940 = vpack.c.b16 %v1804, %v1796
        %v1941 = vpack.c.b16 %v1805, %v1797
        %v1942 = vpack.c.b16 %v1814, %v1806
        %v1943 = vpack.c.b16 %v1815, %v1807
        %v1944 = vpack.c.b16 %v1816, %v1808
        %v1945 = vpack.c.b16 %v1817, %v1809
        %v1946 = vpack.c.b16 %v1818, %v1810
        %v1947 = vpack.c.b16 %v1819, %v1811
        %v1948 = vpack.c.b16 %v1820, %v1812
        %v1949 = vpack.c.b16 %v1821, %v1813
        %2078 = vmatpush.bf16.msra.mxu0 %v1878
        %2079 = vmatpush.bf16.msra.mxu0 %v1870
        %2080 = vmatpush.bf16.msra.mxu0 %v1862
        %2081 = vmatpush.bf16.msra.mxu0 %v1854
        %2082 = vmatpush.bf16.msra.mxu0 %v1846
        %2083 = vmatpush.bf16.msra.mxu0 %v1838
        %2084 = vmatpush.bf16.msra.mxu0 %v1830
        %2085 = vmatpush.bf16.msra.mxu0 %v1822
        %2086 = vmatmul.bf16.gmra.mxu0 %v1394
        %v2087 = vpop.f32.mrf.mxu0
        %v2088 = vadd.f32 %v1422, %v2087
        %v2089 = vpop.f32.mrf.mxu0
        %v2090 = vadd.f32 %v1422, %v2089
        %2091 = vmatmul.bf16.gmra.mxu0 %v1396
        %v2092 = vpop.f32.mrf.mxu0
        %v2093 = vadd.f32 %v1422, %v2092
        %v2094 = vpop.f32.mrf.mxu0
        %v2095 = vadd.f32 %v1422, %v2094
        %2096 = vmatmul.bf16.gmra.mxu0 %v1398
        %v2097 = vpop.f32.mrf.mxu0
        %v2098 = vadd.f32 %v1422, %v2097
        %v2099 = vpop.f32.mrf.mxu0
        %v2100 = vadd.f32 %v1422, %v2099
        %2101 = vmatmul.bf16.gmra.mxu0 %v1400
        %v2102 = vpop.f32.mrf.mxu0
        %v2103 = vadd.f32 %v1422, %v2102
        %v2104 = vpop.f32.mrf.mxu0
        %v2105 = vadd.f32 %v1422, %v2104
        %2106 = vmatmul.bf16.gmra.mxu0 %v1402
        %v2107 = vpop.f32.mrf.mxu0
        %v2108 = vadd.f32 %v1422, %v2107
        %v2109 = vpop.f32.mrf.mxu0
        %v2110 = vadd.f32 %v1422, %v2109
        %2111 = vmatmul.bf16.gmra.mxu0 %v1404
        %v2112 = vpop.f32.mrf.mxu0
        %v2113 = vadd.f32 %v1422, %v2112
        %v2114 = vpop.f32.mrf.mxu0
        %v2115 = vadd.f32 %v1422, %v2114
        %2116 = vmatmul.bf16.gmra.mxu0 %v1406
        %v2117 = vpop.f32.mrf.mxu0
        %v2118 = vadd.f32 %v1422, %v2117
        %v2119 = vpop.f32.mrf.mxu0
        %v2120 = vadd.f32 %v1422, %v2119
        %2121 = vmatmul.bf16.gmra.mxu0 %v1408
        %v2122 = vpop.f32.mrf.mxu0
        %v2123 = vadd.f32 %v1422, %v2122
        %v2124 = vpop.f32.mrf.mxu0
        %v2125 = vadd.f32 %v1422, %v2124
        %2126 = vdwg.mxu0
        %2127 = vmatpush.bf16.msra.mxu0 %v1942
        %2128 = vmatpush.bf16.msra.mxu0 %v1934
        %2129 = vmatpush.bf16.msra.mxu0 %v1926
        %2130 = vmatpush.bf16.msra.mxu0 %v1918
        %2131 = vmatpush.bf16.msra.mxu0 %v1910
        %2132 = vmatpush.bf16.msra.mxu0 %v1902
        %2133 = vmatpush.bf16.msra.mxu0 %v1894
        %2134 = vmatpush.bf16.msra.mxu0 %v1886
        %2135 = vmatmul.bf16.gmra.mxu0 %v1395
        %v2136 = vpop.f32.mrf.mxu0
        %v2137 = vadd.f32 %v2088, %v2136
        %v2138 = vpop.f32.mrf.mxu0
        %v2139 = vadd.f32 %v2090, %v2138
        %2140 = vmatmul.bf16.gmra.mxu0 %v1397
        %v2141 = vpop.f32.mrf.mxu0
        %v2142 = vadd.f32 %v2093, %v2141
        %v2143 = vpop.f32.mrf.mxu0
        %v2144 = vadd.f32 %v2095, %v2143
        %2145 = vmatmul.bf16.gmra.mxu0 %v1399
        %v2146 = vpop.f32.mrf.mxu0
        %v2147 = vadd.f32 %v2098, %v2146
        %v2148 = vpop.f32.mrf.mxu0
        %v2149 = vadd.f32 %v2100, %v2148
        %2150 = vmatmul.bf16.gmra.mxu0 %v1401
        %v2151 = vpop.f32.mrf.mxu0
        %v2152 = vadd.f32 %v2103, %v2151
        %v2153 = vpop.f32.mrf.mxu0
        %v2154 = vadd.f32 %v2105, %v2153
        %2155 = vmatmul.bf16.gmra.mxu0 %v1403
        %v2156 = vpop.f32.mrf.mxu0
        %v2157 = vadd.f32 %v2108, %v2156
        %v2158 = vpop.f32.mrf.mxu0
        %v2159 = vadd.f32 %v2110, %v2158
        %2160 = vmatmul.bf16.gmra.mxu0 %v1405
        %v2161 = vpop.f32.mrf.mxu0
        %v2162 = vadd.f32 %v2113, %v2161
        %v2163 = vpop.f32.mrf.mxu0
        %v2164 = vadd.f32 %v2115, %v2163
        %2165 = vmatmul.bf16.gmra.mxu0 %v1407
        %v2166 = vpop.f32.mrf.mxu0
        %v2167 = vadd.f32 %v2118, %v2166
        %v2168 = vpop.f32.mrf.mxu0
        %v2169 = vadd.f32 %v2120, %v2168
        %2170 = vmatmul.bf16.gmra.mxu0 %v1409
        %v2171 = vpop.f32.mrf.mxu0
        %v2172 = vadd.f32 %v2123, %v2171
        %v2173 = vpop.f32.mrf.mxu0
        %v2174 = vadd.f32 %v2125, %v2173
        %2175 = vdwg.mxu0
        %2176 = vmatpush.bf16.msra.mxu0 %v1879
        %2177 = vmatpush.bf16.msra.mxu0 %v1871
        %2178 = vmatpush.bf16.msra.mxu0 %v1863
        %2179 = vmatpush.bf16.msra.mxu0 %v1855
        %2180 = vmatpush.bf16.msra.mxu0 %v1847
        %2181 = vmatpush.bf16.msra.mxu0 %v1839
        %2182 = vmatpush.bf16.msra.mxu0 %v1831
        %2183 = vmatpush.bf16.msra.mxu0 %v1823
        %2184 = vmatmul.bf16.gmra.mxu0 %v1394
        %v2185 = vpop.f32.mrf.mxu0
        %v2186 = vadd.f32 %v1423, %v2185
        %v2187 = vpop.f32.mrf.mxu0
        %v2188 = vadd.f32 %v1423, %v2187
        %2189 = vmatmul.bf16.gmra.mxu0 %v1396
        %v2190 = vpop.f32.mrf.mxu0
        %v2191 = vadd.f32 %v1423, %v2190
        %v2192 = vpop.f32.mrf.mxu0
        %v2193 = vadd.f32 %v1423, %v2192
        %2194 = vmatmul.bf16.gmra.mxu0 %v1398
        %v2195 = vpop.f32.mrf.mxu0
        %v2196 = vadd.f32 %v1423, %v2195
        %v2197 = vpop.f32.mrf.mxu0
        %v2198 = vadd.f32 %v1423, %v2197
        %2199 = vmatmul.bf16.gmra.mxu0 %v1400
        %v2200 = vpop.f32.mrf.mxu0
        %v2201 = vadd.f32 %v1423, %v2200
        %v2202 = vpop.f32.mrf.mxu0
        %v2203 = vadd.f32 %v1423, %v2202
        %2204 = vmatmul.bf16.gmra.mxu0 %v1402
        %v2205 = vpop.f32.mrf.mxu0
        %v2206 = vadd.f32 %v1423, %v2205
        %v2207 = vpop.f32.mrf.mxu0
        %v2208 = vadd.f32 %v1423, %v2207
        %2209 = vmatmul.bf16.gmra.mxu0 %v1404
        %v2210 = vpop.f32.mrf.mxu0
        %v2211 = vadd.f32 %v1423, %v2210
        %v2212 = vpop.f32.mrf.mxu0
        %v2213 = vadd.f32 %v1423, %v2212
        %2214 = vmatmul.bf16.gmra.mxu0 %v1406
        %v2215 = vpop.f32.mrf.mxu0
        %v2216 = vadd.f32 %v1423, %v2215
        %v2217 = vpop.f32.mrf.mxu0
        %v2218 = vadd.f32 %v1423, %v2217
        %2219 = vmatmul.bf16.gmra.mxu0 %v1408
        %v2220 = vpop.f32.mrf.mxu0
        %v2221 = vadd.f32 %v1423, %v2220
        %v2222 = vpop.f32.mrf.mxu0
        %v2223 = vadd.f32 %v1423, %v2222
        %2224 = vdwg.mxu0
        %2225 = vmatpush.bf16.msra.mxu0 %v1943
        %2226 = vmatpush.bf16.msra.mxu0 %v1935
        %2227 = vmatpush.bf16.msra.mxu0 %v1927
        %2228 = vmatpush.bf16.msra.mxu0 %v1919
        %2229 = vmatpush.bf16.msra.mxu0 %v1911
        %2230 = vmatpush.bf16.msra.mxu0 %v1903
        %2231 = vmatpush.bf16.msra.mxu0 %v1895
        %2232 = vmatpush.bf16.msra.mxu0 %v1887
        %2233 = vmatmul.bf16.gmra.mxu0 %v1395
        %v2234 = vpop.f32.mrf.mxu0
        %v2235 = vadd.f32 %v2186, %v2234
        %v2236 = vpop.f32.mrf.mxu0
        %v2237 = vadd.f32 %v2188, %v2236
        %2238 = vmatmul.bf16.gmra.mxu0 %v1397
        %v2239 = vpop.f32.mrf.mxu0
        %v2240 = vadd.f32 %v2191, %v2239
        %v2241 = vpop.f32.mrf.mxu0
        %v2242 = vadd.f32 %v2193, %v2241
        %2243 = vmatmul.bf16.gmra.mxu0 %v1399
        %v2244 = vpop.f32.mrf.mxu0
        %v2245 = vadd.f32 %v2196, %v2244
        %v2246 = vpop.f32.mrf.mxu0
        %v2247 = vadd.f32 %v2198, %v2246
        %2248 = vmatmul.bf16.gmra.mxu0 %v1401
        %v2249 = vpop.f32.mrf.mxu0
        %v2250 = vadd.f32 %v2201, %v2249
        %v2251 = vpop.f32.mrf.mxu0
        %v2252 = vadd.f32 %v2203, %v2251
        %2253 = vmatmul.bf16.gmra.mxu0 %v1403
        %v2254 = vpop.f32.mrf.mxu0
        %v2255 = vadd.f32 %v2206, %v2254
        %v2256 = vpop.f32.mrf.mxu0
        %v2257 = vadd.f32 %v2208, %v2256
        %2258 = vmatmul.bf16.gmra.mxu0 %v1405
        %v2259 = vpop.f32.mrf.mxu0
        %v2260 = vadd.f32 %v2211, %v2259
        %v2261 = vpop.f32.mrf.mxu0
        %v2262 = vadd.f32 %v2213, %v2261
        %2263 = vmatmul.bf16.gmra.mxu0 %v1407
        %v2264 = vpop.f32.mrf.mxu0
        %v2265 = vadd.f32 %v2216, %v2264
        %v2266 = vpop.f32.mrf.mxu0
        %v2267 = vadd.f32 %v2218, %v2266
        %2268 = vmatmul.bf16.gmra.mxu0 %v1409
        %v2269 = vpop.f32.mrf.mxu0
        %v2270 = vadd.f32 %v2221, %v2269
        %v2271 = vpop.f32.mrf.mxu0
        %v2272 = vadd.f32 %v2223, %v2271
        %2273 = vdwg.mxu0
        %2274 = vmatpush.bf16.msra.mxu0 %v1880
        %2275 = vmatpush.bf16.msra.mxu0 %v1872
        %2276 = vmatpush.bf16.msra.mxu0 %v1864
        %2277 = vmatpush.bf16.msra.mxu0 %v1856
        %2278 = vmatpush.bf16.msra.mxu0 %v1848
        %2279 = vmatpush.bf16.msra.mxu0 %v1840
        %2280 = vmatpush.bf16.msra.mxu0 %v1832
        %2281 = vmatpush.bf16.msra.mxu0 %v1824
        %2282 = vmatmul.bf16.gmra.mxu0 %v1394
        %v2283 = vpop.f32.mrf.mxu0
        %v2284 = vadd.f32 %v1424, %v2283
        %v2285 = vpop.f32.mrf.mxu0
        %v2286 = vadd.f32 %v1424, %v2285
        %2287 = vmatmul.bf16.gmra.mxu0 %v1396
        %v2288 = vpop.f32.mrf.mxu0
        %v2289 = vadd.f32 %v1424, %v2288
        %v2290 = vpop.f32.mrf.mxu0
        %v2291 = vadd.f32 %v1424, %v2290
        %2292 = vmatmul.bf16.gmra.mxu0 %v1398
        %v2293 = vpop.f32.mrf.mxu0
        %v2294 = vadd.f32 %v1424, %v2293
        %v2295 = vpop.f32.mrf.mxu0
        %v2296 = vadd.f32 %v1424, %v2295
        %2297 = vmatmul.bf16.gmra.mxu0 %v1400
        %v2298 = vpop.f32.mrf.mxu0
        %v2299 = vadd.f32 %v1424, %v2298
        %v2300 = vpop.f32.mrf.mxu0
        %v2301 = vadd.f32 %v1424, %v2300
        %2302 = vmatmul.bf16.gmra.mxu0 %v1402
        %v2303 = vpop.f32.mrf.mxu0
        %v2304 = vadd.f32 %v1424, %v2303
        %v2305 = vpop.f32.mrf.mxu0
        %v2306 = vadd.f32 %v1424, %v2305
        %2307 = vmatmul.bf16.gmra.mxu0 %v1404
        %v2308 = vpop.f32.mrf.mxu0
        %v2309 = vadd.f32 %v1424, %v2308
        %v2310 = vpop.f32.mrf.mxu0
        %v2311 = vadd.f32 %v1424, %v2310
        %2312 = vmatmul.bf16.gmra.mxu0 %v1406
        %v2313 = vpop.f32.mrf.mxu0
        %v2314 = vadd.f32 %v1424, %v2313
        %v2315 = vpop.f32.mrf.mxu0
        %v2316 = vadd.f32 %v1424, %v2315
        %2317 = vmatmul.bf16.gmra.mxu0 %v1408
        %v2318 = vpop.f32.mrf.mxu0
        %v2319 = vadd.f32 %v1424, %v2318
        %v2320 = vpop.f32.mrf.mxu0
        %v2321 = vadd.f32 %v1424, %v2320
        %2322 = vdwg.mxu0
        %2323 = vmatpush.bf16.msra.mxu0 %v1944
        %2324 = vmatpush.bf16.msra.mxu0 %v1936
        %2325 = vmatpush.bf16.msra.mxu0 %v1928
        %2326 = vmatpush.bf16.msra.mxu0 %v1920
        %2327 = vmatpush.bf16.msra.mxu0 %v1912
        %2328 = vmatpush.bf16.msra.mxu0 %v1904
        %2329 = vmatpush.bf16.msra.mxu0 %v1896
        %2330 = vmatpush.bf16.msra.mxu0 %v1888
        %2331 = vmatmul.bf16.gmra.mxu0 %v1395
        %v2332 = vpop.f32.mrf.mxu0
        %v2333 = vadd.f32 %v2284, %v2332
        %v2334 = vpop.f32.mrf.mxu0
        %v2335 = vadd.f32 %v2286, %v2334
        %2336 = vmatmul.bf16.gmra.mxu0 %v1397
        %v2337 = vpop.f32.mrf.mxu0
        %v2338 = vadd.f32 %v2289, %v2337
        %v2339 = vpop.f32.mrf.mxu0
        %v2340 = vadd.f32 %v2291, %v2339
        %2341 = vmatmul.bf16.gmra.mxu0 %v1399
        %v2342 = vpop.f32.mrf.mxu0
        %v2343 = vadd.f32 %v2294, %v2342
        %v2344 = vpop.f32.mrf.mxu0
        %v2345 = vadd.f32 %v2296, %v2344
        %2346 = vmatmul.bf16.gmra.mxu0 %v1401
        %v2347 = vpop.f32.mrf.mxu0
        %v2348 = vadd.f32 %v2299, %v2347
        %v2349 = vpop.f32.mrf.mxu0
        %v2350 = vadd.f32 %v2301, %v2349
        %2351 = vmatmul.bf16.gmra.mxu0 %v1403
        %v2352 = vpop.f32.mrf.mxu0
        %v2353 = vadd.f32 %v2304, %v2352
        %v2354 = vpop.f32.mrf.mxu0
        %v2355 = vadd.f32 %v2306, %v2354
        %2356 = vmatmul.bf16.gmra.mxu0 %v1405
        %v2357 = vpop.f32.mrf.mxu0
        %v2358 = vadd.f32 %v2309, %v2357
        %v2359 = vpop.f32.mrf.mxu0
        %v2360 = vadd.f32 %v2311, %v2359
        %2361 = vmatmul.bf16.gmra.mxu0 %v1407
        %v2362 = vpop.f32.mrf.mxu0
        %v2363 = vadd.f32 %v2314, %v2362
        %v2364 = vpop.f32.mrf.mxu0
        %v2365 = vadd.f32 %v2316, %v2364
        %2366 = vmatmul.bf16.gmra.mxu0 %v1409
        %v2367 = vpop.f32.mrf.mxu0
        %v2368 = vadd.f32 %v2319, %v2367
        %v2369 = vpop.f32.mrf.mxu0
        %v2370 = vadd.f32 %v2321, %v2369
        %2371 = vdwg.mxu0
        %2372 = vmatpush.bf16.msra.mxu0 %v1881
        %2373 = vmatpush.bf16.msra.mxu0 %v1873
        %2374 = vmatpush.bf16.msra.mxu0 %v1865
        %2375 = vmatpush.bf16.msra.mxu0 %v1857
        %2376 = vmatpush.bf16.msra.mxu0 %v1849
        %2377 = vmatpush.bf16.msra.mxu0 %v1841
        %2378 = vmatpush.bf16.msra.mxu0 %v1833
        %2379 = vmatpush.bf16.msra.mxu0 %v1825
        %2380 = vmatmul.bf16.gmra.mxu0 %v1394
        %v2381 = vpop.f32.mrf.mxu0
        %v2382 = vadd.f32 %v1425, %v2381
        %v2383 = vpop.f32.mrf.mxu0
        %v2384 = vadd.f32 %v1425, %v2383
        %2385 = vmatmul.bf16.gmra.mxu0 %v1396
        %v2386 = vpop.f32.mrf.mxu0
        %v2387 = vadd.f32 %v1425, %v2386
        %v2388 = vpop.f32.mrf.mxu0
        %v2389 = vadd.f32 %v1425, %v2388
        %2390 = vmatmul.bf16.gmra.mxu0 %v1398
        %v2391 = vpop.f32.mrf.mxu0
        %v2392 = vadd.f32 %v1425, %v2391
        %v2393 = vpop.f32.mrf.mxu0
        %v2394 = vadd.f32 %v1425, %v2393
        %2395 = vmatmul.bf16.gmra.mxu0 %v1400
        %v2396 = vpop.f32.mrf.mxu0
        %v2397 = vadd.f32 %v1425, %v2396
        %v2398 = vpop.f32.mrf.mxu0
        %v2399 = vadd.f32 %v1425, %v2398
        %2400 = vmatmul.bf16.gmra.mxu0 %v1402
        %v2401 = vpop.f32.mrf.mxu0
        %v2402 = vadd.f32 %v1425, %v2401
        %v2403 = vpop.f32.mrf.mxu0
        %v2404 = vadd.f32 %v1425, %v2403
        %2405 = vmatmul.bf16.gmra.mxu0 %v1404
        %v2406 = vpop.f32.mrf.mxu0
        %v2407 = vadd.f32 %v1425, %v2406
        %v2408 = vpop.f32.mrf.mxu0
        %v2409 = vadd.f32 %v1425, %v2408
        %2410 = vmatmul.bf16.gmra.mxu0 %v1406
        %v2411 = vpop.f32.mrf.mxu0
        %v2412 = vadd.f32 %v1425, %v2411
        %v2413 = vpop.f32.mrf.mxu0
        %v2414 = vadd.f32 %v1425, %v2413
        %2415 = vmatmul.bf16.gmra.mxu0 %v1408
        %v2416 = vpop.f32.mrf.mxu0
        %v2417 = vadd.f32 %v1425, %v2416
        %v2418 = vpop.f32.mrf.mxu0
        %v2419 = vadd.f32 %v1425, %v2418
        %2420 = vdwg.mxu0
        %2421 = vmatpush.bf16.msra.mxu0 %v1945
        %2422 = vmatpush.bf16.msra.mxu0 %v1937
        %2423 = vmatpush.bf16.msra.mxu0 %v1929
        %2424 = vmatpush.bf16.msra.mxu0 %v1921
        %2425 = vmatpush.bf16.msra.mxu0 %v1913
        %2426 = vmatpush.bf16.msra.mxu0 %v1905
        %2427 = vmatpush.bf16.msra.mxu0 %v1897
        %2428 = vmatpush.bf16.msra.mxu0 %v1889
        %2429 = vmatmul.bf16.gmra.mxu0 %v1395
        %v2430 = vpop.f32.mrf.mxu0
        %v2431 = vadd.f32 %v2382, %v2430
        %v2432 = vpop.f32.mrf.mxu0
        %v2433 = vadd.f32 %v2384, %v2432
        %2434 = vmatmul.bf16.gmra.mxu0 %v1397
        %v2435 = vpop.f32.mrf.mxu0
        %v2436 = vadd.f32 %v2387, %v2435
        %v2437 = vpop.f32.mrf.mxu0
        %v2438 = vadd.f32 %v2389, %v2437
        %2439 = vmatmul.bf16.gmra.mxu0 %v1399
        %v2440 = vpop.f32.mrf.mxu0
        %v2441 = vadd.f32 %v2392, %v2440
        %v2442 = vpop.f32.mrf.mxu0
        %v2443 = vadd.f32 %v2394, %v2442
        %2444 = vmatmul.bf16.gmra.mxu0 %v1401
        %v2445 = vpop.f32.mrf.mxu0
        %v2446 = vadd.f32 %v2397, %v2445
        %v2447 = vpop.f32.mrf.mxu0
        %v2448 = vadd.f32 %v2399, %v2447
        %2449 = vmatmul.bf16.gmra.mxu0 %v1403
        %v2450 = vpop.f32.mrf.mxu0
        %v2451 = vadd.f32 %v2402, %v2450
        %v2452 = vpop.f32.mrf.mxu0
        %v2453 = vadd.f32 %v2404, %v2452
        %2454 = vmatmul.bf16.gmra.mxu0 %v1405
        %v2455 = vpop.f32.mrf.mxu0
        %v2456 = vadd.f32 %v2407, %v2455
        %v2457 = vpop.f32.mrf.mxu0
        %v2458 = vadd.f32 %v2409, %v2457
        %2459 = vmatmul.bf16.gmra.mxu0 %v1407
        %v2460 = vpop.f32.mrf.mxu0
        %v2461 = vadd.f32 %v2412, %v2460
        %v2462 = vpop.f32.mrf.mxu0
        %v2463 = vadd.f32 %v2414, %v2462
        %2464 = vmatmul.bf16.gmra.mxu0 %v1409
        %v2465 = vpop.f32.mrf.mxu0
        %v2466 = vadd.f32 %v2417, %v2465
        %v2467 = vpop.f32.mrf.mxu0
        %v2468 = vadd.f32 %v2419, %v2467
        %2469 = vdwg.mxu0
        %2470 = vmatpush.bf16.msra.mxu0 %v1882
        %2471 = vmatpush.bf16.msra.mxu0 %v1874
        %2472 = vmatpush.bf16.msra.mxu0 %v1866
        %2473 = vmatpush.bf16.msra.mxu0 %v1858
        %2474 = vmatpush.bf16.msra.mxu0 %v1850
        %2475 = vmatpush.bf16.msra.mxu0 %v1842
        %2476 = vmatpush.bf16.msra.mxu0 %v1834
        %2477 = vmatpush.bf16.msra.mxu0 %v1826
        %2478 = vmatmul.bf16.gmra.mxu0 %v1394
        %v2479 = vpop.f32.mrf.mxu0
        %v2480 = vadd.f32 %v1426, %v2479
        %v2481 = vpop.f32.mrf.mxu0
        %v2482 = vadd.f32 %v1426, %v2481
        %2483 = vmatmul.bf16.gmra.mxu0 %v1396
        %v2484 = vpop.f32.mrf.mxu0
        %v2485 = vadd.f32 %v1426, %v2484
        %v2486 = vpop.f32.mrf.mxu0
        %v2487 = vadd.f32 %v1426, %v2486
        %2488 = vmatmul.bf16.gmra.mxu0 %v1398
        %v2489 = vpop.f32.mrf.mxu0
        %v2490 = vadd.f32 %v1426, %v2489
        %v2491 = vpop.f32.mrf.mxu0
        %v2492 = vadd.f32 %v1426, %v2491
        %2493 = vmatmul.bf16.gmra.mxu0 %v1400
        %v2494 = vpop.f32.mrf.mxu0
        %v2495 = vadd.f32 %v1426, %v2494
        %v2496 = vpop.f32.mrf.mxu0
        %v2497 = vadd.f32 %v1426, %v2496
        %2498 = vmatmul.bf16.gmra.mxu0 %v1402
        %v2499 = vpop.f32.mrf.mxu0
        %v2500 = vadd.f32 %v1426, %v2499
        %v2501 = vpop.f32.mrf.mxu0
        %v2502 = vadd.f32 %v1426, %v2501
        %2503 = vmatmul.bf16.gmra.mxu0 %v1404
        %v2504 = vpop.f32.mrf.mxu0
        %v2505 = vadd.f32 %v1426, %v2504
        %v2506 = vpop.f32.mrf.mxu0
        %v2507 = vadd.f32 %v1426, %v2506
        %2508 = vmatmul.bf16.gmra.mxu0 %v1406
        %v2509 = vpop.f32.mrf.mxu0
        %v2510 = vadd.f32 %v1426, %v2509
        %v2511 = vpop.f32.mrf.mxu0
        %v2512 = vadd.f32 %v1426, %v2511
        %2513 = vmatmul.bf16.gmra.mxu0 %v1408
        %v2514 = vpop.f32.mrf.mxu0
        %v2515 = vadd.f32 %v1426, %v2514
        %v2516 = vpop.f32.mrf.mxu0
        %v2517 = vadd.f32 %v1426, %v2516
        %2518 = vdwg.mxu0
        %2519 = vmatpush.bf16.msra.mxu0 %v1946
        %2520 = vmatpush.bf16.msra.mxu0 %v1938
        %2521 = vmatpush.bf16.msra.mxu0 %v1930
        %2522 = vmatpush.bf16.msra.mxu0 %v1922
        %2523 = vmatpush.bf16.msra.mxu0 %v1914
        %2524 = vmatpush.bf16.msra.mxu0 %v1906
        %2525 = vmatpush.bf16.msra.mxu0 %v1898
        %2526 = vmatpush.bf16.msra.mxu0 %v1890
        %2527 = vmatmul.bf16.gmra.mxu0 %v1395
        %v2528 = vpop.f32.mrf.mxu0
        %v2529 = vadd.f32 %v2480, %v2528
        %v2530 = vpop.f32.mrf.mxu0
        %v2531 = vadd.f32 %v2482, %v2530
        %2532 = vmatmul.bf16.gmra.mxu0 %v1397
        %v2533 = vpop.f32.mrf.mxu0
        %v2534 = vadd.f32 %v2485, %v2533
        %v2535 = vpop.f32.mrf.mxu0
        %v2536 = vadd.f32 %v2487, %v2535
        %2537 = vmatmul.bf16.gmra.mxu0 %v1399
        %v2538 = vpop.f32.mrf.mxu0
        %v2539 = vadd.f32 %v2490, %v2538
        %v2540 = vpop.f32.mrf.mxu0
        %v2541 = vadd.f32 %v2492, %v2540
        %2542 = vmatmul.bf16.gmra.mxu0 %v1401
        %v2543 = vpop.f32.mrf.mxu0
        %v2544 = vadd.f32 %v2495, %v2543
        %v2545 = vpop.f32.mrf.mxu0
        %v2546 = vadd.f32 %v2497, %v2545
        %2547 = vmatmul.bf16.gmra.mxu0 %v1403
        %v2548 = vpop.f32.mrf.mxu0
        %v2549 = vadd.f32 %v2500, %v2548
        %v2550 = vpop.f32.mrf.mxu0
        %v2551 = vadd.f32 %v2502, %v2550
        %2552 = vmatmul.bf16.gmra.mxu0 %v1405
        %v2553 = vpop.f32.mrf.mxu0
        %v2554 = vadd.f32 %v2505, %v2553
        %v2555 = vpop.f32.mrf.mxu0
        %v2556 = vadd.f32 %v2507, %v2555
        %2557 = vmatmul.bf16.gmra.mxu0 %v1407
        %v2558 = vpop.f32.mrf.mxu0
        %v2559 = vadd.f32 %v2510, %v2558
        %v2560 = vpop.f32.mrf.mxu0
        %v2561 = vadd.f32 %v2512, %v2560
        %2562 = vmatmul.bf16.gmra.mxu0 %v1409
        %v2563 = vpop.f32.mrf.mxu0
        %v2564 = vadd.f32 %v2515, %v2563
        %v2565 = vpop.f32.mrf.mxu0
        %v2566 = vadd.f32 %v2517, %v2565
        %2567 = vdwg.mxu0
        %2568 = vmatpush.bf16.msra.mxu0 %v1883
        %2569 = vmatpush.bf16.msra.mxu0 %v1875
        %2570 = vmatpush.bf16.msra.mxu0 %v1867
        %2571 = vmatpush.bf16.msra.mxu0 %v1859
        %2572 = vmatpush.bf16.msra.mxu0 %v1851
        %2573 = vmatpush.bf16.msra.mxu0 %v1843
        %2574 = vmatpush.bf16.msra.mxu0 %v1835
        %2575 = vmatpush.bf16.msra.mxu0 %v1827
        %2576 = vmatmul.bf16.gmra.mxu0 %v1394
        %v2577 = vpop.f32.mrf.mxu0
        %v2578 = vadd.f32 %v1427, %v2577
        %v2579 = vpop.f32.mrf.mxu0
        %v2580 = vadd.f32 %v1427, %v2579
        %2581 = vmatmul.bf16.gmra.mxu0 %v1396
        %v2582 = vpop.f32.mrf.mxu0
        %v2583 = vadd.f32 %v1427, %v2582
        %v2584 = vpop.f32.mrf.mxu0
        %v2585 = vadd.f32 %v1427, %v2584
        %2586 = vmatmul.bf16.gmra.mxu0 %v1398
        %v2587 = vpop.f32.mrf.mxu0
        %v2588 = vadd.f32 %v1427, %v2587
        %v2589 = vpop.f32.mrf.mxu0
        %v2590 = vadd.f32 %v1427, %v2589
        %2591 = vmatmul.bf16.gmra.mxu0 %v1400
        %v2592 = vpop.f32.mrf.mxu0
        %v2593 = vadd.f32 %v1427, %v2592
        %v2594 = vpop.f32.mrf.mxu0
        %v2595 = vadd.f32 %v1427, %v2594
        %2596 = vmatmul.bf16.gmra.mxu0 %v1402
        %v2597 = vpop.f32.mrf.mxu0
        %v2598 = vadd.f32 %v1427, %v2597
        %v2599 = vpop.f32.mrf.mxu0
        %v2600 = vadd.f32 %v1427, %v2599
        %2601 = vmatmul.bf16.gmra.mxu0 %v1404
        %v2602 = vpop.f32.mrf.mxu0
        %v2603 = vadd.f32 %v1427, %v2602
        %v2604 = vpop.f32.mrf.mxu0
        %v2605 = vadd.f32 %v1427, %v2604
        %2606 = vmatmul.bf16.gmra.mxu0 %v1406
        %v2607 = vpop.f32.mrf.mxu0
        %v2608 = vadd.f32 %v1427, %v2607
        %v2609 = vpop.f32.mrf.mxu0
        %v2610 = vadd.f32 %v1427, %v2609
        %2611 = vmatmul.bf16.gmra.mxu0 %v1408
        %v2612 = vpop.f32.mrf.mxu0
        %v2613 = vadd.f32 %v1427, %v2612
        %v2614 = vpop.f32.mrf.mxu0
        %v2615 = vadd.f32 %v1427, %v2614
        %2616 = vdwg.mxu0
        %2617 = vmatpush.bf16.msra.mxu0 %v1947
        %2618 = vmatpush.bf16.msra.mxu0 %v1939
        %2619 = vmatpush.bf16.msra.mxu0 %v1931
        %2620 = vmatpush.bf16.msra.mxu0 %v1923
        %2621 = vmatpush.bf16.msra.mxu0 %v1915
        %2622 = vmatpush.bf16.msra.mxu0 %v1907
        %2623 = vmatpush.bf16.msra.mxu0 %v1899
        %2624 = vmatpush.bf16.msra.mxu0 %v1891
        %2625 = vmatmul.bf16.gmra.mxu0 %v1395
        %v2626 = vpop.f32.mrf.mxu0
        %v2627 = vadd.f32 %v2578, %v2626
        %v2628 = vpop.f32.mrf.mxu0
        %v2629 = vadd.f32 %v2580, %v2628
        %2630 = vmatmul.bf16.gmra.mxu0 %v1397
        %v2631 = vpop.f32.mrf.mxu0
        %v2632 = vadd.f32 %v2583, %v2631
        %v2633 = vpop.f32.mrf.mxu0
        %v2634 = vadd.f32 %v2585, %v2633
        %2635 = vmatmul.bf16.gmra.mxu0 %v1399
        %v2636 = vpop.f32.mrf.mxu0
        %v2637 = vadd.f32 %v2588, %v2636
        %v2638 = vpop.f32.mrf.mxu0
        %v2639 = vadd.f32 %v2590, %v2638
        %2640 = vmatmul.bf16.gmra.mxu0 %v1401
        %v2641 = vpop.f32.mrf.mxu0
        %v2642 = vadd.f32 %v2593, %v2641
        %v2643 = vpop.f32.mrf.mxu0
        %v2644 = vadd.f32 %v2595, %v2643
        %2645 = vmatmul.bf16.gmra.mxu0 %v1403
        %v2646 = vpop.f32.mrf.mxu0
        %v2647 = vadd.f32 %v2598, %v2646
        %v2648 = vpop.f32.mrf.mxu0
        %v2649 = vadd.f32 %v2600, %v2648
        %2650 = vmatmul.bf16.gmra.mxu0 %v1405
        %v2651 = vpop.f32.mrf.mxu0
        %v2652 = vadd.f32 %v2603, %v2651
        %v2653 = vpop.f32.mrf.mxu0
        %v2654 = vadd.f32 %v2605, %v2653
        %2655 = vmatmul.bf16.gmra.mxu0 %v1407
        %v2656 = vpop.f32.mrf.mxu0
        %v2657 = vadd.f32 %v2608, %v2656
        %v2658 = vpop.f32.mrf.mxu0
        %v2659 = vadd.f32 %v2610, %v2658
        %2660 = vmatmul.bf16.gmra.mxu0 %v1409
        %v2661 = vpop.f32.mrf.mxu0
        %v2662 = vadd.f32 %v2613, %v2661
        %v2663 = vpop.f32.mrf.mxu0
        %v2664 = vadd.f32 %v2615, %v2663
        %2665 = vdwg.mxu0
        %2666 = vmatpush.bf16.msra.mxu0 %v1884
        %2667 = vmatpush.bf16.msra.mxu0 %v1876
        %2668 = vmatpush.bf16.msra.mxu0 %v1868
        %2669 = vmatpush.bf16.msra.mxu0 %v1860
        %2670 = vmatpush.bf16.msra.mxu0 %v1852
        %2671 = vmatpush.bf16.msra.mxu0 %v1844
        %2672 = vmatpush.bf16.msra.mxu0 %v1836
        %2673 = vmatpush.bf16.msra.mxu0 %v1828
        %2674 = vmatmul.bf16.gmra.mxu0 %v1394
        %v2675 = vpop.f32.mrf.mxu0
        %v2676 = vadd.f32 %v1428, %v2675
        %v2677 = vpop.f32.mrf.mxu0
        %v2678 = vadd.f32 %v1428, %v2677
        %2679 = vmatmul.bf16.gmra.mxu0 %v1396
        %v2680 = vpop.f32.mrf.mxu0
        %v2681 = vadd.f32 %v1428, %v2680
        %v2682 = vpop.f32.mrf.mxu0
        %v2683 = vadd.f32 %v1428, %v2682
        %2684 = vmatmul.bf16.gmra.mxu0 %v1398
        %v2685 = vpop.f32.mrf.mxu0
        %v2686 = vadd.f32 %v1428, %v2685
        %v2687 = vpop.f32.mrf.mxu0
        %v2688 = vadd.f32 %v1428, %v2687
        %2689 = vmatmul.bf16.gmra.mxu0 %v1400
        %v2690 = vpop.f32.mrf.mxu0
        %v2691 = vadd.f32 %v1428, %v2690
        %v2692 = vpop.f32.mrf.mxu0
        %v2693 = vadd.f32 %v1428, %v2692
        %2694 = vmatmul.bf16.gmra.mxu0 %v1402
        %v2695 = vpop.f32.mrf.mxu0
        %v2696 = vadd.f32 %v1428, %v2695
        %v2697 = vpop.f32.mrf.mxu0
        %v2698 = vadd.f32 %v1428, %v2697
        %2699 = vmatmul.bf16.gmra.mxu0 %v1404
        %v2700 = vpop.f32.mrf.mxu0
        %v2701 = vadd.f32 %v1428, %v2700
        %v2702 = vpop.f32.mrf.mxu0
        %v2703 = vadd.f32 %v1428, %v2702
        %2704 = vmatmul.bf16.gmra.mxu0 %v1406
        %v2705 = vpop.f32.mrf.mxu0
        %v2706 = vadd.f32 %v1428, %v2705
        %v2707 = vpop.f32.mrf.mxu0
        %v2708 = vadd.f32 %v1428, %v2707
        %2709 = vmatmul.bf16.gmra.mxu0 %v1408
        %v2710 = vpop.f32.mrf.mxu0
        %v2711 = vadd.f32 %v1428, %v2710
        %v2712 = vpop.f32.mrf.mxu0
        %v2713 = vadd.f32 %v1428, %v2712
        %2714 = vdwg.mxu0
        %2715 = vmatpush.bf16.msra.mxu0 %v1948
        %2716 = vmatpush.bf16.msra.mxu0 %v1940
        %2717 = vmatpush.bf16.msra.mxu0 %v1932
        %2718 = vmatpush.bf16.msra.mxu0 %v1924
        %2719 = vmatpush.bf16.msra.mxu0 %v1916
        %2720 = vmatpush.bf16.msra.mxu0 %v1908
        %2721 = vmatpush.bf16.msra.mxu0 %v1900
        %2722 = vmatpush.bf16.msra.mxu0 %v1892
        %2723 = vmatmul.bf16.gmra.mxu0 %v1395
        %v2724 = vpop.f32.mrf.mxu0
        %v2725 = vadd.f32 %v2676, %v2724
        %v2726 = vpop.f32.mrf.mxu0
        %v2727 = vadd.f32 %v2678, %v2726
        %2728 = vmatmul.bf16.gmra.mxu0 %v1397
        %v2729 = vpop.f32.mrf.mxu0
        %v2730 = vadd.f32 %v2681, %v2729
        %v2731 = vpop.f32.mrf.mxu0
        %v2732 = vadd.f32 %v2683, %v2731
        %2733 = vmatmul.bf16.gmra.mxu0 %v1399
        %v2734 = vpop.f32.mrf.mxu0
        %v2735 = vadd.f32 %v2686, %v2734
        %v2736 = vpop.f32.mrf.mxu0
        %v2737 = vadd.f32 %v2688, %v2736
        %2738 = vmatmul.bf16.gmra.mxu0 %v1401
        %v2739 = vpop.f32.mrf.mxu0
        %v2740 = vadd.f32 %v2691, %v2739
        %v2741 = vpop.f32.mrf.mxu0
        %v2742 = vadd.f32 %v2693, %v2741
        %2743 = vmatmul.bf16.gmra.mxu0 %v1403
        %v2744 = vpop.f32.mrf.mxu0
        %v2745 = vadd.f32 %v2696, %v2744
        %v2746 = vpop.f32.mrf.mxu0
        %v2747 = vadd.f32 %v2698, %v2746
        %2748 = vmatmul.bf16.gmra.mxu0 %v1405
        %v2749 = vpop.f32.mrf.mxu0
        %v2750 = vadd.f32 %v2701, %v2749
        %v2751 = vpop.f32.mrf.mxu0
        %v2752 = vadd.f32 %v2703, %v2751
        %2753 = vmatmul.bf16.gmra.mxu0 %v1407
        %v2754 = vpop.f32.mrf.mxu0
        %v2755 = vadd.f32 %v2706, %v2754
        %v2756 = vpop.f32.mrf.mxu0
        %v2757 = vadd.f32 %v2708, %v2756
        %2758 = vmatmul.bf16.gmra.mxu0 %v1409
        %v2759 = vpop.f32.mrf.mxu0
        %v2760 = vadd.f32 %v2711, %v2759
        %v2761 = vpop.f32.mrf.mxu0
        %v2762 = vadd.f32 %v2713, %v2761
        %2763 = vdwg.mxu0
        %2764 = vmatpush.bf16.msra.mxu0 %v1885
        %2765 = vmatpush.bf16.msra.mxu0 %v1877
        %2766 = vmatpush.bf16.msra.mxu0 %v1869
        %2767 = vmatpush.bf16.msra.mxu0 %v1861
        %2768 = vmatpush.bf16.msra.mxu0 %v1853
        %2769 = vmatpush.bf16.msra.mxu0 %v1845
        %2770 = vmatpush.bf16.msra.mxu0 %v1837
        %2771 = vmatpush.bf16.msra.mxu0 %v1829
        %2772 = vmatmul.bf16.gmra.mxu0 %v1394
        %v2773 = vpop.f32.mrf.mxu0
        %v2774 = vadd.f32 %v1429, %v2773
        %v2775 = vpop.f32.mrf.mxu0
        %v2776 = vadd.f32 %v1429, %v2775
        %2777 = vmatmul.bf16.gmra.mxu0 %v1396
        %v2778 = vpop.f32.mrf.mxu0
        %v2779 = vadd.f32 %v1429, %v2778
        %v2780 = vpop.f32.mrf.mxu0
        %v2781 = vadd.f32 %v1429, %v2780
        %2782 = vmatmul.bf16.gmra.mxu0 %v1398
        %v2783 = vpop.f32.mrf.mxu0
        %v2784 = vadd.f32 %v1429, %v2783
        %v2785 = vpop.f32.mrf.mxu0
        %v2786 = vadd.f32 %v1429, %v2785
        %2787 = vmatmul.bf16.gmra.mxu0 %v1400
        %v2788 = vpop.f32.mrf.mxu0
        %v2789 = vadd.f32 %v1429, %v2788
        %v2790 = vpop.f32.mrf.mxu0
        %v2791 = vadd.f32 %v1429, %v2790
        %2792 = vmatmul.bf16.gmra.mxu0 %v1402
        %v2793 = vpop.f32.mrf.mxu0
        %v2794 = vadd.f32 %v1429, %v2793
        %v2795 = vpop.f32.mrf.mxu0
        %v2796 = vadd.f32 %v1429, %v2795
        %2797 = vmatmul.bf16.gmra.mxu0 %v1404
        %v2798 = vpop.f32.mrf.mxu0
        %v2799 = vadd.f32 %v1429, %v2798
        %v2800 = vpop.f32.mrf.mxu0
        %v2801 = vadd.f32 %v1429, %v2800
        %2802 = vmatmul.bf16.gmra.mxu0 %v1406
        %v2803 = vpop.f32.mrf.mxu0
        %v2804 = vadd.f32 %v1429, %v2803
        %v2805 = vpop.f32.mrf.mxu0
        %v2806 = vadd.f32 %v1429, %v2805
        %2807 = vmatmul.bf16.gmra.mxu0 %v1408
        %v2808 = vpop.f32.mrf.mxu0
        %v2809 = vadd.f32 %v1429, %v2808
        %v2810 = vpop.f32.mrf.mxu0
        %v2811 = vadd.f32 %v1429, %v2810
        %2812 = vdwg.mxu0
        %2813 = vmatpush.bf16.msra.mxu0 %v1949
        %2814 = vmatpush.bf16.msra.mxu0 %v1941
        %2815 = vmatpush.bf16.msra.mxu0 %v1933
        %2816 = vmatpush.bf16.msra.mxu0 %v1925
        %2817 = vmatpush.bf16.msra.mxu0 %v1917
        %2818 = vmatpush.bf16.msra.mxu0 %v1909
        %2819 = vmatpush.bf16.msra.mxu0 %v1901
        %2820 = vmatpush.bf16.msra.mxu0 %v1893
        %2821 = vmatmul.bf16.gmra.mxu0 %v1395
        %v2822 = vpop.f32.mrf.mxu0
        %v2823 = vadd.f32 %v2774, %v2822
        %v2824 = vpop.f32.mrf.mxu0
        %v2825 = vadd.f32 %v2776, %v2824
        %2826 = vmatmul.bf16.gmra.mxu0 %v1397
        %v2827 = vpop.f32.mrf.mxu0
        %v2828 = vadd.f32 %v2779, %v2827
        %v2829 = vpop.f32.mrf.mxu0
        %v2830 = vadd.f32 %v2781, %v2829
        %2831 = vmatmul.bf16.gmra.mxu0 %v1399
        %v2832 = vpop.f32.mrf.mxu0
        %v2833 = vadd.f32 %v2784, %v2832
        %v2834 = vpop.f32.mrf.mxu0
        %v2835 = vadd.f32 %v2786, %v2834
        %2836 = vmatmul.bf16.gmra.mxu0 %v1401
        %v2837 = vpop.f32.mrf.mxu0
        %v2838 = vadd.f32 %v2789, %v2837
        %v2839 = vpop.f32.mrf.mxu0
        %v2840 = vadd.f32 %v2791, %v2839
        %2841 = vmatmul.bf16.gmra.mxu0 %v1403
        %v2842 = vpop.f32.mrf.mxu0
        %v2843 = vadd.f32 %v2794, %v2842
        %v2844 = vpop.f32.mrf.mxu0
        %v2845 = vadd.f32 %v2796, %v2844
        %2846 = vmatmul.bf16.gmra.mxu0 %v1405
        %v2847 = vpop.f32.mrf.mxu0
        %v2848 = vadd.f32 %v2799, %v2847
        %v2849 = vpop.f32.mrf.mxu0
        %v2850 = vadd.f32 %v2801, %v2849
        %2851 = vmatmul.bf16.gmra.mxu0 %v1407
        %v2852 = vpop.f32.mrf.mxu0
        %v2853 = vadd.f32 %v2804, %v2852
        %v2854 = vpop.f32.mrf.mxu0
        %v2855 = vadd.f32 %v2806, %v2854
        %2856 = vmatmul.bf16.gmra.mxu0 %v1409
        %v2857 = vpop.f32.mrf.mxu0
        %v2858 = vadd.f32 %v2809, %v2857
        %v2859 = vpop.f32.mrf.mxu0
        %v2860 = vadd.f32 %v2811, %v2859
        %2861 = vdwg.mxu0
        %v2862 = vadd.f32 %v2137, %v2139
        %v2863 = vadd.f32 %v2862, %v2142
        %v2864 = vadd.f32 %v2863, %v2144
        %v2865 = vadd.f32 %v2864, %v2147
        %v2866 = vadd.f32 %v2865, %v2149
        %v2867 = vadd.f32 %v2866, %v2152
        %v2868 = vadd.f32 %v2867, %v2154
        %v2869 = vadd.f32 %v2868, %v2157
        %v2870 = vadd.f32 %v2869, %v2159
        %v2871 = vadd.f32 %v2870, %v2162
        %v2872 = vadd.f32 %v2871, %v2164
        %v2873 = vadd.f32 %v2872, %v2167
        %v2874 = vadd.f32 %v2873, %v2169
        %v2875 = vadd.f32 %v2874, %v2172
        %v2876 = vadd.f32 %v2875, %v2174
        %v2877 = vrot.slane %v2876, 4
        %v2878 = vadd.f32 %v2876, %v2877
        %v2879 = vrot.slane %v2878, 2
        %v2880 = vadd.f32 %v2878, %v2879
        %v2881 = vrot.slane %v2880, 1
        %v2882 = vadd.f32 %v2880, %v2881
        %v2883 = vadd.f32 %v2235, %v2237
        %v2884 = vadd.f32 %v2883, %v2240
        %v2885 = vadd.f32 %v2884, %v2242
        %v2886 = vadd.f32 %v2885, %v2245
        %v2887 = vadd.f32 %v2886, %v2247
        %v2888 = vadd.f32 %v2887, %v2250
        %v2889 = vadd.f32 %v2888, %v2252
        %v2890 = vadd.f32 %v2889, %v2255
        %v2891 = vadd.f32 %v2890, %v2257
        %v2892 = vadd.f32 %v2891, %v2260
        %v2893 = vadd.f32 %v2892, %v2262
        %v2894 = vadd.f32 %v2893, %v2265
        %v2895 = vadd.f32 %v2894, %v2267
        %v2896 = vadd.f32 %v2895, %v2270
        %v2897 = vadd.f32 %v2896, %v2272
        %v2898 = vrot.slane %v2897, 4
        %v2899 = vadd.f32 %v2897, %v2898
        %v2900 = vrot.slane %v2899, 2
        %v2901 = vadd.f32 %v2899, %v2900
        %v2902 = vrot.slane %v2901, 1
        %v2903 = vadd.f32 %v2901, %v2902
        %v2904 = vadd.f32 %v2333, %v2335
        %v2905 = vadd.f32 %v2904, %v2338
        %v2906 = vadd.f32 %v2905, %v2340
        %v2907 = vadd.f32 %v2906, %v2343
        %v2908 = vadd.f32 %v2907, %v2345
        %v2909 = vadd.f32 %v2908, %v2348
        %v2910 = vadd.f32 %v2909, %v2350
        %v2911 = vadd.f32 %v2910, %v2353
        %v2912 = vadd.f32 %v2911, %v2355
        %v2913 = vadd.f32 %v2912, %v2358
        %v2914 = vadd.f32 %v2913, %v2360
        %v2915 = vadd.f32 %v2914, %v2363
        %v2916 = vadd.f32 %v2915, %v2365
        %v2917 = vadd.f32 %v2916, %v2368
        %v2918 = vadd.f32 %v2917, %v2370
        %v2919 = vrot.slane %v2918, 4
        %v2920 = vadd.f32 %v2918, %v2919
        %v2921 = vrot.slane %v2920, 2
        %v2922 = vadd.f32 %v2920, %v2921
        %v2923 = vrot.slane %v2922, 1
        %v2924 = vadd.f32 %v2922, %v2923
        %v2925 = vadd.f32 %v2431, %v2433
        %v2926 = vadd.f32 %v2925, %v2436
        %v2927 = vadd.f32 %v2926, %v2438
        %v2928 = vadd.f32 %v2927, %v2441
        %v2929 = vadd.f32 %v2928, %v2443
        %v2930 = vadd.f32 %v2929, %v2446
        %v2931 = vadd.f32 %v2930, %v2448
        %v2932 = vadd.f32 %v2931, %v2451
        %v2933 = vadd.f32 %v2932, %v2453
        %v2934 = vadd.f32 %v2933, %v2456
        %v2935 = vadd.f32 %v2934, %v2458
        %v2936 = vadd.f32 %v2935, %v2461
        %v2937 = vadd.f32 %v2936, %v2463
        %v2938 = vadd.f32 %v2937, %v2466
        %v2939 = vadd.f32 %v2938, %v2468
        %v2940 = vrot.slane %v2939, 4
        %v2941 = vadd.f32 %v2939, %v2940
        %v2942 = vrot.slane %v2941, 2
        %v2943 = vadd.f32 %v2941, %v2942
        %v2944 = vrot.slane %v2943, 1
        %v2945 = vadd.f32 %v2943, %v2944
        %v2946 = vadd.f32 %v2529, %v2531
        %v2947 = vadd.f32 %v2946, %v2534
        %v2948 = vadd.f32 %v2947, %v2536
        %v2949 = vadd.f32 %v2948, %v2539
        %v2950 = vadd.f32 %v2949, %v2541
        %v2951 = vadd.f32 %v2950, %v2544
        %v2952 = vadd.f32 %v2951, %v2546
        %v2953 = vadd.f32 %v2952, %v2549
        %v2954 = vadd.f32 %v2953, %v2551
        %v2955 = vadd.f32 %v2954, %v2554
        %v2956 = vadd.f32 %v2955, %v2556
        %v2957 = vadd.f32 %v2956, %v2559
        %v2958 = vadd.f32 %v2957, %v2561
        %v2959 = vadd.f32 %v2958, %v2564
        %v2960 = vadd.f32 %v2959, %v2566
        %v2961 = vrot.slane %v2960, 4
        %v2962 = vadd.f32 %v2960, %v2961
        %v2963 = vrot.slane %v2962, 2
        %v2964 = vadd.f32 %v2962, %v2963
        %v2965 = vrot.slane %v2964, 1
        %v2966 = vadd.f32 %v2964, %v2965
        %v2967 = vadd.f32 %v2627, %v2629
        %v2968 = vadd.f32 %v2967, %v2632
        %v2969 = vadd.f32 %v2968, %v2634
        %v2970 = vadd.f32 %v2969, %v2637
        %v2971 = vadd.f32 %v2970, %v2639
        %v2972 = vadd.f32 %v2971, %v2642
        %v2973 = vadd.f32 %v2972, %v2644
        %v2974 = vadd.f32 %v2973, %v2647
        %v2975 = vadd.f32 %v2974, %v2649
        %v2976 = vadd.f32 %v2975, %v2652
        %v2977 = vadd.f32 %v2976, %v2654
        %v2978 = vadd.f32 %v2977, %v2657
        %v2979 = vadd.f32 %v2978, %v2659
        %v2980 = vadd.f32 %v2979, %v2662
        %v2981 = vadd.f32 %v2980, %v2664
        %v2982 = vrot.slane %v2981, 4
        %v2983 = vadd.f32 %v2981, %v2982
        %v2984 = vrot.slane %v2983, 2
        %v2985 = vadd.f32 %v2983, %v2984
        %v2986 = vrot.slane %v2985, 1
        %v2987 = vadd.f32 %v2985, %v2986
        %v2988 = vadd.f32 %v2725, %v2727
        %v2989 = vadd.f32 %v2988, %v2730
        %v2990 = vadd.f32 %v2989, %v2732
        %v2991 = vadd.f32 %v2990, %v2735
        %v2992 = vadd.f32 %v2991, %v2737
        %v2993 = vadd.f32 %v2992, %v2740
        %v2994 = vadd.f32 %v2993, %v2742
        %v2995 = vadd.f32 %v2994, %v2745
        %v2996 = vadd.f32 %v2995, %v2747
        %v2997 = vadd.f32 %v2996, %v2750
        %v2998 = vadd.f32 %v2997, %v2752
        %v2999 = vadd.f32 %v2998, %v2755
        %v3000 = vadd.f32 %v2999, %v2757
        %v3001 = vadd.f32 %v3000, %v2760
        %v3002 = vadd.f32 %v3001, %v2762
        %v3003 = vrot.slane %v3002, 4
        %v3004 = vadd.f32 %v3002, %v3003
        %v3005 = vrot.slane %v3004, 2
        %v3006 = vadd.f32 %v3004, %v3005
        %v3007 = vrot.slane %v3006, 1
        %v3008 = vadd.f32 %v3006, %v3007
        %v3009 = vadd.f32 %v2823, %v2825
        %v3010 = vadd.f32 %v3009, %v2828
        %v3011 = vadd.f32 %v3010, %v2830
        %v3012 = vadd.f32 %v3011, %v2833
        %v3013 = vadd.f32 %v3012, %v2835
        %v3014 = vadd.f32 %v3013, %v2838
        %v3015 = vadd.f32 %v3014, %v2840
        %v3016 = vadd.f32 %v3015, %v2843
        %v3017 = vadd.f32 %v3016, %v2845
        %v3018 = vadd.f32 %v3017, %v2848
        %v3019 = vadd.f32 %v3018, %v2850
        %v3020 = vadd.f32 %v3019, %v2853
        %v3021 = vadd.f32 %v3020, %v2855
        %v3022 = vadd.f32 %v3021, %v2858
        %v3023 = vadd.f32 %v3022, %v2860
        %v3024 = vrot.slane %v3023, 4
        %v3025 = vadd.f32 %v3023, %v3024
        %v3026 = vrot.slane %v3025, 2
        %v3027 = vadd.f32 %v3025, %v3026
        %v3028 = vrot.slane %v3027, 1
        %v3029 = vadd.f32 %v3027, %v3028
        %v3030 = vmul.f32 %v2882, %v1040
        %v3031 = vmul.f32 %v2903, %v1040
        %v3032 = vmul.f32 %v2924, %v1040
        %v3033 = vmul.f32 %v2945, %v1040
        %v3034 = vmul.f32 %v2966, %v1040
        %v3035 = vmul.f32 %v2987, %v1040
        %v3036 = vmul.f32 %v3008, %v1040
        %v3037 = vmul.f32 %v3029, %v1040
        %v3038 = vmul.f32 %v2137, %v2137
        %v3039 = vmul.f32 %v2235, %v2235
        %v3040 = vmul.f32 %v2333, %v2333
        %v3041 = vmul.f32 %v2431, %v2431
        %v3042 = vmul.f32 %v2529, %v2529
        %v3043 = vmul.f32 %v2627, %v2627
        %v3044 = vmul.f32 %v2725, %v2725
        %v3045 = vmul.f32 %v2823, %v2823
        %v3046 = vmul.f32 %v2139, %v2139
        %v3047 = vmul.f32 %v2237, %v2237
        %v3048 = vmul.f32 %v2335, %v2335
        %v3049 = vmul.f32 %v2433, %v2433
        %v3050 = vmul.f32 %v2531, %v2531
        %v3051 = vmul.f32 %v2629, %v2629
        %v3052 = vmul.f32 %v2727, %v2727
        %v3053 = vmul.f32 %v2825, %v2825
        %v3054 = vmul.f32 %v2142, %v2142
        %v3055 = vmul.f32 %v2240, %v2240
        %v3056 = vmul.f32 %v2338, %v2338
        %v3057 = vmul.f32 %v2436, %v2436
        %v3058 = vmul.f32 %v2534, %v2534
        %v3059 = vmul.f32 %v2632, %v2632
        %v3060 = vmul.f32 %v2730, %v2730
        %v3061 = vmul.f32 %v2828, %v2828
        %v3062 = vmul.f32 %v2144, %v2144
        %v3063 = vmul.f32 %v2242, %v2242
        %v3064 = vmul.f32 %v2340, %v2340
        %v3065 = vmul.f32 %v2438, %v2438
        %v3066 = vmul.f32 %v2536, %v2536
        %v3067 = vmul.f32 %v2634, %v2634
        %v3068 = vmul.f32 %v2732, %v2732
        %v3069 = vmul.f32 %v2830, %v2830
        %v3070 = vmul.f32 %v2147, %v2147
        %v3071 = vmul.f32 %v2245, %v2245
        %v3072 = vmul.f32 %v2343, %v2343
        %v3073 = vmul.f32 %v2441, %v2441
        %v3074 = vmul.f32 %v2539, %v2539
        %v3075 = vmul.f32 %v2637, %v2637
        %v3076 = vmul.f32 %v2735, %v2735
        %v3077 = vmul.f32 %v2833, %v2833
        %v3078 = vmul.f32 %v2149, %v2149
        %v3079 = vmul.f32 %v2247, %v2247
        %v3080 = vmul.f32 %v2345, %v2345
        %v3081 = vmul.f32 %v2443, %v2443
        %v3082 = vmul.f32 %v2541, %v2541
        %v3083 = vmul.f32 %v2639, %v2639
        %v3084 = vmul.f32 %v2737, %v2737
        %v3085 = vmul.f32 %v2835, %v2835
        %v3086 = vmul.f32 %v2152, %v2152
        %v3087 = vmul.f32 %v2250, %v2250
        %v3088 = vmul.f32 %v2348, %v2348
        %v3089 = vmul.f32 %v2446, %v2446
        %v3090 = vmul.f32 %v2544, %v2544
        %v3091 = vmul.f32 %v2642, %v2642
        %v3092 = vmul.f32 %v2740, %v2740
        %v3093 = vmul.f32 %v2838, %v2838
        %v3094 = vmul.f32 %v2154, %v2154
        %v3095 = vmul.f32 %v2252, %v2252
        %v3096 = vmul.f32 %v2350, %v2350
        %v3097 = vmul.f32 %v2448, %v2448
        %v3098 = vmul.f32 %v2546, %v2546
        %v3099 = vmul.f32 %v2644, %v2644
        %v3100 = vmul.f32 %v2742, %v2742
        %v3101 = vmul.f32 %v2840, %v2840
        %v3102 = vmul.f32 %v2157, %v2157
        %v3103 = vmul.f32 %v2255, %v2255
        %v3104 = vmul.f32 %v2353, %v2353
        %v3105 = vmul.f32 %v2451, %v2451
        %v3106 = vmul.f32 %v2549, %v2549
        %v3107 = vmul.f32 %v2647, %v2647
        %v3108 = vmul.f32 %v2745, %v2745
        %v3109 = vmul.f32 %v2843, %v2843
        %v3110 = vmul.f32 %v2159, %v2159
        %v3111 = vmul.f32 %v2257, %v2257
        %v3112 = vmul.f32 %v2355, %v2355
        %v3113 = vmul.f32 %v2453, %v2453
        %v3114 = vmul.f32 %v2551, %v2551
        %v3115 = vmul.f32 %v2649, %v2649
        %v3116 = vmul.f32 %v2747, %v2747
        %v3117 = vmul.f32 %v2845, %v2845
        %v3118 = vmul.f32 %v2162, %v2162
        %v3119 = vmul.f32 %v2260, %v2260
        %v3120 = vmul.f32 %v2358, %v2358
        %v3121 = vmul.f32 %v2456, %v2456
        %v3122 = vmul.f32 %v2554, %v2554
        %v3123 = vmul.f32 %v2652, %v2652
        %v3124 = vmul.f32 %v2750, %v2750
        %v3125 = vmul.f32 %v2848, %v2848
        %v3126 = vmul.f32 %v2164, %v2164
        %v3127 = vmul.f32 %v2262, %v2262
        %v3128 = vmul.f32 %v2360, %v2360
        %v3129 = vmul.f32 %v2458, %v2458
        %v3130 = vmul.f32 %v2556, %v2556
        %v3131 = vmul.f32 %v2654, %v2654
        %v3132 = vmul.f32 %v2752, %v2752
        %v3133 = vmul.f32 %v2850, %v2850
        %v3134 = vmul.f32 %v2167, %v2167
        %v3135 = vmul.f32 %v2265, %v2265
        %v3136 = vmul.f32 %v2363, %v2363
        %v3137 = vmul.f32 %v2461, %v2461
        %v3138 = vmul.f32 %v2559, %v2559
        %v3139 = vmul.f32 %v2657, %v2657
        %v3140 = vmul.f32 %v2755, %v2755
        %v3141 = vmul.f32 %v2853, %v2853
        %v3142 = vmul.f32 %v2169, %v2169
        %v3143 = vmul.f32 %v2267, %v2267
        %v3144 = vmul.f32 %v2365, %v2365
        %v3145 = vmul.f32 %v2463, %v2463
        %v3146 = vmul.f32 %v2561, %v2561
        %v3147 = vmul.f32 %v2659, %v2659
        %v3148 = vmul.f32 %v2757, %v2757
        %v3149 = vmul.f32 %v2855, %v2855
        %v3150 = vmul.f32 %v2172, %v2172
        %v3151 = vmul.f32 %v2270, %v2270
        %v3152 = vmul.f32 %v2368, %v2368
        %v3153 = vmul.f32 %v2466, %v2466
        %v3154 = vmul.f32 %v2564, %v2564
        %v3155 = vmul.f32 %v2662, %v2662
        %v3156 = vmul.f32 %v2760, %v2760
        %v3157 = vmul.f32 %v2858, %v2858
        %v3158 = vmul.f32 %v2174, %v2174
        %v3159 = vmul.f32 %v2272, %v2272
        %v3160 = vmul.f32 %v2370, %v2370
        %v3161 = vmul.f32 %v2468, %v2468
        %v3162 = vmul.f32 %v2566, %v2566
        %v3163 = vmul.f32 %v2664, %v2664
        %v3164 = vmul.f32 %v2762, %v2762
        %v3165 = vmul.f32 %v2860, %v2860
        %v3166 = vadd.f32 %v3038, %v3046
        %v3167 = vadd.f32 %v3166, %v3054
        %v3168 = vadd.f32 %v3167, %v3062
        %v3169 = vadd.f32 %v3168, %v3070
        %v3170 = vadd.f32 %v3169, %v3078
        %v3171 = vadd.f32 %v3170, %v3086
        %v3172 = vadd.f32 %v3171, %v3094
        %v3173 = vadd.f32 %v3172, %v3102
        %v3174 = vadd.f32 %v3173, %v3110
        %v3175 = vadd.f32 %v3174, %v3118
        %v3176 = vadd.f32 %v3175, %v3126
        %v3177 = vadd.f32 %v3176, %v3134
        %v3178 = vadd.f32 %v3177, %v3142
        %v3179 = vadd.f32 %v3178, %v3150
        %v3180 = vadd.f32 %v3179, %v3158
        %v3181 = vrot.slane %v3180, 4
        %v3182 = vadd.f32 %v3180, %v3181
        %v3183 = vrot.slane %v3182, 2
        %v3184 = vadd.f32 %v3182, %v3183
        %v3185 = vrot.slane %v3184, 1
        %v3186 = vadd.f32 %v3184, %v3185
        %v3187 = vadd.f32 %v3039, %v3047
        %v3188 = vadd.f32 %v3187, %v3055
        %v3189 = vadd.f32 %v3188, %v3063
        %v3190 = vadd.f32 %v3189, %v3071
        %v3191 = vadd.f32 %v3190, %v3079
        %v3192 = vadd.f32 %v3191, %v3087
        %v3193 = vadd.f32 %v3192, %v3095
        %v3194 = vadd.f32 %v3193, %v3103
        %v3195 = vadd.f32 %v3194, %v3111
        %v3196 = vadd.f32 %v3195, %v3119
        %v3197 = vadd.f32 %v3196, %v3127
        %v3198 = vadd.f32 %v3197, %v3135
        %v3199 = vadd.f32 %v3198, %v3143
        %v3200 = vadd.f32 %v3199, %v3151
        %v3201 = vadd.f32 %v3200, %v3159
        %v3202 = vrot.slane %v3201, 4
        %v3203 = vadd.f32 %v3201, %v3202
        %v3204 = vrot.slane %v3203, 2
        %v3205 = vadd.f32 %v3203, %v3204
        %v3206 = vrot.slane %v3205, 1
        %v3207 = vadd.f32 %v3205, %v3206
        %v3208 = vadd.f32 %v3040, %v3048
        %v3209 = vadd.f32 %v3208, %v3056
        %v3210 = vadd.f32 %v3209, %v3064
        %v3211 = vadd.f32 %v3210, %v3072
        %v3212 = vadd.f32 %v3211, %v3080
        %v3213 = vadd.f32 %v3212, %v3088
        %v3214 = vadd.f32 %v3213, %v3096
        %v3215 = vadd.f32 %v3214, %v3104
        %v3216 = vadd.f32 %v3215, %v3112
        %v3217 = vadd.f32 %v3216, %v3120
        %v3218 = vadd.f32 %v3217, %v3128
        %v3219 = vadd.f32 %v3218, %v3136
        %v3220 = vadd.f32 %v3219, %v3144
        %v3221 = vadd.f32 %v3220, %v3152
        %v3222 = vadd.f32 %v3221, %v3160
        %v3223 = vrot.slane %v3222, 4
        %v3224 = vadd.f32 %v3222, %v3223
        %v3225 = vrot.slane %v3224, 2
        %v3226 = vadd.f32 %v3224, %v3225
        %v3227 = vrot.slane %v3226, 1
        %v3228 = vadd.f32 %v3226, %v3227
        %v3229 = vadd.f32 %v3041, %v3049
        %v3230 = vadd.f32 %v3229, %v3057
        %v3231 = vadd.f32 %v3230, %v3065
        %v3232 = vadd.f32 %v3231, %v3073
        %v3233 = vadd.f32 %v3232, %v3081
        %v3234 = vadd.f32 %v3233, %v3089
        %v3235 = vadd.f32 %v3234, %v3097
        %v3236 = vadd.f32 %v3235, %v3105
        %v3237 = vadd.f32 %v3236, %v3113
        %v3238 = vadd.f32 %v3237, %v3121
        %v3239 = vadd.f32 %v3238, %v3129
        %v3240 = vadd.f32 %v3239, %v3137
        %v3241 = vadd.f32 %v3240, %v3145
        %v3242 = vadd.f32 %v3241, %v3153
        %v3243 = vadd.f32 %v3242, %v3161
        %v3244 = vrot.slane %v3243, 4
        %v3245 = vadd.f32 %v3243, %v3244
        %v3246 = vrot.slane %v3245, 2
        %v3247 = vadd.f32 %v3245, %v3246
        %v3248 = vrot.slane %v3247, 1
        %v3249 = vadd.f32 %v3247, %v3248
        %v3250 = vadd.f32 %v3042, %v3050
        %v3251 = vadd.f32 %v3250, %v3058
        %v3252 = vadd.f32 %v3251, %v3066
        %v3253 = vadd.f32 %v3252, %v3074
        %v3254 = vadd.f32 %v3253, %v3082
        %v3255 = vadd.f32 %v3254, %v3090
        %v3256 = vadd.f32 %v3255, %v3098
        %v3257 = vadd.f32 %v3256, %v3106
        %v3258 = vadd.f32 %v3257, %v3114
        %v3259 = vadd.f32 %v3258, %v3122
        %v3260 = vadd.f32 %v3259, %v3130
        %v3261 = vadd.f32 %v3260, %v3138
        %v3262 = vadd.f32 %v3261, %v3146
        %v3263 = vadd.f32 %v3262, %v3154
        %v3264 = vadd.f32 %v3263, %v3162
        %v3265 = vrot.slane %v3264, 4
        %v3266 = vadd.f32 %v3264, %v3265
        %v3267 = vrot.slane %v3266, 2
        %v3268 = vadd.f32 %v3266, %v3267
        %v3269 = vrot.slane %v3268, 1
        %v3270 = vadd.f32 %v3268, %v3269
        %v3271 = vadd.f32 %v3043, %v3051
        %v3272 = vadd.f32 %v3271, %v3059
        %v3273 = vadd.f32 %v3272, %v3067
        %v3274 = vadd.f32 %v3273, %v3075
        %v3275 = vadd.f32 %v3274, %v3083
        %v3276 = vadd.f32 %v3275, %v3091
        %v3277 = vadd.f32 %v3276, %v3099
        %v3278 = vadd.f32 %v3277, %v3107
        %v3279 = vadd.f32 %v3278, %v3115
        %v3280 = vadd.f32 %v3279, %v3123
        %v3281 = vadd.f32 %v3280, %v3131
        %v3282 = vadd.f32 %v3281, %v3139
        %v3283 = vadd.f32 %v3282, %v3147
        %v3284 = vadd.f32 %v3283, %v3155
        %v3285 = vadd.f32 %v3284, %v3163
        %v3286 = vrot.slane %v3285, 4
        %v3287 = vadd.f32 %v3285, %v3286
        %v3288 = vrot.slane %v3287, 2
        %v3289 = vadd.f32 %v3287, %v3288
        %v3290 = vrot.slane %v3289, 1
        %v3291 = vadd.f32 %v3289, %v3290
        %v3292 = vadd.f32 %v3044, %v3052
        %v3293 = vadd.f32 %v3292, %v3060
        %v3294 = vadd.f32 %v3293, %v3068
        %v3295 = vadd.f32 %v3294, %v3076
        %v3296 = vadd.f32 %v3295, %v3084
        %v3297 = vadd.f32 %v3296, %v3092
        %v3298 = vadd.f32 %v3297, %v3100
        %v3299 = vadd.f32 %v3298, %v3108
        %v3300 = vadd.f32 %v3299, %v3116
        %v3301 = vadd.f32 %v3300, %v3124
        %v3302 = vadd.f32 %v3301, %v3132
        %v3303 = vadd.f32 %v3302, %v3140
        %v3304 = vadd.f32 %v3303, %v3148
        %v3305 = vadd.f32 %v3304, %v3156
        %v3306 = vadd.f32 %v3305, %v3164
        %v3307 = vrot.slane %v3306, 4
        %v3308 = vadd.f32 %v3306, %v3307
        %v3309 = vrot.slane %v3308, 2
        %v3310 = vadd.f32 %v3308, %v3309
        %v3311 = vrot.slane %v3310, 1
        %v3312 = vadd.f32 %v3310, %v3311
        %v3313 = vadd.f32 %v3045, %v3053
        %v3314 = vadd.f32 %v3313, %v3061
        %v3315 = vadd.f32 %v3314, %v3069
        %v3316 = vadd.f32 %v3315, %v3077
        %v3317 = vadd.f32 %v3316, %v3085
        %v3318 = vadd.f32 %v3317, %v3093
        %v3319 = vadd.f32 %v3318, %v3101
        %v3320 = vadd.f32 %v3319, %v3109
        %v3321 = vadd.f32 %v3320, %v3117
        %v3322 = vadd.f32 %v3321, %v3125
        %v3323 = vadd.f32 %v3322, %v3133
        %v3324 = vadd.f32 %v3323, %v3141
        %v3325 = vadd.f32 %v3324, %v3149
        %v3326 = vadd.f32 %v3325, %v3157
        %v3327 = vadd.f32 %v3326, %v3165
        %v3328 = vrot.slane %v3327, 4
        %v3329 = vadd.f32 %v3327, %v3328
        %v3330 = vrot.slane %v3329, 2
        %v3331 = vadd.f32 %v3329, %v3330
        %v3332 = vrot.slane %v3331, 1
        %v3333 = vadd.f32 %v3331, %v3332
        %v3334 = vmul.f32 %v3186, %v1040
        %v3335 = vmul.f32 %v3207, %v1040
        %v3336 = vmul.f32 %v3228, %v1040
        %v3337 = vmul.f32 %v3249, %v1040
        %v3338 = vmul.f32 %v3270, %v1040
        %v3339 = vmul.f32 %v3291, %v1040
        %v3340 = vmul.f32 %v3312, %v1040
        %v3341 = vmul.f32 %v3333, %v1040
        %v3342 = vmul.f32 %v3030, %v3030
        %v3343 = vmul.f32 %v3031, %v3031
        %v3344 = vmul.f32 %v3032, %v3032
        %v3345 = vmul.f32 %v3033, %v3033
        %v3346 = vmul.f32 %v3034, %v3034
        %v3347 = vmul.f32 %v3035, %v3035
        %v3348 = vmul.f32 %v3036, %v3036
        %v3349 = vmul.f32 %v3037, %v3037
        %v3350 = vsub.f32 %v3334, %v3342
        %v3351 = vsub.f32 %v3335, %v3343
        %v3352 = vsub.f32 %v3336, %v3344
        %v3353 = vsub.f32 %v3337, %v3345
        %v3354 = vsub.f32 %v3338, %v3346
        %v3355 = vsub.f32 %v3339, %v3347
        %v3356 = vsub.f32 %v3340, %v3348
        %v3357 = vsub.f32 %v3341, %v3349
        %v3358 = vadd.f32 %v3350, 1e-05
        %v3359 = vadd.f32 %v3351, 1e-05
        %v3360 = vadd.f32 %v3352, 1e-05
        %v3361 = vadd.f32 %v3353, 1e-05
        %v3362 = vadd.f32 %v3354, 1e-05
        %v3363 = vadd.f32 %v3355, 1e-05
        %v3364 = vadd.f32 %v3356, 1e-05
        %v3365 = vadd.f32 %v3357, 1e-05
        %v3366 = vrsqrt.pop %v3358
        %v3367 = vmul.f32 %v3366, %v3358
        %v3368 = vmul.f32 %v3367, %v3366
        %v3369 = vmul.f32 0.5, %v3368
        %v3370 = vsub.f32 1.5, %v3369
        %v3371 = vmul.f32 %v3366, %v3370
        %vm3372 = vweird.f32 %v3358
        %vm3373 = vweird.f32 %v3366
        %vm3374 = vmor %vm3372, %vm3373
        %v3375 = vsel %vm3374, %v3366, %v3371
        %v3376 = vrsqrt.pop %v3359
        %v3377 = vmul.f32 %v3376, %v3359
        %v3378 = vmul.f32 %v3377, %v3376
        %v3379 = vmul.f32 0.5, %v3378
        %v3380 = vsub.f32 1.5, %v3379
        %v3381 = vmul.f32 %v3376, %v3380
        %vm3382 = vweird.f32 %v3359
        %vm3383 = vweird.f32 %v3376
        %vm3384 = vmor %vm3382, %vm3383
        %v3385 = vsel %vm3384, %v3376, %v3381
        %v3386 = vrsqrt.pop %v3360
        %v3387 = vmul.f32 %v3386, %v3360
        %v3388 = vmul.f32 %v3387, %v3386
        %v3389 = vmul.f32 0.5, %v3388
        %v3390 = vsub.f32 1.5, %v3389
        %v3391 = vmul.f32 %v3386, %v3390
        %vm3392 = vweird.f32 %v3360
        %vm3393 = vweird.f32 %v3386
        %vm3394 = vmor %vm3392, %vm3393
        %v3395 = vsel %vm3394, %v3386, %v3391
        %v3396 = vrsqrt.pop %v3361
        %v3397 = vmul.f32 %v3396, %v3361
        %v3398 = vmul.f32 %v3397, %v3396
        %v3399 = vmul.f32 0.5, %v3398
        %v3400 = vsub.f32 1.5, %v3399
        %v3401 = vmul.f32 %v3396, %v3400
        %vm3402 = vweird.f32 %v3361
        %vm3403 = vweird.f32 %v3396
        %vm3404 = vmor %vm3402, %vm3403
        %v3405 = vsel %vm3404, %v3396, %v3401
        %v3406 = vrsqrt.pop %v3362
        %v3407 = vmul.f32 %v3406, %v3362
        %v3408 = vmul.f32 %v3407, %v3406
        %v3409 = vmul.f32 0.5, %v3408
        %v3410 = vsub.f32 1.5, %v3409
        %v3411 = vmul.f32 %v3406, %v3410
        %vm3412 = vweird.f32 %v3362
        %vm3413 = vweird.f32 %v3406
        %vm3414 = vmor %vm3412, %vm3413
        %v3415 = vsel %vm3414, %v3406, %v3411
        %v3416 = vrsqrt.pop %v3363
        %v3417 = vmul.f32 %v3416, %v3363
        %v3418 = vmul.f32 %v3417, %v3416
        %v3419 = vmul.f32 0.5, %v3418
        %v3420 = vsub.f32 1.5, %v3419
        %v3421 = vmul.f32 %v3416, %v3420
        %vm3422 = vweird.f32 %v3363
        %vm3423 = vweird.f32 %v3416
        %vm3424 = vmor %vm3422, %vm3423
        %v3425 = vsel %vm3424, %v3416, %v3421
        %v3426 = vrsqrt.pop %v3364
        %v3427 = vmul.f32 %v3426, %v3364
        %v3428 = vmul.f32 %v3427, %v3426
        %v3429 = vmul.f32 0.5, %v3428
        %v3430 = vsub.f32 1.5, %v3429
        %v3431 = vmul.f32 %v3426, %v3430
        %vm3432 = vweird.f32 %v3364
        %vm3433 = vweird.f32 %v3426
        %vm3434 = vmor %vm3432, %vm3433
        %v3435 = vsel %vm3434, %v3426, %v3431
        %v3436 = vrsqrt.pop %v3365
        %v3437 = vmul.f32 %v3436, %v3365
        %v3438 = vmul.f32 %v3437, %v3436
        %v3439 = vmul.f32 0.5, %v3438
        %v3440 = vsub.f32 1.5, %v3439
        %v3441 = vmul.f32 %v3436, %v3440
        %vm3442 = vweird.f32 %v3365
        %vm3443 = vweird.f32 %v3436
        %vm3444 = vmor %vm3442, %vm3443
        %v3445 = vsel %vm3444, %v3436, %v3441
        %v3454 = vrot.slane %v3385, 7
        %v3455 = vrot.slane %v3395, 6
        %v3456 = vrot.slane %v3405, 5
        %v3457 = vrot.slane %v3415, 4
        %v3458 = vrot.slane %v3425, 3
        %v3459 = vrot.slane %v3435, 2
        %v3460 = vrot.slane %v3445, 1
        %v3461 = vsel %vm1148, %v3375, %v3454
        %vm3462 = vcmask 1042434
        %v3463 = vsel %vm3462, %v3455, %v3456
        %vm3464 = vcmask 1041408
        %v3465 = vsel %vm3464, %v3461, %v3463
        %vm3466 = vcmask 1044484
        %v3467 = vsel %vm3466, %v3457, %v3458
        %vm3468 = vcmask 1046534
        %v3469 = vsel %vm3468, %v3459, %v3460
        %vm3470 = vcmask 1045508
        %v3471 = vsel %vm3470, %v3467, %v3469
        %vm3472 = vcmask 1043456
        %v3473 = vsel %vm3472, %v3465, %v3471
        %v3475 = vmul.f32 %v1416, %v3473
        %v3477 = vperm.slane %v3475, 0
        %v3478 = vperm.slane %v3475, 1
        %v3479 = vperm.slane %v3475, 2
        %v3480 = vperm.slane %v3475, 3
        %v3481 = vperm.slane %v3475, 4
        %v3482 = vperm.slane %v3475, 5
        %v3483 = vperm.slane %v3475, 6
        %v3484 = vperm.slane %v3475, 7
        %v3493 = vmul.f32 %v3030, %v3477
        %v3494 = vmul.f32 %v3031, %v3478
        %v3495 = vmul.f32 %v3032, %v3479
        %v3496 = vmul.f32 %v3033, %v3480
        %v3497 = vmul.f32 %v3034, %v3481
        %v3498 = vmul.f32 %v3035, %v3482
        %v3499 = vmul.f32 %v3036, %v3483
        %v3500 = vmul.f32 %v3037, %v3484
        %v3509 = vrot.slane %v3494, 7
        %v3510 = vrot.slane %v3495, 6
        %v3511 = vrot.slane %v3496, 5
        %v3512 = vrot.slane %v3497, 4
        %v3513 = vrot.slane %v3498, 3
        %v3514 = vrot.slane %v3499, 2
        %v3515 = vrot.slane %v3500, 1
        %v3516 = vsel %vm1148, %v3493, %v3509
        %v3517 = vsel %vm3462, %v3510, %v3511
        %v3518 = vsel %vm3464, %v3516, %v3517
        %v3519 = vsel %vm3466, %v3512, %v3513
        %v3520 = vsel %vm3468, %v3514, %v3515
        %v3521 = vsel %vm3470, %v3519, %v3520
        %v3522 = vsel %vm3472, %v3518, %v3521
        %v3524 = vsub.f32 %v1420, %v3522
        %v3525 = vmul.f32 %v2137, %v3477
        %v3526 = vmul.f32 %v2235, %v3478
        %v3527 = vmul.f32 %v2333, %v3479
        %v3528 = vmul.f32 %v2431, %v3480
        %v3529 = vmul.f32 %v2529, %v3481
        %v3530 = vmul.f32 %v2627, %v3482
        %v3531 = vmul.f32 %v2725, %v3483
        %v3532 = vmul.f32 %v2823, %v3484
        %v3533 = vmul.f32 %v2139, %v3477
        %v3534 = vmul.f32 %v2237, %v3478
        %v3535 = vmul.f32 %v2335, %v3479
        %v3536 = vmul.f32 %v2433, %v3480
        %v3537 = vmul.f32 %v2531, %v3481
        %v3538 = vmul.f32 %v2629, %v3482
        %v3539 = vmul.f32 %v2727, %v3483
        %v3540 = vmul.f32 %v2825, %v3484
        %v3541 = vmul.f32 %v2142, %v3477
        %v3542 = vmul.f32 %v2240, %v3478
        %v3543 = vmul.f32 %v2338, %v3479
        %v3544 = vmul.f32 %v2436, %v3480
        %v3545 = vmul.f32 %v2534, %v3481
        %v3546 = vmul.f32 %v2632, %v3482
        %v3547 = vmul.f32 %v2730, %v3483
        %v3548 = vmul.f32 %v2828, %v3484
        %v3549 = vmul.f32 %v2144, %v3477
        %v3550 = vmul.f32 %v2242, %v3478
        %v3551 = vmul.f32 %v2340, %v3479
        %v3552 = vmul.f32 %v2438, %v3480
        %v3553 = vmul.f32 %v2536, %v3481
        %v3554 = vmul.f32 %v2634, %v3482
        %v3555 = vmul.f32 %v2732, %v3483
        %v3556 = vmul.f32 %v2830, %v3484
        %v3557 = vmul.f32 %v2147, %v3477
        %v3558 = vmul.f32 %v2245, %v3478
        %v3559 = vmul.f32 %v2343, %v3479
        %v3560 = vmul.f32 %v2441, %v3480
        %v3561 = vmul.f32 %v2539, %v3481
        %v3562 = vmul.f32 %v2637, %v3482
        %v3563 = vmul.f32 %v2735, %v3483
        %v3564 = vmul.f32 %v2833, %v3484
        %v3565 = vmul.f32 %v2149, %v3477
        %v3566 = vmul.f32 %v2247, %v3478
        %v3567 = vmul.f32 %v2345, %v3479
        %v3568 = vmul.f32 %v2443, %v3480
        %v3569 = vmul.f32 %v2541, %v3481
        %v3570 = vmul.f32 %v2639, %v3482
        %v3571 = vmul.f32 %v2737, %v3483
        %v3572 = vmul.f32 %v2835, %v3484
        %v3573 = vmul.f32 %v2152, %v3477
        %v3574 = vmul.f32 %v2250, %v3478
        %v3575 = vmul.f32 %v2348, %v3479
        %v3576 = vmul.f32 %v2446, %v3480
        %v3577 = vmul.f32 %v2544, %v3481
        %v3578 = vmul.f32 %v2642, %v3482
        %v3579 = vmul.f32 %v2740, %v3483
        %v3580 = vmul.f32 %v2838, %v3484
        %v3581 = vmul.f32 %v2154, %v3477
        %v3582 = vmul.f32 %v2252, %v3478
        %v3583 = vmul.f32 %v2350, %v3479
        %v3584 = vmul.f32 %v2448, %v3480
        %v3585 = vmul.f32 %v2546, %v3481
        %v3586 = vmul.f32 %v2644, %v3482
        %v3587 = vmul.f32 %v2742, %v3483
        %v3588 = vmul.f32 %v2840, %v3484
        %v3589 = vmul.f32 %v2157, %v3477
        %v3590 = vmul.f32 %v2255, %v3478
        %v3591 = vmul.f32 %v2353, %v3479
        %v3592 = vmul.f32 %v2451, %v3480
        %v3593 = vmul.f32 %v2549, %v3481
        %v3594 = vmul.f32 %v2647, %v3482
        %v3595 = vmul.f32 %v2745, %v3483
        %v3596 = vmul.f32 %v2843, %v3484
        %v3597 = vmul.f32 %v2159, %v3477
        %v3598 = vmul.f32 %v2257, %v3478
        %v3599 = vmul.f32 %v2355, %v3479
        %v3600 = vmul.f32 %v2453, %v3480
        %v3601 = vmul.f32 %v2551, %v3481
        %v3602 = vmul.f32 %v2649, %v3482
        %v3603 = vmul.f32 %v2747, %v3483
        %v3604 = vmul.f32 %v2845, %v3484
        %v3605 = vmul.f32 %v2162, %v3477
        %v3606 = vmul.f32 %v2260, %v3478
        %v3607 = vmul.f32 %v2358, %v3479
        %v3608 = vmul.f32 %v2456, %v3480
        %v3609 = vmul.f32 %v2554, %v3481
        %v3610 = vmul.f32 %v2652, %v3482
        %v3611 = vmul.f32 %v2750, %v3483
        %v3612 = vmul.f32 %v2848, %v3484
        %v3613 = vmul.f32 %v2164, %v3477
        %v3614 = vmul.f32 %v2262, %v3478
        %v3615 = vmul.f32 %v2360, %v3479
        %v3616 = vmul.f32 %v2458, %v3480
        %v3617 = vmul.f32 %v2556, %v3481
        %v3618 = vmul.f32 %v2654, %v3482
        %v3619 = vmul.f32 %v2752, %v3483
        %v3620 = vmul.f32 %v2850, %v3484
        %v3621 = vmul.f32 %v2167, %v3477
        %v3622 = vmul.f32 %v2265, %v3478
        %v3623 = vmul.f32 %v2363, %v3479
        %v3624 = vmul.f32 %v2461, %v3480
        %v3625 = vmul.f32 %v2559, %v3481
        %v3626 = vmul.f32 %v2657, %v3482
        %v3627 = vmul.f32 %v2755, %v3483
        %v3628 = vmul.f32 %v2853, %v3484
        %v3629 = vmul.f32 %v2169, %v3477
        %v3630 = vmul.f32 %v2267, %v3478
        %v3631 = vmul.f32 %v2365, %v3479
        %v3632 = vmul.f32 %v2463, %v3480
        %v3633 = vmul.f32 %v2561, %v3481
        %v3634 = vmul.f32 %v2659, %v3482
        %v3635 = vmul.f32 %v2757, %v3483
        %v3636 = vmul.f32 %v2855, %v3484
        %v3637 = vmul.f32 %v2172, %v3477
        %v3638 = vmul.f32 %v2270, %v3478
        %v3639 = vmul.f32 %v2368, %v3479
        %v3640 = vmul.f32 %v2466, %v3480
        %v3641 = vmul.f32 %v2564, %v3481
        %v3642 = vmul.f32 %v2662, %v3482
        %v3643 = vmul.f32 %v2760, %v3483
        %v3644 = vmul.f32 %v2858, %v3484
        %v3645 = vmul.f32 %v2174, %v3477
        %v3646 = vmul.f32 %v2272, %v3478
        %v3647 = vmul.f32 %v2370, %v3479
        %v3648 = vmul.f32 %v2468, %v3480
        %v3649 = vmul.f32 %v2566, %v3481
        %v3650 = vmul.f32 %v2664, %v3482
        %v3651 = vmul.f32 %v2762, %v3483
        %v3652 = vmul.f32 %v2860, %v3484
        %v3654 = vperm.slane %v3524, 0
        %v3655 = vperm.slane %v3524, 1
        %v3656 = vperm.slane %v3524, 2
        %v3657 = vperm.slane %v3524, 3
        %v3658 = vperm.slane %v3524, 4
        %v3659 = vperm.slane %v3524, 5
        %v3660 = vperm.slane %v3524, 6
        %v3661 = vperm.slane %v3524, 7
        %v3670 = vadd.f32 %v3525, %v3654
        %v3671 = vadd.f32 %v3526, %v3655
        %v3672 = vadd.f32 %v3527, %v3656
        %v3673 = vadd.f32 %v3528, %v3657
        %v3674 = vadd.f32 %v3529, %v3658
        %v3675 = vadd.f32 %v3530, %v3659
        %v3676 = vadd.f32 %v3531, %v3660
        %v3677 = vadd.f32 %v3532, %v3661
        %v3678 = vadd.f32 %v3533, %v3654
        %v3679 = vadd.f32 %v3534, %v3655
        %v3680 = vadd.f32 %v3535, %v3656
        %v3681 = vadd.f32 %v3536, %v3657
        %v3682 = vadd.f32 %v3537, %v3658
        %v3683 = vadd.f32 %v3538, %v3659
        %v3684 = vadd.f32 %v3539, %v3660
        %v3685 = vadd.f32 %v3540, %v3661
        %v3686 = vadd.f32 %v3541, %v3654
        %v3687 = vadd.f32 %v3542, %v3655
        %v3688 = vadd.f32 %v3543, %v3656
        %v3689 = vadd.f32 %v3544, %v3657
        %v3690 = vadd.f32 %v3545, %v3658
        %v3691 = vadd.f32 %v3546, %v3659
        %v3692 = vadd.f32 %v3547, %v3660
        %v3693 = vadd.f32 %v3548, %v3661
        %v3694 = vadd.f32 %v3549, %v3654
        %v3695 = vadd.f32 %v3550, %v3655
        %v3696 = vadd.f32 %v3551, %v3656
        %v3697 = vadd.f32 %v3552, %v3657
        %v3698 = vadd.f32 %v3553, %v3658
        %v3699 = vadd.f32 %v3554, %v3659
        %v3700 = vadd.f32 %v3555, %v3660
        %v3701 = vadd.f32 %v3556, %v3661
        %v3702 = vadd.f32 %v3557, %v3654
        %v3703 = vadd.f32 %v3558, %v3655
        %v3704 = vadd.f32 %v3559, %v3656
        %v3705 = vadd.f32 %v3560, %v3657
        %v3706 = vadd.f32 %v3561, %v3658
        %v3707 = vadd.f32 %v3562, %v3659
        %v3708 = vadd.f32 %v3563, %v3660
        %v3709 = vadd.f32 %v3564, %v3661
        %v3710 = vadd.f32 %v3565, %v3654
        %v3711 = vadd.f32 %v3566, %v3655
        %v3712 = vadd.f32 %v3567, %v3656
        %v3713 = vadd.f32 %v3568, %v3657
        %v3714 = vadd.f32 %v3569, %v3658
        %v3715 = vadd.f32 %v3570, %v3659
        %v3716 = vadd.f32 %v3571, %v3660
        %v3717 = vadd.f32 %v3572, %v3661
        %v3718 = vadd.f32 %v3573, %v3654
        %v3719 = vadd.f32 %v3574, %v3655
        %v3720 = vadd.f32 %v3575, %v3656
        %v3721 = vadd.f32 %v3576, %v3657
        %v3722 = vadd.f32 %v3577, %v3658
        %v3723 = vadd.f32 %v3578, %v3659
        %v3724 = vadd.f32 %v3579, %v3660
        %v3725 = vadd.f32 %v3580, %v3661
        %v3726 = vadd.f32 %v3581, %v3654
        %v3727 = vadd.f32 %v3582, %v3655
        %v3728 = vadd.f32 %v3583, %v3656
        %v3729 = vadd.f32 %v3584, %v3657
        %v3730 = vadd.f32 %v3585, %v3658
        %v3731 = vadd.f32 %v3586, %v3659
        %v3732 = vadd.f32 %v3587, %v3660
        %v3733 = vadd.f32 %v3588, %v3661
        %v3734 = vadd.f32 %v3589, %v3654
        %v3735 = vadd.f32 %v3590, %v3655
        %v3736 = vadd.f32 %v3591, %v3656
        %v3737 = vadd.f32 %v3592, %v3657
        %v3738 = vadd.f32 %v3593, %v3658
        %v3739 = vadd.f32 %v3594, %v3659
        %v3740 = vadd.f32 %v3595, %v3660
        %v3741 = vadd.f32 %v3596, %v3661
        %v3742 = vadd.f32 %v3597, %v3654
        %v3743 = vadd.f32 %v3598, %v3655
        %v3744 = vadd.f32 %v3599, %v3656
        %v3745 = vadd.f32 %v3600, %v3657
        %v3746 = vadd.f32 %v3601, %v3658
        %v3747 = vadd.f32 %v3602, %v3659
        %v3748 = vadd.f32 %v3603, %v3660
        %v3749 = vadd.f32 %v3604, %v3661
        %v3750 = vadd.f32 %v3605, %v3654
        %v3751 = vadd.f32 %v3606, %v3655
        %v3752 = vadd.f32 %v3607, %v3656
        %v3753 = vadd.f32 %v3608, %v3657
        %v3754 = vadd.f32 %v3609, %v3658
        %v3755 = vadd.f32 %v3610, %v3659
        %v3756 = vadd.f32 %v3611, %v3660
        %v3757 = vadd.f32 %v3612, %v3661
        %v3758 = vadd.f32 %v3613, %v3654
        %v3759 = vadd.f32 %v3614, %v3655
        %v3760 = vadd.f32 %v3615, %v3656
        %v3761 = vadd.f32 %v3616, %v3657
        %v3762 = vadd.f32 %v3617, %v3658
        %v3763 = vadd.f32 %v3618, %v3659
        %v3764 = vadd.f32 %v3619, %v3660
        %v3765 = vadd.f32 %v3620, %v3661
        %v3766 = vadd.f32 %v3621, %v3654
        %v3767 = vadd.f32 %v3622, %v3655
        %v3768 = vadd.f32 %v3623, %v3656
        %v3769 = vadd.f32 %v3624, %v3657
        %v3770 = vadd.f32 %v3625, %v3658
        %v3771 = vadd.f32 %v3626, %v3659
        %v3772 = vadd.f32 %v3627, %v3660
        %v3773 = vadd.f32 %v3628, %v3661
        %v3774 = vadd.f32 %v3629, %v3654
        %v3775 = vadd.f32 %v3630, %v3655
        %v3776 = vadd.f32 %v3631, %v3656
        %v3777 = vadd.f32 %v3632, %v3657
        %v3778 = vadd.f32 %v3633, %v3658
        %v3779 = vadd.f32 %v3634, %v3659
        %v3780 = vadd.f32 %v3635, %v3660
        %v3781 = vadd.f32 %v3636, %v3661
        %v3782 = vadd.f32 %v3637, %v3654
        %v3783 = vadd.f32 %v3638, %v3655
        %v3784 = vadd.f32 %v3639, %v3656
        %v3785 = vadd.f32 %v3640, %v3657
        %v3786 = vadd.f32 %v3641, %v3658
        %v3787 = vadd.f32 %v3642, %v3659
        %v3788 = vadd.f32 %v3643, %v3660
        %v3789 = vadd.f32 %v3644, %v3661
        %v3790 = vadd.f32 %v3645, %v3654
        %v3791 = vadd.f32 %v3646, %v3655
        %v3792 = vadd.f32 %v3647, %v3656
        %v3793 = vadd.f32 %v3648, %v3657
        %v3794 = vadd.f32 %v3649, %v3658
        %v3795 = vadd.f32 %v3650, %v3659
        %v3796 = vadd.f32 %v3651, %v3660
        %v3797 = vadd.f32 %v3652, %v3661
        %v3798 = vmax.f32 %v3670, 0.0
        %v3799 = vmax.f32 %v3671, 0.0
        %v3800 = vmax.f32 %v3672, 0.0
        %v3801 = vmax.f32 %v3673, 0.0
        %v3802 = vmax.f32 %v3674, 0.0
        %v3803 = vmax.f32 %v3675, 0.0
        %v3804 = vmax.f32 %v3676, 0.0
        %v3805 = vmax.f32 %v3677, 0.0
        %v3806 = vmax.f32 %v3678, 0.0
        %v3807 = vmax.f32 %v3679, 0.0
        %v3808 = vmax.f32 %v3680, 0.0
        %v3809 = vmax.f32 %v3681, 0.0
        %v3810 = vmax.f32 %v3682, 0.0
        %v3811 = vmax.f32 %v3683, 0.0
        %v3812 = vmax.f32 %v3684, 0.0
        %v3813 = vmax.f32 %v3685, 0.0
        %v3814 = vmax.f32 %v3686, 0.0
        %v3815 = vmax.f32 %v3687, 0.0
        %v3816 = vmax.f32 %v3688, 0.0
        %v3817 = vmax.f32 %v3689, 0.0
        %v3818 = vmax.f32 %v3690, 0.0
        %v3819 = vmax.f32 %v3691, 0.0
        %v3820 = vmax.f32 %v3692, 0.0
        %v3821 = vmax.f32 %v3693, 0.0
        %v3822 = vmax.f32 %v3694, 0.0
        %v3823 = vmax.f32 %v3695, 0.0
        %v3824 = vmax.f32 %v3696, 0.0
        %v3825 = vmax.f32 %v3697, 0.0
        %v3826 = vmax.f32 %v3698, 0.0
        %v3827 = vmax.f32 %v3699, 0.0
        %v3828 = vmax.f32 %v3700, 0.0
        %v3829 = vmax.f32 %v3701, 0.0
        %v3830 = vmax.f32 %v3702, 0.0
        %v3831 = vmax.f32 %v3703, 0.0
        %v3832 = vmax.f32 %v3704, 0.0
        %v3833 = vmax.f32 %v3705, 0.0
        %v3834 = vmax.f32 %v3706, 0.0
        %v3835 = vmax.f32 %v3707, 0.0
        %v3836 = vmax.f32 %v3708, 0.0
        %v3837 = vmax.f32 %v3709, 0.0
        %v3838 = vmax.f32 %v3710, 0.0
        %v3839 = vmax.f32 %v3711, 0.0
        %v3840 = vmax.f32 %v3712, 0.0
        %v3841 = vmax.f32 %v3713, 0.0
        %v3842 = vmax.f32 %v3714, 0.0
        %v3843 = vmax.f32 %v3715, 0.0
        %v3844 = vmax.f32 %v3716, 0.0
        %v3845 = vmax.f32 %v3717, 0.0
        %v3846 = vmax.f32 %v3718, 0.0
        %v3847 = vmax.f32 %v3719, 0.0
        %v3848 = vmax.f32 %v3720, 0.0
        %v3849 = vmax.f32 %v3721, 0.0
        %v3850 = vmax.f32 %v3722, 0.0
        %v3851 = vmax.f32 %v3723, 0.0
        %v3852 = vmax.f32 %v3724, 0.0
        %v3853 = vmax.f32 %v3725, 0.0
        %v3854 = vmax.f32 %v3726, 0.0
        %v3855 = vmax.f32 %v3727, 0.0
        %v3856 = vmax.f32 %v3728, 0.0
        %v3857 = vmax.f32 %v3729, 0.0
        %v3858 = vmax.f32 %v3730, 0.0
        %v3859 = vmax.f32 %v3731, 0.0
        %v3860 = vmax.f32 %v3732, 0.0
        %v3861 = vmax.f32 %v3733, 0.0
        %v3862 = vmax.f32 %v3734, 0.0
        %v3863 = vmax.f32 %v3735, 0.0
        %v3864 = vmax.f32 %v3736, 0.0
        %v3865 = vmax.f32 %v3737, 0.0
        %v3866 = vmax.f32 %v3738, 0.0
        %v3867 = vmax.f32 %v3739, 0.0
        %v3868 = vmax.f32 %v3740, 0.0
        %v3869 = vmax.f32 %v3741, 0.0
        %v3870 = vmax.f32 %v3742, 0.0
        %v3871 = vmax.f32 %v3743, 0.0
        %v3872 = vmax.f32 %v3744, 0.0
        %v3873 = vmax.f32 %v3745, 0.0
        %v3874 = vmax.f32 %v3746, 0.0
        %v3875 = vmax.f32 %v3747, 0.0
        %v3876 = vmax.f32 %v3748, 0.0
        %v3877 = vmax.f32 %v3749, 0.0
        %v3878 = vmax.f32 %v3750, 0.0
        %v3879 = vmax.f32 %v3751, 0.0
        %v3880 = vmax.f32 %v3752, 0.0
        %v3881 = vmax.f32 %v3753, 0.0
        %v3882 = vmax.f32 %v3754, 0.0
        %v3883 = vmax.f32 %v3755, 0.0
        %v3884 = vmax.f32 %v3756, 0.0
        %v3885 = vmax.f32 %v3757, 0.0
        %v3886 = vmax.f32 %v3758, 0.0
        %v3887 = vmax.f32 %v3759, 0.0
        %v3888 = vmax.f32 %v3760, 0.0
        %v3889 = vmax.f32 %v3761, 0.0
        %v3890 = vmax.f32 %v3762, 0.0
        %v3891 = vmax.f32 %v3763, 0.0
        %v3892 = vmax.f32 %v3764, 0.0
        %v3893 = vmax.f32 %v3765, 0.0
        %v3894 = vmax.f32 %v3766, 0.0
        %v3895 = vmax.f32 %v3767, 0.0
        %v3896 = vmax.f32 %v3768, 0.0
        %v3897 = vmax.f32 %v3769, 0.0
        %v3898 = vmax.f32 %v3770, 0.0
        %v3899 = vmax.f32 %v3771, 0.0
        %v3900 = vmax.f32 %v3772, 0.0
        %v3901 = vmax.f32 %v3773, 0.0
        %v3902 = vmax.f32 %v3774, 0.0
        %v3903 = vmax.f32 %v3775, 0.0
        %v3904 = vmax.f32 %v3776, 0.0
        %v3905 = vmax.f32 %v3777, 0.0
        %v3906 = vmax.f32 %v3778, 0.0
        %v3907 = vmax.f32 %v3779, 0.0
        %v3908 = vmax.f32 %v3780, 0.0
        %v3909 = vmax.f32 %v3781, 0.0
        %v3910 = vmax.f32 %v3782, 0.0
        %v3911 = vmax.f32 %v3783, 0.0
        %v3912 = vmax.f32 %v3784, 0.0
        %v3913 = vmax.f32 %v3785, 0.0
        %v3914 = vmax.f32 %v3786, 0.0
        %v3915 = vmax.f32 %v3787, 0.0
        %v3916 = vmax.f32 %v3788, 0.0
        %v3917 = vmax.f32 %v3789, 0.0
        %v3918 = vmax.f32 %v3790, 0.0
        %v3919 = vmax.f32 %v3791, 0.0
        %v3920 = vmax.f32 %v3792, 0.0
        %v3921 = vmax.f32 %v3793, 0.0
        %v3922 = vmax.f32 %v3794, 0.0
        %v3923 = vmax.f32 %v3795, 0.0
        %v3924 = vmax.f32 %v3796, 0.0
        %v3925 = vmax.f32 %v3797, 0.0
        %v3926 = vld [vmem:[#allocation7] sm:$0xff]
        %v3927 = vld [vmem:[#allocation7 + $0x8] sm:$0xff]
        %v3928 = vld [vmem:[#allocation7 + $0x10] sm:$0xff]
        %v3929 = vld [vmem:[#allocation7 + $0x18] sm:$0xff]
        %v3930 = vld [vmem:[#allocation7 + $0x20] sm:$0xff]
        %v3931 = vld [vmem:[#allocation7 + $0x28] sm:$0xff]
        %v3932 = vld [vmem:[#allocation7 + $0x30] sm:$0xff]
        %v3933 = vld [vmem:[#allocation7 + $0x38] sm:$0xff]
        %v3934 = vld [vmem:[#allocation7 + $0x40] sm:$0xff]
        %v3935 = vld [vmem:[#allocation7 + $0x48] sm:$0xff]
        %v3936 = vld [vmem:[#allocation7 + $0x50] sm:$0xff]
        %v3937 = vld [vmem:[#allocation7 + $0x58] sm:$0xff]
        %v3938 = vld [vmem:[#allocation7 + $0x60] sm:$0xff]
        %v3939 = vld [vmem:[#allocation7 + $0x68] sm:$0xff]
        %v3940 = vld [vmem:[#allocation7 + $0x70] sm:$0xff]
        %v3941 = vld [vmem:[#allocation7 + $0x78] sm:$0xff]
        %v3942 = vld [vmem:[#allocation7 + $0x80] sm:$0xff]
        %v3943 = vld [vmem:[#allocation7 + $0x88] sm:$0xff]
        %v3944 = vld [vmem:[#allocation7 + $0x90] sm:$0xff]
        %v3945 = vld [vmem:[#allocation7 + $0x98] sm:$0xff]
        %v3946 = vld [vmem:[#allocation7 + $0xa0] sm:$0xff]
        %v3947 = vld [vmem:[#allocation7 + $0xa8] sm:$0xff]
        %v3948 = vld [vmem:[#allocation7 + $0xb0] sm:$0xff]
        %v3949 = vld [vmem:[#allocation7 + $0xb8] sm:$0xff]
        %v3950 = vld [vmem:[#allocation7 + $0xc0] sm:$0xff]
        %v3951 = vld [vmem:[#allocation7 + $0xc8] sm:$0xff]
        %v3952 = vld [vmem:[#allocation7 + $0xd0] sm:$0xff]
        %v3953 = vld [vmem:[#allocation7 + $0xd8] sm:$0xff]
        %v3954 = vld [vmem:[#allocation7 + $0xe0] sm:$0xff]
        %v3955 = vld [vmem:[#allocation7 + $0xe8] sm:$0xff]
        %v3956 = vld [vmem:[#allocation7 + $0xf0] sm:$0xff]
        %v3957 = vld [vmem:[#allocation7 + $0xf8] sm:$0xff]
        %v3958 = vld [vmem:[#allocation7 + $0x100] sm:$0xff]
        %v3959 = vld [vmem:[#allocation7 + $0x108] sm:$0xff]
        %v3960 = vld [vmem:[#allocation7 + $0x110] sm:$0xff]
        %v3961 = vld [vmem:[#allocation7 + $0x118] sm:$0xff]
        %v3962 = vld [vmem:[#allocation7 + $0x120] sm:$0xff]
        %v3963 = vld [vmem:[#allocation7 + $0x128] sm:$0xff]
        %v3964 = vld [vmem:[#allocation7 + $0x130] sm:$0xff]
        %v3965 = vld [vmem:[#allocation7 + $0x138] sm:$0xff]
        %v3966 = vld [vmem:[#allocation7 + $0x140] sm:$0xff]
        %v3967 = vld [vmem:[#allocation7 + $0x148] sm:$0xff]
        %v3968 = vld [vmem:[#allocation7 + $0x150] sm:$0xff]
        %v3969 = vld [vmem:[#allocation7 + $0x158] sm:$0xff]
        %v3970 = vld [vmem:[#allocation7 + $0x160] sm:$0xff]
        %v3971 = vld [vmem:[#allocation7 + $0x168] sm:$0xff]
        %v3972 = vld [vmem:[#allocation7 + $0x170] sm:$0xff]
        %v3973 = vld [vmem:[#allocation7 + $0x178] sm:$0xff]
        %v3974 = vld [vmem:[#allocation7 + $0x180] sm:$0xff]
        %v3975 = vld [vmem:[#allocation7 + $0x188] sm:$0xff]
        %v3976 = vld [vmem:[#allocation7 + $0x190] sm:$0xff]
        %v3977 = vld [vmem:[#allocation7 + $0x198] sm:$0xff]
        %v3978 = vld [vmem:[#allocation7 + $0x1a0] sm:$0xff]
        %v3979 = vld [vmem:[#allocation7 + $0x1a8] sm:$0xff]
        %v3980 = vld [vmem:[#allocation7 + $0x1b0] sm:$0xff]
        %v3981 = vld [vmem:[#allocation7 + $0x1b8] sm:$0xff]
        %v3982 = vld [vmem:[#allocation7 + $0x1c0] sm:$0xff]
        %v3983 = vld [vmem:[#allocation7 + $0x1c8] sm:$0xff]
        %v3984 = vld [vmem:[#allocation7 + $0x1d0] sm:$0xff]
        %v3985 = vld [vmem:[#allocation7 + $0x1d8] sm:$0xff]
        %v3986 = vld [vmem:[#allocation7 + $0x1e0] sm:$0xff]
        %v3987 = vld [vmem:[#allocation7 + $0x1e8] sm:$0xff]
        %v3988 = vld [vmem:[#allocation7 + $0x1f0] sm:$0xff]
        %v3989 = vld [vmem:[#allocation7 + $0x1f8] sm:$0xff]
        %v3990 = vld [vmem:[#allocation7 + $0x200] sm:$0xff]
        %v3991 = vld [vmem:[#allocation7 + $0x208] sm:$0xff]
        %v3992 = vld [vmem:[#allocation7 + $0x210] sm:$0xff]
        %v3993 = vld [vmem:[#allocation7 + $0x218] sm:$0xff]
        %v3994 = vld [vmem:[#allocation7 + $0x220] sm:$0xff]
        %v3995 = vld [vmem:[#allocation7 + $0x228] sm:$0xff]
        %v3996 = vld [vmem:[#allocation7 + $0x230] sm:$0xff]
        %v3997 = vld [vmem:[#allocation7 + $0x238] sm:$0xff]
        %v3998 = vld [vmem:[#allocation7 + $0x240] sm:$0xff]
        %v3999 = vld [vmem:[#allocation7 + $0x248] sm:$0xff]
        %v4000 = vld [vmem:[#allocation7 + $0x250] sm:$0xff]
        %v4001 = vld [vmem:[#allocation7 + $0x258] sm:$0xff]
        %v4002 = vld [vmem:[#allocation7 + $0x260] sm:$0xff]
        %v4003 = vld [vmem:[#allocation7 + $0x268] sm:$0xff]
        %v4004 = vld [vmem:[#allocation7 + $0x270] sm:$0xff]
        %v4005 = vld [vmem:[#allocation7 + $0x278] sm:$0xff]
        %v4006 = vld [vmem:[#allocation7 + $0x280] sm:$0xff]
        %v4007 = vld [vmem:[#allocation7 + $0x288] sm:$0xff]
        %v4008 = vld [vmem:[#allocation7 + $0x290] sm:$0xff]
        %v4009 = vld [vmem:[#allocation7 + $0x298] sm:$0xff]
        %v4010 = vld [vmem:[#allocation7 + $0x2a0] sm:$0xff]
        %v4011 = vld [vmem:[#allocation7 + $0x2a8] sm:$0xff]
        %v4012 = vld [vmem:[#allocation7 + $0x2b0] sm:$0xff]
        %v4013 = vld [vmem:[#allocation7 + $0x2b8] sm:$0xff]
        %v4014 = vld [vmem:[#allocation7 + $0x2c0] sm:$0xff]
        %v4015 = vld [vmem:[#allocation7 + $0x2c8] sm:$0xff]
        %v4016 = vld [vmem:[#allocation7 + $0x2d0] sm:$0xff]
        %v4017 = vld [vmem:[#allocation7 + $0x2d8] sm:$0xff]
        %v4018 = vld [vmem:[#allocation7 + $0x2e0] sm:$0xff]
        %v4019 = vld [vmem:[#allocation7 + $0x2e8] sm:$0xff]
        %v4020 = vld [vmem:[#allocation7 + $0x2f0] sm:$0xff]
        %v4021 = vld [vmem:[#allocation7 + $0x2f8] sm:$0xff]
        %v4022 = vld [vmem:[#allocation7 + $0x300] sm:$0xff]
        %v4023 = vld [vmem:[#allocation7 + $0x308] sm:$0xff]
        %v4024 = vld [vmem:[#allocation7 + $0x310] sm:$0xff]
        %v4025 = vld [vmem:[#allocation7 + $0x318] sm:$0xff]
        %v4026 = vld [vmem:[#allocation7 + $0x320] sm:$0xff]
        %v4027 = vld [vmem:[#allocation7 + $0x328] sm:$0xff]
        %v4028 = vld [vmem:[#allocation7 + $0x330] sm:$0xff]
        %v4029 = vld [vmem:[#allocation7 + $0x338] sm:$0xff]
        %v4030 = vld [vmem:[#allocation7 + $0x340] sm:$0xff]
        %v4031 = vld [vmem:[#allocation7 + $0x348] sm:$0xff]
        %v4032 = vld [vmem:[#allocation7 + $0x350] sm:$0xff]
        %v4033 = vld [vmem:[#allocation7 + $0x358] sm:$0xff]
        %v4034 = vld [vmem:[#allocation7 + $0x360] sm:$0xff]
        %v4035 = vld [vmem:[#allocation7 + $0x368] sm:$0xff]
        %v4036 = vld [vmem:[#allocation7 + $0x370] sm:$0xff]
        %v4037 = vld [vmem:[#allocation7 + $0x378] sm:$0xff]
        %v4038 = vld [vmem:[#allocation7 + $0x380] sm:$0xff]
        %v4039 = vld [vmem:[#allocation7 + $0x388] sm:$0xff]
        %v4040 = vld [vmem:[#allocation7 + $0x390] sm:$0xff]
        %v4041 = vld [vmem:[#allocation7 + $0x398] sm:$0xff]
        %v4042 = vld [vmem:[#allocation7 + $0x3a0] sm:$0xff]
        %v4043 = vld [vmem:[#allocation7 + $0x3a8] sm:$0xff]
        %v4044 = vld [vmem:[#allocation7 + $0x3b0] sm:$0xff]
        %v4045 = vld [vmem:[#allocation7 + $0x3b8] sm:$0xff]
        %v4046 = vld [vmem:[#allocation7 + $0x3c0] sm:$0xff]
        %v4047 = vld [vmem:[#allocation7 + $0x3c8] sm:$0xff]
        %v4048 = vld [vmem:[#allocation7 + $0x3d0] sm:$0xff]
        %v4049 = vld [vmem:[#allocation7 + $0x3d8] sm:$0xff]
        %v4050 = vld [vmem:[#allocation7 + $0x3e0] sm:$0xff]
        %v4051 = vld [vmem:[#allocation7 + $0x3e8] sm:$0xff]
        %v4052 = vld [vmem:[#allocation7 + $0x3f0] sm:$0xff]
        %v4053 = vld [vmem:[#allocation7 + $0x3f8] sm:$0xff]
        %v4054 = vld [vmem:[#allocation7 + $0x400] sm:$0xff]
        %v4055 = vld [vmem:[#allocation7 + $0x408] sm:$0xff]
        %v4056 = vld [vmem:[#allocation7 + $0x410] sm:$0xff]
        %v4057 = vld [vmem:[#allocation7 + $0x418] sm:$0xff]
        %v4058 = vld [vmem:[#allocation7 + $0x420] sm:$0xff]
        %v4059 = vld [vmem:[#allocation7 + $0x428] sm:$0xff]
        %v4060 = vld [vmem:[#allocation7 + $0x430] sm:$0xff]
        %v4061 = vld [vmem:[#allocation7 + $0x438] sm:$0xff]
        %v4062 = vld [vmem:[#allocation7 + $0x440] sm:$0xff]
        %v4063 = vld [vmem:[#allocation7 + $0x448] sm:$0xff]
        %v4064 = vld [vmem:[#allocation7 + $0x450] sm:$0xff]
        %v4065 = vld [vmem:[#allocation7 + $0x458] sm:$0xff]
        %v4066 = vld [vmem:[#allocation7 + $0x460] sm:$0xff]
        %v4067 = vld [vmem:[#allocation7 + $0x468] sm:$0xff]
        %v4068 = vld [vmem:[#allocation7 + $0x470] sm:$0xff]
        %v4069 = vld [vmem:[#allocation7 + $0x478] sm:$0xff]
        %v4070 = vld [vmem:[#allocation7 + $0x480] sm:$0xff]
        %v4071 = vld [vmem:[#allocation7 + $0x488] sm:$0xff]
        %v4072 = vld [vmem:[#allocation7 + $0x490] sm:$0xff]
        %v4073 = vld [vmem:[#allocation7 + $0x498] sm:$0xff]
        %v4074 = vld [vmem:[#allocation7 + $0x4a0] sm:$0xff]
        %v4075 = vld [vmem:[#allocation7 + $0x4a8] sm:$0xff]
        %v4076 = vld [vmem:[#allocation7 + $0x4b0] sm:$0xff]
        %v4077 = vld [vmem:[#allocation7 + $0x4b8] sm:$0xff]
        %v4078 = vld [vmem:[#allocation7 + $0x4c0] sm:$0xff]
        %v4079 = vld [vmem:[#allocation7 + $0x4c8] sm:$0xff]
        %v4080 = vld [vmem:[#allocation7 + $0x4d0] sm:$0xff]
        %v4081 = vld [vmem:[#allocation7 + $0x4d8] sm:$0xff]
        %v4082 = vld [vmem:[#allocation7 + $0x4e0] sm:$0xff]
        %v4083 = vld [vmem:[#allocation7 + $0x4e8] sm:$0xff]
        %v4084 = vld [vmem:[#allocation7 + $0x4f0] sm:$0xff]
        %v4085 = vld [vmem:[#allocation7 + $0x4f8] sm:$0xff]
        %v4086 = vld [vmem:[#allocation7 + $0x500] sm:$0xff]
        %v4087 = vld [vmem:[#allocation7 + $0x508] sm:$0xff]
        %v4088 = vld [vmem:[#allocation7 + $0x510] sm:$0xff]
        %v4089 = vld [vmem:[#allocation7 + $0x518] sm:$0xff]
        %v4090 = vld [vmem:[#allocation7 + $0x520] sm:$0xff]
        %v4091 = vld [vmem:[#allocation7 + $0x528] sm:$0xff]
        %v4092 = vld [vmem:[#allocation7 + $0x530] sm:$0xff]
        %v4093 = vld [vmem:[#allocation7 + $0x538] sm:$0xff]
        %v4094 = vld [vmem:[#allocation7 + $0x540] sm:$0xff]
        %v4095 = vld [vmem:[#allocation7 + $0x548] sm:$0xff]
        %v4096 = vld [vmem:[#allocation7 + $0x550] sm:$0xff]
        %v4097 = vld [vmem:[#allocation7 + $0x558] sm:$0xff]
        %v4098 = vld [vmem:[#allocation7 + $0x560] sm:$0xff]
        %v4099 = vld [vmem:[#allocation7 + $0x568] sm:$0xff]
        %v4100 = vld [vmem:[#allocation7 + $0x570] sm:$0xff]
        %v4101 = vld [vmem:[#allocation7 + $0x578] sm:$0xff]
        %v4102 = vld [vmem:[#allocation7 + $0x580] sm:$0xff]
        %v4103 = vld [vmem:[#allocation7 + $0x588] sm:$0xff]
        %v4104 = vld [vmem:[#allocation7 + $0x590] sm:$0xff]
        %v4105 = vld [vmem:[#allocation7 + $0x598] sm:$0xff]
        %v4106 = vld [vmem:[#allocation7 + $0x5a0] sm:$0xff]
        %v4107 = vld [vmem:[#allocation7 + $0x5a8] sm:$0xff]
        %v4108 = vld [vmem:[#allocation7 + $0x5b0] sm:$0xff]
        %v4109 = vld [vmem:[#allocation7 + $0x5b8] sm:$0xff]
        %v4110 = vld [vmem:[#allocation7 + $0x5c0] sm:$0xff]
        %v4111 = vld [vmem:[#allocation7 + $0x5c8] sm:$0xff]
        %v4112 = vld [vmem:[#allocation7 + $0x5d0] sm:$0xff]
        %v4113 = vld [vmem:[#allocation7 + $0x5d8] sm:$0xff]
        %v4114 = vld [vmem:[#allocation7 + $0x5e0] sm:$0xff]
        %v4115 = vld [vmem:[#allocation7 + $0x5e8] sm:$0xff]
        %v4116 = vld [vmem:[#allocation7 + $0x5f0] sm:$0xff]
        %v4117 = vld [vmem:[#allocation7 + $0x5f8] sm:$0xff]
        %v4118 = vld [vmem:[#allocation7 + $0x600] sm:$0xff]
        %v4119 = vld [vmem:[#allocation7 + $0x608] sm:$0xff]
        %v4120 = vld [vmem:[#allocation7 + $0x610] sm:$0xff]
        %v4121 = vld [vmem:[#allocation7 + $0x618] sm:$0xff]
        %v4122 = vld [vmem:[#allocation7 + $0x620] sm:$0xff]
        %v4123 = vld [vmem:[#allocation7 + $0x628] sm:$0xff]
        %v4124 = vld [vmem:[#allocation7 + $0x630] sm:$0xff]
        %v4125 = vld [vmem:[#allocation7 + $0x638] sm:$0xff]
        %v4126 = vld [vmem:[#allocation7 + $0x640] sm:$0xff]
        %v4127 = vld [vmem:[#allocation7 + $0x648] sm:$0xff]
        %v4128 = vld [vmem:[#allocation7 + $0x650] sm:$0xff]
        %v4129 = vld [vmem:[#allocation7 + $0x658] sm:$0xff]
        %v4130 = vld [vmem:[#allocation7 + $0x660] sm:$0xff]
        %v4131 = vld [vmem:[#allocation7 + $0x668] sm:$0xff]
        %v4132 = vld [vmem:[#allocation7 + $0x670] sm:$0xff]
        %v4133 = vld [vmem:[#allocation7 + $0x678] sm:$0xff]
        %v4134 = vld [vmem:[#allocation7 + $0x680] sm:$0xff]
        %v4135 = vld [vmem:[#allocation7 + $0x688] sm:$0xff]
        %v4136 = vld [vmem:[#allocation7 + $0x690] sm:$0xff]
        %v4137 = vld [vmem:[#allocation7 + $0x698] sm:$0xff]
        %v4138 = vld [vmem:[#allocation7 + $0x6a0] sm:$0xff]
        %v4139 = vld [vmem:[#allocation7 + $0x6a8] sm:$0xff]
        %v4140 = vld [vmem:[#allocation7 + $0x6b0] sm:$0xff]
        %v4141 = vld [vmem:[#allocation7 + $0x6b8] sm:$0xff]
        %v4142 = vld [vmem:[#allocation7 + $0x6c0] sm:$0xff]
        %v4143 = vld [vmem:[#allocation7 + $0x6c8] sm:$0xff]
        %v4144 = vld [vmem:[#allocation7 + $0x6d0] sm:$0xff]
        %v4145 = vld [vmem:[#allocation7 + $0x6d8] sm:$0xff]
        %v4146 = vld [vmem:[#allocation7 + $0x6e0] sm:$0xff]
        %v4147 = vld [vmem:[#allocation7 + $0x6e8] sm:$0xff]
        %v4148 = vld [vmem:[#allocation7 + $0x6f0] sm:$0xff]
        %v4149 = vld [vmem:[#allocation7 + $0x6f8] sm:$0xff]
        %v4150 = vld [vmem:[#allocation7 + $0x700] sm:$0xff]
        %v4151 = vld [vmem:[#allocation7 + $0x708] sm:$0xff]
        %v4152 = vld [vmem:[#allocation7 + $0x710] sm:$0xff]
        %v4153 = vld [vmem:[#allocation7 + $0x718] sm:$0xff]
        %v4154 = vld [vmem:[#allocation7 + $0x720] sm:$0xff]
        %v4155 = vld [vmem:[#allocation7 + $0x728] sm:$0xff]
        %v4156 = vld [vmem:[#allocation7 + $0x730] sm:$0xff]
        %v4157 = vld [vmem:[#allocation7 + $0x738] sm:$0xff]
        %v4158 = vld [vmem:[#allocation7 + $0x740] sm:$0xff]
        %v4159 = vld [vmem:[#allocation7 + $0x748] sm:$0xff]
        %v4160 = vld [vmem:[#allocation7 + $0x750] sm:$0xff]
        %v4161 = vld [vmem:[#allocation7 + $0x758] sm:$0xff]
        %v4162 = vld [vmem:[#allocation7 + $0x760] sm:$0xff]
        %v4163 = vld [vmem:[#allocation7 + $0x768] sm:$0xff]
        %v4164 = vld [vmem:[#allocation7 + $0x770] sm:$0xff]
        %v4165 = vld [vmem:[#allocation7 + $0x778] sm:$0xff]
        %v4166 = vld [vmem:[#allocation7 + $0x780] sm:$0xff]
        %v4167 = vld [vmem:[#allocation7 + $0x788] sm:$0xff]
        %v4168 = vld [vmem:[#allocation7 + $0x790] sm:$0xff]
        %v4169 = vld [vmem:[#allocation7 + $0x798] sm:$0xff]
        %v4170 = vld [vmem:[#allocation7 + $0x7a0] sm:$0xff]
        %v4171 = vld [vmem:[#allocation7 + $0x7a8] sm:$0xff]
        %v4172 = vld [vmem:[#allocation7 + $0x7b0] sm:$0xff]
        %v4173 = vld [vmem:[#allocation7 + $0x7b8] sm:$0xff]
        %v4174 = vld [vmem:[#allocation7 + $0x7c0] sm:$0xff]
        %v4175 = vld [vmem:[#allocation7 + $0x7c8] sm:$0xff]
        %v4176 = vld [vmem:[#allocation7 + $0x7d0] sm:$0xff]
        %v4177 = vld [vmem:[#allocation7 + $0x7d8] sm:$0xff]
        %v4178 = vld [vmem:[#allocation7 + $0x7e0] sm:$0xff]
        %v4179 = vld [vmem:[#allocation7 + $0x7e8] sm:$0xff]
        %v4180 = vld [vmem:[#allocation7 + $0x7f0] sm:$0xff]
        %v4181 = vld [vmem:[#allocation7 + $0x7f8] sm:$0xff]
        %v4182 = vld [vmem:[#allocation7 + $0x800] sm:$0xff]
        %v4183 = vld [vmem:[#allocation7 + $0x808] sm:$0xff]
        %v4184 = vld [vmem:[#allocation7 + $0x810] sm:$0xff]
        %v4185 = vld [vmem:[#allocation7 + $0x818] sm:$0xff]
        %v4186 = vld [vmem:[#allocation7 + $0x820] sm:$0xff]
        %v4187 = vld [vmem:[#allocation7 + $0x828] sm:$0xff]
        %v4188 = vld [vmem:[#allocation7 + $0x830] sm:$0xff]
        %v4189 = vld [vmem:[#allocation7 + $0x838] sm:$0xff]
        %v4190 = vld [vmem:[#allocation7 + $0x840] sm:$0xff]
        %v4191 = vld [vmem:[#allocation7 + $0x848] sm:$0xff]
        %v4192 = vld [vmem:[#allocation7 + $0x850] sm:$0xff]
        %v4193 = vld [vmem:[#allocation7 + $0x858] sm:$0xff]
        %v4194 = vld [vmem:[#allocation7 + $0x860] sm:$0xff]
        %v4195 = vld [vmem:[#allocation7 + $0x868] sm:$0xff]
        %v4196 = vld [vmem:[#allocation7 + $0x870] sm:$0xff]
        %v4197 = vld [vmem:[#allocation7 + $0x878] sm:$0xff]
        %v4198 = vld [vmem:[#allocation7 + $0x880] sm:$0xff]
        %v4199 = vld [vmem:[#allocation7 + $0x888] sm:$0xff]
        %v4200 = vld [vmem:[#allocation7 + $0x890] sm:$0xff]
        %v4201 = vld [vmem:[#allocation7 + $0x898] sm:$0xff]
        %v4202 = vld [vmem:[#allocation7 + $0x8a0] sm:$0xff]
        %v4203 = vld [vmem:[#allocation7 + $0x8a8] sm:$0xff]
        %v4204 = vld [vmem:[#allocation7 + $0x8b0] sm:$0xff]
        %v4205 = vld [vmem:[#allocation7 + $0x8b8] sm:$0xff]
        %v4206 = vld [vmem:[#allocation7 + $0x8c0] sm:$0xff]
        %v4207 = vld [vmem:[#allocation7 + $0x8c8] sm:$0xff]
        %v4208 = vld [vmem:[#allocation7 + $0x8d0] sm:$0xff]
        %v4209 = vld [vmem:[#allocation7 + $0x8d8] sm:$0xff]
        %v4210 = vld [vmem:[#allocation7 + $0x8e0] sm:$0xff]
        %v4211 = vld [vmem:[#allocation7 + $0x8e8] sm:$0xff]
        %v4212 = vld [vmem:[#allocation7 + $0x8f0] sm:$0xff]
        %v4213 = vld [vmem:[#allocation7 + $0x8f8] sm:$0xff]
        %v4214 = vld [vmem:[#allocation7 + $0x900] sm:$0xff]
        %v4215 = vld [vmem:[#allocation7 + $0x908] sm:$0xff]
        %v4216 = vld [vmem:[#allocation7 + $0x910] sm:$0xff]
        %v4217 = vld [vmem:[#allocation7 + $0x918] sm:$0xff]
        %v4218 = vld [vmem:[#allocation7 + $0x920] sm:$0xff]
        %v4219 = vld [vmem:[#allocation7 + $0x928] sm:$0xff]
        %v4220 = vld [vmem:[#allocation7 + $0x930] sm:$0xff]
        %v4221 = vld [vmem:[#allocation7 + $0x938] sm:$0xff]
        %v4222 = vld [vmem:[#allocation7 + $0x940] sm:$0xff]
        %v4223 = vld [vmem:[#allocation7 + $0x948] sm:$0xff]
        %v4224 = vld [vmem:[#allocation7 + $0x950] sm:$0xff]
        %v4225 = vld [vmem:[#allocation7 + $0x958] sm:$0xff]
        %v4226 = vld [vmem:[#allocation7 + $0x960] sm:$0xff]
        %v4227 = vld [vmem:[#allocation7 + $0x968] sm:$0xff]
        %v4228 = vld [vmem:[#allocation7 + $0x970] sm:$0xff]
        %v4229 = vld [vmem:[#allocation7 + $0x978] sm:$0xff]
        %v4230 = vld [vmem:[#allocation7 + $0x980] sm:$0xff]
        %v4231 = vld [vmem:[#allocation7 + $0x988] sm:$0xff]
        %v4232 = vld [vmem:[#allocation7 + $0x990] sm:$0xff]
        %v4233 = vld [vmem:[#allocation7 + $0x998] sm:$0xff]
        %v4234 = vld [vmem:[#allocation7 + $0x9a0] sm:$0xff]
        %v4235 = vld [vmem:[#allocation7 + $0x9a8] sm:$0xff]
        %v4236 = vld [vmem:[#allocation7 + $0x9b0] sm:$0xff]
        %v4237 = vld [vmem:[#allocation7 + $0x9b8] sm:$0xff]
        %v4238 = vld [vmem:[#allocation7 + $0x9c0] sm:$0xff]
        %v4239 = vld [vmem:[#allocation7 + $0x9c8] sm:$0xff]
        %v4240 = vld [vmem:[#allocation7 + $0x9d0] sm:$0xff]
        %v4241 = vld [vmem:[#allocation7 + $0x9d8] sm:$0xff]
        %v4242 = vld [vmem:[#allocation7 + $0x9e0] sm:$0xff]
        %v4243 = vld [vmem:[#allocation7 + $0x9e8] sm:$0xff]
        %v4244 = vld [vmem:[#allocation7 + $0x9f0] sm:$0xff]
        %v4245 = vld [vmem:[#allocation7 + $0x9f8] sm:$0xff]
        %v4246 = vld [vmem:[#allocation7 + $0xa00] sm:$0xff]
        %v4247 = vld [vmem:[#allocation7 + $0xa08] sm:$0xff]
        %v4248 = vld [vmem:[#allocation7 + $0xa10] sm:$0xff]
        %v4249 = vld [vmem:[#allocation7 + $0xa18] sm:$0xff]
        %v4250 = vld [vmem:[#allocation7 + $0xa20] sm:$0xff]
        %v4251 = vld [vmem:[#allocation7 + $0xa28] sm:$0xff]
        %v4252 = vld [vmem:[#allocation7 + $0xa30] sm:$0xff]
        %v4253 = vld [vmem:[#allocation7 + $0xa38] sm:$0xff]
        %v4254 = vld [vmem:[#allocation7 + $0xa40] sm:$0xff]
        %v4255 = vld [vmem:[#allocation7 + $0xa48] sm:$0xff]
        %v4256 = vld [vmem:[#allocation7 + $0xa50] sm:$0xff]
        %v4257 = vld [vmem:[#allocation7 + $0xa58] sm:$0xff]
        %v4258 = vld [vmem:[#allocation7 + $0xa60] sm:$0xff]
        %v4259 = vld [vmem:[#allocation7 + $0xa68] sm:$0xff]
        %v4260 = vld [vmem:[#allocation7 + $0xa70] sm:$0xff]
        %v4261 = vld [vmem:[#allocation7 + $0xa78] sm:$0xff]
        %v4262 = vld [vmem:[#allocation7 + $0xa80] sm:$0xff]
        %v4263 = vld [vmem:[#allocation7 + $0xa88] sm:$0xff]
        %v4264 = vld [vmem:[#allocation7 + $0xa90] sm:$0xff]
        %v4265 = vld [vmem:[#allocation7 + $0xa98] sm:$0xff]
        %v4266 = vld [vmem:[#allocation7 + $0xaa0] sm:$0xff]
        %v4267 = vld [vmem:[#allocation7 + $0xaa8] sm:$0xff]
        %v4268 = vld [vmem:[#allocation7 + $0xab0] sm:$0xff]
        %v4269 = vld [vmem:[#allocation7 + $0xab8] sm:$0xff]
        %v4270 = vld [vmem:[#allocation7 + $0xac0] sm:$0xff]
        %v4271 = vld [vmem:[#allocation7 + $0xac8] sm:$0xff]
        %v4272 = vld [vmem:[#allocation7 + $0xad0] sm:$0xff]
        %v4273 = vld [vmem:[#allocation7 + $0xad8] sm:$0xff]
        %v4274 = vld [vmem:[#allocation7 + $0xae0] sm:$0xff]
        %v4275 = vld [vmem:[#allocation7 + $0xae8] sm:$0xff]
        %v4276 = vld [vmem:[#allocation7 + $0xaf0] sm:$0xff]
        %v4277 = vld [vmem:[#allocation7 + $0xaf8] sm:$0xff]
        %v4278 = vld [vmem:[#allocation7 + $0xb00] sm:$0xff]
        %v4279 = vld [vmem:[#allocation7 + $0xb08] sm:$0xff]
        %v4280 = vld [vmem:[#allocation7 + $0xb10] sm:$0xff]
        %v4281 = vld [vmem:[#allocation7 + $0xb18] sm:$0xff]
        %v4282 = vld [vmem:[#allocation7 + $0xb20] sm:$0xff]
        %v4283 = vld [vmem:[#allocation7 + $0xb28] sm:$0xff]
        %v4284 = vld [vmem:[#allocation7 + $0xb30] sm:$0xff]
        %v4285 = vld [vmem:[#allocation7 + $0xb38] sm:$0xff]
        %v4286 = vld [vmem:[#allocation7 + $0xb40] sm:$0xff]
        %v4287 = vld [vmem:[#allocation7 + $0xb48] sm:$0xff]
        %v4288 = vld [vmem:[#allocation7 + $0xb50] sm:$0xff]
        %v4289 = vld [vmem:[#allocation7 + $0xb58] sm:$0xff]
        %v4290 = vld [vmem:[#allocation7 + $0xb60] sm:$0xff]
        %v4291 = vld [vmem:[#allocation7 + $0xb68] sm:$0xff]
        %v4292 = vld [vmem:[#allocation7 + $0xb70] sm:$0xff]
        %v4293 = vld [vmem:[#allocation7 + $0xb78] sm:$0xff]
        %v4294 = vld [vmem:[#allocation7 + $0xb80] sm:$0xff]
        %v4295 = vld [vmem:[#allocation7 + $0xb88] sm:$0xff]
        %v4296 = vld [vmem:[#allocation7 + $0xb90] sm:$0xff]
        %v4297 = vld [vmem:[#allocation7 + $0xb98] sm:$0xff]
        %v4298 = vld [vmem:[#allocation7 + $0xba0] sm:$0xff]
        %v4299 = vld [vmem:[#allocation7 + $0xba8] sm:$0xff]
        %v4300 = vld [vmem:[#allocation7 + $0xbb0] sm:$0xff]
        %v4301 = vld [vmem:[#allocation7 + $0xbb8] sm:$0xff]
        %v4302 = vld [vmem:[#allocation7 + $0xbc0] sm:$0xff]
        %v4303 = vld [vmem:[#allocation7 + $0xbc8] sm:$0xff]
        %v4304 = vld [vmem:[#allocation7 + $0xbd0] sm:$0xff]
        %v4305 = vld [vmem:[#allocation7 + $0xbd8] sm:$0xff]
        %v4306 = vld [vmem:[#allocation7 + $0xbe0] sm:$0xff]
        %v4307 = vld [vmem:[#allocation7 + $0xbe8] sm:$0xff]
        %v4308 = vld [vmem:[#allocation7 + $0xbf0] sm:$0xff]
        %v4309 = vld [vmem:[#allocation7 + $0xbf8] sm:$0xff]
        %v4310 = vld [vmem:[#allocation7 + $0xc00] sm:$0xff]
        %v4311 = vld [vmem:[#allocation7 + $0xc08] sm:$0xff]
        %v4312 = vld [vmem:[#allocation7 + $0xc10] sm:$0xff]
        %v4313 = vld [vmem:[#allocation7 + $0xc18] sm:$0xff]
        %v4314 = vld [vmem:[#allocation7 + $0xc20] sm:$0xff]
        %v4315 = vld [vmem:[#allocation7 + $0xc28] sm:$0xff]
        %v4316 = vld [vmem:[#allocation7 + $0xc30] sm:$0xff]
        %v4317 = vld [vmem:[#allocation7 + $0xc38] sm:$0xff]
        %v4318 = vld [vmem:[#allocation7 + $0xc40] sm:$0xff]
        %v4319 = vld [vmem:[#allocation7 + $0xc48] sm:$0xff]
        %v4320 = vld [vmem:[#allocation7 + $0xc50] sm:$0xff]
        %v4321 = vld [vmem:[#allocation7 + $0xc58] sm:$0xff]
        %v4322 = vld [vmem:[#allocation7 + $0xc60] sm:$0xff]
        %v4323 = vld [vmem:[#allocation7 + $0xc68] sm:$0xff]
        %v4324 = vld [vmem:[#allocation7 + $0xc70] sm:$0xff]
        %v4325 = vld [vmem:[#allocation7 + $0xc78] sm:$0xff]
        %v4326 = vld [vmem:[#allocation7 + $0xc80] sm:$0xff]
        %v4327 = vld [vmem:[#allocation7 + $0xc88] sm:$0xff]
        %v4328 = vld [vmem:[#allocation7 + $0xc90] sm:$0xff]
        %v4329 = vld [vmem:[#allocation7 + $0xc98] sm:$0xff]
        %v4330 = vld [vmem:[#allocation7 + $0xca0] sm:$0xff]
        %v4331 = vld [vmem:[#allocation7 + $0xca8] sm:$0xff]
        %v4332 = vld [vmem:[#allocation7 + $0xcb0] sm:$0xff]
        %v4333 = vld [vmem:[#allocation7 + $0xcb8] sm:$0xff]
        %v4334 = vld [vmem:[#allocation7 + $0xcc0] sm:$0xff]
        %v4335 = vld [vmem:[#allocation7 + $0xcc8] sm:$0xff]
        %v4336 = vld [vmem:[#allocation7 + $0xcd0] sm:$0xff]
        %v4337 = vld [vmem:[#allocation7 + $0xcd8] sm:$0xff]
        %v4338 = vld [vmem:[#allocation7 + $0xce0] sm:$0xff]
        %v4339 = vld [vmem:[#allocation7 + $0xce8] sm:$0xff]
        %v4340 = vld [vmem:[#allocation7 + $0xcf0] sm:$0xff]
        %v4341 = vld [vmem:[#allocation7 + $0xcf8] sm:$0xff]
        %v4342 = vld [vmem:[#allocation7 + $0xd00] sm:$0xff]
        %v4343 = vld [vmem:[#allocation7 + $0xd08] sm:$0xff]
        %v4344 = vld [vmem:[#allocation7 + $0xd10] sm:$0xff]
        %v4345 = vld [vmem:[#allocation7 + $0xd18] sm:$0xff]
        %v4346 = vld [vmem:[#allocation7 + $0xd20] sm:$0xff]
        %v4347 = vld [vmem:[#allocation7 + $0xd28] sm:$0xff]
        %v4348 = vld [vmem:[#allocation7 + $0xd30] sm:$0xff]
        %v4349 = vld [vmem:[#allocation7 + $0xd38] sm:$0xff]
        %v4350 = vld [vmem:[#allocation7 + $0xd40] sm:$0xff]
        %v4351 = vld [vmem:[#allocation7 + $0xd48] sm:$0xff]
        %v4352 = vld [vmem:[#allocation7 + $0xd50] sm:$0xff]
        %v4353 = vld [vmem:[#allocation7 + $0xd58] sm:$0xff]
        %v4354 = vld [vmem:[#allocation7 + $0xd60] sm:$0xff]
        %v4355 = vld [vmem:[#allocation7 + $0xd68] sm:$0xff]
        %v4356 = vld [vmem:[#allocation7 + $0xd70] sm:$0xff]
        %v4357 = vld [vmem:[#allocation7 + $0xd78] sm:$0xff]
        %v4358 = vld [vmem:[#allocation7 + $0xd80] sm:$0xff]
        %v4359 = vld [vmem:[#allocation7 + $0xd88] sm:$0xff]
        %v4360 = vld [vmem:[#allocation7 + $0xd90] sm:$0xff]
        %v4361 = vld [vmem:[#allocation7 + $0xd98] sm:$0xff]
        %v4362 = vld [vmem:[#allocation7 + $0xda0] sm:$0xff]
        %v4363 = vld [vmem:[#allocation7 + $0xda8] sm:$0xff]
        %v4364 = vld [vmem:[#allocation7 + $0xdb0] sm:$0xff]
        %v4365 = vld [vmem:[#allocation7 + $0xdb8] sm:$0xff]
        %v4366 = vld [vmem:[#allocation7 + $0xdc0] sm:$0xff]
        %v4367 = vld [vmem:[#allocation7 + $0xdc8] sm:$0xff]
        %v4368 = vld [vmem:[#allocation7 + $0xdd0] sm:$0xff]
        %v4369 = vld [vmem:[#allocation7 + $0xdd8] sm:$0xff]
        %v4370 = vld [vmem:[#allocation7 + $0xde0] sm:$0xff]
        %v4371 = vld [vmem:[#allocation7 + $0xde8] sm:$0xff]
        %v4372 = vld [vmem:[#allocation7 + $0xdf0] sm:$0xff]
        %v4373 = vld [vmem:[#allocation7 + $0xdf8] sm:$0xff]
        %v4374 = vld [vmem:[#allocation7 + $0xe00] sm:$0xff]
        %v4375 = vld [vmem:[#allocation7 + $0xe08] sm:$0xff]
        %v4376 = vld [vmem:[#allocation7 + $0xe10] sm:$0xff]
        %v4377 = vld [vmem:[#allocation7 + $0xe18] sm:$0xff]
        %v4378 = vld [vmem:[#allocation7 + $0xe20] sm:$0xff]
        %v4379 = vld [vmem:[#allocation7 + $0xe28] sm:$0xff]
        %v4380 = vld [vmem:[#allocation7 + $0xe30] sm:$0xff]
        %v4381 = vld [vmem:[#allocation7 + $0xe38] sm:$0xff]
        %v4382 = vld [vmem:[#allocation7 + $0xe40] sm:$0xff]
        %v4383 = vld [vmem:[#allocation7 + $0xe48] sm:$0xff]
        %v4384 = vld [vmem:[#allocation7 + $0xe50] sm:$0xff]
        %v4385 = vld [vmem:[#allocation7 + $0xe58] sm:$0xff]
        %v4386 = vld [vmem:[#allocation7 + $0xe60] sm:$0xff]
        %v4387 = vld [vmem:[#allocation7 + $0xe68] sm:$0xff]
        %v4388 = vld [vmem:[#allocation7 + $0xe70] sm:$0xff]
        %v4389 = vld [vmem:[#allocation7 + $0xe78] sm:$0xff]
        %v4390 = vld [vmem:[#allocation7 + $0xe80] sm:$0xff]
        %v4391 = vld [vmem:[#allocation7 + $0xe88] sm:$0xff]
        %v4392 = vld [vmem:[#allocation7 + $0xe90] sm:$0xff]
        %v4393 = vld [vmem:[#allocation7 + $0xe98] sm:$0xff]
        %v4394 = vld [vmem:[#allocation7 + $0xea0] sm:$0xff]
        %v4395 = vld [vmem:[#allocation7 + $0xea8] sm:$0xff]
        %v4396 = vld [vmem:[#allocation7 + $0xeb0] sm:$0xff]
        %v4397 = vld [vmem:[#allocation7 + $0xeb8] sm:$0xff]
        %v4398 = vld [vmem:[#allocation7 + $0xec0] sm:$0xff]
        %v4399 = vld [vmem:[#allocation7 + $0xec8] sm:$0xff]
        %v4400 = vld [vmem:[#allocation7 + $0xed0] sm:$0xff]
        %v4401 = vld [vmem:[#allocation7 + $0xed8] sm:$0xff]
        %v4402 = vld [vmem:[#allocation7 + $0xee0] sm:$0xff]
        %v4403 = vld [vmem:[#allocation7 + $0xee8] sm:$0xff]
        %v4404 = vld [vmem:[#allocation7 + $0xef0] sm:$0xff]
        %v4405 = vld [vmem:[#allocation7 + $0xef8] sm:$0xff]
        %v4406 = vld [vmem:[#allocation7 + $0xf00] sm:$0xff]
        %v4407 = vld [vmem:[#allocation7 + $0xf08] sm:$0xff]
        %v4408 = vld [vmem:[#allocation7 + $0xf10] sm:$0xff]
        %v4409 = vld [vmem:[#allocation7 + $0xf18] sm:$0xff]
        %v4410 = vld [vmem:[#allocation7 + $0xf20] sm:$0xff]
        %v4411 = vld [vmem:[#allocation7 + $0xf28] sm:$0xff]
        %v4412 = vld [vmem:[#allocation7 + $0xf30] sm:$0xff]
        %v4413 = vld [vmem:[#allocation7 + $0xf38] sm:$0xff]
        %v4414 = vld [vmem:[#allocation7 + $0xf40] sm:$0xff]
        %v4415 = vld [vmem:[#allocation7 + $0xf48] sm:$0xff]
        %v4416 = vld [vmem:[#allocation7 + $0xf50] sm:$0xff]
        %v4417 = vld [vmem:[#allocation7 + $0xf58] sm:$0xff]
        %v4418 = vld [vmem:[#allocation7 + $0xf60] sm:$0xff]
        %v4419 = vld [vmem:[#allocation7 + $0xf68] sm:$0xff]
        %v4420 = vld [vmem:[#allocation7 + $0xf70] sm:$0xff]
        %v4421 = vld [vmem:[#allocation7 + $0xf78] sm:$0xff]
        %v4422 = vld [vmem:[#allocation7 + $0xf80] sm:$0xff]
        %v4423 = vld [vmem:[#allocation7 + $0xf88] sm:$0xff]
        %v4424 = vld [vmem:[#allocation7 + $0xf90] sm:$0xff]
        %v4425 = vld [vmem:[#allocation7 + $0xf98] sm:$0xff]
        %v4426 = vld [vmem:[#allocation7 + $0xfa0] sm:$0xff]
        %v4427 = vld [vmem:[#allocation7 + $0xfa8] sm:$0xff]
        %v4428 = vld [vmem:[#allocation7 + $0xfb0] sm:$0xff]
        %v4429 = vld [vmem:[#allocation7 + $0xfb8] sm:$0xff]
        %v4430 = vld [vmem:[#allocation7 + $0xfc0] sm:$0xff]
        %v4431 = vld [vmem:[#allocation7 + $0xfc8] sm:$0xff]
        %v4432 = vld [vmem:[#allocation7 + $0xfd0] sm:$0xff]
        %v4433 = vld [vmem:[#allocation7 + $0xfd8] sm:$0xff]
        %v4434 = vld [vmem:[#allocation7 + $0xfe0] sm:$0xff]
        %v4435 = vld [vmem:[#allocation7 + $0xfe8] sm:$0xff]
        %v4436 = vld [vmem:[#allocation7 + $0xff0] sm:$0xff]
        %v4437 = vld [vmem:[#allocation7 + $0xff8] sm:$0xff]
        %v4438 = vpack.c.bf16 %v3806, %v3798
        %v4439 = vpack.c.bf16 %v3807, %v3799
        %v4440 = vpack.c.bf16 %v3808, %v3800
        %v4441 = vpack.c.bf16 %v3809, %v3801
        %v4442 = vpack.c.bf16 %v3810, %v3802
        %v4443 = vpack.c.bf16 %v3811, %v3803
        %v4444 = vpack.c.bf16 %v3812, %v3804
        %v4445 = vpack.c.bf16 %v3813, %v3805
        %v4446 = vpack.c.bf16 %v3822, %v3814
        %v4447 = vpack.c.bf16 %v3823, %v3815
        %v4448 = vpack.c.bf16 %v3824, %v3816
        %v4449 = vpack.c.bf16 %v3825, %v3817
        %v4450 = vpack.c.bf16 %v3826, %v3818
        %v4451 = vpack.c.bf16 %v3827, %v3819
        %v4452 = vpack.c.bf16 %v3828, %v3820
        %v4453 = vpack.c.bf16 %v3829, %v3821
        %v4454 = vpack.c.bf16 %v3838, %v3830
        %v4455 = vpack.c.bf16 %v3839, %v3831
        %v4456 = vpack.c.bf16 %v3840, %v3832
        %v4457 = vpack.c.bf16 %v3841, %v3833
        %v4458 = vpack.c.bf16 %v3842, %v3834
        %v4459 = vpack.c.bf16 %v3843, %v3835
        %v4460 = vpack.c.bf16 %v3844, %v3836
        %v4461 = vpack.c.bf16 %v3845, %v3837
        %v4462 = vpack.c.bf16 %v3854, %v3846
        %v4463 = vpack.c.bf16 %v3855, %v3847
        %v4464 = vpack.c.bf16 %v3856, %v3848
        %v4465 = vpack.c.bf16 %v3857, %v3849
        %v4466 = vpack.c.bf16 %v3858, %v3850
        %v4467 = vpack.c.bf16 %v3859, %v3851
        %v4468 = vpack.c.bf16 %v3860, %v3852
        %v4469 = vpack.c.bf16 %v3861, %v3853
        %v4470 = vpack.c.bf16 %v3870, %v3862
        %v4471 = vpack.c.bf16 %v3871, %v3863
        %v4472 = vpack.c.bf16 %v3872, %v3864
        %v4473 = vpack.c.bf16 %v3873, %v3865
        %v4474 = vpack.c.bf16 %v3874, %v3866
        %v4475 = vpack.c.bf16 %v3875, %v3867
        %v4476 = vpack.c.bf16 %v3876, %v3868
        %v4477 = vpack.c.bf16 %v3877, %v3869
        %v4478 = vpack.c.bf16 %v3886, %v3878
        %v4479 = vpack.c.bf16 %v3887, %v3879
        %v4480 = vpack.c.bf16 %v3888, %v3880
        %v4481 = vpack.c.bf16 %v3889, %v3881
        %v4482 = vpack.c.bf16 %v3890, %v3882
        %v4483 = vpack.c.bf16 %v3891, %v3883
        %v4484 = vpack.c.bf16 %v3892, %v3884
        %v4485 = vpack.c.bf16 %v3893, %v3885
        %v4486 = vpack.c.bf16 %v3902, %v3894
        %v4487 = vpack.c.bf16 %v3903, %v3895
        %v4488 = vpack.c.bf16 %v3904, %v3896
        %v4489 = vpack.c.bf16 %v3905, %v3897
        %v4490 = vpack.c.bf16 %v3906, %v3898
        %v4491 = vpack.c.bf16 %v3907, %v3899
        %v4492 = vpack.c.bf16 %v3908, %v3900
        %v4493 = vpack.c.bf16 %v3909, %v3901
        %v4494 = vpack.c.bf16 %v3918, %v3910
        %v4495 = vpack.c.bf16 %v3919, %v3911
        %v4496 = vpack.c.bf16 %v3920, %v3912
        %v4497 = vpack.c.bf16 %v3921, %v3913
        %v4498 = vpack.c.bf16 %v3922, %v3914
        %v4499 = vpack.c.bf16 %v3923, %v3915
        %v4500 = vpack.c.bf16 %v3924, %v3916
        %v4501 = vpack.c.bf16 %v3925, %v3917
        %s4502 = scalar_lea.vmem [#allocation11], 3
        %v4503 = vld [vmem:[%s4502] ss:$8 sm:$0xf]
        %v4504 = vld [vmem:[%s4502] ss:$8 sm:$0xf0]
        %v4505 = vor.u32 %v4503, %v4504
        %s4506 = scalar_lea.vmem [#allocation11], 4
        %v4507 = vld [vmem:[%s4506] ss:$8 sm:$0xf]
        %v4508 = vld [vmem:[%s4506] ss:$8 sm:$0xf0]
        %v4509 = vor.u32 %v4507, %v4508
        %s4510 = scalar_lea.vmem [#allocation11], 5
        %v4511 = vld [vmem:[%s4510] ss:$8 sm:$0xf]
        %v4512 = vld [vmem:[%s4510] ss:$8 sm:$0xf0]
        %v4513 = vor.u32 %v4511, %v4512
        %v4515 = vperm.slane %v4505, 0
        %v4516 = vperm.slane %v4505, 1
        %v4517 = vperm.slane %v4505, 2
        %v4518 = vperm.slane %v4505, 3
        %v4519 = vperm.slane %v4505, 4
        %v4520 = vperm.slane %v4505, 5
        %v4521 = vperm.slane %v4505, 6
        %v4522 = vperm.slane %v4505, 7
        %v5043 = vunpack.c.l.b16 %v3926
        %v5044 = vunpack.c.h.b16 %v3926
        %v5045 = vunpack.c.l.b16 %v3927
        %v5046 = vunpack.c.h.b16 %v3927
        %v5047 = vunpack.c.l.b16 %v3928
        %v5048 = vunpack.c.h.b16 %v3928
        %v5049 = vunpack.c.l.b16 %v3929
        %v5050 = vunpack.c.h.b16 %v3929
        %v5051 = vunpack.c.l.b16 %v3930
        %v5052 = vunpack.c.h.b16 %v3930
        %v5053 = vunpack.c.l.b16 %v3931
        %v5054 = vunpack.c.h.b16 %v3931
        %v5055 = vunpack.c.l.b16 %v3932
        %v5056 = vunpack.c.h.b16 %v3932
        %v5057 = vunpack.c.l.b16 %v3933
        %v5058 = vunpack.c.h.b16 %v3933
        %v5059 = vunpack.c.l.b16 %v3934
        %v5060 = vunpack.c.h.b16 %v3934
        %v5061 = vunpack.c.l.b16 %v3935
        %v5062 = vunpack.c.h.b16 %v3935
        %v5063 = vunpack.c.l.b16 %v3936
        %v5064 = vunpack.c.h.b16 %v3936
        %v5065 = vunpack.c.l.b16 %v3937
        %v5066 = vunpack.c.h.b16 %v3937
        %v5067 = vunpack.c.l.b16 %v3938
        %v5068 = vunpack.c.h.b16 %v3938
        %v5069 = vunpack.c.l.b16 %v3939
        %v5070 = vunpack.c.h.b16 %v3939
        %v5071 = vunpack.c.l.b16 %v3940
        %v5072 = vunpack.c.h.b16 %v3940
        %v5073 = vunpack.c.l.b16 %v3941
        %v5074 = vunpack.c.h.b16 %v3941
        %v5075 = vunpack.c.l.b16 %v3942
        %v5076 = vunpack.c.h.b16 %v3942
        %v5077 = vunpack.c.l.b16 %v3943
        %v5078 = vunpack.c.h.b16 %v3943
        %v5079 = vunpack.c.l.b16 %v3944
        %v5080 = vunpack.c.h.b16 %v3944
        %v5081 = vunpack.c.l.b16 %v3945
        %v5082 = vunpack.c.h.b16 %v3945
        %v5083 = vunpack.c.l.b16 %v3946
        %v5084 = vunpack.c.h.b16 %v3946
        %v5085 = vunpack.c.l.b16 %v3947
        %v5086 = vunpack.c.h.b16 %v3947
        %v5087 = vunpack.c.l.b16 %v3948
        %v5088 = vunpack.c.h.b16 %v3948
        %v5089 = vunpack.c.l.b16 %v3949
        %v5090 = vunpack.c.h.b16 %v3949
        %v5091 = vunpack.c.l.b16 %v3950
        %v5092 = vunpack.c.h.b16 %v3950
        %v5093 = vunpack.c.l.b16 %v3951
        %v5094 = vunpack.c.h.b16 %v3951
        %v5095 = vunpack.c.l.b16 %v3952
        %v5096 = vunpack.c.h.b16 %v3952
        %v5097 = vunpack.c.l.b16 %v3953
        %v5098 = vunpack.c.h.b16 %v3953
        %v5099 = vunpack.c.l.b16 %v3954
        %v5100 = vunpack.c.h.b16 %v3954
        %v5101 = vunpack.c.l.b16 %v3955
        %v5102 = vunpack.c.h.b16 %v3955
        %v5103 = vunpack.c.l.b16 %v3956
        %v5104 = vunpack.c.h.b16 %v3956
        %v5105 = vunpack.c.l.b16 %v3957
        %v5106 = vunpack.c.h.b16 %v3957
        %v5107 = vunpack.c.l.b16 %v3958
        %v5108 = vunpack.c.h.b16 %v3958
        %v5109 = vunpack.c.l.b16 %v3959
        %v5110 = vunpack.c.h.b16 %v3959
        %v5111 = vunpack.c.l.b16 %v3960
        %v5112 = vunpack.c.h.b16 %v3960
        %v5113 = vunpack.c.l.b16 %v3961
        %v5114 = vunpack.c.h.b16 %v3961
        %v5115 = vunpack.c.l.b16 %v3962
        %v5116 = vunpack.c.h.b16 %v3962
        %v5117 = vunpack.c.l.b16 %v3963
        %v5118 = vunpack.c.h.b16 %v3963
        %v5119 = vunpack.c.l.b16 %v3964
        %v5120 = vunpack.c.h.b16 %v3964
        %v5121 = vunpack.c.l.b16 %v3965
        %v5122 = vunpack.c.h.b16 %v3965
        %v5123 = vunpack.c.l.b16 %v3966
        %v5124 = vunpack.c.h.b16 %v3966
        %v5125 = vunpack.c.l.b16 %v3967
        %v5126 = vunpack.c.h.b16 %v3967
        %v5127 = vunpack.c.l.b16 %v3968
        %v5128 = vunpack.c.h.b16 %v3968
        %v5129 = vunpack.c.l.b16 %v3969
        %v5130 = vunpack.c.h.b16 %v3969
        %v5131 = vunpack.c.l.b16 %v3970
        %v5132 = vunpack.c.h.b16 %v3970
        %v5133 = vunpack.c.l.b16 %v3971
        %v5134 = vunpack.c.h.b16 %v3971
        %v5135 = vunpack.c.l.b16 %v3972
        %v5136 = vunpack.c.h.b16 %v3972
        %v5137 = vunpack.c.l.b16 %v3973
        %v5138 = vunpack.c.h.b16 %v3973
        %v5139 = vunpack.c.l.b16 %v3974
        %v5140 = vunpack.c.h.b16 %v3974
        %v5141 = vunpack.c.l.b16 %v3975
        %v5142 = vunpack.c.h.b16 %v3975
        %v5143 = vunpack.c.l.b16 %v3976
        %v5144 = vunpack.c.h.b16 %v3976
        %v5145 = vunpack.c.l.b16 %v3977
        %v5146 = vunpack.c.h.b16 %v3977
        %v5147 = vunpack.c.l.b16 %v3978
        %v5148 = vunpack.c.h.b16 %v3978
        %v5149 = vunpack.c.l.b16 %v3979
        %v5150 = vunpack.c.h.b16 %v3979
        %v5151 = vunpack.c.l.b16 %v3980
        %v5152 = vunpack.c.h.b16 %v3980
        %v5153 = vunpack.c.l.b16 %v3981
        %v5154 = vunpack.c.h.b16 %v3981
        %v5155 = vunpack.c.l.b16 %v3982
        %v5156 = vunpack.c.h.b16 %v3982
        %v5157 = vunpack.c.l.b16 %v3983
        %v5158 = vunpack.c.h.b16 %v3983
        %v5159 = vunpack.c.l.b16 %v3984
        %v5160 = vunpack.c.h.b16 %v3984
        %v5161 = vunpack.c.l.b16 %v3985
        %v5162 = vunpack.c.h.b16 %v3985
        %v5163 = vunpack.c.l.b16 %v3986
        %v5164 = vunpack.c.h.b16 %v3986
        %v5165 = vunpack.c.l.b16 %v3987
        %v5166 = vunpack.c.h.b16 %v3987
        %v5167 = vunpack.c.l.b16 %v3988
        %v5168 = vunpack.c.h.b16 %v3988
        %v5169 = vunpack.c.l.b16 %v3989
        %v5170 = vunpack.c.h.b16 %v3989
        %v5171 = vunpack.c.l.b16 %v3990
        %v5172 = vunpack.c.h.b16 %v3990
        %v5173 = vunpack.c.l.b16 %v3991
        %v5174 = vunpack.c.h.b16 %v3991
        %v5175 = vunpack.c.l.b16 %v3992
        %v5176 = vunpack.c.h.b16 %v3992
        %v5177 = vunpack.c.l.b16 %v3993
        %v5178 = vunpack.c.h.b16 %v3993
        %v5179 = vunpack.c.l.b16 %v3994
        %v5180 = vunpack.c.h.b16 %v3994
        %v5181 = vunpack.c.l.b16 %v3995
        %v5182 = vunpack.c.h.b16 %v3995
        %v5183 = vunpack.c.l.b16 %v3996
        %v5184 = vunpack.c.h.b16 %v3996
        %v5185 = vunpack.c.l.b16 %v3997
        %v5186 = vunpack.c.h.b16 %v3997
        %v5187 = vunpack.c.l.b16 %v3998
        %v5188 = vunpack.c.h.b16 %v3998
        %v5189 = vunpack.c.l.b16 %v3999
        %v5190 = vunpack.c.h.b16 %v3999
        %v5191 = vunpack.c.l.b16 %v4000
        %v5192 = vunpack.c.h.b16 %v4000
        %v5193 = vunpack.c.l.b16 %v4001
        %v5194 = vunpack.c.h.b16 %v4001
        %v5195 = vunpack.c.l.b16 %v4002
        %v5196 = vunpack.c.h.b16 %v4002
        %v5197 = vunpack.c.l.b16 %v4003
        %v5198 = vunpack.c.h.b16 %v4003
        %v5199 = vunpack.c.l.b16 %v4004
        %v5200 = vunpack.c.h.b16 %v4004
        %v5201 = vunpack.c.l.b16 %v4005
        %v5202 = vunpack.c.h.b16 %v4005
        %v5203 = vunpack.c.l.b16 %v4006
        %v5204 = vunpack.c.h.b16 %v4006
        %v5205 = vunpack.c.l.b16 %v4007
        %v5206 = vunpack.c.h.b16 %v4007
        %v5207 = vunpack.c.l.b16 %v4008
        %v5208 = vunpack.c.h.b16 %v4008
        %v5209 = vunpack.c.l.b16 %v4009
        %v5210 = vunpack.c.h.b16 %v4009
        %v5211 = vunpack.c.l.b16 %v4010
        %v5212 = vunpack.c.h.b16 %v4010
        %v5213 = vunpack.c.l.b16 %v4011
        %v5214 = vunpack.c.h.b16 %v4011
        %v5215 = vunpack.c.l.b16 %v4012
        %v5216 = vunpack.c.h.b16 %v4012
        %v5217 = vunpack.c.l.b16 %v4013
        %v5218 = vunpack.c.h.b16 %v4013
        %v5219 = vunpack.c.l.b16 %v4014
        %v5220 = vunpack.c.h.b16 %v4014
        %v5221 = vunpack.c.l.b16 %v4015
        %v5222 = vunpack.c.h.b16 %v4015
        %v5223 = vunpack.c.l.b16 %v4016
        %v5224 = vunpack.c.h.b16 %v4016
        %v5225 = vunpack.c.l.b16 %v4017
        %v5226 = vunpack.c.h.b16 %v4017
        %v5227 = vunpack.c.l.b16 %v4018
        %v5228 = vunpack.c.h.b16 %v4018
        %v5229 = vunpack.c.l.b16 %v4019
        %v5230 = vunpack.c.h.b16 %v4019
        %v5231 = vunpack.c.l.b16 %v4020
        %v5232 = vunpack.c.h.b16 %v4020
        %v5233 = vunpack.c.l.b16 %v4021
        %v5234 = vunpack.c.h.b16 %v4021
        %v5235 = vunpack.c.l.b16 %v4022
        %v5236 = vunpack.c.h.b16 %v4022
        %v5237 = vunpack.c.l.b16 %v4023
        %v5238 = vunpack.c.h.b16 %v4023
        %v5239 = vunpack.c.l.b16 %v4024
        %v5240 = vunpack.c.h.b16 %v4024
        %v5241 = vunpack.c.l.b16 %v4025
        %v5242 = vunpack.c.h.b16 %v4025
        %v5243 = vunpack.c.l.b16 %v4026
        %v5244 = vunpack.c.h.b16 %v4026
        %v5245 = vunpack.c.l.b16 %v4027
        %v5246 = vunpack.c.h.b16 %v4027
        %v5247 = vunpack.c.l.b16 %v4028
        %v5248 = vunpack.c.h.b16 %v4028
        %v5249 = vunpack.c.l.b16 %v4029
        %v5250 = vunpack.c.h.b16 %v4029
        %v5251 = vunpack.c.l.b16 %v4030
        %v5252 = vunpack.c.h.b16 %v4030
        %v5253 = vunpack.c.l.b16 %v4031
        %v5254 = vunpack.c.h.b16 %v4031
        %v5255 = vunpack.c.l.b16 %v4032
        %v5256 = vunpack.c.h.b16 %v4032
        %v5257 = vunpack.c.l.b16 %v4033
        %v5258 = vunpack.c.h.b16 %v4033
        %v5259 = vunpack.c.l.b16 %v4034
        %v5260 = vunpack.c.h.b16 %v4034
        %v5261 = vunpack.c.l.b16 %v4035
        %v5262 = vunpack.c.h.b16 %v4035
        %v5263 = vunpack.c.l.b16 %v4036
        %v5264 = vunpack.c.h.b16 %v4036
        %v5265 = vunpack.c.l.b16 %v4037
        %v5266 = vunpack.c.h.b16 %v4037
        %v5267 = vunpack.c.l.b16 %v4038
        %v5268 = vunpack.c.h.b16 %v4038
        %v5269 = vunpack.c.l.b16 %v4039
        %v5270 = vunpack.c.h.b16 %v4039
        %v5271 = vunpack.c.l.b16 %v4040
        %v5272 = vunpack.c.h.b16 %v4040
        %v5273 = vunpack.c.l.b16 %v4041
        %v5274 = vunpack.c.h.b16 %v4041
        %v5275 = vunpack.c.l.b16 %v4042
        %v5276 = vunpack.c.h.b16 %v4042
        %v5277 = vunpack.c.l.b16 %v4043
        %v5278 = vunpack.c.h.b16 %v4043
        %v5279 = vunpack.c.l.b16 %v4044
        %v5280 = vunpack.c.h.b16 %v4044
        %v5281 = vunpack.c.l.b16 %v4045
        %v5282 = vunpack.c.h.b16 %v4045
        %v5283 = vunpack.c.l.b16 %v4046
        %v5284 = vunpack.c.h.b16 %v4046
        %v5285 = vunpack.c.l.b16 %v4047
        %v5286 = vunpack.c.h.b16 %v4047
        %v5287 = vunpack.c.l.b16 %v4048
        %v5288 = vunpack.c.h.b16 %v4048
        %v5289 = vunpack.c.l.b16 %v4049
        %v5290 = vunpack.c.h.b16 %v4049
        %v5291 = vunpack.c.l.b16 %v4050
        %v5292 = vunpack.c.h.b16 %v4050
        %v5293 = vunpack.c.l.b16 %v4051
        %v5294 = vunpack.c.h.b16 %v4051
        %v5295 = vunpack.c.l.b16 %v4052
        %v5296 = vunpack.c.h.b16 %v4052
        %v5297 = vunpack.c.l.b16 %v4053
        %v5298 = vunpack.c.h.b16 %v4053
        %v5299 = vunpack.c.l.b16 %v4054
        %v5300 = vunpack.c.h.b16 %v4054
        %v5301 = vunpack.c.l.b16 %v4055
        %v5302 = vunpack.c.h.b16 %v4055
        %v5303 = vunpack.c.l.b16 %v4056
        %v5304 = vunpack.c.h.b16 %v4056
        %v5305 = vunpack.c.l.b16 %v4057
        %v5306 = vunpack.c.h.b16 %v4057
        %v5307 = vunpack.c.l.b16 %v4058
        %v5308 = vunpack.c.h.b16 %v4058
        %v5309 = vunpack.c.l.b16 %v4059
        %v5310 = vunpack.c.h.b16 %v4059
        %v5311 = vunpack.c.l.b16 %v4060
        %v5312 = vunpack.c.h.b16 %v4060
        %v5313 = vunpack.c.l.b16 %v4061
        %v5314 = vunpack.c.h.b16 %v4061
        %v5315 = vunpack.c.l.b16 %v4062
        %v5316 = vunpack.c.h.b16 %v4062
        %v5317 = vunpack.c.l.b16 %v4063
        %v5318 = vunpack.c.h.b16 %v4063
        %v5319 = vunpack.c.l.b16 %v4064
        %v5320 = vunpack.c.h.b16 %v4064
        %v5321 = vunpack.c.l.b16 %v4065
        %v5322 = vunpack.c.h.b16 %v4065
        %v5323 = vunpack.c.l.b16 %v4066
        %v5324 = vunpack.c.h.b16 %v4066
        %v5325 = vunpack.c.l.b16 %v4067
        %v5326 = vunpack.c.h.b16 %v4067
        %v5327 = vunpack.c.l.b16 %v4068
        %v5328 = vunpack.c.h.b16 %v4068
        %v5329 = vunpack.c.l.b16 %v4069
        %v5330 = vunpack.c.h.b16 %v4069
        %v5331 = vunpack.c.l.b16 %v4070
        %v5332 = vunpack.c.h.b16 %v4070
        %v5333 = vunpack.c.l.b16 %v4071
        %v5334 = vunpack.c.h.b16 %v4071
        %v5335 = vunpack.c.l.b16 %v4072
        %v5336 = vunpack.c.h.b16 %v4072
        %v5337 = vunpack.c.l.b16 %v4073
        %v5338 = vunpack.c.h.b16 %v4073
        %v5339 = vunpack.c.l.b16 %v4074
        %v5340 = vunpack.c.h.b16 %v4074
        %v5341 = vunpack.c.l.b16 %v4075
        %v5342 = vunpack.c.h.b16 %v4075
        %v5343 = vunpack.c.l.b16 %v4076
        %v5344 = vunpack.c.h.b16 %v4076
        %v5345 = vunpack.c.l.b16 %v4077
        %v5346 = vunpack.c.h.b16 %v4077
        %v5347 = vunpack.c.l.b16 %v4078
        %v5348 = vunpack.c.h.b16 %v4078
        %v5349 = vunpack.c.l.b16 %v4079
        %v5350 = vunpack.c.h.b16 %v4079
        %v5351 = vunpack.c.l.b16 %v4080
        %v5352 = vunpack.c.h.b16 %v4080
        %v5353 = vunpack.c.l.b16 %v4081
        %v5354 = vunpack.c.h.b16 %v4081
        %v5355 = vunpack.c.l.b16 %v4082
        %v5356 = vunpack.c.h.b16 %v4082
        %v5357 = vunpack.c.l.b16 %v4083
        %v5358 = vunpack.c.h.b16 %v4083
        %v5359 = vunpack.c.l.b16 %v4084
        %v5360 = vunpack.c.h.b16 %v4084
        %v5361 = vunpack.c.l.b16 %v4085
        %v5362 = vunpack.c.h.b16 %v4085
        %v5363 = vunpack.c.l.b16 %v4086
        %v5364 = vunpack.c.h.b16 %v4086
        %v5365 = vunpack.c.l.b16 %v4087
        %v5366 = vunpack.c.h.b16 %v4087
        %v5367 = vunpack.c.l.b16 %v4088
        %v5368 = vunpack.c.h.b16 %v4088
        %v5369 = vunpack.c.l.b16 %v4089
        %v5370 = vunpack.c.h.b16 %v4089
        %v5371 = vunpack.c.l.b16 %v4090
        %v5372 = vunpack.c.h.b16 %v4090
        %v5373 = vunpack.c.l.b16 %v4091
        %v5374 = vunpack.c.h.b16 %v4091
        %v5375 = vunpack.c.l.b16 %v4092
        %v5376 = vunpack.c.h.b16 %v4092
        %v5377 = vunpack.c.l.b16 %v4093
        %v5378 = vunpack.c.h.b16 %v4093
        %v5379 = vunpack.c.l.b16 %v4094
        %v5380 = vunpack.c.h.b16 %v4094
        %v5381 = vunpack.c.l.b16 %v4095
        %v5382 = vunpack.c.h.b16 %v4095
        %v5383 = vunpack.c.l.b16 %v4096
        %v5384 = vunpack.c.h.b16 %v4096
        %v5385 = vunpack.c.l.b16 %v4097
        %v5386 = vunpack.c.h.b16 %v4097
        %v5387 = vunpack.c.l.b16 %v4098
        %v5388 = vunpack.c.h.b16 %v4098
        %v5389 = vunpack.c.l.b16 %v4099
        %v5390 = vunpack.c.h.b16 %v4099
        %v5391 = vunpack.c.l.b16 %v4100
        %v5392 = vunpack.c.h.b16 %v4100
        %v5393 = vunpack.c.l.b16 %v4101
        %v5394 = vunpack.c.h.b16 %v4101
        %v5395 = vunpack.c.l.b16 %v4102
        %v5396 = vunpack.c.h.b16 %v4102
        %v5397 = vunpack.c.l.b16 %v4103
        %v5398 = vunpack.c.h.b16 %v4103
        %v5399 = vunpack.c.l.b16 %v4104
        %v5400 = vunpack.c.h.b16 %v4104
        %v5401 = vunpack.c.l.b16 %v4105
        %v5402 = vunpack.c.h.b16 %v4105
        %v5403 = vunpack.c.l.b16 %v4106
        %v5404 = vunpack.c.h.b16 %v4106
        %v5405 = vunpack.c.l.b16 %v4107
        %v5406 = vunpack.c.h.b16 %v4107
        %v5407 = vunpack.c.l.b16 %v4108
        %v5408 = vunpack.c.h.b16 %v4108
        %v5409 = vunpack.c.l.b16 %v4109
        %v5410 = vunpack.c.h.b16 %v4109
        %v5411 = vunpack.c.l.b16 %v4110
        %v5412 = vunpack.c.h.b16 %v4110
        %v5413 = vunpack.c.l.b16 %v4111
        %v5414 = vunpack.c.h.b16 %v4111
        %v5415 = vunpack.c.l.b16 %v4112
        %v5416 = vunpack.c.h.b16 %v4112
        %v5417 = vunpack.c.l.b16 %v4113
        %v5418 = vunpack.c.h.b16 %v4113
        %v5419 = vunpack.c.l.b16 %v4114
        %v5420 = vunpack.c.h.b16 %v4114
        %v5421 = vunpack.c.l.b16 %v4115
        %v5422 = vunpack.c.h.b16 %v4115
        %v5423 = vunpack.c.l.b16 %v4116
        %v5424 = vunpack.c.h.b16 %v4116
        %v5425 = vunpack.c.l.b16 %v4117
        %v5426 = vunpack.c.h.b16 %v4117
        %v5427 = vunpack.c.l.b16 %v4118
        %v5428 = vunpack.c.h.b16 %v4118
        %v5429 = vunpack.c.l.b16 %v4119
        %v5430 = vunpack.c.h.b16 %v4119
        %v5431 = vunpack.c.l.b16 %v4120
        %v5432 = vunpack.c.h.b16 %v4120
        %v5433 = vunpack.c.l.b16 %v4121
        %v5434 = vunpack.c.h.b16 %v4121
        %v5435 = vunpack.c.l.b16 %v4122
        %v5436 = vunpack.c.h.b16 %v4122
        %v5437 = vunpack.c.l.b16 %v4123
        %v5438 = vunpack.c.h.b16 %v4123
        %v5439 = vunpack.c.l.b16 %v4124
        %v5440 = vunpack.c.h.b16 %v4124
        %v5441 = vunpack.c.l.b16 %v4125
        %v5442 = vunpack.c.h.b16 %v4125
        %v5443 = vunpack.c.l.b16 %v4126
        %v5444 = vunpack.c.h.b16 %v4126
        %v5445 = vunpack.c.l.b16 %v4127
        %v5446 = vunpack.c.h.b16 %v4127
        %v5447 = vunpack.c.l.b16 %v4128
        %v5448 = vunpack.c.h.b16 %v4128
        %v5449 = vunpack.c.l.b16 %v4129
        %v5450 = vunpack.c.h.b16 %v4129
        %v5451 = vunpack.c.l.b16 %v4130
        %v5452 = vunpack.c.h.b16 %v4130
        %v5453 = vunpack.c.l.b16 %v4131
        %v5454 = vunpack.c.h.b16 %v4131
        %v5455 = vunpack.c.l.b16 %v4132
        %v5456 = vunpack.c.h.b16 %v4132
        %v5457 = vunpack.c.l.b16 %v4133
        %v5458 = vunpack.c.h.b16 %v4133
        %v5459 = vunpack.c.l.b16 %v4134
        %v5460 = vunpack.c.h.b16 %v4134
        %v5461 = vunpack.c.l.b16 %v4135
        %v5462 = vunpack.c.h.b16 %v4135
        %v5463 = vunpack.c.l.b16 %v4136
        %v5464 = vunpack.c.h.b16 %v4136
        %v5465 = vunpack.c.l.b16 %v4137
        %v5466 = vunpack.c.h.b16 %v4137
        %v5467 = vunpack.c.l.b16 %v4138
        %v5468 = vunpack.c.h.b16 %v4138
        %v5469 = vunpack.c.l.b16 %v4139
        %v5470 = vunpack.c.h.b16 %v4139
        %v5471 = vunpack.c.l.b16 %v4140
        %v5472 = vunpack.c.h.b16 %v4140
        %v5473 = vunpack.c.l.b16 %v4141
        %v5474 = vunpack.c.h.b16 %v4141
        %v5475 = vunpack.c.l.b16 %v4142
        %v5476 = vunpack.c.h.b16 %v4142
        %v5477 = vunpack.c.l.b16 %v4143
        %v5478 = vunpack.c.h.b16 %v4143
        %v5479 = vunpack.c.l.b16 %v4144
        %v5480 = vunpack.c.h.b16 %v4144
        %v5481 = vunpack.c.l.b16 %v4145
        %v5482 = vunpack.c.h.b16 %v4145
        %v5483 = vunpack.c.l.b16 %v4146
        %v5484 = vunpack.c.h.b16 %v4146
        %v5485 = vunpack.c.l.b16 %v4147
        %v5486 = vunpack.c.h.b16 %v4147
        %v5487 = vunpack.c.l.b16 %v4148
        %v5488 = vunpack.c.h.b16 %v4148
        %v5489 = vunpack.c.l.b16 %v4149
        %v5490 = vunpack.c.h.b16 %v4149
        %v5491 = vunpack.c.l.b16 %v4150
        %v5492 = vunpack.c.h.b16 %v4150
        %v5493 = vunpack.c.l.b16 %v4151
        %v5494 = vunpack.c.h.b16 %v4151
        %v5495 = vunpack.c.l.b16 %v4152
        %v5496 = vunpack.c.h.b16 %v4152
        %v5497 = vunpack.c.l.b16 %v4153
        %v5498 = vunpack.c.h.b16 %v4153
        %v5499 = vunpack.c.l.b16 %v4154
        %v5500 = vunpack.c.h.b16 %v4154
        %v5501 = vunpack.c.l.b16 %v4155
        %v5502 = vunpack.c.h.b16 %v4155
        %v5503 = vunpack.c.l.b16 %v4156
        %v5504 = vunpack.c.h.b16 %v4156
        %v5505 = vunpack.c.l.b16 %v4157
        %v5506 = vunpack.c.h.b16 %v4157
        %v5507 = vunpack.c.l.b16 %v4158
        %v5508 = vunpack.c.h.b16 %v4158
        %v5509 = vunpack.c.l.b16 %v4159
        %v5510 = vunpack.c.h.b16 %v4159
        %v5511 = vunpack.c.l.b16 %v4160
        %v5512 = vunpack.c.h.b16 %v4160
        %v5513 = vunpack.c.l.b16 %v4161
        %v5514 = vunpack.c.h.b16 %v4161
        %v5515 = vunpack.c.l.b16 %v4162
        %v5516 = vunpack.c.h.b16 %v4162
        %v5517 = vunpack.c.l.b16 %v4163
        %v5518 = vunpack.c.h.b16 %v4163
        %v5519 = vunpack.c.l.b16 %v4164
        %v5520 = vunpack.c.h.b16 %v4164
        %v5521 = vunpack.c.l.b16 %v4165
        %v5522 = vunpack.c.h.b16 %v4165
        %v5523 = vunpack.c.l.b16 %v4166
        %v5524 = vunpack.c.h.b16 %v4166
        %v5525 = vunpack.c.l.b16 %v4167
        %v5526 = vunpack.c.h.b16 %v4167
        %v5527 = vunpack.c.l.b16 %v4168
        %v5528 = vunpack.c.h.b16 %v4168
        %v5529 = vunpack.c.l.b16 %v4169
        %v5530 = vunpack.c.h.b16 %v4169
        %v5531 = vunpack.c.l.b16 %v4170
        %v5532 = vunpack.c.h.b16 %v4170
        %v5533 = vunpack.c.l.b16 %v4171
        %v5534 = vunpack.c.h.b16 %v4171
        %v5535 = vunpack.c.l.b16 %v4172
        %v5536 = vunpack.c.h.b16 %v4172
        %v5537 = vunpack.c.l.b16 %v4173
        %v5538 = vunpack.c.h.b16 %v4173
        %v5539 = vunpack.c.l.b16 %v4174
        %v5540 = vunpack.c.h.b16 %v4174
        %v5541 = vunpack.c.l.b16 %v4175
        %v5542 = vunpack.c.h.b16 %v4175
        %v5543 = vunpack.c.l.b16 %v4176
        %v5544 = vunpack.c.h.b16 %v4176
        %v5545 = vunpack.c.l.b16 %v4177
        %v5546 = vunpack.c.h.b16 %v4177
        %v5547 = vunpack.c.l.b16 %v4178
        %v5548 = vunpack.c.h.b16 %v4178
        %v5549 = vunpack.c.l.b16 %v4179
        %v5550 = vunpack.c.h.b16 %v4179
        %v5551 = vunpack.c.l.b16 %v4180
        %v5552 = vunpack.c.h.b16 %v4180
        %v5553 = vunpack.c.l.b16 %v4181
        %v5554 = vunpack.c.h.b16 %v4181
        %v5555 = vunpack.c.l.b16 %v4182
        %v5556 = vunpack.c.h.b16 %v4182
        %v5557 = vunpack.c.l.b16 %v4183
        %v5558 = vunpack.c.h.b16 %v4183
        %v5559 = vunpack.c.l.b16 %v4184
        %v5560 = vunpack.c.h.b16 %v4184
        %v5561 = vunpack.c.l.b16 %v4185
        %v5562 = vunpack.c.h.b16 %v4185
        %v5563 = vunpack.c.l.b16 %v4186
        %v5564 = vunpack.c.h.b16 %v4186
        %v5565 = vunpack.c.l.b16 %v4187
        %v5566 = vunpack.c.h.b16 %v4187
        %v5567 = vunpack.c.l.b16 %v4188
        %v5568 = vunpack.c.h.b16 %v4188
        %v5569 = vunpack.c.l.b16 %v4189
        %v5570 = vunpack.c.h.b16 %v4189
        %v5571 = vunpack.c.l.b16 %v4190
        %v5572 = vunpack.c.h.b16 %v4190
        %v5573 = vunpack.c.l.b16 %v4191
        %v5574 = vunpack.c.h.b16 %v4191
        %v5575 = vunpack.c.l.b16 %v4192
        %v5576 = vunpack.c.h.b16 %v4192
        %v5577 = vunpack.c.l.b16 %v4193
        %v5578 = vunpack.c.h.b16 %v4193
        %v5579 = vunpack.c.l.b16 %v4194
        %v5580 = vunpack.c.h.b16 %v4194
        %v5581 = vunpack.c.l.b16 %v4195
        %v5582 = vunpack.c.h.b16 %v4195
        %v5583 = vunpack.c.l.b16 %v4196
        %v5584 = vunpack.c.h.b16 %v4196
        %v5585 = vunpack.c.l.b16 %v4197
        %v5586 = vunpack.c.h.b16 %v4197
        %v5587 = vunpack.c.l.b16 %v4198
        %v5588 = vunpack.c.h.b16 %v4198
        %v5589 = vunpack.c.l.b16 %v4199
        %v5590 = vunpack.c.h.b16 %v4199
        %v5591 = vunpack.c.l.b16 %v4200
        %v5592 = vunpack.c.h.b16 %v4200
        %v5593 = vunpack.c.l.b16 %v4201
        %v5594 = vunpack.c.h.b16 %v4201
        %v5595 = vunpack.c.l.b16 %v4202
        %v5596 = vunpack.c.h.b16 %v4202
        %v5597 = vunpack.c.l.b16 %v4203
        %v5598 = vunpack.c.h.b16 %v4203
        %v5599 = vunpack.c.l.b16 %v4204
        %v5600 = vunpack.c.h.b16 %v4204
        %v5601 = vunpack.c.l.b16 %v4205
        %v5602 = vunpack.c.h.b16 %v4205
        %v5603 = vunpack.c.l.b16 %v4206
        %v5604 = vunpack.c.h.b16 %v4206
        %v5605 = vunpack.c.l.b16 %v4207
        %v5606 = vunpack.c.h.b16 %v4207
        %v5607 = vunpack.c.l.b16 %v4208
        %v5608 = vunpack.c.h.b16 %v4208
        %v5609 = vunpack.c.l.b16 %v4209
        %v5610 = vunpack.c.h.b16 %v4209
        %v5611 = vunpack.c.l.b16 %v4210
        %v5612 = vunpack.c.h.b16 %v4210
        %v5613 = vunpack.c.l.b16 %v4211
        %v5614 = vunpack.c.h.b16 %v4211
        %v5615 = vunpack.c.l.b16 %v4212
        %v5616 = vunpack.c.h.b16 %v4212
        %v5617 = vunpack.c.l.b16 %v4213
        %v5618 = vunpack.c.h.b16 %v4213
        %v5619 = vunpack.c.l.b16 %v4214
        %v5620 = vunpack.c.h.b16 %v4214
        %v5621 = vunpack.c.l.b16 %v4215
        %v5622 = vunpack.c.h.b16 %v4215
        %v5623 = vunpack.c.l.b16 %v4216
        %v5624 = vunpack.c.h.b16 %v4216
        %v5625 = vunpack.c.l.b16 %v4217
        %v5626 = vunpack.c.h.b16 %v4217
        %v5627 = vunpack.c.l.b16 %v4218
        %v5628 = vunpack.c.h.b16 %v4218
        %v5629 = vunpack.c.l.b16 %v4219
        %v5630 = vunpack.c.h.b16 %v4219
        %v5631 = vunpack.c.l.b16 %v4220
        %v5632 = vunpack.c.h.b16 %v4220
        %v5633 = vunpack.c.l.b16 %v4221
        %v5634 = vunpack.c.h.b16 %v4221
        %v5635 = vunpack.c.l.b16 %v4222
        %v5636 = vunpack.c.h.b16 %v4222
        %v5637 = vunpack.c.l.b16 %v4223
        %v5638 = vunpack.c.h.b16 %v4223
        %v5639 = vunpack.c.l.b16 %v4224
        %v5640 = vunpack.c.h.b16 %v4224
        %v5641 = vunpack.c.l.b16 %v4225
        %v5642 = vunpack.c.h.b16 %v4225
        %v5643 = vunpack.c.l.b16 %v4226
        %v5644 = vunpack.c.h.b16 %v4226
        %v5645 = vunpack.c.l.b16 %v4227
        %v5646 = vunpack.c.h.b16 %v4227
        %v5647 = vunpack.c.l.b16 %v4228
        %v5648 = vunpack.c.h.b16 %v4228
        %v5649 = vunpack.c.l.b16 %v4229
        %v5650 = vunpack.c.h.b16 %v4229
        %v5651 = vunpack.c.l.b16 %v4230
        %v5652 = vunpack.c.h.b16 %v4230
        %v5653 = vunpack.c.l.b16 %v4231
        %v5654 = vunpack.c.h.b16 %v4231
        %v5655 = vunpack.c.l.b16 %v4232
        %v5656 = vunpack.c.h.b16 %v4232
        %v5657 = vunpack.c.l.b16 %v4233
        %v5658 = vunpack.c.h.b16 %v4233
        %v5659 = vunpack.c.l.b16 %v4234
        %v5660 = vunpack.c.h.b16 %v4234
        %v5661 = vunpack.c.l.b16 %v4235
        %v5662 = vunpack.c.h.b16 %v4235
        %v5663 = vunpack.c.l.b16 %v4236
        %v5664 = vunpack.c.h.b16 %v4236
        %v5665 = vunpack.c.l.b16 %v4237
        %v5666 = vunpack.c.h.b16 %v4237
        %v5667 = vunpack.c.l.b16 %v4238
        %v5668 = vunpack.c.h.b16 %v4238
        %v5669 = vunpack.c.l.b16 %v4239
        %v5670 = vunpack.c.h.b16 %v4239
        %v5671 = vunpack.c.l.b16 %v4240
        %v5672 = vunpack.c.h.b16 %v4240
        %v5673 = vunpack.c.l.b16 %v4241
        %v5674 = vunpack.c.h.b16 %v4241
        %v5675 = vunpack.c.l.b16 %v4242
        %v5676 = vunpack.c.h.b16 %v4242
        %v5677 = vunpack.c.l.b16 %v4243
        %v5678 = vunpack.c.h.b16 %v4243
        %v5679 = vunpack.c.l.b16 %v4244
        %v5680 = vunpack.c.h.b16 %v4244
        %v5681 = vunpack.c.l.b16 %v4245
        %v5682 = vunpack.c.h.b16 %v4245
        %v5683 = vunpack.c.l.b16 %v4246
        %v5684 = vunpack.c.h.b16 %v4246
        %v5685 = vunpack.c.l.b16 %v4247
        %v5686 = vunpack.c.h.b16 %v4247
        %v5687 = vunpack.c.l.b16 %v4248
        %v5688 = vunpack.c.h.b16 %v4248
        %v5689 = vunpack.c.l.b16 %v4249
        %v5690 = vunpack.c.h.b16 %v4249
        %v5691 = vunpack.c.l.b16 %v4250
        %v5692 = vunpack.c.h.b16 %v4250
        %v5693 = vunpack.c.l.b16 %v4251
        %v5694 = vunpack.c.h.b16 %v4251
        %v5695 = vunpack.c.l.b16 %v4252
        %v5696 = vunpack.c.h.b16 %v4252
        %v5697 = vunpack.c.l.b16 %v4253
        %v5698 = vunpack.c.h.b16 %v4253
        %v5699 = vunpack.c.l.b16 %v4254
        %v5700 = vunpack.c.h.b16 %v4254
        %v5701 = vunpack.c.l.b16 %v4255
        %v5702 = vunpack.c.h.b16 %v4255
        %v5703 = vunpack.c.l.b16 %v4256
        %v5704 = vunpack.c.h.b16 %v4256
        %v5705 = vunpack.c.l.b16 %v4257
        %v5706 = vunpack.c.h.b16 %v4257
        %v5707 = vunpack.c.l.b16 %v4258
        %v5708 = vunpack.c.h.b16 %v4258
        %v5709 = vunpack.c.l.b16 %v4259
        %v5710 = vunpack.c.h.b16 %v4259
        %v5711 = vunpack.c.l.b16 %v4260
        %v5712 = vunpack.c.h.b16 %v4260
        %v5713 = vunpack.c.l.b16 %v4261
        %v5714 = vunpack.c.h.b16 %v4261
        %v5715 = vunpack.c.l.b16 %v4262
        %v5716 = vunpack.c.h.b16 %v4262
        %v5717 = vunpack.c.l.b16 %v4263
        %v5718 = vunpack.c.h.b16 %v4263
        %v5719 = vunpack.c.l.b16 %v4264
        %v5720 = vunpack.c.h.b16 %v4264
        %v5721 = vunpack.c.l.b16 %v4265
        %v5722 = vunpack.c.h.b16 %v4265
        %v5723 = vunpack.c.l.b16 %v4266
        %v5724 = vunpack.c.h.b16 %v4266
        %v5725 = vunpack.c.l.b16 %v4267
        %v5726 = vunpack.c.h.b16 %v4267
        %v5727 = vunpack.c.l.b16 %v4268
        %v5728 = vunpack.c.h.b16 %v4268
        %v5729 = vunpack.c.l.b16 %v4269
        %v5730 = vunpack.c.h.b16 %v4269
        %v5731 = vunpack.c.l.b16 %v4270
        %v5732 = vunpack.c.h.b16 %v4270
        %v5733 = vunpack.c.l.b16 %v4271
        %v5734 = vunpack.c.h.b16 %v4271
        %v5735 = vunpack.c.l.b16 %v4272
        %v5736 = vunpack.c.h.b16 %v4272
        %v5737 = vunpack.c.l.b16 %v4273
        %v5738 = vunpack.c.h.b16 %v4273
        %v5739 = vunpack.c.l.b16 %v4274
        %v5740 = vunpack.c.h.b16 %v4274
        %v5741 = vunpack.c.l.b16 %v4275
        %v5742 = vunpack.c.h.b16 %v4275
        %v5743 = vunpack.c.l.b16 %v4276
        %v5744 = vunpack.c.h.b16 %v4276
        %v5745 = vunpack.c.l.b16 %v4277
        %v5746 = vunpack.c.h.b16 %v4277
        %v5747 = vunpack.c.l.b16 %v4278
        %v5748 = vunpack.c.h.b16 %v4278
        %v5749 = vunpack.c.l.b16 %v4279
        %v5750 = vunpack.c.h.b16 %v4279
        %v5751 = vunpack.c.l.b16 %v4280
        %v5752 = vunpack.c.h.b16 %v4280
        %v5753 = vunpack.c.l.b16 %v4281
        %v5754 = vunpack.c.h.b16 %v4281
        %v5755 = vunpack.c.l.b16 %v4282
        %v5756 = vunpack.c.h.b16 %v4282
        %v5757 = vunpack.c.l.b16 %v4283
        %v5758 = vunpack.c.h.b16 %v4283
        %v5759 = vunpack.c.l.b16 %v4284
        %v5760 = vunpack.c.h.b16 %v4284
        %v5761 = vunpack.c.l.b16 %v4285
        %v5762 = vunpack.c.h.b16 %v4285
        %v5763 = vunpack.c.l.b16 %v4286
        %v5764 = vunpack.c.h.b16 %v4286
        %v5765 = vunpack.c.l.b16 %v4287
        %v5766 = vunpack.c.h.b16 %v4287
        %v5767 = vunpack.c.l.b16 %v4288
        %v5768 = vunpack.c.h.b16 %v4288
        %v5769 = vunpack.c.l.b16 %v4289
        %v5770 = vunpack.c.h.b16 %v4289
        %v5771 = vunpack.c.l.b16 %v4290
        %v5772 = vunpack.c.h.b16 %v4290
        %v5773 = vunpack.c.l.b16 %v4291
        %v5774 = vunpack.c.h.b16 %v4291
        %v5775 = vunpack.c.l.b16 %v4292
        %v5776 = vunpack.c.h.b16 %v4292
        %v5777 = vunpack.c.l.b16 %v4293
        %v5778 = vunpack.c.h.b16 %v4293
        %v5779 = vunpack.c.l.b16 %v4294
        %v5780 = vunpack.c.h.b16 %v4294
        %v5781 = vunpack.c.l.b16 %v4295
        %v5782 = vunpack.c.h.b16 %v4295
        %v5783 = vunpack.c.l.b16 %v4296
        %v5784 = vunpack.c.h.b16 %v4296
        %v5785 = vunpack.c.l.b16 %v4297
        %v5786 = vunpack.c.h.b16 %v4297
        %v5787 = vunpack.c.l.b16 %v4298
        %v5788 = vunpack.c.h.b16 %v4298
        %v5789 = vunpack.c.l.b16 %v4299
        %v5790 = vunpack.c.h.b16 %v4299
        %v5791 = vunpack.c.l.b16 %v4300
        %v5792 = vunpack.c.h.b16 %v4300
        %v5793 = vunpack.c.l.b16 %v4301
        %v5794 = vunpack.c.h.b16 %v4301
        %v5795 = vunpack.c.l.b16 %v4302
        %v5796 = vunpack.c.h.b16 %v4302
        %v5797 = vunpack.c.l.b16 %v4303
        %v5798 = vunpack.c.h.b16 %v4303
        %v5799 = vunpack.c.l.b16 %v4304
        %v5800 = vunpack.c.h.b16 %v4304
        %v5801 = vunpack.c.l.b16 %v4305
        %v5802 = vunpack.c.h.b16 %v4305
        %v5803 = vunpack.c.l.b16 %v4306
        %v5804 = vunpack.c.h.b16 %v4306
        %v5805 = vunpack.c.l.b16 %v4307
        %v5806 = vunpack.c.h.b16 %v4307
        %v5807 = vunpack.c.l.b16 %v4308
        %v5808 = vunpack.c.h.b16 %v4308
        %v5809 = vunpack.c.l.b16 %v4309
        %v5810 = vunpack.c.h.b16 %v4309
        %v5811 = vunpack.c.l.b16 %v4310
        %v5812 = vunpack.c.h.b16 %v4310
        %v5813 = vunpack.c.l.b16 %v4311
        %v5814 = vunpack.c.h.b16 %v4311
        %v5815 = vunpack.c.l.b16 %v4312
        %v5816 = vunpack.c.h.b16 %v4312
        %v5817 = vunpack.c.l.b16 %v4313
        %v5818 = vunpack.c.h.b16 %v4313
        %v5819 = vunpack.c.l.b16 %v4314
        %v5820 = vunpack.c.h.b16 %v4314
        %v5821 = vunpack.c.l.b16 %v4315
        %v5822 = vunpack.c.h.b16 %v4315
        %v5823 = vunpack.c.l.b16 %v4316
        %v5824 = vunpack.c.h.b16 %v4316
        %v5825 = vunpack.c.l.b16 %v4317
        %v5826 = vunpack.c.h.b16 %v4317
        %v5827 = vunpack.c.l.b16 %v4318
        %v5828 = vunpack.c.h.b16 %v4318
        %v5829 = vunpack.c.l.b16 %v4319
        %v5830 = vunpack.c.h.b16 %v4319
        %v5831 = vunpack.c.l.b16 %v4320
        %v5832 = vunpack.c.h.b16 %v4320
        %v5833 = vunpack.c.l.b16 %v4321
        %v5834 = vunpack.c.h.b16 %v4321
        %v5835 = vunpack.c.l.b16 %v4322
        %v5836 = vunpack.c.h.b16 %v4322
        %v5837 = vunpack.c.l.b16 %v4323
        %v5838 = vunpack.c.h.b16 %v4323
        %v5839 = vunpack.c.l.b16 %v4324
        %v5840 = vunpack.c.h.b16 %v4324
        %v5841 = vunpack.c.l.b16 %v4325
        %v5842 = vunpack.c.h.b16 %v4325
        %v5843 = vunpack.c.l.b16 %v4326
        %v5844 = vunpack.c.h.b16 %v4326
        %v5845 = vunpack.c.l.b16 %v4327
        %v5846 = vunpack.c.h.b16 %v4327
        %v5847 = vunpack.c.l.b16 %v4328
        %v5848 = vunpack.c.h.b16 %v4328
        %v5849 = vunpack.c.l.b16 %v4329
        %v5850 = vunpack.c.h.b16 %v4329
        %v5851 = vunpack.c.l.b16 %v4330
        %v5852 = vunpack.c.h.b16 %v4330
        %v5853 = vunpack.c.l.b16 %v4331
        %v5854 = vunpack.c.h.b16 %v4331
        %v5855 = vunpack.c.l.b16 %v4332
        %v5856 = vunpack.c.h.b16 %v4332
        %v5857 = vunpack.c.l.b16 %v4333
        %v5858 = vunpack.c.h.b16 %v4333
        %v5859 = vunpack.c.l.b16 %v4334
        %v5860 = vunpack.c.h.b16 %v4334
        %v5861 = vunpack.c.l.b16 %v4335
        %v5862 = vunpack.c.h.b16 %v4335
        %v5863 = vunpack.c.l.b16 %v4336
        %v5864 = vunpack.c.h.b16 %v4336
        %v5865 = vunpack.c.l.b16 %v4337
        %v5866 = vunpack.c.h.b16 %v4337
        %v5867 = vunpack.c.l.b16 %v4338
        %v5868 = vunpack.c.h.b16 %v4338
        %v5869 = vunpack.c.l.b16 %v4339
        %v5870 = vunpack.c.h.b16 %v4339
        %v5871 = vunpack.c.l.b16 %v4340
        %v5872 = vunpack.c.h.b16 %v4340
        %v5873 = vunpack.c.l.b16 %v4341
        %v5874 = vunpack.c.h.b16 %v4341
        %v5875 = vunpack.c.l.b16 %v4342
        %v5876 = vunpack.c.h.b16 %v4342
        %v5877 = vunpack.c.l.b16 %v4343
        %v5878 = vunpack.c.h.b16 %v4343
        %v5879 = vunpack.c.l.b16 %v4344
        %v5880 = vunpack.c.h.b16 %v4344
        %v5881 = vunpack.c.l.b16 %v4345
        %v5882 = vunpack.c.h.b16 %v4345
        %v5883 = vunpack.c.l.b16 %v4346
        %v5884 = vunpack.c.h.b16 %v4346
        %v5885 = vunpack.c.l.b16 %v4347
        %v5886 = vunpack.c.h.b16 %v4347
        %v5887 = vunpack.c.l.b16 %v4348
        %v5888 = vunpack.c.h.b16 %v4348
        %v5889 = vunpack.c.l.b16 %v4349
        %v5890 = vunpack.c.h.b16 %v4349
        %v5891 = vunpack.c.l.b16 %v4350
        %v5892 = vunpack.c.h.b16 %v4350
        %v5893 = vunpack.c.l.b16 %v4351
        %v5894 = vunpack.c.h.b16 %v4351
        %v5895 = vunpack.c.l.b16 %v4352
        %v5896 = vunpack.c.h.b16 %v4352
        %v5897 = vunpack.c.l.b16 %v4353
        %v5898 = vunpack.c.h.b16 %v4353
        %v5899 = vunpack.c.l.b16 %v4354
        %v5900 = vunpack.c.h.b16 %v4354
        %v5901 = vunpack.c.l.b16 %v4355
        %v5902 = vunpack.c.h.b16 %v4355
        %v5903 = vunpack.c.l.b16 %v4356
        %v5904 = vunpack.c.h.b16 %v4356
        %v5905 = vunpack.c.l.b16 %v4357
        %v5906 = vunpack.c.h.b16 %v4357
        %v5907 = vunpack.c.l.b16 %v4358
        %v5908 = vunpack.c.h.b16 %v4358
        %v5909 = vunpack.c.l.b16 %v4359
        %v5910 = vunpack.c.h.b16 %v4359
        %v5911 = vunpack.c.l.b16 %v4360
        %v5912 = vunpack.c.h.b16 %v4360
        %v5913 = vunpack.c.l.b16 %v4361
        %v5914 = vunpack.c.h.b16 %v4361
        %v5915 = vunpack.c.l.b16 %v4362
        %v5916 = vunpack.c.h.b16 %v4362
        %v5917 = vunpack.c.l.b16 %v4363
        %v5918 = vunpack.c.h.b16 %v4363
        %v5919 = vunpack.c.l.b16 %v4364
        %v5920 = vunpack.c.h.b16 %v4364
        %v5921 = vunpack.c.l.b16 %v4365
        %v5922 = vunpack.c.h.b16 %v4365
        %v5923 = vunpack.c.l.b16 %v4366
        %v5924 = vunpack.c.h.b16 %v4366
        %v5925 = vunpack.c.l.b16 %v4367
        %v5926 = vunpack.c.h.b16 %v4367
        %v5927 = vunpack.c.l.b16 %v4368
        %v5928 = vunpack.c.h.b16 %v4368
        %v5929 = vunpack.c.l.b16 %v4369
        %v5930 = vunpack.c.h.b16 %v4369
        %v5931 = vunpack.c.l.b16 %v4370
        %v5932 = vunpack.c.h.b16 %v4370
        %v5933 = vunpack.c.l.b16 %v4371
        %v5934 = vunpack.c.h.b16 %v4371
        %v5935 = vunpack.c.l.b16 %v4372
        %v5936 = vunpack.c.h.b16 %v4372
        %v5937 = vunpack.c.l.b16 %v4373
        %v5938 = vunpack.c.h.b16 %v4373
        %v5939 = vunpack.c.l.b16 %v4374
        %v5940 = vunpack.c.h.b16 %v4374
        %v5941 = vunpack.c.l.b16 %v4375
        %v5942 = vunpack.c.h.b16 %v4375
        %v5943 = vunpack.c.l.b16 %v4376
        %v5944 = vunpack.c.h.b16 %v4376
        %v5945 = vunpack.c.l.b16 %v4377
        %v5946 = vunpack.c.h.b16 %v4377
        %v5947 = vunpack.c.l.b16 %v4378
        %v5948 = vunpack.c.h.b16 %v4378
        %v5949 = vunpack.c.l.b16 %v4379
        %v5950 = vunpack.c.h.b16 %v4379
        %v5951 = vunpack.c.l.b16 %v4380
        %v5952 = vunpack.c.h.b16 %v4380
        %v5953 = vunpack.c.l.b16 %v4381
        %v5954 = vunpack.c.h.b16 %v4381
        %v5955 = vunpack.c.l.b16 %v4382
        %v5956 = vunpack.c.h.b16 %v4382
        %v5957 = vunpack.c.l.b16 %v4383
        %v5958 = vunpack.c.h.b16 %v4383
        %v5959 = vunpack.c.l.b16 %v4384
        %v5960 = vunpack.c.h.b16 %v4384
        %v5961 = vunpack.c.l.b16 %v4385
        %v5962 = vunpack.c.h.b16 %v4385
        %v5963 = vunpack.c.l.b16 %v4386
        %v5964 = vunpack.c.h.b16 %v4386
        %v5965 = vunpack.c.l.b16 %v4387
        %v5966 = vunpack.c.h.b16 %v4387
        %v5967 = vunpack.c.l.b16 %v4388
        %v5968 = vunpack.c.h.b16 %v4388
        %v5969 = vunpack.c.l.b16 %v4389
        %v5970 = vunpack.c.h.b16 %v4389
        %v5971 = vunpack.c.l.b16 %v4390
        %v5972 = vunpack.c.h.b16 %v4390
        %v5973 = vunpack.c.l.b16 %v4391
        %v5974 = vunpack.c.h.b16 %v4391
        %v5975 = vunpack.c.l.b16 %v4392
        %v5976 = vunpack.c.h.b16 %v4392
        %v5977 = vunpack.c.l.b16 %v4393
        %v5978 = vunpack.c.h.b16 %v4393
        %v5979 = vunpack.c.l.b16 %v4394
        %v5980 = vunpack.c.h.b16 %v4394
        %v5981 = vunpack.c.l.b16 %v4395
        %v5982 = vunpack.c.h.b16 %v4395
        %v5983 = vunpack.c.l.b16 %v4396
        %v5984 = vunpack.c.h.b16 %v4396
        %v5985 = vunpack.c.l.b16 %v4397
        %v5986 = vunpack.c.h.b16 %v4397
        %v5987 = vunpack.c.l.b16 %v4398
        %v5988 = vunpack.c.h.b16 %v4398
        %v5989 = vunpack.c.l.b16 %v4399
        %v5990 = vunpack.c.h.b16 %v4399
        %v5991 = vunpack.c.l.b16 %v4400
        %v5992 = vunpack.c.h.b16 %v4400
        %v5993 = vunpack.c.l.b16 %v4401
        %v5994 = vunpack.c.h.b16 %v4401
        %v5995 = vunpack.c.l.b16 %v4402
        %v5996 = vunpack.c.h.b16 %v4402
        %v5997 = vunpack.c.l.b16 %v4403
        %v5998 = vunpack.c.h.b16 %v4403
        %v5999 = vunpack.c.l.b16 %v4404
        %v6000 = vunpack.c.h.b16 %v4404
        %v6001 = vunpack.c.l.b16 %v4405
        %v6002 = vunpack.c.h.b16 %v4405
        %v6003 = vunpack.c.l.b16 %v4406
        %v6004 = vunpack.c.h.b16 %v4406
        %v6005 = vunpack.c.l.b16 %v4407
        %v6006 = vunpack.c.h.b16 %v4407
        %v6007 = vunpack.c.l.b16 %v4408
        %v6008 = vunpack.c.h.b16 %v4408
        %v6009 = vunpack.c.l.b16 %v4409
        %v6010 = vunpack.c.h.b16 %v4409
        %v6011 = vunpack.c.l.b16 %v4410
        %v6012 = vunpack.c.h.b16 %v4410
        %v6013 = vunpack.c.l.b16 %v4411
        %v6014 = vunpack.c.h.b16 %v4411
        %v6015 = vunpack.c.l.b16 %v4412
        %v6016 = vunpack.c.h.b16 %v4412
        %v6017 = vunpack.c.l.b16 %v4413
        %v6018 = vunpack.c.h.b16 %v4413
        %v6019 = vunpack.c.l.b16 %v4414
        %v6020 = vunpack.c.h.b16 %v4414
        %v6021 = vunpack.c.l.b16 %v4415
        %v6022 = vunpack.c.h.b16 %v4415
        %v6023 = vunpack.c.l.b16 %v4416
        %v6024 = vunpack.c.h.b16 %v4416
        %v6025 = vunpack.c.l.b16 %v4417
        %v6026 = vunpack.c.h.b16 %v4417
        %v6027 = vunpack.c.l.b16 %v4418
        %v6028 = vunpack.c.h.b16 %v4418
        %v6029 = vunpack.c.l.b16 %v4419
        %v6030 = vunpack.c.h.b16 %v4419
        %v6031 = vunpack.c.l.b16 %v4420
        %v6032 = vunpack.c.h.b16 %v4420
        %v6033 = vunpack.c.l.b16 %v4421
        %v6034 = vunpack.c.h.b16 %v4421
        %v6035 = vunpack.c.l.b16 %v4422
        %v6036 = vunpack.c.h.b16 %v4422
        %v6037 = vunpack.c.l.b16 %v4423
        %v6038 = vunpack.c.h.b16 %v4423
        %v6039 = vunpack.c.l.b16 %v4424
        %v6040 = vunpack.c.h.b16 %v4424
        %v6041 = vunpack.c.l.b16 %v4425
        %v6042 = vunpack.c.h.b16 %v4425
        %v6043 = vunpack.c.l.b16 %v4426
        %v6044 = vunpack.c.h.b16 %v4426
        %v6045 = vunpack.c.l.b16 %v4427
        %v6046 = vunpack.c.h.b16 %v4427
        %v6047 = vunpack.c.l.b16 %v4428
        %v6048 = vunpack.c.h.b16 %v4428
        %v6049 = vunpack.c.l.b16 %v4429
        %v6050 = vunpack.c.h.b16 %v4429
        %v6051 = vunpack.c.l.b16 %v4430
        %v6052 = vunpack.c.h.b16 %v4430
        %v6053 = vunpack.c.l.b16 %v4431
        %v6054 = vunpack.c.h.b16 %v4431
        %v6055 = vunpack.c.l.b16 %v4432
        %v6056 = vunpack.c.h.b16 %v4432
        %v6057 = vunpack.c.l.b16 %v4433
        %v6058 = vunpack.c.h.b16 %v4433
        %v6059 = vunpack.c.l.b16 %v4434
        %v6060 = vunpack.c.h.b16 %v4434
        %v6061 = vunpack.c.l.b16 %v4435
        %v6062 = vunpack.c.h.b16 %v4435
        %v6063 = vunpack.c.l.b16 %v4436
        %v6064 = vunpack.c.h.b16 %v4436
        %v6065 = vunpack.c.l.b16 %v4437
        %v6066 = vunpack.c.h.b16 %v4437
        %v6067 = vpack.c.b16 %v5051, %v5043
        %v6068 = vpack.c.b16 %v5052, %v5044
        %v6069 = vpack.c.b16 %v5053, %v5045
        %v6070 = vpack.c.b16 %v5054, %v5046
        %v6071 = vpack.c.b16 %v5055, %v5047
        %v6072 = vpack.c.b16 %v5056, %v5048
        %v6073 = vpack.c.b16 %v5057, %v5049
        %v6074 = vpack.c.b16 %v5058, %v5050
        %v6075 = vpack.c.b16 %v5067, %v5059
        %v6076 = vpack.c.b16 %v5068, %v5060
        %v6077 = vpack.c.b16 %v5069, %v5061
        %v6078 = vpack.c.b16 %v5070, %v5062
        %v6079 = vpack.c.b16 %v5071, %v5063
        %v6080 = vpack.c.b16 %v5072, %v5064
        %v6081 = vpack.c.b16 %v5073, %v5065
        %v6082 = vpack.c.b16 %v5074, %v5066
        %v6083 = vpack.c.b16 %v5083, %v5075
        %v6084 = vpack.c.b16 %v5084, %v5076
        %v6085 = vpack.c.b16 %v5085, %v5077
        %v6086 = vpack.c.b16 %v5086, %v5078
        %v6087 = vpack.c.b16 %v5087, %v5079
        %v6088 = vpack.c.b16 %v5088, %v5080
        %v6089 = vpack.c.b16 %v5089, %v5081
        %v6090 = vpack.c.b16 %v5090, %v5082
        %v6091 = vpack.c.b16 %v5099, %v5091
        %v6092 = vpack.c.b16 %v5100, %v5092
        %v6093 = vpack.c.b16 %v5101, %v5093
        %v6094 = vpack.c.b16 %v5102, %v5094
        %v6095 = vpack.c.b16 %v5103, %v5095
        %v6096 = vpack.c.b16 %v5104, %v5096
        %v6097 = vpack.c.b16 %v5105, %v5097
        %v6098 = vpack.c.b16 %v5106, %v5098
        %v6099 = vpack.c.b16 %v5115, %v5107
        %v6100 = vpack.c.b16 %v5116, %v5108
        %v6101 = vpack.c.b16 %v5117, %v5109
        %v6102 = vpack.c.b16 %v5118, %v5110
        %v6103 = vpack.c.b16 %v5119, %v5111
        %v6104 = vpack.c.b16 %v5120, %v5112
        %v6105 = vpack.c.b16 %v5121, %v5113
        %v6106 = vpack.c.b16 %v5122, %v5114
        %v6107 = vpack.c.b16 %v5131, %v5123
        %v6108 = vpack.c.b16 %v5132, %v5124
        %v6109 = vpack.c.b16 %v5133, %v5125
        %v6110 = vpack.c.b16 %v5134, %v5126
        %v6111 = vpack.c.b16 %v5135, %v5127
        %v6112 = vpack.c.b16 %v5136, %v5128
        %v6113 = vpack.c.b16 %v5137, %v5129
        %v6114 = vpack.c.b16 %v5138, %v5130
        %v6115 = vpack.c.b16 %v5147, %v5139
        %v6116 = vpack.c.b16 %v5148, %v5140
        %v6117 = vpack.c.b16 %v5149, %v5141
        %v6118 = vpack.c.b16 %v5150, %v5142
        %v6119 = vpack.c.b16 %v5151, %v5143
        %v6120 = vpack.c.b16 %v5152, %v5144
        %v6121 = vpack.c.b16 %v5153, %v5145
        %v6122 = vpack.c.b16 %v5154, %v5146
        %v6123 = vpack.c.b16 %v5163, %v5155
        %v6124 = vpack.c.b16 %v5164, %v5156
        %v6125 = vpack.c.b16 %v5165, %v5157
        %v6126 = vpack.c.b16 %v5166, %v5158
        %v6127 = vpack.c.b16 %v5167, %v5159
        %v6128 = vpack.c.b16 %v5168, %v5160
        %v6129 = vpack.c.b16 %v5169, %v5161
        %v6130 = vpack.c.b16 %v5170, %v5162
        %v6131 = vpack.c.b16 %v5179, %v5171
        %v6132 = vpack.c.b16 %v5180, %v5172
        %v6133 = vpack.c.b16 %v5181, %v5173
        %v6134 = vpack.c.b16 %v5182, %v5174
        %v6135 = vpack.c.b16 %v5183, %v5175
        %v6136 = vpack.c.b16 %v5184, %v5176
        %v6137 = vpack.c.b16 %v5185, %v5177
        %v6138 = vpack.c.b16 %v5186, %v5178
        %v6139 = vpack.c.b16 %v5195, %v5187
        %v6140 = vpack.c.b16 %v5196, %v5188
        %v6141 = vpack.c.b16 %v5197, %v5189
        %v6142 = vpack.c.b16 %v5198, %v5190
        %v6143 = vpack.c.b16 %v5199, %v5191
        %v6144 = vpack.c.b16 %v5200, %v5192
        %v6145 = vpack.c.b16 %v5201, %v5193
        %v6146 = vpack.c.b16 %v5202, %v5194
        %v6147 = vpack.c.b16 %v5211, %v5203
        %v6148 = vpack.c.b16 %v5212, %v5204
        %v6149 = vpack.c.b16 %v5213, %v5205
        %v6150 = vpack.c.b16 %v5214, %v5206
        %v6151 = vpack.c.b16 %v5215, %v5207
        %v6152 = vpack.c.b16 %v5216, %v5208
        %v6153 = vpack.c.b16 %v5217, %v5209
        %v6154 = vpack.c.b16 %v5218, %v5210
        %v6155 = vpack.c.b16 %v5227, %v5219
        %v6156 = vpack.c.b16 %v5228, %v5220
        %v6157 = vpack.c.b16 %v5229, %v5221
        %v6158 = vpack.c.b16 %v5230, %v5222
        %v6159 = vpack.c.b16 %v5231, %v5223
        %v6160 = vpack.c.b16 %v5232, %v5224
        %v6161 = vpack.c.b16 %v5233, %v5225
        %v6162 = vpack.c.b16 %v5234, %v5226
        %v6163 = vpack.c.b16 %v5243, %v5235
        %v6164 = vpack.c.b16 %v5244, %v5236
        %v6165 = vpack.c.b16 %v5245, %v5237
        %v6166 = vpack.c.b16 %v5246, %v5238
        %v6167 = vpack.c.b16 %v5247, %v5239
        %v6168 = vpack.c.b16 %v5248, %v5240
        %v6169 = vpack.c.b16 %v5249, %v5241
        %v6170 = vpack.c.b16 %v5250, %v5242
        %v6171 = vpack.c.b16 %v5259, %v5251
        %v6172 = vpack.c.b16 %v5260, %v5252
        %v6173 = vpack.c.b16 %v5261, %v5253
        %v6174 = vpack.c.b16 %v5262, %v5254
        %v6175 = vpack.c.b16 %v5263, %v5255
        %v6176 = vpack.c.b16 %v5264, %v5256
        %v6177 = vpack.c.b16 %v5265, %v5257
        %v6178 = vpack.c.b16 %v5266, %v5258
        %v6179 = vpack.c.b16 %v5275, %v5267
        %v6180 = vpack.c.b16 %v5276, %v5268
        %v6181 = vpack.c.b16 %v5277, %v5269
        %v6182 = vpack.c.b16 %v5278, %v5270
        %v6183 = vpack.c.b16 %v5279, %v5271
        %v6184 = vpack.c.b16 %v5280, %v5272
        %v6185 = vpack.c.b16 %v5281, %v5273
        %v6186 = vpack.c.b16 %v5282, %v5274
        %v6187 = vpack.c.b16 %v5291, %v5283
        %v6188 = vpack.c.b16 %v5292, %v5284
        %v6189 = vpack.c.b16 %v5293, %v5285
        %v6190 = vpack.c.b16 %v5294, %v5286
        %v6191 = vpack.c.b16 %v5295, %v5287
        %v6192 = vpack.c.b16 %v5296, %v5288
        %v6193 = vpack.c.b16 %v5297, %v5289
        %v6194 = vpack.c.b16 %v5298, %v5290
        %v6195 = vpack.c.b16 %v5307, %v5299
        %v6196 = vpack.c.b16 %v5308, %v5300
        %v6197 = vpack.c.b16 %v5309, %v5301
        %v6198 = vpack.c.b16 %v5310, %v5302
        %v6199 = vpack.c.b16 %v5311, %v5303
        %v6200 = vpack.c.b16 %v5312, %v5304
        %v6201 = vpack.c.b16 %v5313, %v5305
        %v6202 = vpack.c.b16 %v5314, %v5306
        %v6203 = vpack.c.b16 %v5323, %v5315
        %v6204 = vpack.c.b16 %v5324, %v5316
        %v6205 = vpack.c.b16 %v5325, %v5317
        %v6206 = vpack.c.b16 %v5326, %v5318
        %v6207 = vpack.c.b16 %v5327, %v5319
        %v6208 = vpack.c.b16 %v5328, %v5320
        %v6209 = vpack.c.b16 %v5329, %v5321
        %v6210 = vpack.c.b16 %v5330, %v5322
        %v6211 = vpack.c.b16 %v5339, %v5331
        %v6212 = vpack.c.b16 %v5340, %v5332
        %v6213 = vpack.c.b16 %v5341, %v5333
        %v6214 = vpack.c.b16 %v5342, %v5334
        %v6215 = vpack.c.b16 %v5343, %v5335
        %v6216 = vpack.c.b16 %v5344, %v5336
        %v6217 = vpack.c.b16 %v5345, %v5337
        %v6218 = vpack.c.b16 %v5346, %v5338
        %v6219 = vpack.c.b16 %v5355, %v5347
        %v6220 = vpack.c.b16 %v5356, %v5348
        %v6221 = vpack.c.b16 %v5357, %v5349
        %v6222 = vpack.c.b16 %v5358, %v5350
        %v6223 = vpack.c.b16 %v5359, %v5351
        %v6224 = vpack.c.b16 %v5360, %v5352
        %v6225 = vpack.c.b16 %v5361, %v5353
        %v6226 = vpack.c.b16 %v5362, %v5354
        %v6227 = vpack.c.b16 %v5371, %v5363
        %v6228 = vpack.c.b16 %v5372, %v5364
        %v6229 = vpack.c.b16 %v5373, %v5365
        %v6230 = vpack.c.b16 %v5374, %v5366
        %v6231 = vpack.c.b16 %v5375, %v5367
        %v6232 = vpack.c.b16 %v5376, %v5368
        %v6233 = vpack.c.b16 %v5377, %v5369
        %v6234 = vpack.c.b16 %v5378, %v5370
        %v6235 = vpack.c.b16 %v5387, %v5379
        %v6236 = vpack.c.b16 %v5388, %v5380
        %v6237 = vpack.c.b16 %v5389, %v5381
        %v6238 = vpack.c.b16 %v5390, %v5382
        %v6239 = vpack.c.b16 %v5391, %v5383
        %v6240 = vpack.c.b16 %v5392, %v5384
        %v6241 = vpack.c.b16 %v5393, %v5385
        %v6242 = vpack.c.b16 %v5394, %v5386
        %v6243 = vpack.c.b16 %v5403, %v5395
        %v6244 = vpack.c.b16 %v5404, %v5396
        %v6245 = vpack.c.b16 %v5405, %v5397
        %v6246 = vpack.c.b16 %v5406, %v5398
        %v6247 = vpack.c.b16 %v5407, %v5399
        %v6248 = vpack.c.b16 %v5408, %v5400
        %v6249 = vpack.c.b16 %v5409, %v5401
        %v6250 = vpack.c.b16 %v5410, %v5402
        %v6251 = vpack.c.b16 %v5419, %v5411
        %v6252 = vpack.c.b16 %v5420, %v5412
        %v6253 = vpack.c.b16 %v5421, %v5413
        %v6254 = vpack.c.b16 %v5422, %v5414
        %v6255 = vpack.c.b16 %v5423, %v5415
        %v6256 = vpack.c.b16 %v5424, %v5416
        %v6257 = vpack.c.b16 %v5425, %v5417
        %v6258 = vpack.c.b16 %v5426, %v5418
        %v6259 = vpack.c.b16 %v5435, %v5427
        %v6260 = vpack.c.b16 %v5436, %v5428
        %v6261 = vpack.c.b16 %v5437, %v5429
        %v6262 = vpack.c.b16 %v5438, %v5430
        %v6263 = vpack.c.b16 %v5439, %v5431
        %v6264 = vpack.c.b16 %v5440, %v5432
        %v6265 = vpack.c.b16 %v5441, %v5433
        %v6266 = vpack.c.b16 %v5442, %v5434
        %v6267 = vpack.c.b16 %v5451, %v5443
        %v6268 = vpack.c.b16 %v5452, %v5444
        %v6269 = vpack.c.b16 %v5453, %v5445
        %v6270 = vpack.c.b16 %v5454, %v5446
        %v6271 = vpack.c.b16 %v5455, %v5447
        %v6272 = vpack.c.b16 %v5456, %v5448
        %v6273 = vpack.c.b16 %v5457, %v5449
        %v6274 = vpack.c.b16 %v5458, %v5450
        %v6275 = vpack.c.b16 %v5467, %v5459
        %v6276 = vpack.c.b16 %v5468, %v5460
        %v6277 = vpack.c.b16 %v5469, %v5461
        %v6278 = vpack.c.b16 %v5470, %v5462
        %v6279 = vpack.c.b16 %v5471, %v5463
        %v6280 = vpack.c.b16 %v5472, %v5464
        %v6281 = vpack.c.b16 %v5473, %v5465
        %v6282 = vpack.c.b16 %v5474, %v5466
        %v6283 = vpack.c.b16 %v5483, %v5475
        %v6284 = vpack.c.b16 %v5484, %v5476
        %v6285 = vpack.c.b16 %v5485, %v5477
        %v6286 = vpack.c.b16 %v5486, %v5478
        %v6287 = vpack.c.b16 %v5487, %v5479
        %v6288 = vpack.c.b16 %v5488, %v5480
        %v6289 = vpack.c.b16 %v5489, %v5481
        %v6290 = vpack.c.b16 %v5490, %v5482
        %v6291 = vpack.c.b16 %v5499, %v5491
        %v6292 = vpack.c.b16 %v5500, %v5492
        %v6293 = vpack.c.b16 %v5501, %v5493
        %v6294 = vpack.c.b16 %v5502, %v5494
        %v6295 = vpack.c.b16 %v5503, %v5495
        %v6296 = vpack.c.b16 %v5504, %v5496
        %v6297 = vpack.c.b16 %v5505, %v5497
        %v6298 = vpack.c.b16 %v5506, %v5498
        %v6299 = vpack.c.b16 %v5515, %v5507
        %v6300 = vpack.c.b16 %v5516, %v5508
        %v6301 = vpack.c.b16 %v5517, %v5509
        %v6302 = vpack.c.b16 %v5518, %v5510
        %v6303 = vpack.c.b16 %v5519, %v5511
        %v6304 = vpack.c.b16 %v5520, %v5512
        %v6305 = vpack.c.b16 %v5521, %v5513
        %v6306 = vpack.c.b16 %v5522, %v5514
        %v6307 = vpack.c.b16 %v5531, %v5523
        %v6308 = vpack.c.b16 %v5532, %v5524
        %v6309 = vpack.c.b16 %v5533, %v5525
        %v6310 = vpack.c.b16 %v5534, %v5526
        %v6311 = vpack.c.b16 %v5535, %v5527
        %v6312 = vpack.c.b16 %v5536, %v5528
        %v6313 = vpack.c.b16 %v5537, %v5529
        %v6314 = vpack.c.b16 %v5538, %v5530
        %v6315 = vpack.c.b16 %v5547, %v5539
        %v6316 = vpack.c.b16 %v5548, %v5540
        %v6317 = vpack.c.b16 %v5549, %v5541
        %v6318 = vpack.c.b16 %v5550, %v5542
        %v6319 = vpack.c.b16 %v5551, %v5543
        %v6320 = vpack.c.b16 %v5552, %v5544
        %v6321 = vpack.c.b16 %v5553, %v5545
        %v6322 = vpack.c.b16 %v5554, %v5546
        %v6323 = vpack.c.b16 %v5563, %v5555
        %v6324 = vpack.c.b16 %v5564, %v5556
        %v6325 = vpack.c.b16 %v5565, %v5557
        %v6326 = vpack.c.b16 %v5566, %v5558
        %v6327 = vpack.c.b16 %v5567, %v5559
        %v6328 = vpack.c.b16 %v5568, %v5560
        %v6329 = vpack.c.b16 %v5569, %v5561
        %v6330 = vpack.c.b16 %v5570, %v5562
        %v6331 = vpack.c.b16 %v5579, %v5571
        %v6332 = vpack.c.b16 %v5580, %v5572
        %v6333 = vpack.c.b16 %v5581, %v5573
        %v6334 = vpack.c.b16 %v5582, %v5574
        %v6335 = vpack.c.b16 %v5583, %v5575
        %v6336 = vpack.c.b16 %v5584, %v5576
        %v6337 = vpack.c.b16 %v5585, %v5577
        %v6338 = vpack.c.b16 %v5586, %v5578
        %v6339 = vpack.c.b16 %v5595, %v5587
        %v6340 = vpack.c.b16 %v5596, %v5588
        %v6341 = vpack.c.b16 %v5597, %v5589
        %v6342 = vpack.c.b16 %v5598, %v5590
        %v6343 = vpack.c.b16 %v5599, %v5591
        %v6344 = vpack.c.b16 %v5600, %v5592
        %v6345 = vpack.c.b16 %v5601, %v5593
        %v6346 = vpack.c.b16 %v5602, %v5594
        %v6347 = vpack.c.b16 %v5611, %v5603
        %v6348 = vpack.c.b16 %v5612, %v5604
        %v6349 = vpack.c.b16 %v5613, %v5605
        %v6350 = vpack.c.b16 %v5614, %v5606
        %v6351 = vpack.c.b16 %v5615, %v5607
        %v6352 = vpack.c.b16 %v5616, %v5608
        %v6353 = vpack.c.b16 %v5617, %v5609
        %v6354 = vpack.c.b16 %v5618, %v5610
        %v6355 = vpack.c.b16 %v5627, %v5619
        %v6356 = vpack.c.b16 %v5628, %v5620
        %v6357 = vpack.c.b16 %v5629, %v5621
        %v6358 = vpack.c.b16 %v5630, %v5622
        %v6359 = vpack.c.b16 %v5631, %v5623
        %v6360 = vpack.c.b16 %v5632, %v5624
        %v6361 = vpack.c.b16 %v5633, %v5625
        %v6362 = vpack.c.b16 %v5634, %v5626
        %v6363 = vpack.c.b16 %v5643, %v5635
        %v6364 = vpack.c.b16 %v5644, %v5636
        %v6365 = vpack.c.b16 %v5645, %v5637
        %v6366 = vpack.c.b16 %v5646, %v5638
        %v6367 = vpack.c.b16 %v5647, %v5639
        %v6368 = vpack.c.b16 %v5648, %v5640
        %v6369 = vpack.c.b16 %v5649, %v5641
        %v6370 = vpack.c.b16 %v5650, %v5642
        %v6371 = vpack.c.b16 %v5659, %v5651
        %v6372 = vpack.c.b16 %v5660, %v5652
        %v6373 = vpack.c.b16 %v5661, %v5653
        %v6374 = vpack.c.b16 %v5662, %v5654
        %v6375 = vpack.c.b16 %v5663, %v5655
        %v6376 = vpack.c.b16 %v5664, %v5656
        %v6377 = vpack.c.b16 %v5665, %v5657
        %v6378 = vpack.c.b16 %v5666, %v5658
        %v6379 = vpack.c.b16 %v5675, %v5667
        %v6380 = vpack.c.b16 %v5676, %v5668
        %v6381 = vpack.c.b16 %v5677, %v5669
        %v6382 = vpack.c.b16 %v5678, %v5670
        %v6383 = vpack.c.b16 %v5679, %v5671
        %v6384 = vpack.c.b16 %v5680, %v5672
        %v6385 = vpack.c.b16 %v5681, %v5673
        %v6386 = vpack.c.b16 %v5682, %v5674
        %v6387 = vpack.c.b16 %v5691, %v5683
        %v6388 = vpack.c.b16 %v5692, %v5684
        %v6389 = vpack.c.b16 %v5693, %v5685
        %v6390 = vpack.c.b16 %v5694, %v5686
        %v6391 = vpack.c.b16 %v5695, %v5687
        %v6392 = vpack.c.b16 %v5696, %v5688
        %v6393 = vpack.c.b16 %v5697, %v5689
        %v6394 = vpack.c.b16 %v5698, %v5690
        %v6395 = vpack.c.b16 %v5707, %v5699
        %v6396 = vpack.c.b16 %v5708, %v5700
        %v6397 = vpack.c.b16 %v5709, %v5701
        %v6398 = vpack.c.b16 %v5710, %v5702
        %v6399 = vpack.c.b16 %v5711, %v5703
        %v6400 = vpack.c.b16 %v5712, %v5704
        %v6401 = vpack.c.b16 %v5713, %v5705
        %v6402 = vpack.c.b16 %v5714, %v5706
        %v6403 = vpack.c.b16 %v5723, %v5715
        %v6404 = vpack.c.b16 %v5724, %v5716
        %v6405 = vpack.c.b16 %v5725, %v5717
        %v6406 = vpack.c.b16 %v5726, %v5718
        %v6407 = vpack.c.b16 %v5727, %v5719
        %v6408 = vpack.c.b16 %v5728, %v5720
        %v6409 = vpack.c.b16 %v5729, %v5721
        %v6410 = vpack.c.b16 %v5730, %v5722
        %v6411 = vpack.c.b16 %v5739, %v5731
        %v6412 = vpack.c.b16 %v5740, %v5732
        %v6413 = vpack.c.b16 %v5741, %v5733
        %v6414 = vpack.c.b16 %v5742, %v5734
        %v6415 = vpack.c.b16 %v5743, %v5735
        %v6416 = vpack.c.b16 %v5744, %v5736
        %v6417 = vpack.c.b16 %v5745, %v5737
        %v6418 = vpack.c.b16 %v5746, %v5738
        %v6419 = vpack.c.b16 %v5755, %v5747
        %v6420 = vpack.c.b16 %v5756, %v5748
        %v6421 = vpack.c.b16 %v5757, %v5749
        %v6422 = vpack.c.b16 %v5758, %v5750
        %v6423 = vpack.c.b16 %v5759, %v5751
        %v6424 = vpack.c.b16 %v5760, %v5752
        %v6425 = vpack.c.b16 %v5761, %v5753
        %v6426 = vpack.c.b16 %v5762, %v5754
        %v6427 = vpack.c.b16 %v5771, %v5763
        %v6428 = vpack.c.b16 %v5772, %v5764
        %v6429 = vpack.c.b16 %v5773, %v5765
        %v6430 = vpack.c.b16 %v5774, %v5766
        %v6431 = vpack.c.b16 %v5775, %v5767
        %v6432 = vpack.c.b16 %v5776, %v5768
        %v6433 = vpack.c.b16 %v5777, %v5769
        %v6434 = vpack.c.b16 %v5778, %v5770
        %v6435 = vpack.c.b16 %v5787, %v5779
        %v6436 = vpack.c.b16 %v5788, %v5780
        %v6437 = vpack.c.b16 %v5789, %v5781
        %v6438 = vpack.c.b16 %v5790, %v5782
        %v6439 = vpack.c.b16 %v5791, %v5783
        %v6440 = vpack.c.b16 %v5792, %v5784
        %v6441 = vpack.c.b16 %v5793, %v5785
        %v6442 = vpack.c.b16 %v5794, %v5786
        %v6443 = vpack.c.b16 %v5803, %v5795
        %v6444 = vpack.c.b16 %v5804, %v5796
        %v6445 = vpack.c.b16 %v5805, %v5797
        %v6446 = vpack.c.b16 %v5806, %v5798
        %v6447 = vpack.c.b16 %v5807, %v5799
        %v6448 = vpack.c.b16 %v5808, %v5800
        %v6449 = vpack.c.b16 %v5809, %v5801
        %v6450 = vpack.c.b16 %v5810, %v5802
        %v6451 = vpack.c.b16 %v5819, %v5811
        %v6452 = vpack.c.b16 %v5820, %v5812
        %v6453 = vpack.c.b16 %v5821, %v5813
        %v6454 = vpack.c.b16 %v5822, %v5814
        %v6455 = vpack.c.b16 %v5823, %v5815
        %v6456 = vpack.c.b16 %v5824, %v5816
        %v6457 = vpack.c.b16 %v5825, %v5817
        %v6458 = vpack.c.b16 %v5826, %v5818
        %v6459 = vpack.c.b16 %v5835, %v5827
        %v6460 = vpack.c.b16 %v5836, %v5828
        %v6461 = vpack.c.b16 %v5837, %v5829
        %v6462 = vpack.c.b16 %v5838, %v5830
        %v6463 = vpack.c.b16 %v5839, %v5831
        %v6464 = vpack.c.b16 %v5840, %v5832
        %v6465 = vpack.c.b16 %v5841, %v5833
        %v6466 = vpack.c.b16 %v5842, %v5834
        %v6467 = vpack.c.b16 %v5851, %v5843
        %v6468 = vpack.c.b16 %v5852, %v5844
        %v6469 = vpack.c.b16 %v5853, %v5845
        %v6470 = vpack.c.b16 %v5854, %v5846
        %v6471 = vpack.c.b16 %v5855, %v5847
        %v6472 = vpack.c.b16 %v5856, %v5848
        %v6473 = vpack.c.b16 %v5857, %v5849
        %v6474 = vpack.c.b16 %v5858, %v5850
        %v6475 = vpack.c.b16 %v5867, %v5859
        %v6476 = vpack.c.b16 %v5868, %v5860
        %v6477 = vpack.c.b16 %v5869, %v5861
        %v6478 = vpack.c.b16 %v5870, %v5862
        %v6479 = vpack.c.b16 %v5871, %v5863
        %v6480 = vpack.c.b16 %v5872, %v5864
        %v6481 = vpack.c.b16 %v5873, %v5865
        %v6482 = vpack.c.b16 %v5874, %v5866
        %v6483 = vpack.c.b16 %v5883, %v5875
        %v6484 = vpack.c.b16 %v5884, %v5876
        %v6485 = vpack.c.b16 %v5885, %v5877
        %v6486 = vpack.c.b16 %v5886, %v5878
        %v6487 = vpack.c.b16 %v5887, %v5879
        %v6488 = vpack.c.b16 %v5888, %v5880
        %v6489 = vpack.c.b16 %v5889, %v5881
        %v6490 = vpack.c.b16 %v5890, %v5882
        %v6491 = vpack.c.b16 %v5899, %v5891
        %v6492 = vpack.c.b16 %v5900, %v5892
        %v6493 = vpack.c.b16 %v5901, %v5893
        %v6494 = vpack.c.b16 %v5902, %v5894
        %v6495 = vpack.c.b16 %v5903, %v5895
        %v6496 = vpack.c.b16 %v5904, %v5896
        %v6497 = vpack.c.b16 %v5905, %v5897
        %v6498 = vpack.c.b16 %v5906, %v5898
        %v6499 = vpack.c.b16 %v5915, %v5907
        %v6500 = vpack.c.b16 %v5916, %v5908
        %v6501 = vpack.c.b16 %v5917, %v5909
        %v6502 = vpack.c.b16 %v5918, %v5910
        %v6503 = vpack.c.b16 %v5919, %v5911
        %v6504 = vpack.c.b16 %v5920, %v5912
        %v6505 = vpack.c.b16 %v5921, %v5913
        %v6506 = vpack.c.b16 %v5922, %v5914
        %v6507 = vpack.c.b16 %v5931, %v5923
        %v6508 = vpack.c.b16 %v5932, %v5924
        %v6509 = vpack.c.b16 %v5933, %v5925
        %v6510 = vpack.c.b16 %v5934, %v5926
        %v6511 = vpack.c.b16 %v5935, %v5927
        %v6512 = vpack.c.b16 %v5936, %v5928
        %v6513 = vpack.c.b16 %v5937, %v5929
        %v6514 = vpack.c.b16 %v5938, %v5930
        %v6515 = vpack.c.b16 %v5947, %v5939
        %v6516 = vpack.c.b16 %v5948, %v5940
        %v6517 = vpack.c.b16 %v5949, %v5941
        %v6518 = vpack.c.b16 %v5950, %v5942
        %v6519 = vpack.c.b16 %v5951, %v5943
        %v6520 = vpack.c.b16 %v5952, %v5944
        %v6521 = vpack.c.b16 %v5953, %v5945
        %v6522 = vpack.c.b16 %v5954, %v5946
        %v6523 = vpack.c.b16 %v5963, %v5955
        %v6524 = vpack.c.b16 %v5964, %v5956
        %v6525 = vpack.c.b16 %v5965, %v5957
        %v6526 = vpack.c.b16 %v5966, %v5958
        %v6527 = vpack.c.b16 %v5967, %v5959
        %v6528 = vpack.c.b16 %v5968, %v5960
        %v6529 = vpack.c.b16 %v5969, %v5961
        %v6530 = vpack.c.b16 %v5970, %v5962
        %v6531 = vpack.c.b16 %v5979, %v5971
        %v6532 = vpack.c.b16 %v5980, %v5972
        %v6533 = vpack.c.b16 %v5981, %v5973
        %v6534 = vpack.c.b16 %v5982, %v5974
        %v6535 = vpack.c.b16 %v5983, %v5975
        %v6536 = vpack.c.b16 %v5984, %v5976
        %v6537 = vpack.c.b16 %v5985, %v5977
        %v6538 = vpack.c.b16 %v5986, %v5978
        %v6539 = vpack.c.b16 %v5995, %v5987
        %v6540 = vpack.c.b16 %v5996, %v5988
        %v6541 = vpack.c.b16 %v5997, %v5989
        %v6542 = vpack.c.b16 %v5998, %v5990
        %v6543 = vpack.c.b16 %v5999, %v5991
        %v6544 = vpack.c.b16 %v6000, %v5992
        %v6545 = vpack.c.b16 %v6001, %v5993
        %v6546 = vpack.c.b16 %v6002, %v5994
        %v6547 = vpack.c.b16 %v6011, %v6003
        %v6548 = vpack.c.b16 %v6012, %v6004
        %v6549 = vpack.c.b16 %v6013, %v6005
        %v6550 = vpack.c.b16 %v6014, %v6006
        %v6551 = vpack.c.b16 %v6015, %v6007
        %v6552 = vpack.c.b16 %v6016, %v6008
        %v6553 = vpack.c.b16 %v6017, %v6009
        %v6554 = vpack.c.b16 %v6018, %v6010
        %v6555 = vpack.c.b16 %v6027, %v6019
        %v6556 = vpack.c.b16 %v6028, %v6020
        %v6557 = vpack.c.b16 %v6029, %v6021
        %v6558 = vpack.c.b16 %v6030, %v6022
        %v6559 = vpack.c.b16 %v6031, %v6023
        %v6560 = vpack.c.b16 %v6032, %v6024
        %v6561 = vpack.c.b16 %v6033, %v6025
        %v6562 = vpack.c.b16 %v6034, %v6026
        %v6563 = vpack.c.b16 %v6043, %v6035
        %v6564 = vpack.c.b16 %v6044, %v6036
        %v6565 = vpack.c.b16 %v6045, %v6037
        %v6566 = vpack.c.b16 %v6046, %v6038
        %v6567 = vpack.c.b16 %v6047, %v6039
        %v6568 = vpack.c.b16 %v6048, %v6040
        %v6569 = vpack.c.b16 %v6049, %v6041
        %v6570 = vpack.c.b16 %v6050, %v6042
        %v6571 = vpack.c.b16 %v6059, %v6051
        %v6572 = vpack.c.b16 %v6060, %v6052
        %v6573 = vpack.c.b16 %v6061, %v6053
        %v6574 = vpack.c.b16 %v6062, %v6054
        %v6575 = vpack.c.b16 %v6063, %v6055
        %v6576 = vpack.c.b16 %v6064, %v6056
        %v6577 = vpack.c.b16 %v6065, %v6057
        %v6578 = vpack.c.b16 %v6066, %v6058
        %7091 = vmatpush.bf16.msra.mxu0 %v6123
        %7092 = vmatpush.bf16.msra.mxu0 %v6115
        %7093 = vmatpush.bf16.msra.mxu0 %v6107
        %7094 = vmatpush.bf16.msra.mxu0 %v6099
        %7095 = vmatpush.bf16.msra.mxu0 %v6091
        %7096 = vmatpush.bf16.msra.mxu0 %v6083
        %7097 = vmatpush.bf16.msra.mxu0 %v6075
        %7098 = vmatpush.bf16.msra.mxu0 %v6067
        %7099 = vmatmul.bf16.gmra.mxu0 %v4438
        %v7100 = vpop.f32.mrf.mxu0
        %v7101 = vadd.f32 %v4515, %v7100
        %v7102 = vpop.f32.mrf.mxu0
        %v7103 = vadd.f32 %v4515, %v7102
        %7104 = vmatmul.bf16.gmra.mxu0 %v4446
        %v7105 = vpop.f32.mrf.mxu0
        %v7106 = vadd.f32 %v4515, %v7105
        %v7107 = vpop.f32.mrf.mxu0
        %v7108 = vadd.f32 %v4515, %v7107
        %7109 = vmatmul.bf16.gmra.mxu0 %v4454
        %v7110 = vpop.f32.mrf.mxu0
        %v7111 = vadd.f32 %v4515, %v7110
        %v7112 = vpop.f32.mrf.mxu0
        %v7113 = vadd.f32 %v4515, %v7112
        %7114 = vmatmul.bf16.gmra.mxu0 %v4462
        %v7115 = vpop.f32.mrf.mxu0
        %v7116 = vadd.f32 %v4515, %v7115
        %v7117 = vpop.f32.mrf.mxu0
        %v7118 = vadd.f32 %v4515, %v7117
        %7119 = vmatmul.bf16.gmra.mxu0 %v4470
        %v7120 = vpop.f32.mrf.mxu0
        %v7121 = vadd.f32 %v4515, %v7120
        %v7122 = vpop.f32.mrf.mxu0
        %v7123 = vadd.f32 %v4515, %v7122
        %7124 = vmatmul.bf16.gmra.mxu0 %v4478
        %v7125 = vpop.f32.mrf.mxu0
        %v7126 = vadd.f32 %v4515, %v7125
        %v7127 = vpop.f32.mrf.mxu0
        %v7128 = vadd.f32 %v4515, %v7127
        %7129 = vmatmul.bf16.gmra.mxu0 %v4486
        %v7130 = vpop.f32.mrf.mxu0
        %v7131 = vadd.f32 %v4515, %v7130
        %v7132 = vpop.f32.mrf.mxu0
        %v7133 = vadd.f32 %v4515, %v7132
        %7134 = vmatmul.bf16.gmra.mxu0 %v4494
        %v7135 = vpop.f32.mrf.mxu0
        %v7136 = vadd.f32 %v4515, %v7135
        %v7137 = vpop.f32.mrf.mxu0
        %v7138 = vadd.f32 %v4515, %v7137
        %7139 = vdwg.mxu0
        %7140 = vmatpush.bf16.msra.mxu0 %v6187
        %7141 = vmatpush.bf16.msra.mxu0 %v6179
        %7142 = vmatpush.bf16.msra.mxu0 %v6171
        %7143 = vmatpush.bf16.msra.mxu0 %v6163
        %7144 = vmatpush.bf16.msra.mxu0 %v6155
        %7145 = vmatpush.bf16.msra.mxu0 %v6147
        %7146 = vmatpush.bf16.msra.mxu0 %v6139
        %7147 = vmatpush.bf16.msra.mxu0 %v6131
        %7148 = vmatmul.bf16.gmra.mxu0 %v4439
        %v7149 = vpop.f32.mrf.mxu0
        %v7150 = vadd.f32 %v7101, %v7149
        %v7151 = vpop.f32.mrf.mxu0
        %v7152 = vadd.f32 %v7103, %v7151
        %7153 = vmatmul.bf16.gmra.mxu0 %v4447
        %v7154 = vpop.f32.mrf.mxu0
        %v7155 = vadd.f32 %v7106, %v7154
        %v7156 = vpop.f32.mrf.mxu0
        %v7157 = vadd.f32 %v7108, %v7156
        %7158 = vmatmul.bf16.gmra.mxu0 %v4455
        %v7159 = vpop.f32.mrf.mxu0
        %v7160 = vadd.f32 %v7111, %v7159
        %v7161 = vpop.f32.mrf.mxu0
        %v7162 = vadd.f32 %v7113, %v7161
        %7163 = vmatmul.bf16.gmra.mxu0 %v4463
        %v7164 = vpop.f32.mrf.mxu0
        %v7165 = vadd.f32 %v7116, %v7164
        %v7166 = vpop.f32.mrf.mxu0
        %v7167 = vadd.f32 %v7118, %v7166
        %7168 = vmatmul.bf16.gmra.mxu0 %v4471
        %v7169 = vpop.f32.mrf.mxu0
        %v7170 = vadd.f32 %v7121, %v7169
        %v7171 = vpop.f32.mrf.mxu0
        %v7172 = vadd.f32 %v7123, %v7171
        %7173 = vmatmul.bf16.gmra.mxu0 %v4479
        %v7174 = vpop.f32.mrf.mxu0
        %v7175 = vadd.f32 %v7126, %v7174
        %v7176 = vpop.f32.mrf.mxu0
        %v7177 = vadd.f32 %v7128, %v7176
        %7178 = vmatmul.bf16.gmra.mxu0 %v4487
        %v7179 = vpop.f32.mrf.mxu0
        %v7180 = vadd.f32 %v7131, %v7179
        %v7181 = vpop.f32.mrf.mxu0
        %v7182 = vadd.f32 %v7133, %v7181
        %7183 = vmatmul.bf16.gmra.mxu0 %v4495
        %v7184 = vpop.f32.mrf.mxu0
        %v7185 = vadd.f32 %v7136, %v7184
        %v7186 = vpop.f32.mrf.mxu0
        %v7187 = vadd.f32 %v7138, %v7186
        %7188 = vdwg.mxu0
        %7189 = vmatpush.bf16.msra.mxu0 %v6251
        %7190 = vmatpush.bf16.msra.mxu0 %v6243
        %7191 = vmatpush.bf16.msra.mxu0 %v6235
        %7192 = vmatpush.bf16.msra.mxu0 %v6227
        %7193 = vmatpush.bf16.msra.mxu0 %v6219
        %7194 = vmatpush.bf16.msra.mxu0 %v6211
        %7195 = vmatpush.bf16.msra.mxu0 %v6203
        %7196 = vmatpush.bf16.msra.mxu0 %v6195
        %7197 = vmatmul.bf16.gmra.mxu0 %v4440
        %v7198 = vpop.f32.mrf.mxu0
        %v7199 = vadd.f32 %v7150, %v7198
        %v7200 = vpop.f32.mrf.mxu0
        %v7201 = vadd.f32 %v7152, %v7200
        %7202 = vmatmul.bf16.gmra.mxu0 %v4448
        %v7203 = vpop.f32.mrf.mxu0
        %v7204 = vadd.f32 %v7155, %v7203
        %v7205 = vpop.f32.mrf.mxu0
        %v7206 = vadd.f32 %v7157, %v7205
        %7207 = vmatmul.bf16.gmra.mxu0 %v4456
        %v7208 = vpop.f32.mrf.mxu0
        %v7209 = vadd.f32 %v7160, %v7208
        %v7210 = vpop.f32.mrf.mxu0
        %v7211 = vadd.f32 %v7162, %v7210
        %7212 = vmatmul.bf16.gmra.mxu0 %v4464
        %v7213 = vpop.f32.mrf.mxu0
        %v7214 = vadd.f32 %v7165, %v7213
        %v7215 = vpop.f32.mrf.mxu0
        %v7216 = vadd.f32 %v7167, %v7215
        %7217 = vmatmul.bf16.gmra.mxu0 %v4472
        %v7218 = vpop.f32.mrf.mxu0
        %v7219 = vadd.f32 %v7170, %v7218
        %v7220 = vpop.f32.mrf.mxu0
        %v7221 = vadd.f32 %v7172, %v7220
        %7222 = vmatmul.bf16.gmra.mxu0 %v4480
        %v7223 = vpop.f32.mrf.mxu0
        %v7224 = vadd.f32 %v7175, %v7223
        %v7225 = vpop.f32.mrf.mxu0
        %v7226 = vadd.f32 %v7177, %v7225
        %7227 = vmatmul.bf16.gmra.mxu0 %v4488
        %v7228 = vpop.f32.mrf.mxu0
        %v7229 = vadd.f32 %v7180, %v7228
        %v7230 = vpop.f32.mrf.mxu0
        %v7231 = vadd.f32 %v7182, %v7230
        %7232 = vmatmul.bf16.gmra.mxu0 %v4496
        %v7233 = vpop.f32.mrf.mxu0
        %v7234 = vadd.f32 %v7185, %v7233
        %v7235 = vpop.f32.mrf.mxu0
        %v7236 = vadd.f32 %v7187, %v7235
        %7237 = vdwg.mxu0
        %7238 = vmatpush.bf16.msra.mxu0 %v6315
        %7239 = vmatpush.bf16.msra.mxu0 %v6307
        %7240 = vmatpush.bf16.msra.mxu0 %v6299
        %7241 = vmatpush.bf16.msra.mxu0 %v6291
        %7242 = vmatpush.bf16.msra.mxu0 %v6283
        %7243 = vmatpush.bf16.msra.mxu0 %v6275
        %7244 = vmatpush.bf16.msra.mxu0 %v6267
        %7245 = vmatpush.bf16.msra.mxu0 %v6259
        %7246 = vmatmul.bf16.gmra.mxu0 %v4441
        %v7247 = vpop.f32.mrf.mxu0
        %v7248 = vadd.f32 %v7199, %v7247
        %v7249 = vpop.f32.mrf.mxu0
        %v7250 = vadd.f32 %v7201, %v7249
        %7251 = vmatmul.bf16.gmra.mxu0 %v4449
        %v7252 = vpop.f32.mrf.mxu0
        %v7253 = vadd.f32 %v7204, %v7252
        %v7254 = vpop.f32.mrf.mxu0
        %v7255 = vadd.f32 %v7206, %v7254
        %7256 = vmatmul.bf16.gmra.mxu0 %v4457
        %v7257 = vpop.f32.mrf.mxu0
        %v7258 = vadd.f32 %v7209, %v7257
        %v7259 = vpop.f32.mrf.mxu0
        %v7260 = vadd.f32 %v7211, %v7259
        %7261 = vmatmul.bf16.gmra.mxu0 %v4465
        %v7262 = vpop.f32.mrf.mxu0
        %v7263 = vadd.f32 %v7214, %v7262
        %v7264 = vpop.f32.mrf.mxu0
        %v7265 = vadd.f32 %v7216, %v7264
        %7266 = vmatmul.bf16.gmra.mxu0 %v4473
        %v7267 = vpop.f32.mrf.mxu0
        %v7268 = vadd.f32 %v7219, %v7267
        %v7269 = vpop.f32.mrf.mxu0
        %v7270 = vadd.f32 %v7221, %v7269
        %7271 = vmatmul.bf16.gmra.mxu0 %v4481
        %v7272 = vpop.f32.mrf.mxu0
        %v7273 = vadd.f32 %v7224, %v7272
        %v7274 = vpop.f32.mrf.mxu0
        %v7275 = vadd.f32 %v7226, %v7274
        %7276 = vmatmul.bf16.gmra.mxu0 %v4489
        %v7277 = vpop.f32.mrf.mxu0
        %v7278 = vadd.f32 %v7229, %v7277
        %v7279 = vpop.f32.mrf.mxu0
        %v7280 = vadd.f32 %v7231, %v7279
        %7281 = vmatmul.bf16.gmra.mxu0 %v4497
        %v7282 = vpop.f32.mrf.mxu0
        %v7283 = vadd.f32 %v7234, %v7282
        %v7284 = vpop.f32.mrf.mxu0
        %v7285 = vadd.f32 %v7236, %v7284
        %7286 = vdwg.mxu0
        %7287 = vmatpush.bf16.msra.mxu0 %v6379
        %7288 = vmatpush.bf16.msra.mxu0 %v6371
        %7289 = vmatpush.bf16.msra.mxu0 %v6363
        %7290 = vmatpush.bf16.msra.mxu0 %v6355
        %7291 = vmatpush.bf16.msra.mxu0 %v6347
        %7292 = vmatpush.bf16.msra.mxu0 %v6339
        %7293 = vmatpush.bf16.msra.mxu0 %v6331
        %7294 = vmatpush.bf16.msra.mxu0 %v6323
        %7295 = vmatmul.bf16.gmra.mxu0 %v4442
        %v7296 = vpop.f32.mrf.mxu0
        %v7297 = vadd.f32 %v7248, %v7296
        %v7298 = vpop.f32.mrf.mxu0
        %v7299 = vadd.f32 %v7250, %v7298
        %7300 = vmatmul.bf16.gmra.mxu0 %v4450
        %v7301 = vpop.f32.mrf.mxu0
        %v7302 = vadd.f32 %v7253, %v7301
        %v7303 = vpop.f32.mrf.mxu0
        %v7304 = vadd.f32 %v7255, %v7303
        %7305 = vmatmul.bf16.gmra.mxu0 %v4458
        %v7306 = vpop.f32.mrf.mxu0
        %v7307 = vadd.f32 %v7258, %v7306
        %v7308 = vpop.f32.mrf.mxu0
        %v7309 = vadd.f32 %v7260, %v7308
        %7310 = vmatmul.bf16.gmra.mxu0 %v4466
        %v7311 = vpop.f32.mrf.mxu0
        %v7312 = vadd.f32 %v7263, %v7311
        %v7313 = vpop.f32.mrf.mxu0
        %v7314 = vadd.f32 %v7265, %v7313
        %7315 = vmatmul.bf16.gmra.mxu0 %v4474
        %v7316 = vpop.f32.mrf.mxu0
        %v7317 = vadd.f32 %v7268, %v7316
        %v7318 = vpop.f32.mrf.mxu0
        %v7319 = vadd.f32 %v7270, %v7318
        %7320 = vmatmul.bf16.gmra.mxu0 %v4482
        %v7321 = vpop.f32.mrf.mxu0
        %v7322 = vadd.f32 %v7273, %v7321
        %v7323 = vpop.f32.mrf.mxu0
        %v7324 = vadd.f32 %v7275, %v7323
        %7325 = vmatmul.bf16.gmra.mxu0 %v4490
        %v7326 = vpop.f32.mrf.mxu0
        %v7327 = vadd.f32 %v7278, %v7326
        %v7328 = vpop.f32.mrf.mxu0
        %v7329 = vadd.f32 %v7280, %v7328
        %7330 = vmatmul.bf16.gmra.mxu0 %v4498
        %v7331 = vpop.f32.mrf.mxu0
        %v7332 = vadd.f32 %v7283, %v7331
        %v7333 = vpop.f32.mrf.mxu0
        %v7334 = vadd.f32 %v7285, %v7333
        %7335 = vdwg.mxu0
        %7336 = vmatpush.bf16.msra.mxu0 %v6443
        %7337 = vmatpush.bf16.msra.mxu0 %v6435
        %7338 = vmatpush.bf16.msra.mxu0 %v6427
        %7339 = vmatpush.bf16.msra.mxu0 %v6419
        %7340 = vmatpush.bf16.msra.mxu0 %v6411
        %7341 = vmatpush.bf16.msra.mxu0 %v6403
        %7342 = vmatpush.bf16.msra.mxu0 %v6395
        %7343 = vmatpush.bf16.msra.mxu0 %v6387
        %7344 = vmatmul.bf16.gmra.mxu0 %v4443
        %v7345 = vpop.f32.mrf.mxu0
        %v7346 = vadd.f32 %v7297, %v7345
        %v7347 = vpop.f32.mrf.mxu0
        %v7348 = vadd.f32 %v7299, %v7347
        %7349 = vmatmul.bf16.gmra.mxu0 %v4451
        %v7350 = vpop.f32.mrf.mxu0
        %v7351 = vadd.f32 %v7302, %v7350
        %v7352 = vpop.f32.mrf.mxu0
        %v7353 = vadd.f32 %v7304, %v7352
        %7354 = vmatmul.bf16.gmra.mxu0 %v4459
        %v7355 = vpop.f32.mrf.mxu0
        %v7356 = vadd.f32 %v7307, %v7355
        %v7357 = vpop.f32.mrf.mxu0
        %v7358 = vadd.f32 %v7309, %v7357
        %7359 = vmatmul.bf16.gmra.mxu0 %v4467
        %v7360 = vpop.f32.mrf.mxu0
        %v7361 = vadd.f32 %v7312, %v7360
        %v7362 = vpop.f32.mrf.mxu0
        %v7363 = vadd.f32 %v7314, %v7362
        %7364 = vmatmul.bf16.gmra.mxu0 %v4475
        %v7365 = vpop.f32.mrf.mxu0
        %v7366 = vadd.f32 %v7317, %v7365
        %v7367 = vpop.f32.mrf.mxu0
        %v7368 = vadd.f32 %v7319, %v7367
        %7369 = vmatmul.bf16.gmra.mxu0 %v4483
        %v7370 = vpop.f32.mrf.mxu0
        %v7371 = vadd.f32 %v7322, %v7370
        %v7372 = vpop.f32.mrf.mxu0
        %v7373 = vadd.f32 %v7324, %v7372
        %7374 = vmatmul.bf16.gmra.mxu0 %v4491
        %v7375 = vpop.f32.mrf.mxu0
        %v7376 = vadd.f32 %v7327, %v7375
        %v7377 = vpop.f32.mrf.mxu0
        %v7378 = vadd.f32 %v7329, %v7377
        %7379 = vmatmul.bf16.gmra.mxu0 %v4499
        %v7380 = vpop.f32.mrf.mxu0
        %v7381 = vadd.f32 %v7332, %v7380
        %v7382 = vpop.f32.mrf.mxu0
        %v7383 = vadd.f32 %v7334, %v7382
        %7384 = vdwg.mxu0
        %7385 = vmatpush.bf16.msra.mxu0 %v6507
        %7386 = vmatpush.bf16.msra.mxu0 %v6499
        %7387 = vmatpush.bf16.msra.mxu0 %v6491
        %7388 = vmatpush.bf16.msra.mxu0 %v6483
        %7389 = vmatpush.bf16.msra.mxu0 %v6475
        %7390 = vmatpush.bf16.msra.mxu0 %v6467
        %7391 = vmatpush.bf16.msra.mxu0 %v6459
        %7392 = vmatpush.bf16.msra.mxu0 %v6451
        %7393 = vmatmul.bf16.gmra.mxu0 %v4444
        %v7394 = vpop.f32.mrf.mxu0
        %v7395 = vadd.f32 %v7346, %v7394
        %v7396 = vpop.f32.mrf.mxu0
        %v7397 = vadd.f32 %v7348, %v7396
        %7398 = vmatmul.bf16.gmra.mxu0 %v4452
        %v7399 = vpop.f32.mrf.mxu0
        %v7400 = vadd.f32 %v7351, %v7399
        %v7401 = vpop.f32.mrf.mxu0
        %v7402 = vadd.f32 %v7353, %v7401
        %7403 = vmatmul.bf16.gmra.mxu0 %v4460
        %v7404 = vpop.f32.mrf.mxu0
        %v7405 = vadd.f32 %v7356, %v7404
        %v7406 = vpop.f32.mrf.mxu0
        %v7407 = vadd.f32 %v7358, %v7406
        %7408 = vmatmul.bf16.gmra.mxu0 %v4468
        %v7409 = vpop.f32.mrf.mxu0
        %v7410 = vadd.f32 %v7361, %v7409
        %v7411 = vpop.f32.mrf.mxu0
        %v7412 = vadd.f32 %v7363, %v7411
        %7413 = vmatmul.bf16.gmra.mxu0 %v4476
        %v7414 = vpop.f32.mrf.mxu0
        %v7415 = vadd.f32 %v7366, %v7414
        %v7416 = vpop.f32.mrf.mxu0
        %v7417 = vadd.f32 %v7368, %v7416
        %7418 = vmatmul.bf16.gmra.mxu0 %v4484
        %v7419 = vpop.f32.mrf.mxu0
        %v7420 = vadd.f32 %v7371, %v7419
        %v7421 = vpop.f32.mrf.mxu0
        %v7422 = vadd.f32 %v7373, %v7421
        %7423 = vmatmul.bf16.gmra.mxu0 %v4492
        %v7424 = vpop.f32.mrf.mxu0
        %v7425 = vadd.f32 %v7376, %v7424
        %v7426 = vpop.f32.mrf.mxu0
        %v7427 = vadd.f32 %v7378, %v7426
        %7428 = vmatmul.bf16.gmra.mxu0 %v4500
        %v7429 = vpop.f32.mrf.mxu0
        %v7430 = vadd.f32 %v7381, %v7429
        %v7431 = vpop.f32.mrf.mxu0
        %v7432 = vadd.f32 %v7383, %v7431
        %7433 = vdwg.mxu0
        %7434 = vmatpush.bf16.msra.mxu0 %v6571
        %7435 = vmatpush.bf16.msra.mxu0 %v6563
        %7436 = vmatpush.bf16.msra.mxu0 %v6555
        %7437 = vmatpush.bf16.msra.mxu0 %v6547
        %7438 = vmatpush.bf16.msra.mxu0 %v6539
        %7439 = vmatpush.bf16.msra.mxu0 %v6531
        %7440 = vmatpush.bf16.msra.mxu0 %v6523
        %7441 = vmatpush.bf16.msra.mxu0 %v6515
        %7442 = vmatmul.bf16.gmra.mxu0 %v4445
        %v7443 = vpop.f32.mrf.mxu0
        %v7444 = vadd.f32 %v7395, %v7443
        %v7445 = vpop.f32.mrf.mxu0
        %v7446 = vadd.f32 %v7397, %v7445
        %7447 = vmatmul.bf16.gmra.mxu0 %v4453
        %v7448 = vpop.f32.mrf.mxu0
        %v7449 = vadd.f32 %v7400, %v7448
        %v7450 = vpop.f32.mrf.mxu0
        %v7451 = vadd.f32 %v7402, %v7450
        %7452 = vmatmul.bf16.gmra.mxu0 %v4461
        %v7453 = vpop.f32.mrf.mxu0
        %v7454 = vadd.f32 %v7405, %v7453
        %v7455 = vpop.f32.mrf.mxu0
        %v7456 = vadd.f32 %v7407, %v7455
        %7457 = vmatmul.bf16.gmra.mxu0 %v4469
        %v7458 = vpop.f32.mrf.mxu0
        %v7459 = vadd.f32 %v7410, %v7458
        %v7460 = vpop.f32.mrf.mxu0
        %v7461 = vadd.f32 %v7412, %v7460
        %7462 = vmatmul.bf16.gmra.mxu0 %v4477
        %v7463 = vpop.f32.mrf.mxu0
        %v7464 = vadd.f32 %v7415, %v7463
        %v7465 = vpop.f32.mrf.mxu0
        %v7466 = vadd.f32 %v7417, %v7465
        %7467 = vmatmul.bf16.gmra.mxu0 %v4485
        %v7468 = vpop.f32.mrf.mxu0
        %v7469 = vadd.f32 %v7420, %v7468
        %v7470 = vpop.f32.mrf.mxu0
        %v7471 = vadd.f32 %v7422, %v7470
        %7472 = vmatmul.bf16.gmra.mxu0 %v4493
        %v7473 = vpop.f32.mrf.mxu0
        %v7474 = vadd.f32 %v7425, %v7473
        %v7475 = vpop.f32.mrf.mxu0
        %v7476 = vadd.f32 %v7427, %v7475
        %7477 = vmatmul.bf16.gmra.mxu0 %v4501
        %v7478 = vpop.f32.mrf.mxu0
        %v7479 = vadd.f32 %v7430, %v7478
        %v7480 = vpop.f32.mrf.mxu0
        %v7481 = vadd.f32 %v7432, %v7480
        %7482 = vdwg.mxu0
        %7483 = vmatpush.bf16.msra.mxu0 %v6124
        %7484 = vmatpush.bf16.msra.mxu0 %v6116
        %7485 = vmatpush.bf16.msra.mxu0 %v6108
        %7486 = vmatpush.bf16.msra.mxu0 %v6100
        %7487 = vmatpush.bf16.msra.mxu0 %v6092
        %7488 = vmatpush.bf16.msra.mxu0 %v6084
        %7489 = vmatpush.bf16.msra.mxu0 %v6076
        %7490 = vmatpush.bf16.msra.mxu0 %v6068
        %7491 = vmatmul.bf16.gmra.mxu0 %v4438
        %v7492 = vpop.f32.mrf.mxu0
        %v7493 = vadd.f32 %v4516, %v7492
        %v7494 = vpop.f32.mrf.mxu0
        %v7495 = vadd.f32 %v4516, %v7494
        %7496 = vmatmul.bf16.gmra.mxu0 %v4446
        %v7497 = vpop.f32.mrf.mxu0
        %v7498 = vadd.f32 %v4516, %v7497
        %v7499 = vpop.f32.mrf.mxu0
        %v7500 = vadd.f32 %v4516, %v7499
        %7501 = vmatmul.bf16.gmra.mxu0 %v4454
        %v7502 = vpop.f32.mrf.mxu0
        %v7503 = vadd.f32 %v4516, %v7502
        %v7504 = vpop.f32.mrf.mxu0
        %v7505 = vadd.f32 %v4516, %v7504
        %7506 = vmatmul.bf16.gmra.mxu0 %v4462
        %v7507 = vpop.f32.mrf.mxu0
        %v7508 = vadd.f32 %v4516, %v7507
        %v7509 = vpop.f32.mrf.mxu0
        %v7510 = vadd.f32 %v4516, %v7509
        %7511 = vmatmul.bf16.gmra.mxu0 %v4470
        %v7512 = vpop.f32.mrf.mxu0
        %v7513 = vadd.f32 %v4516, %v7512
        %v7514 = vpop.f32.mrf.mxu0
        %v7515 = vadd.f32 %v4516, %v7514
        %7516 = vmatmul.bf16.gmra.mxu0 %v4478
        %v7517 = vpop.f32.mrf.mxu0
        %v7518 = vadd.f32 %v4516, %v7517
        %v7519 = vpop.f32.mrf.mxu0
        %v7520 = vadd.f32 %v4516, %v7519
        %7521 = vmatmul.bf16.gmra.mxu0 %v4486
        %v7522 = vpop.f32.mrf.mxu0
        %v7523 = vadd.f32 %v4516, %v7522
        %v7524 = vpop.f32.mrf.mxu0
        %v7525 = vadd.f32 %v4516, %v7524
        %7526 = vmatmul.bf16.gmra.mxu0 %v4494
        %v7527 = vpop.f32.mrf.mxu0
        %v7528 = vadd.f32 %v4516, %v7527
        %v7529 = vpop.f32.mrf.mxu0
        %v7530 = vadd.f32 %v4516, %v7529
        %7531 = vdwg.mxu0
        %7532 = vmatpush.bf16.msra.mxu0 %v6188
        %7533 = vmatpush.bf16.msra.mxu0 %v6180
        %7534 = vmatpush.bf16.msra.mxu0 %v6172
        %7535 = vmatpush.bf16.msra.mxu0 %v6164
        %7536 = vmatpush.bf16.msra.mxu0 %v6156
        %7537 = vmatpush.bf16.msra.mxu0 %v6148
        %7538 = vmatpush.bf16.msra.mxu0 %v6140
        %7539 = vmatpush.bf16.msra.mxu0 %v6132
        %7540 = vmatmul.bf16.gmra.mxu0 %v4439
        %v7541 = vpop.f32.mrf.mxu0
        %v7542 = vadd.f32 %v7493, %v7541
        %v7543 = vpop.f32.mrf.mxu0
        %v7544 = vadd.f32 %v7495, %v7543
        %7545 = vmatmul.bf16.gmra.mxu0 %v4447
        %v7546 = vpop.f32.mrf.mxu0
        %v7547 = vadd.f32 %v7498, %v7546
        %v7548 = vpop.f32.mrf.mxu0
        %v7549 = vadd.f32 %v7500, %v7548
        %7550 = vmatmul.bf16.gmra.mxu0 %v4455
        %v7551 = vpop.f32.mrf.mxu0
        %v7552 = vadd.f32 %v7503, %v7551
        %v7553 = vpop.f32.mrf.mxu0
        %v7554 = vadd.f32 %v7505, %v7553
        %7555 = vmatmul.bf16.gmra.mxu0 %v4463
        %v7556 = vpop.f32.mrf.mxu0
        %v7557 = vadd.f32 %v7508, %v7556
        %v7558 = vpop.f32.mrf.mxu0
        %v7559 = vadd.f32 %v7510, %v7558
        %7560 = vmatmul.bf16.gmra.mxu0 %v4471
        %v7561 = vpop.f32.mrf.mxu0
        %v7562 = vadd.f32 %v7513, %v7561
        %v7563 = vpop.f32.mrf.mxu0
        %v7564 = vadd.f32 %v7515, %v7563
        %7565 = vmatmul.bf16.gmra.mxu0 %v4479
        %v7566 = vpop.f32.mrf.mxu0
        %v7567 = vadd.f32 %v7518, %v7566
        %v7568 = vpop.f32.mrf.mxu0
        %v7569 = vadd.f32 %v7520, %v7568
        %7570 = vmatmul.bf16.gmra.mxu0 %v4487
        %v7571 = vpop.f32.mrf.mxu0
        %v7572 = vadd.f32 %v7523, %v7571
        %v7573 = vpop.f32.mrf.mxu0
        %v7574 = vadd.f32 %v7525, %v7573
        %7575 = vmatmul.bf16.gmra.mxu0 %v4495
        %v7576 = vpop.f32.mrf.mxu0
        %v7577 = vadd.f32 %v7528, %v7576
        %v7578 = vpop.f32.mrf.mxu0
        %v7579 = vadd.f32 %v7530, %v7578
        %7580 = vdwg.mxu0
        %7581 = vmatpush.bf16.msra.mxu0 %v6252
        %7582 = vmatpush.bf16.msra.mxu0 %v6244
        %7583 = vmatpush.bf16.msra.mxu0 %v6236
        %7584 = vmatpush.bf16.msra.mxu0 %v6228
        %7585 = vmatpush.bf16.msra.mxu0 %v6220
        %7586 = vmatpush.bf16.msra.mxu0 %v6212
        %7587 = vmatpush.bf16.msra.mxu0 %v6204
        %7588 = vmatpush.bf16.msra.mxu0 %v6196
        %7589 = vmatmul.bf16.gmra.mxu0 %v4440
        %v7590 = vpop.f32.mrf.mxu0
        %v7591 = vadd.f32 %v7542, %v7590
        %v7592 = vpop.f32.mrf.mxu0
        %v7593 = vadd.f32 %v7544, %v7592
        %7594 = vmatmul.bf16.gmra.mxu0 %v4448
        %v7595 = vpop.f32.mrf.mxu0
        %v7596 = vadd.f32 %v7547, %v7595
        %v7597 = vpop.f32.mrf.mxu0
        %v7598 = vadd.f32 %v7549, %v7597
        %7599 = vmatmul.bf16.gmra.mxu0 %v4456
        %v7600 = vpop.f32.mrf.mxu0
        %v7601 = vadd.f32 %v7552, %v7600
        %v7602 = vpop.f32.mrf.mxu0
        %v7603 = vadd.f32 %v7554, %v7602
        %7604 = vmatmul.bf16.gmra.mxu0 %v4464
        %v7605 = vpop.f32.mrf.mxu0
        %v7606 = vadd.f32 %v7557, %v7605
        %v7607 = vpop.f32.mrf.mxu0
        %v7608 = vadd.f32 %v7559, %v7607
        %7609 = vmatmul.bf16.gmra.mxu0 %v4472
        %v7610 = vpop.f32.mrf.mxu0
        %v7611 = vadd.f32 %v7562, %v7610
        %v7612 = vpop.f32.mrf.mxu0
        %v7613 = vadd.f32 %v7564, %v7612
        %7614 = vmatmul.bf16.gmra.mxu0 %v4480
        %v7615 = vpop.f32.mrf.mxu0
        %v7616 = vadd.f32 %v7567, %v7615
        %v7617 = vpop.f32.mrf.mxu0
        %v7618 = vadd.f32 %v7569, %v7617
        %7619 = vmatmul.bf16.gmra.mxu0 %v4488
        %v7620 = vpop.f32.mrf.mxu0
        %v7621 = vadd.f32 %v7572, %v7620
        %v7622 = vpop.f32.mrf.mxu0
        %v7623 = vadd.f32 %v7574, %v7622
        %7624 = vmatmul.bf16.gmra.mxu0 %v4496
        %v7625 = vpop.f32.mrf.mxu0
        %v7626 = vadd.f32 %v7577, %v7625
        %v7627 = vpop.f32.mrf.mxu0
        %v7628 = vadd.f32 %v7579, %v7627
        %7629 = vdwg.mxu0
        %7630 = vmatpush.bf16.msra.mxu0 %v6316
        %7631 = vmatpush.bf16.msra.mxu0 %v6308
        %7632 = vmatpush.bf16.msra.mxu0 %v6300
        %7633 = vmatpush.bf16.msra.mxu0 %v6292
        %7634 = vmatpush.bf16.msra.mxu0 %v6284
        %7635 = vmatpush.bf16.msra.mxu0 %v6276
        %7636 = vmatpush.bf16.msra.mxu0 %v6268
        %7637 = vmatpush.bf16.msra.mxu0 %v6260
        %7638 = vmatmul.bf16.gmra.mxu0 %v4441
        %v7639 = vpop.f32.mrf.mxu0
        %v7640 = vadd.f32 %v7591, %v7639
        %v7641 = vpop.f32.mrf.mxu0
        %v7642 = vadd.f32 %v7593, %v7641
        %7643 = vmatmul.bf16.gmra.mxu0 %v4449
        %v7644 = vpop.f32.mrf.mxu0
        %v7645 = vadd.f32 %v7596, %v7644
        %v7646 = vpop.f32.mrf.mxu0
        %v7647 = vadd.f32 %v7598, %v7646
        %7648 = vmatmul.bf16.gmra.mxu0 %v4457
        %v7649 = vpop.f32.mrf.mxu0
        %v7650 = vadd.f32 %v7601, %v7649
        %v7651 = vpop.f32.mrf.mxu0
        %v7652 = vadd.f32 %v7603, %v7651
        %7653 = vmatmul.bf16.gmra.mxu0 %v4465
        %v7654 = vpop.f32.mrf.mxu0
        %v7655 = vadd.f32 %v7606, %v7654
        %v7656 = vpop.f32.mrf.mxu0
        %v7657 = vadd.f32 %v7608, %v7656
        %7658 = vmatmul.bf16.gmra.mxu0 %v4473
        %v7659 = vpop.f32.mrf.mxu0
        %v7660 = vadd.f32 %v7611, %v7659
        %v7661 = vpop.f32.mrf.mxu0
        %v7662 = vadd.f32 %v7613, %v7661
        %7663 = vmatmul.bf16.gmra.mxu0 %v4481
        %v7664 = vpop.f32.mrf.mxu0
        %v7665 = vadd.f32 %v7616, %v7664
        %v7666 = vpop.f32.mrf.mxu0
        %v7667 = vadd.f32 %v7618, %v7666
        %7668 = vmatmul.bf16.gmra.mxu0 %v4489
        %v7669 = vpop.f32.mrf.mxu0
        %v7670 = vadd.f32 %v7621, %v7669
        %v7671 = vpop.f32.mrf.mxu0
        %v7672 = vadd.f32 %v7623, %v7671
        %7673 = vmatmul.bf16.gmra.mxu0 %v4497
        %v7674 = vpop.f32.mrf.mxu0
        %v7675 = vadd.f32 %v7626, %v7674
        %v7676 = vpop.f32.mrf.mxu0
        %v7677 = vadd.f32 %v7628, %v7676
        %7678 = vdwg.mxu0
        %7679 = vmatpush.bf16.msra.mxu0 %v6380
        %7680 = vmatpush.bf16.msra.mxu0 %v6372
        %7681 = vmatpush.bf16.msra.mxu0 %v6364
        %7682 = vmatpush.bf16.msra.mxu0 %v6356
        %7683 = vmatpush.bf16.msra.mxu0 %v6348
        %7684 = vmatpush.bf16.msra.mxu0 %v6340
        %7685 = vmatpush.bf16.msra.mxu0 %v6332
        %7686 = vmatpush.bf16.msra.mxu0 %v6324
        %7687 = vmatmul.bf16.gmra.mxu0 %v4442
        %v7688 = vpop.f32.mrf.mxu0
        %v7689 = vadd.f32 %v7640, %v7688
        %v7690 = vpop.f32.mrf.mxu0
        %v7691 = vadd.f32 %v7642, %v7690
        %7692 = vmatmul.bf16.gmra.mxu0 %v4450
        %v7693 = vpop.f32.mrf.mxu0
        %v7694 = vadd.f32 %v7645, %v7693
        %v7695 = vpop.f32.mrf.mxu0
        %v7696 = vadd.f32 %v7647, %v7695
        %7697 = vmatmul.bf16.gmra.mxu0 %v4458
        %v7698 = vpop.f32.mrf.mxu0
        %v7699 = vadd.f32 %v7650, %v7698
        %v7700 = vpop.f32.mrf.mxu0
        %v7701 = vadd.f32 %v7652, %v7700
        %7702 = vmatmul.bf16.gmra.mxu0 %v4466
        %v7703 = vpop.f32.mrf.mxu0
        %v7704 = vadd.f32 %v7655, %v7703
        %v7705 = vpop.f32.mrf.mxu0
        %v7706 = vadd.f32 %v7657, %v7705
        %7707 = vmatmul.bf16.gmra.mxu0 %v4474
        %v7708 = vpop.f32.mrf.mxu0
        %v7709 = vadd.f32 %v7660, %v7708
        %v7710 = vpop.f32.mrf.mxu0
        %v7711 = vadd.f32 %v7662, %v7710
        %7712 = vmatmul.bf16.gmra.mxu0 %v4482
        %v7713 = vpop.f32.mrf.mxu0
        %v7714 = vadd.f32 %v7665, %v7713
        %v7715 = vpop.f32.mrf.mxu0
        %v7716 = vadd.f32 %v7667, %v7715
        %7717 = vmatmul.bf16.gmra.mxu0 %v4490
        %v7718 = vpop.f32.mrf.mxu0
        %v7719 = vadd.f32 %v7670, %v7718
        %v7720 = vpop.f32.mrf.mxu0
        %v7721 = vadd.f32 %v7672, %v7720
        %7722 = vmatmul.bf16.gmra.mxu0 %v4498
        %v7723 = vpop.f32.mrf.mxu0
        %v7724 = vadd.f32 %v7675, %v7723
        %v7725 = vpop.f32.mrf.mxu0
        %v7726 = vadd.f32 %v7677, %v7725
        %7727 = vdwg.mxu0
        %7728 = vmatpush.bf16.msra.mxu0 %v6444
        %7729 = vmatpush.bf16.msra.mxu0 %v6436
        %7730 = vmatpush.bf16.msra.mxu0 %v6428
        %7731 = vmatpush.bf16.msra.mxu0 %v6420
        %7732 = vmatpush.bf16.msra.mxu0 %v6412
        %7733 = vmatpush.bf16.msra.mxu0 %v6404
        %7734 = vmatpush.bf16.msra.mxu0 %v6396
        %7735 = vmatpush.bf16.msra.mxu0 %v6388
        %7736 = vmatmul.bf16.gmra.mxu0 %v4443
        %v7737 = vpop.f32.mrf.mxu0
        %v7738 = vadd.f32 %v7689, %v7737
        %v7739 = vpop.f32.mrf.mxu0
        %v7740 = vadd.f32 %v7691, %v7739
        %7741 = vmatmul.bf16.gmra.mxu0 %v4451
        %v7742 = vpop.f32.mrf.mxu0
        %v7743 = vadd.f32 %v7694, %v7742
        %v7744 = vpop.f32.mrf.mxu0
        %v7745 = vadd.f32 %v7696, %v7744
        %7746 = vmatmul.bf16.gmra.mxu0 %v4459
        %v7747 = vpop.f32.mrf.mxu0
        %v7748 = vadd.f32 %v7699, %v7747
        %v7749 = vpop.f32.mrf.mxu0
        %v7750 = vadd.f32 %v7701, %v7749
        %7751 = vmatmul.bf16.gmra.mxu0 %v4467
        %v7752 = vpop.f32.mrf.mxu0
        %v7753 = vadd.f32 %v7704, %v7752
        %v7754 = vpop.f32.mrf.mxu0
        %v7755 = vadd.f32 %v7706, %v7754
        %7756 = vmatmul.bf16.gmra.mxu0 %v4475
        %v7757 = vpop.f32.mrf.mxu0
        %v7758 = vadd.f32 %v7709, %v7757
        %v7759 = vpop.f32.mrf.mxu0
        %v7760 = vadd.f32 %v7711, %v7759
        %7761 = vmatmul.bf16.gmra.mxu0 %v4483
        %v7762 = vpop.f32.mrf.mxu0
        %v7763 = vadd.f32 %v7714, %v7762
        %v7764 = vpop.f32.mrf.mxu0
        %v7765 = vadd.f32 %v7716, %v7764
        %7766 = vmatmul.bf16.gmra.mxu0 %v4491
        %v7767 = vpop.f32.mrf.mxu0
        %v7768 = vadd.f32 %v7719, %v7767
        %v7769 = vpop.f32.mrf.mxu0
        %v7770 = vadd.f32 %v7721, %v7769
        %7771 = vmatmul.bf16.gmra.mxu0 %v4499
        %v7772 = vpop.f32.mrf.mxu0
        %v7773 = vadd.f32 %v7724, %v7772
        %v7774 = vpop.f32.mrf.mxu0
        %v7775 = vadd.f32 %v7726, %v7774
        %7776 = vdwg.mxu0
        %7777 = vmatpush.bf16.msra.mxu0 %v6508
        %7778 = vmatpush.bf16.msra.mxu0 %v6500
        %7779 = vmatpush.bf16.msra.mxu0 %v6492
        %7780 = vmatpush.bf16.msra.mxu0 %v6484
        %7781 = vmatpush.bf16.msra.mxu0 %v6476
        %7782 = vmatpush.bf16.msra.mxu0 %v6468
        %7783 = vmatpush.bf16.msra.mxu0 %v6460
        %7784 = vmatpush.bf16.msra.mxu0 %v6452
        %7785 = vmatmul.bf16.gmra.mxu0 %v4444
        %v7786 = vpop.f32.mrf.mxu0
        %v7787 = vadd.f32 %v7738, %v7786
        %v7788 = vpop.f32.mrf.mxu0
        %v7789 = vadd.f32 %v7740, %v7788
        %7790 = vmatmul.bf16.gmra.mxu0 %v4452
        %v7791 = vpop.f32.mrf.mxu0
        %v7792 = vadd.f32 %v7743, %v7791
        %v7793 = vpop.f32.mrf.mxu0
        %v7794 = vadd.f32 %v7745, %v7793
        %7795 = vmatmul.bf16.gmra.mxu0 %v4460
        %v7796 = vpop.f32.mrf.mxu0
        %v7797 = vadd.f32 %v7748, %v7796
        %v7798 = vpop.f32.mrf.mxu0
        %v7799 = vadd.f32 %v7750, %v7798
        %7800 = vmatmul.bf16.gmra.mxu0 %v4468
        %v7801 = vpop.f32.mrf.mxu0
        %v7802 = vadd.f32 %v7753, %v7801
        %v7803 = vpop.f32.mrf.mxu0
        %v7804 = vadd.f32 %v7755, %v7803
        %7805 = vmatmul.bf16.gmra.mxu0 %v4476
        %v7806 = vpop.f32.mrf.mxu0
        %v7807 = vadd.f32 %v7758, %v7806
        %v7808 = vpop.f32.mrf.mxu0
        %v7809 = vadd.f32 %v7760, %v7808
        %7810 = vmatmul.bf16.gmra.mxu0 %v4484
        %v7811 = vpop.f32.mrf.mxu0
        %v7812 = vadd.f32 %v7763, %v7811
        %v7813 = vpop.f32.mrf.mxu0
        %v7814 = vadd.f32 %v7765, %v7813
        %7815 = vmatmul.bf16.gmra.mxu0 %v4492
        %v7816 = vpop.f32.mrf.mxu0
        %v7817 = vadd.f32 %v7768, %v7816
        %v7818 = vpop.f32.mrf.mxu0
        %v7819 = vadd.f32 %v7770, %v7818
        %7820 = vmatmul.bf16.gmra.mxu0 %v4500
        %v7821 = vpop.f32.mrf.mxu0
        %v7822 = vadd.f32 %v7773, %v7821
        %v7823 = vpop.f32.mrf.mxu0
        %v7824 = vadd.f32 %v7775, %v7823
        %7825 = vdwg.mxu0
        %7826 = vmatpush.bf16.msra.mxu0 %v6572
        %7827 = vmatpush.bf16.msra.mxu0 %v6564
        %7828 = vmatpush.bf16.msra.mxu0 %v6556
        %7829 = vmatpush.bf16.msra.mxu0 %v6548
        %7830 = vmatpush.bf16.msra.mxu0 %v6540
        %7831 = vmatpush.bf16.msra.mxu0 %v6532
        %7832 = vmatpush.bf16.msra.mxu0 %v6524
        %7833 = vmatpush.bf16.msra.mxu0 %v6516
        %7834 = vmatmul.bf16.gmra.mxu0 %v4445
        %v7835 = vpop.f32.mrf.mxu0
        %v7836 = vadd.f32 %v7787, %v7835
        %v7837 = vpop.f32.mrf.mxu0
        %v7838 = vadd.f32 %v7789, %v7837
        %7839 = vmatmul.bf16.gmra.mxu0 %v4453
        %v7840 = vpop.f32.mrf.mxu0
        %v7841 = vadd.f32 %v7792, %v7840
        %v7842 = vpop.f32.mrf.mxu0
        %v7843 = vadd.f32 %v7794, %v7842
        %7844 = vmatmul.bf16.gmra.mxu0 %v4461
        %v7845 = vpop.f32.mrf.mxu0
        %v7846 = vadd.f32 %v7797, %v7845
        %v7847 = vpop.f32.mrf.mxu0
        %v7848 = vadd.f32 %v7799, %v7847
        %7849 = vmatmul.bf16.gmra.mxu0 %v4469
        %v7850 = vpop.f32.mrf.mxu0
        %v7851 = vadd.f32 %v7802, %v7850
        %v7852 = vpop.f32.mrf.mxu0
        %v7853 = vadd.f32 %v7804, %v7852
        %7854 = vmatmul.bf16.gmra.mxu0 %v4477
        %v7855 = vpop.f32.mrf.mxu0
        %v7856 = vadd.f32 %v7807, %v7855
        %v7857 = vpop.f32.mrf.mxu0
        %v7858 = vadd.f32 %v7809, %v7857
        %7859 = vmatmul.bf16.gmra.mxu0 %v4485
        %v7860 = vpop.f32.mrf.mxu0
        %v7861 = vadd.f32 %v7812, %v7860
        %v7862 = vpop.f32.mrf.mxu0
        %v7863 = vadd.f32 %v7814, %v7862
        %7864 = vmatmul.bf16.gmra.mxu0 %v4493
        %v7865 = vpop.f32.mrf.mxu0
        %v7866 = vadd.f32 %v7817, %v7865
        %v7867 = vpop.f32.mrf.mxu0
        %v7868 = vadd.f32 %v7819, %v7867
        %7869 = vmatmul.bf16.gmra.mxu0 %v4501
        %v7870 = vpop.f32.mrf.mxu0
        %v7871 = vadd.f32 %v7822, %v7870
        %v7872 = vpop.f32.mrf.mxu0
        %v7873 = vadd.f32 %v7824, %v7872
        %7874 = vdwg.mxu0
        %7875 = vmatpush.bf16.msra.mxu0 %v6125
        %7876 = vmatpush.bf16.msra.mxu0 %v6117
        %7877 = vmatpush.bf16.msra.mxu0 %v6109
        %7878 = vmatpush.bf16.msra.mxu0 %v6101
        %7879 = vmatpush.bf16.msra.mxu0 %v6093
        %7880 = vmatpush.bf16.msra.mxu0 %v6085
        %7881 = vmatpush.bf16.msra.mxu0 %v6077
        %7882 = vmatpush.bf16.msra.mxu0 %v6069
        %7883 = vmatmul.bf16.gmra.mxu0 %v4438
        %v7884 = vpop.f32.mrf.mxu0
        %v7885 = vadd.f32 %v4517, %v7884
        %v7886 = vpop.f32.mrf.mxu0
        %v7887 = vadd.f32 %v4517, %v7886
        %7888 = vmatmul.bf16.gmra.mxu0 %v4446
        %v7889 = vpop.f32.mrf.mxu0
        %v7890 = vadd.f32 %v4517, %v7889
        %v7891 = vpop.f32.mrf.mxu0
        %v7892 = vadd.f32 %v4517, %v7891
        %7893 = vmatmul.bf16.gmra.mxu0 %v4454
        %v7894 = vpop.f32.mrf.mxu0
        %v7895 = vadd.f32 %v4517, %v7894
        %v7896 = vpop.f32.mrf.mxu0
        %v7897 = vadd.f32 %v4517, %v7896
        %7898 = vmatmul.bf16.gmra.mxu0 %v4462
        %v7899 = vpop.f32.mrf.mxu0
        %v7900 = vadd.f32 %v4517, %v7899
        %v7901 = vpop.f32.mrf.mxu0
        %v7902 = vadd.f32 %v4517, %v7901
        %7903 = vmatmul.bf16.gmra.mxu0 %v4470
        %v7904 = vpop.f32.mrf.mxu0
        %v7905 = vadd.f32 %v4517, %v7904
        %v7906 = vpop.f32.mrf.mxu0
        %v7907 = vadd.f32 %v4517, %v7906
        %7908 = vmatmul.bf16.gmra.mxu0 %v4478
        %v7909 = vpop.f32.mrf.mxu0
        %v7910 = vadd.f32 %v4517, %v7909
        %v7911 = vpop.f32.mrf.mxu0
        %v7912 = vadd.f32 %v4517, %v7911
        %7913 = vmatmul.bf16.gmra.mxu0 %v4486
        %v7914 = vpop.f32.mrf.mxu0
        %v7915 = vadd.f32 %v4517, %v7914
        %v7916 = vpop.f32.mrf.mxu0
        %v7917 = vadd.f32 %v4517, %v7916
        %7918 = vmatmul.bf16.gmra.mxu0 %v4494
        %v7919 = vpop.f32.mrf.mxu0
        %v7920 = vadd.f32 %v4517, %v7919
        %v7921 = vpop.f32.mrf.mxu0
        %v7922 = vadd.f32 %v4517, %v7921
        %7923 = vdwg.mxu0
        %7924 = vmatpush.bf16.msra.mxu0 %v6189
        %7925 = vmatpush.bf16.msra.mxu0 %v6181
        %7926 = vmatpush.bf16.msra.mxu0 %v6173
        %7927 = vmatpush.bf16.msra.mxu0 %v6165
        %7928 = vmatpush.bf16.msra.mxu0 %v6157
        %7929 = vmatpush.bf16.msra.mxu0 %v6149
        %7930 = vmatpush.bf16.msra.mxu0 %v6141
        %7931 = vmatpush.bf16.msra.mxu0 %v6133
        %7932 = vmatmul.bf16.gmra.mxu0 %v4439
        %v7933 = vpop.f32.mrf.mxu0
        %v7934 = vadd.f32 %v7885, %v7933
        %v7935 = vpop.f32.mrf.mxu0
        %v7936 = vadd.f32 %v7887, %v7935
        %7937 = vmatmul.bf16.gmra.mxu0 %v4447
        %v7938 = vpop.f32.mrf.mxu0
        %v7939 = vadd.f32 %v7890, %v7938
        %v7940 = vpop.f32.mrf.mxu0
        %v7941 = vadd.f32 %v7892, %v7940
        %7942 = vmatmul.bf16.gmra.mxu0 %v4455
        %v7943 = vpop.f32.mrf.mxu0
        %v7944 = vadd.f32 %v7895, %v7943
        %v7945 = vpop.f32.mrf.mxu0
        %v7946 = vadd.f32 %v7897, %v7945
        %7947 = vmatmul.bf16.gmra.mxu0 %v4463
        %v7948 = vpop.f32.mrf.mxu0
        %v7949 = vadd.f32 %v7900, %v7948
        %v7950 = vpop.f32.mrf.mxu0
        %v7951 = vadd.f32 %v7902, %v7950
        %7952 = vmatmul.bf16.gmra.mxu0 %v4471
        %v7953 = vpop.f32.mrf.mxu0
        %v7954 = vadd.f32 %v7905, %v7953
        %v7955 = vpop.f32.mrf.mxu0
        %v7956 = vadd.f32 %v7907, %v7955
        %7957 = vmatmul.bf16.gmra.mxu0 %v4479
        %v7958 = vpop.f32.mrf.mxu0
        %v7959 = vadd.f32 %v7910, %v7958
        %v7960 = vpop.f32.mrf.mxu0
        %v7961 = vadd.f32 %v7912, %v7960
        %7962 = vmatmul.bf16.gmra.mxu0 %v4487
        %v7963 = vpop.f32.mrf.mxu0
        %v7964 = vadd.f32 %v7915, %v7963
        %v7965 = vpop.f32.mrf.mxu0
        %v7966 = vadd.f32 %v7917, %v7965
        %7967 = vmatmul.bf16.gmra.mxu0 %v4495
        %v7968 = vpop.f32.mrf.mxu0
        %v7969 = vadd.f32 %v7920, %v7968
        %v7970 = vpop.f32.mrf.mxu0
        %v7971 = vadd.f32 %v7922, %v7970
        %7972 = vdwg.mxu0
        %7973 = vmatpush.bf16.msra.mxu0 %v6253
        %7974 = vmatpush.bf16.msra.mxu0 %v6245
        %7975 = vmatpush.bf16.msra.mxu0 %v6237
        %7976 = vmatpush.bf16.msra.mxu0 %v6229
        %7977 = vmatpush.bf16.msra.mxu0 %v6221
        %7978 = vmatpush.bf16.msra.mxu0 %v6213
        %7979 = vmatpush.bf16.msra.mxu0 %v6205
        %7980 = vmatpush.bf16.msra.mxu0 %v6197
        %7981 = vmatmul.bf16.gmra.mxu0 %v4440
        %v7982 = vpop.f32.mrf.mxu0
        %v7983 = vadd.f32 %v7934, %v7982
        %v7984 = vpop.f32.mrf.mxu0
        %v7985 = vadd.f32 %v7936, %v7984
        %7986 = vmatmul.bf16.gmra.mxu0 %v4448
        %v7987 = vpop.f32.mrf.mxu0
        %v7988 = vadd.f32 %v7939, %v7987
        %v7989 = vpop.f32.mrf.mxu0
        %v7990 = vadd.f32 %v7941, %v7989
        %7991 = vmatmul.bf16.gmra.mxu0 %v4456
        %v7992 = vpop.f32.mrf.mxu0
        %v7993 = vadd.f32 %v7944, %v7992
        %v7994 = vpop.f32.mrf.mxu0
        %v7995 = vadd.f32 %v7946, %v7994
        %7996 = vmatmul.bf16.gmra.mxu0 %v4464
        %v7997 = vpop.f32.mrf.mxu0
        %v7998 = vadd.f32 %v7949, %v7997
        %v7999 = vpop.f32.mrf.mxu0
        %v8000 = vadd.f32 %v7951, %v7999
        %8001 = vmatmul.bf16.gmra.mxu0 %v4472
        %v8002 = vpop.f32.mrf.mxu0
        %v8003 = vadd.f32 %v7954, %v8002
        %v8004 = vpop.f32.mrf.mxu0
        %v8005 = vadd.f32 %v7956, %v8004
        %8006 = vmatmul.bf16.gmra.mxu0 %v4480
        %v8007 = vpop.f32.mrf.mxu0
        %v8008 = vadd.f32 %v7959, %v8007
        %v8009 = vpop.f32.mrf.mxu0
        %v8010 = vadd.f32 %v7961, %v8009
        %8011 = vmatmul.bf16.gmra.mxu0 %v4488
        %v8012 = vpop.f32.mrf.mxu0
        %v8013 = vadd.f32 %v7964, %v8012
        %v8014 = vpop.f32.mrf.mxu0
        %v8015 = vadd.f32 %v7966, %v8014
        %8016 = vmatmul.bf16.gmra.mxu0 %v4496
        %v8017 = vpop.f32.mrf.mxu0
        %v8018 = vadd.f32 %v7969, %v8017
        %v8019 = vpop.f32.mrf.mxu0
        %v8020 = vadd.f32 %v7971, %v8019
        %8021 = vdwg.mxu0
        %8022 = vmatpush.bf16.msra.mxu0 %v6317
        %8023 = vmatpush.bf16.msra.mxu0 %v6309
        %8024 = vmatpush.bf16.msra.mxu0 %v6301
        %8025 = vmatpush.bf16.msra.mxu0 %v6293
        %8026 = vmatpush.bf16.msra.mxu0 %v6285
        %8027 = vmatpush.bf16.msra.mxu0 %v6277
        %8028 = vmatpush.bf16.msra.mxu0 %v6269
        %8029 = vmatpush.bf16.msra.mxu0 %v6261
        %8030 = vmatmul.bf16.gmra.mxu0 %v4441
        %v8031 = vpop.f32.mrf.mxu0
        %v8032 = vadd.f32 %v7983, %v8031
        %v8033 = vpop.f32.mrf.mxu0
        %v8034 = vadd.f32 %v7985, %v8033
        %8035 = vmatmul.bf16.gmra.mxu0 %v4449
        %v8036 = vpop.f32.mrf.mxu0
        %v8037 = vadd.f32 %v7988, %v8036
        %v8038 = vpop.f32.mrf.mxu0
        %v8039 = vadd.f32 %v7990, %v8038
        %8040 = vmatmul.bf16.gmra.mxu0 %v4457
        %v8041 = vpop.f32.mrf.mxu0
        %v8042 = vadd.f32 %v7993, %v8041
        %v8043 = vpop.f32.mrf.mxu0
        %v8044 = vadd.f32 %v7995, %v8043
        %8045 = vmatmul.bf16.gmra.mxu0 %v4465
        %v8046 = vpop.f32.mrf.mxu0
        %v8047 = vadd.f32 %v7998, %v8046
        %v8048 = vpop.f32.mrf.mxu0
        %v8049 = vadd.f32 %v8000, %v8048
        %8050 = vmatmul.bf16.gmra.mxu0 %v4473
        %v8051 = vpop.f32.mrf.mxu0
        %v8052 = vadd.f32 %v8003, %v8051
        %v8053 = vpop.f32.mrf.mxu0
        %v8054 = vadd.f32 %v8005, %v8053
        %8055 = vmatmul.bf16.gmra.mxu0 %v4481
        %v8056 = vpop.f32.mrf.mxu0
        %v8057 = vadd.f32 %v8008, %v8056
        %v8058 = vpop.f32.mrf.mxu0
        %v8059 = vadd.f32 %v8010, %v8058
        %8060 = vmatmul.bf16.gmra.mxu0 %v4489
        %v8061 = vpop.f32.mrf.mxu0
        %v8062 = vadd.f32 %v8013, %v8061
        %v8063 = vpop.f32.mrf.mxu0
        %v8064 = vadd.f32 %v8015, %v8063
        %8065 = vmatmul.bf16.gmra.mxu0 %v4497
        %v8066 = vpop.f32.mrf.mxu0
        %v8067 = vadd.f32 %v8018, %v8066
        %v8068 = vpop.f32.mrf.mxu0
        %v8069 = vadd.f32 %v8020, %v8068
        %8070 = vdwg.mxu0
        %8071 = vmatpush.bf16.msra.mxu0 %v6381
        %8072 = vmatpush.bf16.msra.mxu0 %v6373
        %8073 = vmatpush.bf16.msra.mxu0 %v6365
        %8074 = vmatpush.bf16.msra.mxu0 %v6357
        %8075 = vmatpush.bf16.msra.mxu0 %v6349
        %8076 = vmatpush.bf16.msra.mxu0 %v6341
        %8077 = vmatpush.bf16.msra.mxu0 %v6333
        %8078 = vmatpush.bf16.msra.mxu0 %v6325
        %8079 = vmatmul.bf16.gmra.mxu0 %v4442
        %v8080 = vpop.f32.mrf.mxu0
        %v8081 = vadd.f32 %v8032, %v8080
        %v8082 = vpop.f32.mrf.mxu0
        %v8083 = vadd.f32 %v8034, %v8082
        %8084 = vmatmul.bf16.gmra.mxu0 %v4450
        %v8085 = vpop.f32.mrf.mxu0
        %v8086 = vadd.f32 %v8037, %v8085
        %v8087 = vpop.f32.mrf.mxu0
        %v8088 = vadd.f32 %v8039, %v8087
        %8089 = vmatmul.bf16.gmra.mxu0 %v4458
        %v8090 = vpop.f32.mrf.mxu0
        %v8091 = vadd.f32 %v8042, %v8090
        %v8092 = vpop.f32.mrf.mxu0
        %v8093 = vadd.f32 %v8044, %v8092
        %8094 = vmatmul.bf16.gmra.mxu0 %v4466
        %v8095 = vpop.f32.mrf.mxu0
        %v8096 = vadd.f32 %v8047, %v8095
        %v8097 = vpop.f32.mrf.mxu0
        %v8098 = vadd.f32 %v8049, %v8097
        %8099 = vmatmul.bf16.gmra.mxu0 %v4474
        %v8100 = vpop.f32.mrf.mxu0
        %v8101 = vadd.f32 %v8052, %v8100
        %v8102 = vpop.f32.mrf.mxu0
        %v8103 = vadd.f32 %v8054, %v8102
        %8104 = vmatmul.bf16.gmra.mxu0 %v4482
        %v8105 = vpop.f32.mrf.mxu0
        %v8106 = vadd.f32 %v8057, %v8105
        %v8107 = vpop.f32.mrf.mxu0
        %v8108 = vadd.f32 %v8059, %v8107
        %8109 = vmatmul.bf16.gmra.mxu0 %v4490
        %v8110 = vpop.f32.mrf.mxu0
        %v8111 = vadd.f32 %v8062, %v8110
        %v8112 = vpop.f32.mrf.mxu0
        %v8113 = vadd.f32 %v8064, %v8112
        %8114 = vmatmul.bf16.gmra.mxu0 %v4498
        %v8115 = vpop.f32.mrf.mxu0
        %v8116 = vadd.f32 %v8067, %v8115
        %v8117 = vpop.f32.mrf.mxu0
        %v8118 = vadd.f32 %v8069, %v8117
        %8119 = vdwg.mxu0
        %8120 = vmatpush.bf16.msra.mxu0 %v6445
        %8121 = vmatpush.bf16.msra.mxu0 %v6437
        %8122 = vmatpush.bf16.msra.mxu0 %v6429
        %8123 = vmatpush.bf16.msra.mxu0 %v6421
        %8124 = vmatpush.bf16.msra.mxu0 %v6413
        %8125 = vmatpush.bf16.msra.mxu0 %v6405
        %8126 = vmatpush.bf16.msra.mxu0 %v6397
        %8127 = vmatpush.bf16.msra.mxu0 %v6389
        %8128 = vmatmul.bf16.gmra.mxu0 %v4443
        %v8129 = vpop.f32.mrf.mxu0
        %v8130 = vadd.f32 %v8081, %v8129
        %v8131 = vpop.f32.mrf.mxu0
        %v8132 = vadd.f32 %v8083, %v8131
        %8133 = vmatmul.bf16.gmra.mxu0 %v4451
        %v8134 = vpop.f32.mrf.mxu0
        %v8135 = vadd.f32 %v8086, %v8134
        %v8136 = vpop.f32.mrf.mxu0
        %v8137 = vadd.f32 %v8088, %v8136
        %8138 = vmatmul.bf16.gmra.mxu0 %v4459
        %v8139 = vpop.f32.mrf.mxu0
        %v8140 = vadd.f32 %v8091, %v8139
        %v8141 = vpop.f32.mrf.mxu0
        %v8142 = vadd.f32 %v8093, %v8141
        %8143 = vmatmul.bf16.gmra.mxu0 %v4467
        %v8144 = vpop.f32.mrf.mxu0
        %v8145 = vadd.f32 %v8096, %v8144
        %v8146 = vpop.f32.mrf.mxu0
        %v8147 = vadd.f32 %v8098, %v8146
        %8148 = vmatmul.bf16.gmra.mxu0 %v4475
        %v8149 = vpop.f32.mrf.mxu0
        %v8150 = vadd.f32 %v8101, %v8149
        %v8151 = vpop.f32.mrf.mxu0
        %v8152 = vadd.f32 %v8103, %v8151
        %8153 = vmatmul.bf16.gmra.mxu0 %v4483
        %v8154 = vpop.f32.mrf.mxu0
        %v8155 = vadd.f32 %v8106, %v8154
        %v8156 = vpop.f32.mrf.mxu0
        %v8157 = vadd.f32 %v8108, %v8156
        %8158 = vmatmul.bf16.gmra.mxu0 %v4491
        %v8159 = vpop.f32.mrf.mxu0
        %v8160 = vadd.f32 %v8111, %v8159
        %v8161 = vpop.f32.mrf.mxu0
        %v8162 = vadd.f32 %v8113, %v8161
        %8163 = vmatmul.bf16.gmra.mxu0 %v4499
        %v8164 = vpop.f32.mrf.mxu0
        %v8165 = vadd.f32 %v8116, %v8164
        %v8166 = vpop.f32.mrf.mxu0
        %v8167 = vadd.f32 %v8118, %v8166
        %8168 = vdwg.mxu0
        %8169 = vmatpush.bf16.msra.mxu0 %v6509
        %8170 = vmatpush.bf16.msra.mxu0 %v6501
        %8171 = vmatpush.bf16.msra.mxu0 %v6493
        %8172 = vmatpush.bf16.msra.mxu0 %v6485
        %8173 = vmatpush.bf16.msra.mxu0 %v6477
        %8174 = vmatpush.bf16.msra.mxu0 %v6469
        %8175 = vmatpush.bf16.msra.mxu0 %v6461
        %8176 = vmatpush.bf16.msra.mxu0 %v6453
        %8177 = vmatmul.bf16.gmra.mxu0 %v4444
        %v8178 = vpop.f32.mrf.mxu0
        %v8179 = vadd.f32 %v8130, %v8178
        %v8180 = vpop.f32.mrf.mxu0
        %v8181 = vadd.f32 %v8132, %v8180
        %8182 = vmatmul.bf16.gmra.mxu0 %v4452
        %v8183 = vpop.f32.mrf.mxu0
        %v8184 = vadd.f32 %v8135, %v8183
        %v8185 = vpop.f32.mrf.mxu0
        %v8186 = vadd.f32 %v8137, %v8185
        %8187 = vmatmul.bf16.gmra.mxu0 %v4460
        %v8188 = vpop.f32.mrf.mxu0
        %v8189 = vadd.f32 %v8140, %v8188
        %v8190 = vpop.f32.mrf.mxu0
        %v8191 = vadd.f32 %v8142, %v8190
        %8192 = vmatmul.bf16.gmra.mxu0 %v4468
        %v8193 = vpop.f32.mrf.mxu0
        %v8194 = vadd.f32 %v8145, %v8193
        %v8195 = vpop.f32.mrf.mxu0
        %v8196 = vadd.f32 %v8147, %v8195
        %8197 = vmatmul.bf16.gmra.mxu0 %v4476
        %v8198 = vpop.f32.mrf.mxu0
        %v8199 = vadd.f32 %v8150, %v8198
        %v8200 = vpop.f32.mrf.mxu0
        %v8201 = vadd.f32 %v8152, %v8200
        %8202 = vmatmul.bf16.gmra.mxu0 %v4484
        %v8203 = vpop.f32.mrf.mxu0
        %v8204 = vadd.f32 %v8155, %v8203
        %v8205 = vpop.f32.mrf.mxu0
        %v8206 = vadd.f32 %v8157, %v8205
        %8207 = vmatmul.bf16.gmra.mxu0 %v4492
        %v8208 = vpop.f32.mrf.mxu0
        %v8209 = vadd.f32 %v8160, %v8208
        %v8210 = vpop.f32.mrf.mxu0
        %v8211 = vadd.f32 %v8162, %v8210
        %8212 = vmatmul.bf16.gmra.mxu0 %v4500
        %v8213 = vpop.f32.mrf.mxu0
        %v8214 = vadd.f32 %v8165, %v8213
        %v8215 = vpop.f32.mrf.mxu0
        %v8216 = vadd.f32 %v8167, %v8215
        %8217 = vdwg.mxu0
        %8218 = vmatpush.bf16.msra.mxu0 %v6573
        %8219 = vmatpush.bf16.msra.mxu0 %v6565
        %8220 = vmatpush.bf16.msra.mxu0 %v6557
        %8221 = vmatpush.bf16.msra.mxu0 %v6549
        %8222 = vmatpush.bf16.msra.mxu0 %v6541
        %8223 = vmatpush.bf16.msra.mxu0 %v6533
        %8224 = vmatpush.bf16.msra.mxu0 %v6525
        %8225 = vmatpush.bf16.msra.mxu0 %v6517
        %8226 = vmatmul.bf16.gmra.mxu0 %v4445
        %v8227 = vpop.f32.mrf.mxu0
        %v8228 = vadd.f32 %v8179, %v8227
        %v8229 = vpop.f32.mrf.mxu0
        %v8230 = vadd.f32 %v8181, %v8229
        %8231 = vmatmul.bf16.gmra.mxu0 %v4453
        %v8232 = vpop.f32.mrf.mxu0
        %v8233 = vadd.f32 %v8184, %v8232
        %v8234 = vpop.f32.mrf.mxu0
        %v8235 = vadd.f32 %v8186, %v8234
        %8236 = vmatmul.bf16.gmra.mxu0 %v4461
        %v8237 = vpop.f32.mrf.mxu0
        %v8238 = vadd.f32 %v8189, %v8237
        %v8239 = vpop.f32.mrf.mxu0
        %v8240 = vadd.f32 %v8191, %v8239
        %8241 = vmatmul.bf16.gmra.mxu0 %v4469
        %v8242 = vpop.f32.mrf.mxu0
        %v8243 = vadd.f32 %v8194, %v8242
        %v8244 = vpop.f32.mrf.mxu0
        %v8245 = vadd.f32 %v8196, %v8244
        %8246 = vmatmul.bf16.gmra.mxu0 %v4477
        %v8247 = vpop.f32.mrf.mxu0
        %v8248 = vadd.f32 %v8199, %v8247
        %v8249 = vpop.f32.mrf.mxu0
        %v8250 = vadd.f32 %v8201, %v8249
        %8251 = vmatmul.bf16.gmra.mxu0 %v4485
        %v8252 = vpop.f32.mrf.mxu0
        %v8253 = vadd.f32 %v8204, %v8252
        %v8254 = vpop.f32.mrf.mxu0
        %v8255 = vadd.f32 %v8206, %v8254
        %8256 = vmatmul.bf16.gmra.mxu0 %v4493
        %v8257 = vpop.f32.mrf.mxu0
        %v8258 = vadd.f32 %v8209, %v8257
        %v8259 = vpop.f32.mrf.mxu0
        %v8260 = vadd.f32 %v8211, %v8259
        %8261 = vmatmul.bf16.gmra.mxu0 %v4501
        %v8262 = vpop.f32.mrf.mxu0
        %v8263 = vadd.f32 %v8214, %v8262
        %v8264 = vpop.f32.mrf.mxu0
        %v8265 = vadd.f32 %v8216, %v8264
        %8266 = vdwg.mxu0
        %8267 = vmatpush.bf16.msra.mxu0 %v6126
        %8268 = vmatpush.bf16.msra.mxu0 %v6118
        %8269 = vmatpush.bf16.msra.mxu0 %v6110
        %8270 = vmatpush.bf16.msra.mxu0 %v6102
        %8271 = vmatpush.bf16.msra.mxu0 %v6094
        %8272 = vmatpush.bf16.msra.mxu0 %v6086
        %8273 = vmatpush.bf16.msra.mxu0 %v6078
        %8274 = vmatpush.bf16.msra.mxu0 %v6070
        %8275 = vmatmul.bf16.gmra.mxu0 %v4438
        %v8276 = vpop.f32.mrf.mxu0
        %v8277 = vadd.f32 %v4518, %v8276
        %v8278 = vpop.f32.mrf.mxu0
        %v8279 = vadd.f32 %v4518, %v8278
        %8280 = vmatmul.bf16.gmra.mxu0 %v4446
        %v8281 = vpop.f32.mrf.mxu0
        %v8282 = vadd.f32 %v4518, %v8281
        %v8283 = vpop.f32.mrf.mxu0
        %v8284 = vadd.f32 %v4518, %v8283
        %8285 = vmatmul.bf16.gmra.mxu0 %v4454
        %v8286 = vpop.f32.mrf.mxu0
        %v8287 = vadd.f32 %v4518, %v8286
        %v8288 = vpop.f32.mrf.mxu0
        %v8289 = vadd.f32 %v4518, %v8288
        %8290 = vmatmul.bf16.gmra.mxu0 %v4462
        %v8291 = vpop.f32.mrf.mxu0
        %v8292 = vadd.f32 %v4518, %v8291
        %v8293 = vpop.f32.mrf.mxu0
        %v8294 = vadd.f32 %v4518, %v8293
        %8295 = vmatmul.bf16.gmra.mxu0 %v4470
        %v8296 = vpop.f32.mrf.mxu0
        %v8297 = vadd.f32 %v4518, %v8296
        %v8298 = vpop.f32.mrf.mxu0
        %v8299 = vadd.f32 %v4518, %v8298
        %8300 = vmatmul.bf16.gmra.mxu0 %v4478
        %v8301 = vpop.f32.mrf.mxu0
        %v8302 = vadd.f32 %v4518, %v8301
        %v8303 = vpop.f32.mrf.mxu0
        %v8304 = vadd.f32 %v4518, %v8303
        %8305 = vmatmul.bf16.gmra.mxu0 %v4486
        %v8306 = vpop.f32.mrf.mxu0
        %v8307 = vadd.f32 %v4518, %v8306
        %v8308 = vpop.f32.mrf.mxu0
        %v8309 = vadd.f32 %v4518, %v8308
        %8310 = vmatmul.bf16.gmra.mxu0 %v4494
        %v8311 = vpop.f32.mrf.mxu0
        %v8312 = vadd.f32 %v4518, %v8311
        %v8313 = vpop.f32.mrf.mxu0
        %v8314 = vadd.f32 %v4518, %v8313
        %8315 = vdwg.mxu0
        %8316 = vmatpush.bf16.msra.mxu0 %v6190
        %8317 = vmatpush.bf16.msra.mxu0 %v6182
        %8318 = vmatpush.bf16.msra.mxu0 %v6174
        %8319 = vmatpush.bf16.msra.mxu0 %v6166
        %8320 = vmatpush.bf16.msra.mxu0 %v6158
        %8321 = vmatpush.bf16.msra.mxu0 %v6150
        %8322 = vmatpush.bf16.msra.mxu0 %v6142
        %8323 = vmatpush.bf16.msra.mxu0 %v6134
        %8324 = vmatmul.bf16.gmra.mxu0 %v4439
        %v8325 = vpop.f32.mrf.mxu0
        %v8326 = vadd.f32 %v8277, %v8325
        %v8327 = vpop.f32.mrf.mxu0
        %v8328 = vadd.f32 %v8279, %v8327
        %8329 = vmatmul.bf16.gmra.mxu0 %v4447
        %v8330 = vpop.f32.mrf.mxu0
        %v8331 = vadd.f32 %v8282, %v8330
        %v8332 = vpop.f32.mrf.mxu0
        %v8333 = vadd.f32 %v8284, %v8332
        %8334 = vmatmul.bf16.gmra.mxu0 %v4455
        %v8335 = vpop.f32.mrf.mxu0
        %v8336 = vadd.f32 %v8287, %v8335
        %v8337 = vpop.f32.mrf.mxu0
        %v8338 = vadd.f32 %v8289, %v8337
        %8339 = vmatmul.bf16.gmra.mxu0 %v4463
        %v8340 = vpop.f32.mrf.mxu0
        %v8341 = vadd.f32 %v8292, %v8340
        %v8342 = vpop.f32.mrf.mxu0
        %v8343 = vadd.f32 %v8294, %v8342
        %8344 = vmatmul.bf16.gmra.mxu0 %v4471
        %v8345 = vpop.f32.mrf.mxu0
        %v8346 = vadd.f32 %v8297, %v8345
        %v8347 = vpop.f32.mrf.mxu0
        %v8348 = vadd.f32 %v8299, %v8347
        %8349 = vmatmul.bf16.gmra.mxu0 %v4479
        %v8350 = vpop.f32.mrf.mxu0
        %v8351 = vadd.f32 %v8302, %v8350
        %v8352 = vpop.f32.mrf.mxu0
        %v8353 = vadd.f32 %v8304, %v8352
        %8354 = vmatmul.bf16.gmra.mxu0 %v4487
        %v8355 = vpop.f32.mrf.mxu0
        %v8356 = vadd.f32 %v8307, %v8355
        %v8357 = vpop.f32.mrf.mxu0
        %v8358 = vadd.f32 %v8309, %v8357
        %8359 = vmatmul.bf16.gmra.mxu0 %v4495
        %v8360 = vpop.f32.mrf.mxu0
        %v8361 = vadd.f32 %v8312, %v8360
        %v8362 = vpop.f32.mrf.mxu0
        %v8363 = vadd.f32 %v8314, %v8362
        %8364 = vdwg.mxu0
        %8365 = vmatpush.bf16.msra.mxu0 %v6254
        %8366 = vmatpush.bf16.msra.mxu0 %v6246
        %8367 = vmatpush.bf16.msra.mxu0 %v6238
        %8368 = vmatpush.bf16.msra.mxu0 %v6230
        %8369 = vmatpush.bf16.msra.mxu0 %v6222
        %8370 = vmatpush.bf16.msra.mxu0 %v6214
        %8371 = vmatpush.bf16.msra.mxu0 %v6206
        %8372 = vmatpush.bf16.msra.mxu0 %v6198
        %8373 = vmatmul.bf16.gmra.mxu0 %v4440
        %v8374 = vpop.f32.mrf.mxu0
        %v8375 = vadd.f32 %v8326, %v8374
        %v8376 = vpop.f32.mrf.mxu0
        %v8377 = vadd.f32 %v8328, %v8376
        %8378 = vmatmul.bf16.gmra.mxu0 %v4448
        %v8379 = vpop.f32.mrf.mxu0
        %v8380 = vadd.f32 %v8331, %v8379
        %v8381 = vpop.f32.mrf.mxu0
        %v8382 = vadd.f32 %v8333, %v8381
        %8383 = vmatmul.bf16.gmra.mxu0 %v4456
        %v8384 = vpop.f32.mrf.mxu0
        %v8385 = vadd.f32 %v8336, %v8384
        %v8386 = vpop.f32.mrf.mxu0
        %v8387 = vadd.f32 %v8338, %v8386
        %8388 = vmatmul.bf16.gmra.mxu0 %v4464
        %v8389 = vpop.f32.mrf.mxu0
        %v8390 = vadd.f32 %v8341, %v8389
        %v8391 = vpop.f32.mrf.mxu0
        %v8392 = vadd.f32 %v8343, %v8391
        %8393 = vmatmul.bf16.gmra.mxu0 %v4472
        %v8394 = vpop.f32.mrf.mxu0
        %v8395 = vadd.f32 %v8346, %v8394
        %v8396 = vpop.f32.mrf.mxu0
        %v8397 = vadd.f32 %v8348, %v8396
        %8398 = vmatmul.bf16.gmra.mxu0 %v4480
        %v8399 = vpop.f32.mrf.mxu0
        %v8400 = vadd.f32 %v8351, %v8399
        %v8401 = vpop.f32.mrf.mxu0
        %v8402 = vadd.f32 %v8353, %v8401
        %8403 = vmatmul.bf16.gmra.mxu0 %v4488
        %v8404 = vpop.f32.mrf.mxu0
        %v8405 = vadd.f32 %v8356, %v8404
        %v8406 = vpop.f32.mrf.mxu0
        %v8407 = vadd.f32 %v8358, %v8406
        %8408 = vmatmul.bf16.gmra.mxu0 %v4496
        %v8409 = vpop.f32.mrf.mxu0
        %v8410 = vadd.f32 %v8361, %v8409
        %v8411 = vpop.f32.mrf.mxu0
        %v8412 = vadd.f32 %v8363, %v8411
        %8413 = vdwg.mxu0
        %8414 = vmatpush.bf16.msra.mxu0 %v6318
        %8415 = vmatpush.bf16.msra.mxu0 %v6310
        %8416 = vmatpush.bf16.msra.mxu0 %v6302
        %8417 = vmatpush.bf16.msra.mxu0 %v6294
        %8418 = vmatpush.bf16.msra.mxu0 %v6286
        %8419 = vmatpush.bf16.msra.mxu0 %v6278
        %8420 = vmatpush.bf16.msra.mxu0 %v6270
        %8421 = vmatpush.bf16.msra.mxu0 %v6262
        %8422 = vmatmul.bf16.gmra.mxu0 %v4441
        %v8423 = vpop.f32.mrf.mxu0
        %v8424 = vadd.f32 %v8375, %v8423
        %v8425 = vpop.f32.mrf.mxu0
        %v8426 = vadd.f32 %v8377, %v8425
        %8427 = vmatmul.bf16.gmra.mxu0 %v4449
        %v8428 = vpop.f32.mrf.mxu0
        %v8429 = vadd.f32 %v8380, %v8428
        %v8430 = vpop.f32.mrf.mxu0
        %v8431 = vadd.f32 %v8382, %v8430
        %8432 = vmatmul.bf16.gmra.mxu0 %v4457
        %v8433 = vpop.f32.mrf.mxu0
        %v8434 = vadd.f32 %v8385, %v8433
        %v8435 = vpop.f32.mrf.mxu0
        %v8436 = vadd.f32 %v8387, %v8435
        %8437 = vmatmul.bf16.gmra.mxu0 %v4465
        %v8438 = vpop.f32.mrf.mxu0
        %v8439 = vadd.f32 %v8390, %v8438
        %v8440 = vpop.f32.mrf.mxu0
        %v8441 = vadd.f32 %v8392, %v8440
        %8442 = vmatmul.bf16.gmra.mxu0 %v4473
        %v8443 = vpop.f32.mrf.mxu0
        %v8444 = vadd.f32 %v8395, %v8443
        %v8445 = vpop.f32.mrf.mxu0
        %v8446 = vadd.f32 %v8397, %v8445
        %8447 = vmatmul.bf16.gmra.mxu0 %v4481
        %v8448 = vpop.f32.mrf.mxu0
        %v8449 = vadd.f32 %v8400, %v8448
        %v8450 = vpop.f32.mrf.mxu0
        %v8451 = vadd.f32 %v8402, %v8450
        %8452 = vmatmul.bf16.gmra.mxu0 %v4489
        %v8453 = vpop.f32.mrf.mxu0
        %v8454 = vadd.f32 %v8405, %v8453
        %v8455 = vpop.f32.mrf.mxu0
        %v8456 = vadd.f32 %v8407, %v8455
        %8457 = vmatmul.bf16.gmra.mxu0 %v4497
        %v8458 = vpop.f32.mrf.mxu0
        %v8459 = vadd.f32 %v8410, %v8458
        %v8460 = vpop.f32.mrf.mxu0
        %v8461 = vadd.f32 %v8412, %v8460
        %8462 = vdwg.mxu0
        %8463 = vmatpush.bf16.msra.mxu0 %v6382
        %8464 = vmatpush.bf16.msra.mxu0 %v6374
        %8465 = vmatpush.bf16.msra.mxu0 %v6366
        %8466 = vmatpush.bf16.msra.mxu0 %v6358
        %8467 = vmatpush.bf16.msra.mxu0 %v6350
        %8468 = vmatpush.bf16.msra.mxu0 %v6342
        %8469 = vmatpush.bf16.msra.mxu0 %v6334
        %8470 = vmatpush.bf16.msra.mxu0 %v6326
        %8471 = vmatmul.bf16.gmra.mxu0 %v4442
        %v8472 = vpop.f32.mrf.mxu0
        %v8473 = vadd.f32 %v8424, %v8472
        %v8474 = vpop.f32.mrf.mxu0
        %v8475 = vadd.f32 %v8426, %v8474
        %8476 = vmatmul.bf16.gmra.mxu0 %v4450
        %v8477 = vpop.f32.mrf.mxu0
        %v8478 = vadd.f32 %v8429, %v8477
        %v8479 = vpop.f32.mrf.mxu0
        %v8480 = vadd.f32 %v8431, %v8479
        %8481 = vmatmul.bf16.gmra.mxu0 %v4458
        %v8482 = vpop.f32.mrf.mxu0
        %v8483 = vadd.f32 %v8434, %v8482
        %v8484 = vpop.f32.mrf.mxu0
        %v8485 = vadd.f32 %v8436, %v8484
        %8486 = vmatmul.bf16.gmra.mxu0 %v4466
        %v8487 = vpop.f32.mrf.mxu0
        %v8488 = vadd.f32 %v8439, %v8487
        %v8489 = vpop.f32.mrf.mxu0
        %v8490 = vadd.f32 %v8441, %v8489
        %8491 = vmatmul.bf16.gmra.mxu0 %v4474
        %v8492 = vpop.f32.mrf.mxu0
        %v8493 = vadd.f32 %v8444, %v8492
        %v8494 = vpop.f32.mrf.mxu0
        %v8495 = vadd.f32 %v8446, %v8494
        %8496 = vmatmul.bf16.gmra.mxu0 %v4482
        %v8497 = vpop.f32.mrf.mxu0
        %v8498 = vadd.f32 %v8449, %v8497
        %v8499 = vpop.f32.mrf.mxu0
        %v8500 = vadd.f32 %v8451, %v8499
        %8501 = vmatmul.bf16.gmra.mxu0 %v4490
        %v8502 = vpop.f32.mrf.mxu0
        %v8503 = vadd.f32 %v8454, %v8502
        %v8504 = vpop.f32.mrf.mxu0
        %v8505 = vadd.f32 %v8456, %v8504
        %8506 = vmatmul.bf16.gmra.mxu0 %v4498
        %v8507 = vpop.f32.mrf.mxu0
        %v8508 = vadd.f32 %v8459, %v8507
        %v8509 = vpop.f32.mrf.mxu0
        %v8510 = vadd.f32 %v8461, %v8509
        %8511 = vdwg.mxu0
        %8512 = vmatpush.bf16.msra.mxu0 %v6446
        %8513 = vmatpush.bf16.msra.mxu0 %v6438
        %8514 = vmatpush.bf16.msra.mxu0 %v6430
        %8515 = vmatpush.bf16.msra.mxu0 %v6422
        %8516 = vmatpush.bf16.msra.mxu0 %v6414
        %8517 = vmatpush.bf16.msra.mxu0 %v6406
        %8518 = vmatpush.bf16.msra.mxu0 %v6398
        %8519 = vmatpush.bf16.msra.mxu0 %v6390
        %8520 = vmatmul.bf16.gmra.mxu0 %v4443
        %v8521 = vpop.f32.mrf.mxu0
        %v8522 = vadd.f32 %v8473, %v8521
        %v8523 = vpop.f32.mrf.mxu0
        %v8524 = vadd.f32 %v8475, %v8523
        %8525 = vmatmul.bf16.gmra.mxu0 %v4451
        %v8526 = vpop.f32.mrf.mxu0
        %v8527 = vadd.f32 %v8478, %v8526
        %v8528 = vpop.f32.mrf.mxu0
        %v8529 = vadd.f32 %v8480, %v8528
        %8530 = vmatmul.bf16.gmra.mxu0 %v4459
        %v8531 = vpop.f32.mrf.mxu0
        %v8532 = vadd.f32 %v8483, %v8531
        %v8533 = vpop.f32.mrf.mxu0
        %v8534 = vadd.f32 %v8485, %v8533
        %8535 = vmatmul.bf16.gmra.mxu0 %v4467
        %v8536 = vpop.f32.mrf.mxu0
        %v8537 = vadd.f32 %v8488, %v8536
        %v8538 = vpop.f32.mrf.mxu0
        %v8539 = vadd.f32 %v8490, %v8538
        %8540 = vmatmul.bf16.gmra.mxu0 %v4475
        %v8541 = vpop.f32.mrf.mxu0
        %v8542 = vadd.f32 %v8493, %v8541
        %v8543 = vpop.f32.mrf.mxu0
        %v8544 = vadd.f32 %v8495, %v8543
        %8545 = vmatmul.bf16.gmra.mxu0 %v4483
        %v8546 = vpop.f32.mrf.mxu0
        %v8547 = vadd.f32 %v8498, %v8546
        %v8548 = vpop.f32.mrf.mxu0
        %v8549 = vadd.f32 %v8500, %v8548
        %8550 = vmatmul.bf16.gmra.mxu0 %v4491
        %v8551 = vpop.f32.mrf.mxu0
        %v8552 = vadd.f32 %v8503, %v8551
        %v8553 = vpop.f32.mrf.mxu0
        %v8554 = vadd.f32 %v8505, %v8553
        %8555 = vmatmul.bf16.gmra.mxu0 %v4499
        %v8556 = vpop.f32.mrf.mxu0
        %v8557 = vadd.f32 %v8508, %v8556
        %v8558 = vpop.f32.mrf.mxu0
        %v8559 = vadd.f32 %v8510, %v8558
        %8560 = vdwg.mxu0
        %8561 = vmatpush.bf16.msra.mxu0 %v6510
        %8562 = vmatpush.bf16.msra.mxu0 %v6502
        %8563 = vmatpush.bf16.msra.mxu0 %v6494
        %8564 = vmatpush.bf16.msra.mxu0 %v6486
        %8565 = vmatpush.bf16.msra.mxu0 %v6478
        %8566 = vmatpush.bf16.msra.mxu0 %v6470
        %8567 = vmatpush.bf16.msra.mxu0 %v6462
        %8568 = vmatpush.bf16.msra.mxu0 %v6454
        %8569 = vmatmul.bf16.gmra.mxu0 %v4444
        %v8570 = vpop.f32.mrf.mxu0
        %v8571 = vadd.f32 %v8522, %v8570
        %v8572 = vpop.f32.mrf.mxu0
        %v8573 = vadd.f32 %v8524, %v8572
        %8574 = vmatmul.bf16.gmra.mxu0 %v4452
        %v8575 = vpop.f32.mrf.mxu0
        %v8576 = vadd.f32 %v8527, %v8575
        %v8577 = vpop.f32.mrf.mxu0
        %v8578 = vadd.f32 %v8529, %v8577
        %8579 = vmatmul.bf16.gmra.mxu0 %v4460
        %v8580 = vpop.f32.mrf.mxu0
        %v8581 = vadd.f32 %v8532, %v8580
        %v8582 = vpop.f32.mrf.mxu0
        %v8583 = vadd.f32 %v8534, %v8582
        %8584 = vmatmul.bf16.gmra.mxu0 %v4468
        %v8585 = vpop.f32.mrf.mxu0
        %v8586 = vadd.f32 %v8537, %v8585
        %v8587 = vpop.f32.mrf.mxu0
        %v8588 = vadd.f32 %v8539, %v8587
        %8589 = vmatmul.bf16.gmra.mxu0 %v4476
        %v8590 = vpop.f32.mrf.mxu0
        %v8591 = vadd.f32 %v8542, %v8590
        %v8592 = vpop.f32.mrf.mxu0
        %v8593 = vadd.f32 %v8544, %v8592
        %8594 = vmatmul.bf16.gmra.mxu0 %v4484
        %v8595 = vpop.f32.mrf.mxu0
        %v8596 = vadd.f32 %v8547, %v8595
        %v8597 = vpop.f32.mrf.mxu0
        %v8598 = vadd.f32 %v8549, %v8597
        %8599 = vmatmul.bf16.gmra.mxu0 %v4492
        %v8600 = vpop.f32.mrf.mxu0
        %v8601 = vadd.f32 %v8552, %v8600
        %v8602 = vpop.f32.mrf.mxu0
        %v8603 = vadd.f32 %v8554, %v8602
        %8604 = vmatmul.bf16.gmra.mxu0 %v4500
        %v8605 = vpop.f32.mrf.mxu0
        %v8606 = vadd.f32 %v8557, %v8605
        %v8607 = vpop.f32.mrf.mxu0
        %v8608 = vadd.f32 %v8559, %v8607
        %8609 = vdwg.mxu0
        %8610 = vmatpush.bf16.msra.mxu0 %v6574
        %8611 = vmatpush.bf16.msra.mxu0 %v6566
        %8612 = vmatpush.bf16.msra.mxu0 %v6558
        %8613 = vmatpush.bf16.msra.mxu0 %v6550
        %8614 = vmatpush.bf16.msra.mxu0 %v6542
        %8615 = vmatpush.bf16.msra.mxu0 %v6534
        %8616 = vmatpush.bf16.msra.mxu0 %v6526
        %8617 = vmatpush.bf16.msra.mxu0 %v6518
        %8618 = vmatmul.bf16.gmra.mxu0 %v4445
        %v8619 = vpop.f32.mrf.mxu0
        %v8620 = vadd.f32 %v8571, %v8619
        %v8621 = vpop.f32.mrf.mxu0
        %v8622 = vadd.f32 %v8573, %v8621
        %8623 = vmatmul.bf16.gmra.mxu0 %v4453
        %v8624 = vpop.f32.mrf.mxu0
        %v8625 = vadd.f32 %v8576, %v8624
        %v8626 = vpop.f32.mrf.mxu0
        %v8627 = vadd.f32 %v8578, %v8626
        %8628 = vmatmul.bf16.gmra.mxu0 %v4461
        %v8629 = vpop.f32.mrf.mxu0
        %v8630 = vadd.f32 %v8581, %v8629
        %v8631 = vpop.f32.mrf.mxu0
        %v8632 = vadd.f32 %v8583, %v8631
        %8633 = vmatmul.bf16.gmra.mxu0 %v4469
        %v8634 = vpop.f32.mrf.mxu0
        %v8635 = vadd.f32 %v8586, %v8634
        %v8636 = vpop.f32.mrf.mxu0
        %v8637 = vadd.f32 %v8588, %v8636
        %8638 = vmatmul.bf16.gmra.mxu0 %v4477
        %v8639 = vpop.f32.mrf.mxu0
        %v8640 = vadd.f32 %v8591, %v8639
        %v8641 = vpop.f32.mrf.mxu0
        %v8642 = vadd.f32 %v8593, %v8641
        %8643 = vmatmul.bf16.gmra.mxu0 %v4485
        %v8644 = vpop.f32.mrf.mxu0
        %v8645 = vadd.f32 %v8596, %v8644
        %v8646 = vpop.f32.mrf.mxu0
        %v8647 = vadd.f32 %v8598, %v8646
        %8648 = vmatmul.bf16.gmra.mxu0 %v4493
        %v8649 = vpop.f32.mrf.mxu0
        %v8650 = vadd.f32 %v8601, %v8649
        %v8651 = vpop.f32.mrf.mxu0
        %v8652 = vadd.f32 %v8603, %v8651
        %8653 = vmatmul.bf16.gmra.mxu0 %v4501
        %v8654 = vpop.f32.mrf.mxu0
        %v8655 = vadd.f32 %v8606, %v8654
        %v8656 = vpop.f32.mrf.mxu0
        %v8657 = vadd.f32 %v8608, %v8656
        %8658 = vdwg.mxu0
        %8659 = vmatpush.bf16.msra.mxu0 %v6127
        %8660 = vmatpush.bf16.msra.mxu0 %v6119
        %8661 = vmatpush.bf16.msra.mxu0 %v6111
        %8662 = vmatpush.bf16.msra.mxu0 %v6103
        %8663 = vmatpush.bf16.msra.mxu0 %v6095
        %8664 = vmatpush.bf16.msra.mxu0 %v6087
        %8665 = vmatpush.bf16.msra.mxu0 %v6079
        %8666 = vmatpush.bf16.msra.mxu0 %v6071
        %8667 = vmatmul.bf16.gmra.mxu0 %v4438
        %v8668 = vpop.f32.mrf.mxu0
        %v8669 = vadd.f32 %v4519, %v8668
        %v8670 = vpop.f32.mrf.mxu0
        %v8671 = vadd.f32 %v4519, %v8670
        %8672 = vmatmul.bf16.gmra.mxu0 %v4446
        %v8673 = vpop.f32.mrf.mxu0
        %v8674 = vadd.f32 %v4519, %v8673
        %v8675 = vpop.f32.mrf.mxu0
        %v8676 = vadd.f32 %v4519, %v8675
        %8677 = vmatmul.bf16.gmra.mxu0 %v4454
        %v8678 = vpop.f32.mrf.mxu0
        %v8679 = vadd.f32 %v4519, %v8678
        %v8680 = vpop.f32.mrf.mxu0
        %v8681 = vadd.f32 %v4519, %v8680
        %8682 = vmatmul.bf16.gmra.mxu0 %v4462
        %v8683 = vpop.f32.mrf.mxu0
        %v8684 = vadd.f32 %v4519, %v8683
        %v8685 = vpop.f32.mrf.mxu0
        %v8686 = vadd.f32 %v4519, %v8685
        %8687 = vmatmul.bf16.gmra.mxu0 %v4470
        %v8688 = vpop.f32.mrf.mxu0
        %v8689 = vadd.f32 %v4519, %v8688
        %v8690 = vpop.f32.mrf.mxu0
        %v8691 = vadd.f32 %v4519, %v8690
        %8692 = vmatmul.bf16.gmra.mxu0 %v4478
        %v8693 = vpop.f32.mrf.mxu0
        %v8694 = vadd.f32 %v4519, %v8693
        %v8695 = vpop.f32.mrf.mxu0
        %v8696 = vadd.f32 %v4519, %v8695
        %8697 = vmatmul.bf16.gmra.mxu0 %v4486
        %v8698 = vpop.f32.mrf.mxu0
        %v8699 = vadd.f32 %v4519, %v8698
        %v8700 = vpop.f32.mrf.mxu0
        %v8701 = vadd.f32 %v4519, %v8700
        %8702 = vmatmul.bf16.gmra.mxu0 %v4494
        %v8703 = vpop.f32.mrf.mxu0
        %v8704 = vadd.f32 %v4519, %v8703
        %v8705 = vpop.f32.mrf.mxu0
        %v8706 = vadd.f32 %v4519, %v8705
        %8707 = vdwg.mxu0
        %8708 = vmatpush.bf16.msra.mxu0 %v6191
        %8709 = vmatpush.bf16.msra.mxu0 %v6183
        %8710 = vmatpush.bf16.msra.mxu0 %v6175
        %8711 = vmatpush.bf16.msra.mxu0 %v6167
        %8712 = vmatpush.bf16.msra.mxu0 %v6159
        %8713 = vmatpush.bf16.msra.mxu0 %v6151
        %8714 = vmatpush.bf16.msra.mxu0 %v6143
        %8715 = vmatpush.bf16.msra.mxu0 %v6135
        %8716 = vmatmul.bf16.gmra.mxu0 %v4439
        %v8717 = vpop.f32.mrf.mxu0
        %v8718 = vadd.f32 %v8669, %v8717
        %v8719 = vpop.f32.mrf.mxu0
        %v8720 = vadd.f32 %v8671, %v8719
        %8721 = vmatmul.bf16.gmra.mxu0 %v4447
        %v8722 = vpop.f32.mrf.mxu0
        %v8723 = vadd.f32 %v8674, %v8722
        %v8724 = vpop.f32.mrf.mxu0
        %v8725 = vadd.f32 %v8676, %v8724
        %8726 = vmatmul.bf16.gmra.mxu0 %v4455
        %v8727 = vpop.f32.mrf.mxu0
        %v8728 = vadd.f32 %v8679, %v8727
        %v8729 = vpop.f32.mrf.mxu0
        %v8730 = vadd.f32 %v8681, %v8729
        %8731 = vmatmul.bf16.gmra.mxu0 %v4463
        %v8732 = vpop.f32.mrf.mxu0
        %v8733 = vadd.f32 %v8684, %v8732
        %v8734 = vpop.f32.mrf.mxu0
        %v8735 = vadd.f32 %v8686, %v8734
        %8736 = vmatmul.bf16.gmra.mxu0 %v4471
        %v8737 = vpop.f32.mrf.mxu0
        %v8738 = vadd.f32 %v8689, %v8737
        %v8739 = vpop.f32.mrf.mxu0
        %v8740 = vadd.f32 %v8691, %v8739
        %8741 = vmatmul.bf16.gmra.mxu0 %v4479
        %v8742 = vpop.f32.mrf.mxu0
        %v8743 = vadd.f32 %v8694, %v8742
        %v8744 = vpop.f32.mrf.mxu0
        %v8745 = vadd.f32 %v8696, %v8744
        %8746 = vmatmul.bf16.gmra.mxu0 %v4487
        %v8747 = vpop.f32.mrf.mxu0
        %v8748 = vadd.f32 %v8699, %v8747
        %v8749 = vpop.f32.mrf.mxu0
        %v8750 = vadd.f32 %v8701, %v8749
        %8751 = vmatmul.bf16.gmra.mxu0 %v4495
        %v8752 = vpop.f32.mrf.mxu0
        %v8753 = vadd.f32 %v8704, %v8752
        %v8754 = vpop.f32.mrf.mxu0
        %v8755 = vadd.f32 %v8706, %v8754
        %8756 = vdwg.mxu0
        %8757 = vmatpush.bf16.msra.mxu0 %v6255
        %8758 = vmatpush.bf16.msra.mxu0 %v6247
        %8759 = vmatpush.bf16.msra.mxu0 %v6239
        %8760 = vmatpush.bf16.msra.mxu0 %v6231
        %8761 = vmatpush.bf16.msra.mxu0 %v6223
        %8762 = vmatpush.bf16.msra.mxu0 %v6215
        %8763 = vmatpush.bf16.msra.mxu0 %v6207
        %8764 = vmatpush.bf16.msra.mxu0 %v6199
        %8765 = vmatmul.bf16.gmra.mxu0 %v4440
        %v8766 = vpop.f32.mrf.mxu0
        %v8767 = vadd.f32 %v8718, %v8766
        %v8768 = vpop.f32.mrf.mxu0
        %v8769 = vadd.f32 %v8720, %v8768
        %8770 = vmatmul.bf16.gmra.mxu0 %v4448
        %v8771 = vpop.f32.mrf.mxu0
        %v8772 = vadd.f32 %v8723, %v8771
        %v8773 = vpop.f32.mrf.mxu0
        %v8774 = vadd.f32 %v8725, %v8773
        %8775 = vmatmul.bf16.gmra.mxu0 %v4456
        %v8776 = vpop.f32.mrf.mxu0
        %v8777 = vadd.f32 %v8728, %v8776
        %v8778 = vpop.f32.mrf.mxu0
        %v8779 = vadd.f32 %v8730, %v8778
        %8780 = vmatmul.bf16.gmra.mxu0 %v4464
        %v8781 = vpop.f32.mrf.mxu0
        %v8782 = vadd.f32 %v8733, %v8781
        %v8783 = vpop.f32.mrf.mxu0
        %v8784 = vadd.f32 %v8735, %v8783
        %8785 = vmatmul.bf16.gmra.mxu0 %v4472
        %v8786 = vpop.f32.mrf.mxu0
        %v8787 = vadd.f32 %v8738, %v8786
        %v8788 = vpop.f32.mrf.mxu0
        %v8789 = vadd.f32 %v8740, %v8788
        %8790 = vmatmul.bf16.gmra.mxu0 %v4480
        %v8791 = vpop.f32.mrf.mxu0
        %v8792 = vadd.f32 %v8743, %v8791
        %v8793 = vpop.f32.mrf.mxu0
        %v8794 = vadd.f32 %v8745, %v8793
        %8795 = vmatmul.bf16.gmra.mxu0 %v4488
        %v8796 = vpop.f32.mrf.mxu0
        %v8797 = vadd.f32 %v8748, %v8796
        %v8798 = vpop.f32.mrf.mxu0
        %v8799 = vadd.f32 %v8750, %v8798
        %8800 = vmatmul.bf16.gmra.mxu0 %v4496
        %v8801 = vpop.f32.mrf.mxu0
        %v8802 = vadd.f32 %v8753, %v8801
        %v8803 = vpop.f32.mrf.mxu0
        %v8804 = vadd.f32 %v8755, %v8803
        %8805 = vdwg.mxu0
        %8806 = vmatpush.bf16.msra.mxu0 %v6319
        %8807 = vmatpush.bf16.msra.mxu0 %v6311
        %8808 = vmatpush.bf16.msra.mxu0 %v6303
        %8809 = vmatpush.bf16.msra.mxu0 %v6295
        %8810 = vmatpush.bf16.msra.mxu0 %v6287
        %8811 = vmatpush.bf16.msra.mxu0 %v6279
        %8812 = vmatpush.bf16.msra.mxu0 %v6271
        %8813 = vmatpush.bf16.msra.mxu0 %v6263
        %8814 = vmatmul.bf16.gmra.mxu0 %v4441
        %v8815 = vpop.f32.mrf.mxu0
        %v8816 = vadd.f32 %v8767, %v8815
        %v8817 = vpop.f32.mrf.mxu0
        %v8818 = vadd.f32 %v8769, %v8817
        %8819 = vmatmul.bf16.gmra.mxu0 %v4449
        %v8820 = vpop.f32.mrf.mxu0
        %v8821 = vadd.f32 %v8772, %v8820
        %v8822 = vpop.f32.mrf.mxu0
        %v8823 = vadd.f32 %v8774, %v8822
        %8824 = vmatmul.bf16.gmra.mxu0 %v4457
        %v8825 = vpop.f32.mrf.mxu0
        %v8826 = vadd.f32 %v8777, %v8825
        %v8827 = vpop.f32.mrf.mxu0
        %v8828 = vadd.f32 %v8779, %v8827
        %8829 = vmatmul.bf16.gmra.mxu0 %v4465
        %v8830 = vpop.f32.mrf.mxu0
        %v8831 = vadd.f32 %v8782, %v8830
        %v8832 = vpop.f32.mrf.mxu0
        %v8833 = vadd.f32 %v8784, %v8832
        %8834 = vmatmul.bf16.gmra.mxu0 %v4473
        %v8835 = vpop.f32.mrf.mxu0
        %v8836 = vadd.f32 %v8787, %v8835
        %v8837 = vpop.f32.mrf.mxu0
        %v8838 = vadd.f32 %v8789, %v8837
        %8839 = vmatmul.bf16.gmra.mxu0 %v4481
        %v8840 = vpop.f32.mrf.mxu0
        %v8841 = vadd.f32 %v8792, %v8840
        %v8842 = vpop.f32.mrf.mxu0
        %v8843 = vadd.f32 %v8794, %v8842
        %8844 = vmatmul.bf16.gmra.mxu0 %v4489
        %v8845 = vpop.f32.mrf.mxu0
        %v8846 = vadd.f32 %v8797, %v8845
        %v8847 = vpop.f32.mrf.mxu0
        %v8848 = vadd.f32 %v8799, %v8847
        %8849 = vmatmul.bf16.gmra.mxu0 %v4497
        %v8850 = vpop.f32.mrf.mxu0
        %v8851 = vadd.f32 %v8802, %v8850
        %v8852 = vpop.f32.mrf.mxu0
        %v8853 = vadd.f32 %v8804, %v8852
        %8854 = vdwg.mxu0
        %8855 = vmatpush.bf16.msra.mxu0 %v6383
        %8856 = vmatpush.bf16.msra.mxu0 %v6375
        %8857 = vmatpush.bf16.msra.mxu0 %v6367
        %8858 = vmatpush.bf16.msra.mxu0 %v6359
        %8859 = vmatpush.bf16.msra.mxu0 %v6351
        %8860 = vmatpush.bf16.msra.mxu0 %v6343
        %8861 = vmatpush.bf16.msra.mxu0 %v6335
        %8862 = vmatpush.bf16.msra.mxu0 %v6327
        %8863 = vmatmul.bf16.gmra.mxu0 %v4442
        %v8864 = vpop.f32.mrf.mxu0
        %v8865 = vadd.f32 %v8816, %v8864
        %v8866 = vpop.f32.mrf.mxu0
        %v8867 = vadd.f32 %v8818, %v8866
        %8868 = vmatmul.bf16.gmra.mxu0 %v4450
        %v8869 = vpop.f32.mrf.mxu0
        %v8870 = vadd.f32 %v8821, %v8869
        %v8871 = vpop.f32.mrf.mxu0
        %v8872 = vadd.f32 %v8823, %v8871
        %8873 = vmatmul.bf16.gmra.mxu0 %v4458
        %v8874 = vpop.f32.mrf.mxu0
        %v8875 = vadd.f32 %v8826, %v8874
        %v8876 = vpop.f32.mrf.mxu0
        %v8877 = vadd.f32 %v8828, %v8876
        %8878 = vmatmul.bf16.gmra.mxu0 %v4466
        %v8879 = vpop.f32.mrf.mxu0
        %v8880 = vadd.f32 %v8831, %v8879
        %v8881 = vpop.f32.mrf.mxu0
        %v8882 = vadd.f32 %v8833, %v8881
        %8883 = vmatmul.bf16.gmra.mxu0 %v4474
        %v8884 = vpop.f32.mrf.mxu0
        %v8885 = vadd.f32 %v8836, %v8884
        %v8886 = vpop.f32.mrf.mxu0
        %v8887 = vadd.f32 %v8838, %v8886
        %8888 = vmatmul.bf16.gmra.mxu0 %v4482
        %v8889 = vpop.f32.mrf.mxu0
        %v8890 = vadd.f32 %v8841, %v8889
        %v8891 = vpop.f32.mrf.mxu0
        %v8892 = vadd.f32 %v8843, %v8891
        %8893 = vmatmul.bf16.gmra.mxu0 %v4490
        %v8894 = vpop.f32.mrf.mxu0
        %v8895 = vadd.f32 %v8846, %v8894
        %v8896 = vpop.f32.mrf.mxu0
        %v8897 = vadd.f32 %v8848, %v8896
        %8898 = vmatmul.bf16.gmra.mxu0 %v4498
        %v8899 = vpop.f32.mrf.mxu0
        %v8900 = vadd.f32 %v8851, %v8899
        %v8901 = vpop.f32.mrf.mxu0
        %v8902 = vadd.f32 %v8853, %v8901
        %8903 = vdwg.mxu0
        %8904 = vmatpush.bf16.msra.mxu0 %v6447
        %8905 = vmatpush.bf16.msra.mxu0 %v6439
        %8906 = vmatpush.bf16.msra.mxu0 %v6431
        %8907 = vmatpush.bf16.msra.mxu0 %v6423
        %8908 = vmatpush.bf16.msra.mxu0 %v6415
        %8909 = vmatpush.bf16.msra.mxu0 %v6407
        %8910 = vmatpush.bf16.msra.mxu0 %v6399
        %8911 = vmatpush.bf16.msra.mxu0 %v6391
        %8912 = vmatmul.bf16.gmra.mxu0 %v4443
        %v8913 = vpop.f32.mrf.mxu0
        %v8914 = vadd.f32 %v8865, %v8913
        %v8915 = vpop.f32.mrf.mxu0
        %v8916 = vadd.f32 %v8867, %v8915
        %8917 = vmatmul.bf16.gmra.mxu0 %v4451
        %v8918 = vpop.f32.mrf.mxu0
        %v8919 = vadd.f32 %v8870, %v8918
        %v8920 = vpop.f32.mrf.mxu0
        %v8921 = vadd.f32 %v8872, %v8920
        %8922 = vmatmul.bf16.gmra.mxu0 %v4459
        %v8923 = vpop.f32.mrf.mxu0
        %v8924 = vadd.f32 %v8875, %v8923
        %v8925 = vpop.f32.mrf.mxu0
        %v8926 = vadd.f32 %v8877, %v8925
        %8927 = vmatmul.bf16.gmra.mxu0 %v4467
        %v8928 = vpop.f32.mrf.mxu0
        %v8929 = vadd.f32 %v8880, %v8928
        %v8930 = vpop.f32.mrf.mxu0
        %v8931 = vadd.f32 %v8882, %v8930
        %8932 = vmatmul.bf16.gmra.mxu0 %v4475
        %v8933 = vpop.f32.mrf.mxu0
        %v8934 = vadd.f32 %v8885, %v8933
        %v8935 = vpop.f32.mrf.mxu0
        %v8936 = vadd.f32 %v8887, %v8935
        %8937 = vmatmul.bf16.gmra.mxu0 %v4483
        %v8938 = vpop.f32.mrf.mxu0
        %v8939 = vadd.f32 %v8890, %v8938
        %v8940 = vpop.f32.mrf.mxu0
        %v8941 = vadd.f32 %v8892, %v8940
        %8942 = vmatmul.bf16.gmra.mxu0 %v4491
        %v8943 = vpop.f32.mrf.mxu0
        %v8944 = vadd.f32 %v8895, %v8943
        %v8945 = vpop.f32.mrf.mxu0
        %v8946 = vadd.f32 %v8897, %v8945
        %8947 = vmatmul.bf16.gmra.mxu0 %v4499
        %v8948 = vpop.f32.mrf.mxu0
        %v8949 = vadd.f32 %v8900, %v8948
        %v8950 = vpop.f32.mrf.mxu0
        %v8951 = vadd.f32 %v8902, %v8950
        %8952 = vdwg.mxu0
        %8953 = vmatpush.bf16.msra.mxu0 %v6511
        %8954 = vmatpush.bf16.msra.mxu0 %v6503
        %8955 = vmatpush.bf16.msra.mxu0 %v6495
        %8956 = vmatpush.bf16.msra.mxu0 %v6487
        %8957 = vmatpush.bf16.msra.mxu0 %v6479
        %8958 = vmatpush.bf16.msra.mxu0 %v6471
        %8959 = vmatpush.bf16.msra.mxu0 %v6463
        %8960 = vmatpush.bf16.msra.mxu0 %v6455
        %8961 = vmatmul.bf16.gmra.mxu0 %v4444
        %v8962 = vpop.f32.mrf.mxu0
        %v8963 = vadd.f32 %v8914, %v8962
        %v8964 = vpop.f32.mrf.mxu0
        %v8965 = vadd.f32 %v8916, %v8964
        %8966 = vmatmul.bf16.gmra.mxu0 %v4452
        %v8967 = vpop.f32.mrf.mxu0
        %v8968 = vadd.f32 %v8919, %v8967
        %v8969 = vpop.f32.mrf.mxu0
        %v8970 = vadd.f32 %v8921, %v8969
        %8971 = vmatmul.bf16.gmra.mxu0 %v4460
        %v8972 = vpop.f32.mrf.mxu0
        %v8973 = vadd.f32 %v8924, %v8972
        %v8974 = vpop.f32.mrf.mxu0
        %v8975 = vadd.f32 %v8926, %v8974
        %8976 = vmatmul.bf16.gmra.mxu0 %v4468
        %v8977 = vpop.f32.mrf.mxu0
        %v8978 = vadd.f32 %v8929, %v8977
        %v8979 = vpop.f32.mrf.mxu0
        %v8980 = vadd.f32 %v8931, %v8979
        %8981 = vmatmul.bf16.gmra.mxu0 %v4476
        %v8982 = vpop.f32.mrf.mxu0
        %v8983 = vadd.f32 %v8934, %v8982
        %v8984 = vpop.f32.mrf.mxu0
        %v8985 = vadd.f32 %v8936, %v8984
        %8986 = vmatmul.bf16.gmra.mxu0 %v4484
        %v8987 = vpop.f32.mrf.mxu0
        %v8988 = vadd.f32 %v8939, %v8987
        %v8989 = vpop.f32.mrf.mxu0
        %v8990 = vadd.f32 %v8941, %v8989
        %8991 = vmatmul.bf16.gmra.mxu0 %v4492
        %v8992 = vpop.f32.mrf.mxu0
        %v8993 = vadd.f32 %v8944, %v8992
        %v8994 = vpop.f32.mrf.mxu0
        %v8995 = vadd.f32 %v8946, %v8994
        %8996 = vmatmul.bf16.gmra.mxu0 %v4500
        %v8997 = vpop.f32.mrf.mxu0
        %v8998 = vadd.f32 %v8949, %v8997
        %v8999 = vpop.f32.mrf.mxu0
        %v9000 = vadd.f32 %v8951, %v8999
        %9001 = vdwg.mxu0
        %9002 = vmatpush.bf16.msra.mxu0 %v6575
        %9003 = vmatpush.bf16.msra.mxu0 %v6567
        %9004 = vmatpush.bf16.msra.mxu0 %v6559
        %9005 = vmatpush.bf16.msra.mxu0 %v6551
        %9006 = vmatpush.bf16.msra.mxu0 %v6543
        %9007 = vmatpush.bf16.msra.mxu0 %v6535
        %9008 = vmatpush.bf16.msra.mxu0 %v6527
        %9009 = vmatpush.bf16.msra.mxu0 %v6519
        %9010 = vmatmul.bf16.gmra.mxu0 %v4445
        %v9011 = vpop.f32.mrf.mxu0
        %v9012 = vadd.f32 %v8963, %v9011
        %v9013 = vpop.f32.mrf.mxu0
        %v9014 = vadd.f32 %v8965, %v9013
        %9015 = vmatmul.bf16.gmra.mxu0 %v4453
        %v9016 = vpop.f32.mrf.mxu0
        %v9017 = vadd.f32 %v8968, %v9016
        %v9018 = vpop.f32.mrf.mxu0
        %v9019 = vadd.f32 %v8970, %v9018
        %9020 = vmatmul.bf16.gmra.mxu0 %v4461
        %v9021 = vpop.f32.mrf.mxu0
        %v9022 = vadd.f32 %v8973, %v9021
        %v9023 = vpop.f32.mrf.mxu0
        %v9024 = vadd.f32 %v8975, %v9023
        %9025 = vmatmul.bf16.gmra.mxu0 %v4469
        %v9026 = vpop.f32.mrf.mxu0
        %v9027 = vadd.f32 %v8978, %v9026
        %v9028 = vpop.f32.mrf.mxu0
        %v9029 = vadd.f32 %v8980, %v9028
        %9030 = vmatmul.bf16.gmra.mxu0 %v4477
        %v9031 = vpop.f32.mrf.mxu0
        %v9032 = vadd.f32 %v8983, %v9031
        %v9033 = vpop.f32.mrf.mxu0
        %v9034 = vadd.f32 %v8985, %v9033
        %9035 = vmatmul.bf16.gmra.mxu0 %v4485
        %v9036 = vpop.f32.mrf.mxu0
        %v9037 = vadd.f32 %v8988, %v9036
        %v9038 = vpop.f32.mrf.mxu0
        %v9039 = vadd.f32 %v8990, %v9038
        %9040 = vmatmul.bf16.gmra.mxu0 %v4493
        %v9041 = vpop.f32.mrf.mxu0
        %v9042 = vadd.f32 %v8993, %v9041
        %v9043 = vpop.f32.mrf.mxu0
        %v9044 = vadd.f32 %v8995, %v9043
        %9045 = vmatmul.bf16.gmra.mxu0 %v4501
        %v9046 = vpop.f32.mrf.mxu0
        %v9047 = vadd.f32 %v8998, %v9046
        %v9048 = vpop.f32.mrf.mxu0
        %v9049 = vadd.f32 %v9000, %v9048
        %9050 = vdwg.mxu0
        %9051 = vmatpush.bf16.msra.mxu0 %v6128
        %9052 = vmatpush.bf16.msra.mxu0 %v6120
        %9053 = vmatpush.bf16.msra.mxu0 %v6112
        %9054 = vmatpush.bf16.msra.mxu0 %v6104
        %9055 = vmatpush.bf16.msra.mxu0 %v6096
        %9056 = vmatpush.bf16.msra.mxu0 %v6088
        %9057 = vmatpush.bf16.msra.mxu0 %v6080
        %9058 = vmatpush.bf16.msra.mxu0 %v6072
        %9059 = vmatmul.bf16.gmra.mxu0 %v4438
        %v9060 = vpop.f32.mrf.mxu0
        %v9061 = vadd.f32 %v4520, %v9060
        %v9062 = vpop.f32.mrf.mxu0
        %v9063 = vadd.f32 %v4520, %v9062
        %9064 = vmatmul.bf16.gmra.mxu0 %v4446
        %v9065 = vpop.f32.mrf.mxu0
        %v9066 = vadd.f32 %v4520, %v9065
        %v9067 = vpop.f32.mrf.mxu0
        %v9068 = vadd.f32 %v4520, %v9067
        %9069 = vmatmul.bf16.gmra.mxu0 %v4454
        %v9070 = vpop.f32.mrf.mxu0
        %v9071 = vadd.f32 %v4520, %v9070
        %v9072 = vpop.f32.mrf.mxu0
        %v9073 = vadd.f32 %v4520, %v9072
        %9074 = vmatmul.bf16.gmra.mxu0 %v4462
        %v9075 = vpop.f32.mrf.mxu0
        %v9076 = vadd.f32 %v4520, %v9075
        %v9077 = vpop.f32.mrf.mxu0
        %v9078 = vadd.f32 %v4520, %v9077
        %9079 = vmatmul.bf16.gmra.mxu0 %v4470
        %v9080 = vpop.f32.mrf.mxu0
        %v9081 = vadd.f32 %v4520, %v9080
        %v9082 = vpop.f32.mrf.mxu0
        %v9083 = vadd.f32 %v4520, %v9082
        %9084 = vmatmul.bf16.gmra.mxu0 %v4478
        %v9085 = vpop.f32.mrf.mxu0
        %v9086 = vadd.f32 %v4520, %v9085
        %v9087 = vpop.f32.mrf.mxu0
        %v9088 = vadd.f32 %v4520, %v9087
        %9089 = vmatmul.bf16.gmra.mxu0 %v4486
        %v9090 = vpop.f32.mrf.mxu0
        %v9091 = vadd.f32 %v4520, %v9090
        %v9092 = vpop.f32.mrf.mxu0
        %v9093 = vadd.f32 %v4520, %v9092
        %9094 = vmatmul.bf16.gmra.mxu0 %v4494
        %v9095 = vpop.f32.mrf.mxu0
        %v9096 = vadd.f32 %v4520, %v9095
        %v9097 = vpop.f32.mrf.mxu0
        %v9098 = vadd.f32 %v4520, %v9097
        %9099 = vdwg.mxu0
        %9100 = vmatpush.bf16.msra.mxu0 %v6192
        %9101 = vmatpush.bf16.msra.mxu0 %v6184
        %9102 = vmatpush.bf16.msra.mxu0 %v6176
        %9103 = vmatpush.bf16.msra.mxu0 %v6168
        %9104 = vmatpush.bf16.msra.mxu0 %v6160
        %9105 = vmatpush.bf16.msra.mxu0 %v6152
        %9106 = vmatpush.bf16.msra.mxu0 %v6144
        %9107 = vmatpush.bf16.msra.mxu0 %v6136
        %9108 = vmatmul.bf16.gmra.mxu0 %v4439
        %v9109 = vpop.f32.mrf.mxu0
        %v9110 = vadd.f32 %v9061, %v9109
        %v9111 = vpop.f32.mrf.mxu0
        %v9112 = vadd.f32 %v9063, %v9111
        %9113 = vmatmul.bf16.gmra.mxu0 %v4447
        %v9114 = vpop.f32.mrf.mxu0
        %v9115 = vadd.f32 %v9066, %v9114
        %v9116 = vpop.f32.mrf.mxu0
        %v9117 = vadd.f32 %v9068, %v9116
        %9118 = vmatmul.bf16.gmra.mxu0 %v4455
        %v9119 = vpop.f32.mrf.mxu0
        %v9120 = vadd.f32 %v9071, %v9119
        %v9121 = vpop.f32.mrf.mxu0
        %v9122 = vadd.f32 %v9073, %v9121
        %9123 = vmatmul.bf16.gmra.mxu0 %v4463
        %v9124 = vpop.f32.mrf.mxu0
        %v9125 = vadd.f32 %v9076, %v9124
        %v9126 = vpop.f32.mrf.mxu0
        %v9127 = vadd.f32 %v9078, %v9126
        %9128 = vmatmul.bf16.gmra.mxu0 %v4471
        %v9129 = vpop.f32.mrf.mxu0
        %v9130 = vadd.f32 %v9081, %v9129
        %v9131 = vpop.f32.mrf.mxu0
        %v9132 = vadd.f32 %v9083, %v9131
        %9133 = vmatmul.bf16.gmra.mxu0 %v4479
        %v9134 = vpop.f32.mrf.mxu0
        %v9135 = vadd.f32 %v9086, %v9134
        %v9136 = vpop.f32.mrf.mxu0
        %v9137 = vadd.f32 %v9088, %v9136
        %9138 = vmatmul.bf16.gmra.mxu0 %v4487
        %v9139 = vpop.f32.mrf.mxu0
        %v9140 = vadd.f32 %v9091, %v9139
        %v9141 = vpop.f32.mrf.mxu0
        %v9142 = vadd.f32 %v9093, %v9141
        %9143 = vmatmul.bf16.gmra.mxu0 %v4495
        %v9144 = vpop.f32.mrf.mxu0
        %v9145 = vadd.f32 %v9096, %v9144
        %v9146 = vpop.f32.mrf.mxu0
        %v9147 = vadd.f32 %v9098, %v9146
        %9148 = vdwg.mxu0
        %9149 = vmatpush.bf16.msra.mxu0 %v6256
        %9150 = vmatpush.bf16.msra.mxu0 %v6248
        %9151 = vmatpush.bf16.msra.mxu0 %v6240
        %9152 = vmatpush.bf16.msra.mxu0 %v6232
        %9153 = vmatpush.bf16.msra.mxu0 %v6224
        %9154 = vmatpush.bf16.msra.mxu0 %v6216
        %9155 = vmatpush.bf16.msra.mxu0 %v6208
        %9156 = vmatpush.bf16.msra.mxu0 %v6200
        %9157 = vmatmul.bf16.gmra.mxu0 %v4440
        %v9158 = vpop.f32.mrf.mxu0
        %v9159 = vadd.f32 %v9110, %v9158
        %v9160 = vpop.f32.mrf.mxu0
        %v9161 = vadd.f32 %v9112, %v9160
        %9162 = vmatmul.bf16.gmra.mxu0 %v4448
        %v9163 = vpop.f32.mrf.mxu0
        %v9164 = vadd.f32 %v9115, %v9163
        %v9165 = vpop.f32.mrf.mxu0
        %v9166 = vadd.f32 %v9117, %v9165
        %9167 = vmatmul.bf16.gmra.mxu0 %v4456
        %v9168 = vpop.f32.mrf.mxu0
        %v9169 = vadd.f32 %v9120, %v9168
        %v9170 = vpop.f32.mrf.mxu0
        %v9171 = vadd.f32 %v9122, %v9170
        %9172 = vmatmul.bf16.gmra.mxu0 %v4464
        %v9173 = vpop.f32.mrf.mxu0
        %v9174 = vadd.f32 %v9125, %v9173
        %v9175 = vpop.f32.mrf.mxu0
        %v9176 = vadd.f32 %v9127, %v9175
        %9177 = vmatmul.bf16.gmra.mxu0 %v4472
        %v9178 = vpop.f32.mrf.mxu0
        %v9179 = vadd.f32 %v9130, %v9178
        %v9180 = vpop.f32.mrf.mxu0
        %v9181 = vadd.f32 %v9132, %v9180
        %9182 = vmatmul.bf16.gmra.mxu0 %v4480
        %v9183 = vpop.f32.mrf.mxu0
        %v9184 = vadd.f32 %v9135, %v9183
        %v9185 = vpop.f32.mrf.mxu0
        %v9186 = vadd.f32 %v9137, %v9185
        %9187 = vmatmul.bf16.gmra.mxu0 %v4488
        %v9188 = vpop.f32.mrf.mxu0
        %v9189 = vadd.f32 %v9140, %v9188
        %v9190 = vpop.f32.mrf.mxu0
        %v9191 = vadd.f32 %v9142, %v9190
        %9192 = vmatmul.bf16.gmra.mxu0 %v4496
        %v9193 = vpop.f32.mrf.mxu0
        %v9194 = vadd.f32 %v9145, %v9193
        %v9195 = vpop.f32.mrf.mxu0
        %v9196 = vadd.f32 %v9147, %v9195
        %9197 = vdwg.mxu0
        %9198 = vmatpush.bf16.msra.mxu0 %v6320
        %9199 = vmatpush.bf16.msra.mxu0 %v6312
        %9200 = vmatpush.bf16.msra.mxu0 %v6304
        %9201 = vmatpush.bf16.msra.mxu0 %v6296
        %9202 = vmatpush.bf16.msra.mxu0 %v6288
        %9203 = vmatpush.bf16.msra.mxu0 %v6280
        %9204 = vmatpush.bf16.msra.mxu0 %v6272
        %9205 = vmatpush.bf16.msra.mxu0 %v6264
        %9206 = vmatmul.bf16.gmra.mxu0 %v4441
        %v9207 = vpop.f32.mrf.mxu0
        %v9208 = vadd.f32 %v9159, %v9207
        %v9209 = vpop.f32.mrf.mxu0
        %v9210 = vadd.f32 %v9161, %v9209
        %9211 = vmatmul.bf16.gmra.mxu0 %v4449
        %v9212 = vpop.f32.mrf.mxu0
        %v9213 = vadd.f32 %v9164, %v9212
        %v9214 = vpop.f32.mrf.mxu0
        %v9215 = vadd.f32 %v9166, %v9214
        %9216 = vmatmul.bf16.gmra.mxu0 %v4457
        %v9217 = vpop.f32.mrf.mxu0
        %v9218 = vadd.f32 %v9169, %v9217
        %v9219 = vpop.f32.mrf.mxu0
        %v9220 = vadd.f32 %v9171, %v9219
        %9221 = vmatmul.bf16.gmra.mxu0 %v4465
        %v9222 = vpop.f32.mrf.mxu0
        %v9223 = vadd.f32 %v9174, %v9222
        %v9224 = vpop.f32.mrf.mxu0
        %v9225 = vadd.f32 %v9176, %v9224
        %9226 = vmatmul.bf16.gmra.mxu0 %v4473
        %v9227 = vpop.f32.mrf.mxu0
        %v9228 = vadd.f32 %v9179, %v9227
        %v9229 = vpop.f32.mrf.mxu0
        %v9230 = vadd.f32 %v9181, %v9229
        %9231 = vmatmul.bf16.gmra.mxu0 %v4481
        %v9232 = vpop.f32.mrf.mxu0
        %v9233 = vadd.f32 %v9184, %v9232
        %v9234 = vpop.f32.mrf.mxu0
        %v9235 = vadd.f32 %v9186, %v9234
        %9236 = vmatmul.bf16.gmra.mxu0 %v4489
        %v9237 = vpop.f32.mrf.mxu0
        %v9238 = vadd.f32 %v9189, %v9237
        %v9239 = vpop.f32.mrf.mxu0
        %v9240 = vadd.f32 %v9191, %v9239
        %9241 = vmatmul.bf16.gmra.mxu0 %v4497
        %v9242 = vpop.f32.mrf.mxu0
        %v9243 = vadd.f32 %v9194, %v9242
        %v9244 = vpop.f32.mrf.mxu0
        %v9245 = vadd.f32 %v9196, %v9244
        %9246 = vdwg.mxu0
        %9247 = vmatpush.bf16.msra.mxu0 %v6384
        %9248 = vmatpush.bf16.msra.mxu0 %v6376
        %9249 = vmatpush.bf16.msra.mxu0 %v6368
        %9250 = vmatpush.bf16.msra.mxu0 %v6360
        %9251 = vmatpush.bf16.msra.mxu0 %v6352
        %9252 = vmatpush.bf16.msra.mxu0 %v6344
        %9253 = vmatpush.bf16.msra.mxu0 %v6336
        %9254 = vmatpush.bf16.msra.mxu0 %v6328
        %9255 = vmatmul.bf16.gmra.mxu0 %v4442
        %v9256 = vpop.f32.mrf.mxu0
        %v9257 = vadd.f32 %v9208, %v9256
        %v9258 = vpop.f32.mrf.mxu0
        %v9259 = vadd.f32 %v9210, %v9258
        %9260 = vmatmul.bf16.gmra.mxu0 %v4450
        %v9261 = vpop.f32.mrf.mxu0
        %v9262 = vadd.f32 %v9213, %v9261
        %v9263 = vpop.f32.mrf.mxu0
        %v9264 = vadd.f32 %v9215, %v9263
        %9265 = vmatmul.bf16.gmra.mxu0 %v4458
        %v9266 = vpop.f32.mrf.mxu0
        %v9267 = vadd.f32 %v9218, %v9266
        %v9268 = vpop.f32.mrf.mxu0
        %v9269 = vadd.f32 %v9220, %v9268
        %9270 = vmatmul.bf16.gmra.mxu0 %v4466
        %v9271 = vpop.f32.mrf.mxu0
        %v9272 = vadd.f32 %v9223, %v9271
        %v9273 = vpop.f32.mrf.mxu0
        %v9274 = vadd.f32 %v9225, %v9273
        %9275 = vmatmul.bf16.gmra.mxu0 %v4474
        %v9276 = vpop.f32.mrf.mxu0
        %v9277 = vadd.f32 %v9228, %v9276
        %v9278 = vpop.f32.mrf.mxu0
        %v9279 = vadd.f32 %v9230, %v9278
        %9280 = vmatmul.bf16.gmra.mxu0 %v4482
        %v9281 = vpop.f32.mrf.mxu0
        %v9282 = vadd.f32 %v9233, %v9281
        %v9283 = vpop.f32.mrf.mxu0
        %v9284 = vadd.f32 %v9235, %v9283
        %9285 = vmatmul.bf16.gmra.mxu0 %v4490
        %v9286 = vpop.f32.mrf.mxu0
        %v9287 = vadd.f32 %v9238, %v9286
        %v9288 = vpop.f32.mrf.mxu0
        %v9289 = vadd.f32 %v9240, %v9288
        %9290 = vmatmul.bf16.gmra.mxu0 %v4498
        %v9291 = vpop.f32.mrf.mxu0
        %v9292 = vadd.f32 %v9243, %v9291
        %v9293 = vpop.f32.mrf.mxu0
        %v9294 = vadd.f32 %v9245, %v9293
        %9295 = vdwg.mxu0
        %9296 = vmatpush.bf16.msra.mxu0 %v6448
        %9297 = vmatpush.bf16.msra.mxu0 %v6440
        %9298 = vmatpush.bf16.msra.mxu0 %v6432
        %9299 = vmatpush.bf16.msra.mxu0 %v6424
        %9300 = vmatpush.bf16.msra.mxu0 %v6416
        %9301 = vmatpush.bf16.msra.mxu0 %v6408
        %9302 = vmatpush.bf16.msra.mxu0 %v6400
        %9303 = vmatpush.bf16.msra.mxu0 %v6392
        %9304 = vmatmul.bf16.gmra.mxu0 %v4443
        %v9305 = vpop.f32.mrf.mxu0
        %v9306 = vadd.f32 %v9257, %v9305
        %v9307 = vpop.f32.mrf.mxu0
        %v9308 = vadd.f32 %v9259, %v9307
        %9309 = vmatmul.bf16.gmra.mxu0 %v4451
        %v9310 = vpop.f32.mrf.mxu0
        %v9311 = vadd.f32 %v9262, %v9310
        %v9312 = vpop.f32.mrf.mxu0
        %v9313 = vadd.f32 %v9264, %v9312
        %9314 = vmatmul.bf16.gmra.mxu0 %v4459
        %v9315 = vpop.f32.mrf.mxu0
        %v9316 = vadd.f32 %v9267, %v9315
        %v9317 = vpop.f32.mrf.mxu0
        %v9318 = vadd.f32 %v9269, %v9317
        %9319 = vmatmul.bf16.gmra.mxu0 %v4467
        %v9320 = vpop.f32.mrf.mxu0
        %v9321 = vadd.f32 %v9272, %v9320
        %v9322 = vpop.f32.mrf.mxu0
        %v9323 = vadd.f32 %v9274, %v9322
        %9324 = vmatmul.bf16.gmra.mxu0 %v4475
        %v9325 = vpop.f32.mrf.mxu0
        %v9326 = vadd.f32 %v9277, %v9325
        %v9327 = vpop.f32.mrf.mxu0
        %v9328 = vadd.f32 %v9279, %v9327
        %9329 = vmatmul.bf16.gmra.mxu0 %v4483
        %v9330 = vpop.f32.mrf.mxu0
        %v9331 = vadd.f32 %v9282, %v9330
        %v9332 = vpop.f32.mrf.mxu0
        %v9333 = vadd.f32 %v9284, %v9332
        %9334 = vmatmul.bf16.gmra.mxu0 %v4491
        %v9335 = vpop.f32.mrf.mxu0
        %v9336 = vadd.f32 %v9287, %v9335
        %v9337 = vpop.f32.mrf.mxu0
        %v9338 = vadd.f32 %v9289, %v9337
        %9339 = vmatmul.bf16.gmra.mxu0 %v4499
        %v9340 = vpop.f32.mrf.mxu0
        %v9341 = vadd.f32 %v9292, %v9340
        %v9342 = vpop.f32.mrf.mxu0
        %v9343 = vadd.f32 %v9294, %v9342
        %9344 = vdwg.mxu0
        %9345 = vmatpush.bf16.msra.mxu0 %v6512
        %9346 = vmatpush.bf16.msra.mxu0 %v6504
        %9347 = vmatpush.bf16.msra.mxu0 %v6496
        %9348 = vmatpush.bf16.msra.mxu0 %v6488
        %9349 = vmatpush.bf16.msra.mxu0 %v6480
        %9350 = vmatpush.bf16.msra.mxu0 %v6472
        %9351 = vmatpush.bf16.msra.mxu0 %v6464
        %9352 = vmatpush.bf16.msra.mxu0 %v6456
        %9353 = vmatmul.bf16.gmra.mxu0 %v4444
        %v9354 = vpop.f32.mrf.mxu0
        %v9355 = vadd.f32 %v9306, %v9354
        %v9356 = vpop.f32.mrf.mxu0
        %v9357 = vadd.f32 %v9308, %v9356
        %9358 = vmatmul.bf16.gmra.mxu0 %v4452
        %v9359 = vpop.f32.mrf.mxu0
        %v9360 = vadd.f32 %v9311, %v9359
        %v9361 = vpop.f32.mrf.mxu0
        %v9362 = vadd.f32 %v9313, %v9361
        %9363 = vmatmul.bf16.gmra.mxu0 %v4460
        %v9364 = vpop.f32.mrf.mxu0
        %v9365 = vadd.f32 %v9316, %v9364
        %v9366 = vpop.f32.mrf.mxu0
        %v9367 = vadd.f32 %v9318, %v9366
        %9368 = vmatmul.bf16.gmra.mxu0 %v4468
        %v9369 = vpop.f32.mrf.mxu0
        %v9370 = vadd.f32 %v9321, %v9369
        %v9371 = vpop.f32.mrf.mxu0
        %v9372 = vadd.f32 %v9323, %v9371
        %9373 = vmatmul.bf16.gmra.mxu0 %v4476
        %v9374 = vpop.f32.mrf.mxu0
        %v9375 = vadd.f32 %v9326, %v9374
        %v9376 = vpop.f32.mrf.mxu0
        %v9377 = vadd.f32 %v9328, %v9376
        %9378 = vmatmul.bf16.gmra.mxu0 %v4484
        %v9379 = vpop.f32.mrf.mxu0
        %v9380 = vadd.f32 %v9331, %v9379
        %v9381 = vpop.f32.mrf.mxu0
        %v9382 = vadd.f32 %v9333, %v9381
        %9383 = vmatmul.bf16.gmra.mxu0 %v4492
        %v9384 = vpop.f32.mrf.mxu0
        %v9385 = vadd.f32 %v9336, %v9384
        %v9386 = vpop.f32.mrf.mxu0
        %v9387 = vadd.f32 %v9338, %v9386
        %9388 = vmatmul.bf16.gmra.mxu0 %v4500
        %v9389 = vpop.f32.mrf.mxu0
        %v9390 = vadd.f32 %v9341, %v9389
        %v9391 = vpop.f32.mrf.mxu0
        %v9392 = vadd.f32 %v9343, %v9391
        %9393 = vdwg.mxu0
        %9394 = vmatpush.bf16.msra.mxu0 %v6576
        %9395 = vmatpush.bf16.msra.mxu0 %v6568
        %9396 = vmatpush.bf16.msra.mxu0 %v6560
        %9397 = vmatpush.bf16.msra.mxu0 %v6552
        %9398 = vmatpush.bf16.msra.mxu0 %v6544
        %9399 = vmatpush.bf16.msra.mxu0 %v6536
        %9400 = vmatpush.bf16.msra.mxu0 %v6528
        %9401 = vmatpush.bf16.msra.mxu0 %v6520
        %9402 = vmatmul.bf16.gmra.mxu0 %v4445
        %v9403 = vpop.f32.mrf.mxu0
        %v9404 = vadd.f32 %v9355, %v9403
        %v9405 = vpop.f32.mrf.mxu0
        %v9406 = vadd.f32 %v9357, %v9405
        %9407 = vmatmul.bf16.gmra.mxu0 %v4453
        %v9408 = vpop.f32.mrf.mxu0
        %v9409 = vadd.f32 %v9360, %v9408
        %v9410 = vpop.f32.mrf.mxu0
        %v9411 = vadd.f32 %v9362, %v9410
        %9412 = vmatmul.bf16.gmra.mxu0 %v4461
        %v9413 = vpop.f32.mrf.mxu0
        %v9414 = vadd.f32 %v9365, %v9413
        %v9415 = vpop.f32.mrf.mxu0
        %v9416 = vadd.f32 %v9367, %v9415
        %9417 = vmatmul.bf16.gmra.mxu0 %v4469
        %v9418 = vpop.f32.mrf.mxu0
        %v9419 = vadd.f32 %v9370, %v9418
        %v9420 = vpop.f32.mrf.mxu0
        %v9421 = vadd.f32 %v9372, %v9420
        %9422 = vmatmul.bf16.gmra.mxu0 %v4477
        %v9423 = vpop.f32.mrf.mxu0
        %v9424 = vadd.f32 %v9375, %v9423
        %v9425 = vpop.f32.mrf.mxu0
        %v9426 = vadd.f32 %v9377, %v9425
        %9427 = vmatmul.bf16.gmra.mxu0 %v4485
        %v9428 = vpop.f32.mrf.mxu0
        %v9429 = vadd.f32 %v9380, %v9428
        %v9430 = vpop.f32.mrf.mxu0
        %v9431 = vadd.f32 %v9382, %v9430
        %9432 = vmatmul.bf16.gmra.mxu0 %v4493
        %v9433 = vpop.f32.mrf.mxu0
        %v9434 = vadd.f32 %v9385, %v9433
        %v9435 = vpop.f32.mrf.mxu0
        %v9436 = vadd.f32 %v9387, %v9435
        %9437 = vmatmul.bf16.gmra.mxu0 %v4501
        %v9438 = vpop.f32.mrf.mxu0
        %v9439 = vadd.f32 %v9390, %v9438
        %v9440 = vpop.f32.mrf.mxu0
        %v9441 = vadd.f32 %v9392, %v9440
        %9442 = vdwg.mxu0
        %9443 = vmatpush.bf16.msra.mxu0 %v6129
        %9444 = vmatpush.bf16.msra.mxu0 %v6121
        %9445 = vmatpush.bf16.msra.mxu0 %v6113
        %9446 = vmatpush.bf16.msra.mxu0 %v6105
        %9447 = vmatpush.bf16.msra.mxu0 %v6097
        %9448 = vmatpush.bf16.msra.mxu0 %v6089
        %9449 = vmatpush.bf16.msra.mxu0 %v6081
        %9450 = vmatpush.bf16.msra.mxu0 %v6073
        %9451 = vmatmul.bf16.gmra.mxu0 %v4438
        %v9452 = vpop.f32.mrf.mxu0
        %v9453 = vadd.f32 %v4521, %v9452
        %v9454 = vpop.f32.mrf.mxu0
        %v9455 = vadd.f32 %v4521, %v9454
        %9456 = vmatmul.bf16.gmra.mxu0 %v4446
        %v9457 = vpop.f32.mrf.mxu0
        %v9458 = vadd.f32 %v4521, %v9457
        %v9459 = vpop.f32.mrf.mxu0
        %v9460 = vadd.f32 %v4521, %v9459
        %9461 = vmatmul.bf16.gmra.mxu0 %v4454
        %v9462 = vpop.f32.mrf.mxu0
        %v9463 = vadd.f32 %v4521, %v9462
        %v9464 = vpop.f32.mrf.mxu0
        %v9465 = vadd.f32 %v4521, %v9464
        %9466 = vmatmul.bf16.gmra.mxu0 %v4462
        %v9467 = vpop.f32.mrf.mxu0
        %v9468 = vadd.f32 %v4521, %v9467
        %v9469 = vpop.f32.mrf.mxu0
        %v9470 = vadd.f32 %v4521, %v9469
        %9471 = vmatmul.bf16.gmra.mxu0 %v4470
        %v9472 = vpop.f32.mrf.mxu0
        %v9473 = vadd.f32 %v4521, %v9472
        %v9474 = vpop.f32.mrf.mxu0
        %v9475 = vadd.f32 %v4521, %v9474
        %9476 = vmatmul.bf16.gmra.mxu0 %v4478
        %v9477 = vpop.f32.mrf.mxu0
        %v9478 = vadd.f32 %v4521, %v9477
        %v9479 = vpop.f32.mrf.mxu0
        %v9480 = vadd.f32 %v4521, %v9479
        %9481 = vmatmul.bf16.gmra.mxu0 %v4486
        %v9482 = vpop.f32.mrf.mxu0
        %v9483 = vadd.f32 %v4521, %v9482
        %v9484 = vpop.f32.mrf.mxu0
        %v9485 = vadd.f32 %v4521, %v9484
        %9486 = vmatmul.bf16.gmra.mxu0 %v4494
        %v9487 = vpop.f32.mrf.mxu0
        %v9488 = vadd.f32 %v4521, %v9487
        %v9489 = vpop.f32.mrf.mxu0
        %v9490 = vadd.f32 %v4521, %v9489
        %9491 = vdwg.mxu0
        %9492 = vmatpush.bf16.msra.mxu0 %v6193
        %9493 = vmatpush.bf16.msra.mxu0 %v6185
        %9494 = vmatpush.bf16.msra.mxu0 %v6177
        %9495 = vmatpush.bf16.msra.mxu0 %v6169
        %9496 = vmatpush.bf16.msra.mxu0 %v6161
        %9497 = vmatpush.bf16.msra.mxu0 %v6153
        %9498 = vmatpush.bf16.msra.mxu0 %v6145
        %9499 = vmatpush.bf16.msra.mxu0 %v6137
        %9500 = vmatmul.bf16.gmra.mxu0 %v4439
        %v9501 = vpop.f32.mrf.mxu0
        %v9502 = vadd.f32 %v9453, %v9501
        %v9503 = vpop.f32.mrf.mxu0
        %v9504 = vadd.f32 %v9455, %v9503
        %9505 = vmatmul.bf16.gmra.mxu0 %v4447
        %v9506 = vpop.f32.mrf.mxu0
        %v9507 = vadd.f32 %v9458, %v9506
        %v9508 = vpop.f32.mrf.mxu0
        %v9509 = vadd.f32 %v9460, %v9508
        %9510 = vmatmul.bf16.gmra.mxu0 %v4455
        %v9511 = vpop.f32.mrf.mxu0
        %v9512 = vadd.f32 %v9463, %v9511
        %v9513 = vpop.f32.mrf.mxu0
        %v9514 = vadd.f32 %v9465, %v9513
        %9515 = vmatmul.bf16.gmra.mxu0 %v4463
        %v9516 = vpop.f32.mrf.mxu0
        %v9517 = vadd.f32 %v9468, %v9516
        %v9518 = vpop.f32.mrf.mxu0
        %v9519 = vadd.f32 %v9470, %v9518
        %9520 = vmatmul.bf16.gmra.mxu0 %v4471
        %v9521 = vpop.f32.mrf.mxu0
        %v9522 = vadd.f32 %v9473, %v9521
        %v9523 = vpop.f32.mrf.mxu0
        %v9524 = vadd.f32 %v9475, %v9523
        %9525 = vmatmul.bf16.gmra.mxu0 %v4479
        %v9526 = vpop.f32.mrf.mxu0
        %v9527 = vadd.f32 %v9478, %v9526
        %v9528 = vpop.f32.mrf.mxu0
        %v9529 = vadd.f32 %v9480, %v9528
        %9530 = vmatmul.bf16.gmra.mxu0 %v4487
        %v9531 = vpop.f32.mrf.mxu0
        %v9532 = vadd.f32 %v9483, %v9531
        %v9533 = vpop.f32.mrf.mxu0
        %v9534 = vadd.f32 %v9485, %v9533
        %9535 = vmatmul.bf16.gmra.mxu0 %v4495
        %v9536 = vpop.f32.mrf.mxu0
        %v9537 = vadd.f32 %v9488, %v9536
        %v9538 = vpop.f32.mrf.mxu0
        %v9539 = vadd.f32 %v9490, %v9538
        %9540 = vdwg.mxu0
        %9541 = vmatpush.bf16.msra.mxu0 %v6257
        %9542 = vmatpush.bf16.msra.mxu0 %v6249
        %9543 = vmatpush.bf16.msra.mxu0 %v6241
        %9544 = vmatpush.bf16.msra.mxu0 %v6233
        %9545 = vmatpush.bf16.msra.mxu0 %v6225
        %9546 = vmatpush.bf16.msra.mxu0 %v6217
        %9547 = vmatpush.bf16.msra.mxu0 %v6209
        %9548 = vmatpush.bf16.msra.mxu0 %v6201
        %9549 = vmatmul.bf16.gmra.mxu0 %v4440
        %v9550 = vpop.f32.mrf.mxu0
        %v9551 = vadd.f32 %v9502, %v9550
        %v9552 = vpop.f32.mrf.mxu0
        %v9553 = vadd.f32 %v9504, %v9552
        %9554 = vmatmul.bf16.gmra.mxu0 %v4448
        %v9555 = vpop.f32.mrf.mxu0
        %v9556 = vadd.f32 %v9507, %v9555
        %v9557 = vpop.f32.mrf.mxu0
        %v9558 = vadd.f32 %v9509, %v9557
        %9559 = vmatmul.bf16.gmra.mxu0 %v4456
        %v9560 = vpop.f32.mrf.mxu0
        %v9561 = vadd.f32 %v9512, %v9560
        %v9562 = vpop.f32.mrf.mxu0
        %v9563 = vadd.f32 %v9514, %v9562
        %9564 = vmatmul.bf16.gmra.mxu0 %v4464
        %v9565 = vpop.f32.mrf.mxu0
        %v9566 = vadd.f32 %v9517, %v9565
        %v9567 = vpop.f32.mrf.mxu0
        %v9568 = vadd.f32 %v9519, %v9567
        %9569 = vmatmul.bf16.gmra.mxu0 %v4472
        %v9570 = vpop.f32.mrf.mxu0
        %v9571 = vadd.f32 %v9522, %v9570
        %v9572 = vpop.f32.mrf.mxu0
        %v9573 = vadd.f32 %v9524, %v9572
        %9574 = vmatmul.bf16.gmra.mxu0 %v4480
        %v9575 = vpop.f32.mrf.mxu0
        %v9576 = vadd.f32 %v9527, %v9575
        %v9577 = vpop.f32.mrf.mxu0
        %v9578 = vadd.f32 %v9529, %v9577
        %9579 = vmatmul.bf16.gmra.mxu0 %v4488
        %v9580 = vpop.f32.mrf.mxu0
        %v9581 = vadd.f32 %v9532, %v9580
        %v9582 = vpop.f32.mrf.mxu0
        %v9583 = vadd.f32 %v9534, %v9582
        %9584 = vmatmul.bf16.gmra.mxu0 %v4496
        %v9585 = vpop.f32.mrf.mxu0
        %v9586 = vadd.f32 %v9537, %v9585
        %v9587 = vpop.f32.mrf.mxu0
        %v9588 = vadd.f32 %v9539, %v9587
        %9589 = vdwg.mxu0
        %9590 = vmatpush.bf16.msra.mxu0 %v6321
        %9591 = vmatpush.bf16.msra.mxu0 %v6313
        %9592 = vmatpush.bf16.msra.mxu0 %v6305
        %9593 = vmatpush.bf16.msra.mxu0 %v6297
        %9594 = vmatpush.bf16.msra.mxu0 %v6289
        %9595 = vmatpush.bf16.msra.mxu0 %v6281
        %9596 = vmatpush.bf16.msra.mxu0 %v6273
        %9597 = vmatpush.bf16.msra.mxu0 %v6265
        %9598 = vmatmul.bf16.gmra.mxu0 %v4441
        %v9599 = vpop.f32.mrf.mxu0
        %v9600 = vadd.f32 %v9551, %v9599
        %v9601 = vpop.f32.mrf.mxu0
        %v9602 = vadd.f32 %v9553, %v9601
        %9603 = vmatmul.bf16.gmra.mxu0 %v4449
        %v9604 = vpop.f32.mrf.mxu0
        %v9605 = vadd.f32 %v9556, %v9604
        %v9606 = vpop.f32.mrf.mxu0
        %v9607 = vadd.f32 %v9558, %v9606
        %9608 = vmatmul.bf16.gmra.mxu0 %v4457
        %v9609 = vpop.f32.mrf.mxu0
        %v9610 = vadd.f32 %v9561, %v9609
        %v9611 = vpop.f32.mrf.mxu0
        %v9612 = vadd.f32 %v9563, %v9611
        %9613 = vmatmul.bf16.gmra.mxu0 %v4465
        %v9614 = vpop.f32.mrf.mxu0
        %v9615 = vadd.f32 %v9566, %v9614
        %v9616 = vpop.f32.mrf.mxu0
        %v9617 = vadd.f32 %v9568, %v9616
        %9618 = vmatmul.bf16.gmra.mxu0 %v4473
        %v9619 = vpop.f32.mrf.mxu0
        %v9620 = vadd.f32 %v9571, %v9619
        %v9621 = vpop.f32.mrf.mxu0
        %v9622 = vadd.f32 %v9573, %v9621
        %9623 = vmatmul.bf16.gmra.mxu0 %v4481
        %v9624 = vpop.f32.mrf.mxu0
        %v9625 = vadd.f32 %v9576, %v9624
        %v9626 = vpop.f32.mrf.mxu0
        %v9627 = vadd.f32 %v9578, %v9626
        %9628 = vmatmul.bf16.gmra.mxu0 %v4489
        %v9629 = vpop.f32.mrf.mxu0
        %v9630 = vadd.f32 %v9581, %v9629
        %v9631 = vpop.f32.mrf.mxu0
        %v9632 = vadd.f32 %v9583, %v9631
        %9633 = vmatmul.bf16.gmra.mxu0 %v4497
        %v9634 = vpop.f32.mrf.mxu0
        %v9635 = vadd.f32 %v9586, %v9634
        %v9636 = vpop.f32.mrf.mxu0
        %v9637 = vadd.f32 %v9588, %v9636
        %9638 = vdwg.mxu0
        %9639 = vmatpush.bf16.msra.mxu0 %v6385
        %9640 = vmatpush.bf16.msra.mxu0 %v6377
        %9641 = vmatpush.bf16.msra.mxu0 %v6369
        %9642 = vmatpush.bf16.msra.mxu0 %v6361
        %9643 = vmatpush.bf16.msra.mxu0 %v6353
        %9644 = vmatpush.bf16.msra.mxu0 %v6345
        %9645 = vmatpush.bf16.msra.mxu0 %v6337
        %9646 = vmatpush.bf16.msra.mxu0 %v6329
        %9647 = vmatmul.bf16.gmra.mxu0 %v4442
        %v9648 = vpop.f32.mrf.mxu0
        %v9649 = vadd.f32 %v9600, %v9648
        %v9650 = vpop.f32.mrf.mxu0
        %v9651 = vadd.f32 %v9602, %v9650
        %9652 = vmatmul.bf16.gmra.mxu0 %v4450
        %v9653 = vpop.f32.mrf.mxu0
        %v9654 = vadd.f32 %v9605, %v9653
        %v9655 = vpop.f32.mrf.mxu0
        %v9656 = vadd.f32 %v9607, %v9655
        %9657 = vmatmul.bf16.gmra.mxu0 %v4458
        %v9658 = vpop.f32.mrf.mxu0
        %v9659 = vadd.f32 %v9610, %v9658
        %v9660 = vpop.f32.mrf.mxu0
        %v9661 = vadd.f32 %v9612, %v9660
        %9662 = vmatmul.bf16.gmra.mxu0 %v4466
        %v9663 = vpop.f32.mrf.mxu0
        %v9664 = vadd.f32 %v9615, %v9663
        %v9665 = vpop.f32.mrf.mxu0
        %v9666 = vadd.f32 %v9617, %v9665
        %9667 = vmatmul.bf16.gmra.mxu0 %v4474
        %v9668 = vpop.f32.mrf.mxu0
        %v9669 = vadd.f32 %v9620, %v9668
        %v9670 = vpop.f32.mrf.mxu0
        %v9671 = vadd.f32 %v9622, %v9670
        %9672 = vmatmul.bf16.gmra.mxu0 %v4482
        %v9673 = vpop.f32.mrf.mxu0
        %v9674 = vadd.f32 %v9625, %v9673
        %v9675 = vpop.f32.mrf.mxu0
        %v9676 = vadd.f32 %v9627, %v9675
        %9677 = vmatmul.bf16.gmra.mxu0 %v4490
        %v9678 = vpop.f32.mrf.mxu0
        %v9679 = vadd.f32 %v9630, %v9678
        %v9680 = vpop.f32.mrf.mxu0
        %v9681 = vadd.f32 %v9632, %v9680
        %9682 = vmatmul.bf16.gmra.mxu0 %v4498
        %v9683 = vpop.f32.mrf.mxu0
        %v9684 = vadd.f32 %v9635, %v9683
        %v9685 = vpop.f32.mrf.mxu0
        %v9686 = vadd.f32 %v9637, %v9685
        %9687 = vdwg.mxu0
        %9688 = vmatpush.bf16.msra.mxu0 %v6449
        %9689 = vmatpush.bf16.msra.mxu0 %v6441
        %9690 = vmatpush.bf16.msra.mxu0 %v6433
        %9691 = vmatpush.bf16.msra.mxu0 %v6425
        %9692 = vmatpush.bf16.msra.mxu0 %v6417
        %9693 = vmatpush.bf16.msra.mxu0 %v6409
        %9694 = vmatpush.bf16.msra.mxu0 %v6401
        %9695 = vmatpush.bf16.msra.mxu0 %v6393
        %9696 = vmatmul.bf16.gmra.mxu0 %v4443
        %v9697 = vpop.f32.mrf.mxu0
        %v9698 = vadd.f32 %v9649, %v9697
        %v9699 = vpop.f32.mrf.mxu0
        %v9700 = vadd.f32 %v9651, %v9699
        %9701 = vmatmul.bf16.gmra.mxu0 %v4451
        %v9702 = vpop.f32.mrf.mxu0
        %v9703 = vadd.f32 %v9654, %v9702
        %v9704 = vpop.f32.mrf.mxu0
        %v9705 = vadd.f32 %v9656, %v9704
        %9706 = vmatmul.bf16.gmra.mxu0 %v4459
        %v9707 = vpop.f32.mrf.mxu0
        %v9708 = vadd.f32 %v9659, %v9707
        %v9709 = vpop.f32.mrf.mxu0
        %v9710 = vadd.f32 %v9661, %v9709
        %9711 = vmatmul.bf16.gmra.mxu0 %v4467
        %v9712 = vpop.f32.mrf.mxu0
        %v9713 = vadd.f32 %v9664, %v9712
        %v9714 = vpop.f32.mrf.mxu0
        %v9715 = vadd.f32 %v9666, %v9714
        %9716 = vmatmul.bf16.gmra.mxu0 %v4475
        %v9717 = vpop.f32.mrf.mxu0
        %v9718 = vadd.f32 %v9669, %v9717
        %v9719 = vpop.f32.mrf.mxu0
        %v9720 = vadd.f32 %v9671, %v9719
        %9721 = vmatmul.bf16.gmra.mxu0 %v4483
        %v9722 = vpop.f32.mrf.mxu0
        %v9723 = vadd.f32 %v9674, %v9722
        %v9724 = vpop.f32.mrf.mxu0
        %v9725 = vadd.f32 %v9676, %v9724
        %9726 = vmatmul.bf16.gmra.mxu0 %v4491
        %v9727 = vpop.f32.mrf.mxu0
        %v9728 = vadd.f32 %v9679, %v9727
        %v9729 = vpop.f32.mrf.mxu0
        %v9730 = vadd.f32 %v9681, %v9729
        %9731 = vmatmul.bf16.gmra.mxu0 %v4499
        %v9732 = vpop.f32.mrf.mxu0
        %v9733 = vadd.f32 %v9684, %v9732
        %v9734 = vpop.f32.mrf.mxu0
        %v9735 = vadd.f32 %v9686, %v9734
        %9736 = vdwg.mxu0
        %9737 = vmatpush.bf16.msra.mxu0 %v6513
        %9738 = vmatpush.bf16.msra.mxu0 %v6505
        %9739 = vmatpush.bf16.msra.mxu0 %v6497
        %9740 = vmatpush.bf16.msra.mxu0 %v6489
        %9741 = vmatpush.bf16.msra.mxu0 %v6481
        %9742 = vmatpush.bf16.msra.mxu0 %v6473
        %9743 = vmatpush.bf16.msra.mxu0 %v6465
        %9744 = vmatpush.bf16.msra.mxu0 %v6457
        %9745 = vmatmul.bf16.gmra.mxu0 %v4444
        %v9746 = vpop.f32.mrf.mxu0
        %v9747 = vadd.f32 %v9698, %v9746
        %v9748 = vpop.f32.mrf.mxu0
        %v9749 = vadd.f32 %v9700, %v9748
        %9750 = vmatmul.bf16.gmra.mxu0 %v4452
        %v9751 = vpop.f32.mrf.mxu0
        %v9752 = vadd.f32 %v9703, %v9751
        %v9753 = vpop.f32.mrf.mxu0
        %v9754 = vadd.f32 %v9705, %v9753
        %9755 = vmatmul.bf16.gmra.mxu0 %v4460
        %v9756 = vpop.f32.mrf.mxu0
        %v9757 = vadd.f32 %v9708, %v9756
        %v9758 = vpop.f32.mrf.mxu0
        %v9759 = vadd.f32 %v9710, %v9758
        %9760 = vmatmul.bf16.gmra.mxu0 %v4468
        %v9761 = vpop.f32.mrf.mxu0
        %v9762 = vadd.f32 %v9713, %v9761
        %v9763 = vpop.f32.mrf.mxu0
        %v9764 = vadd.f32 %v9715, %v9763
        %9765 = vmatmul.bf16.gmra.mxu0 %v4476
        %v9766 = vpop.f32.mrf.mxu0
        %v9767 = vadd.f32 %v9718, %v9766
        %v9768 = vpop.f32.mrf.mxu0
        %v9769 = vadd.f32 %v9720, %v9768
        %9770 = vmatmul.bf16.gmra.mxu0 %v4484
        %v9771 = vpop.f32.mrf.mxu0
        %v9772 = vadd.f32 %v9723, %v9771
        %v9773 = vpop.f32.mrf.mxu0
        %v9774 = vadd.f32 %v9725, %v9773
        %9775 = vmatmul.bf16.gmra.mxu0 %v4492
        %v9776 = vpop.f32.mrf.mxu0
        %v9777 = vadd.f32 %v9728, %v9776
        %v9778 = vpop.f32.mrf.mxu0
        %v9779 = vadd.f32 %v9730, %v9778
        %9780 = vmatmul.bf16.gmra.mxu0 %v4500
        %v9781 = vpop.f32.mrf.mxu0
        %v9782 = vadd.f32 %v9733, %v9781
        %v9783 = vpop.f32.mrf.mxu0
        %v9784 = vadd.f32 %v9735, %v9783
        %9785 = vdwg.mxu0
        %9786 = vmatpush.bf16.msra.mxu0 %v6577
        %9787 = vmatpush.bf16.msra.mxu0 %v6569
        %9788 = vmatpush.bf16.msra.mxu0 %v6561
        %9789 = vmatpush.bf16.msra.mxu0 %v6553
        %9790 = vmatpush.bf16.msra.mxu0 %v6545
        %9791 = vmatpush.bf16.msra.mxu0 %v6537
        %9792 = vmatpush.bf16.msra.mxu0 %v6529
        %9793 = vmatpush.bf16.msra.mxu0 %v6521
        %9794 = vmatmul.bf16.gmra.mxu0 %v4445
        %v9795 = vpop.f32.mrf.mxu0
        %v9796 = vadd.f32 %v9747, %v9795
        %v9797 = vpop.f32.mrf.mxu0
        %v9798 = vadd.f32 %v9749, %v9797
        %9799 = vmatmul.bf16.gmra.mxu0 %v4453
        %v9800 = vpop.f32.mrf.mxu0
        %v9801 = vadd.f32 %v9752, %v9800
        %v9802 = vpop.f32.mrf.mxu0
        %v9803 = vadd.f32 %v9754, %v9802
        %9804 = vmatmul.bf16.gmra.mxu0 %v4461
        %v9805 = vpop.f32.mrf.mxu0
        %v9806 = vadd.f32 %v9757, %v9805
        %v9807 = vpop.f32.mrf.mxu0
        %v9808 = vadd.f32 %v9759, %v9807
        %9809 = vmatmul.bf16.gmra.mxu0 %v4469
        %v9810 = vpop.f32.mrf.mxu0
        %v9811 = vadd.f32 %v9762, %v9810
        %v9812 = vpop.f32.mrf.mxu0
        %v9813 = vadd.f32 %v9764, %v9812
        %9814 = vmatmul.bf16.gmra.mxu0 %v4477
        %v9815 = vpop.f32.mrf.mxu0
        %v9816 = vadd.f32 %v9767, %v9815
        %v9817 = vpop.f32.mrf.mxu0
        %v9818 = vadd.f32 %v9769, %v9817
        %9819 = vmatmul.bf16.gmra.mxu0 %v4485
        %v9820 = vpop.f32.mrf.mxu0
        %v9821 = vadd.f32 %v9772, %v9820
        %v9822 = vpop.f32.mrf.mxu0
        %v9823 = vadd.f32 %v9774, %v9822
        %9824 = vmatmul.bf16.gmra.mxu0 %v4493
        %v9825 = vpop.f32.mrf.mxu0
        %v9826 = vadd.f32 %v9777, %v9825
        %v9827 = vpop.f32.mrf.mxu0
        %v9828 = vadd.f32 %v9779, %v9827
        %9829 = vmatmul.bf16.gmra.mxu0 %v4501
        %v9830 = vpop.f32.mrf.mxu0
        %v9831 = vadd.f32 %v9782, %v9830
        %v9832 = vpop.f32.mrf.mxu0
        %v9833 = vadd.f32 %v9784, %v9832
        %9834 = vdwg.mxu0
        %9835 = vmatpush.bf16.msra.mxu0 %v6130
        %9836 = vmatpush.bf16.msra.mxu0 %v6122
        %9837 = vmatpush.bf16.msra.mxu0 %v6114
        %9838 = vmatpush.bf16.msra.mxu0 %v6106
        %9839 = vmatpush.bf16.msra.mxu0 %v6098
        %9840 = vmatpush.bf16.msra.mxu0 %v6090
        %9841 = vmatpush.bf16.msra.mxu0 %v6082
        %9842 = vmatpush.bf16.msra.mxu0 %v6074
        %9843 = vmatmul.bf16.gmra.mxu0 %v4438
        %v9844 = vpop.f32.mrf.mxu0
        %v9845 = vadd.f32 %v4522, %v9844
        %v9846 = vpop.f32.mrf.mxu0
        %v9847 = vadd.f32 %v4522, %v9846
        %9848 = vmatmul.bf16.gmra.mxu0 %v4446
        %v9849 = vpop.f32.mrf.mxu0
        %v9850 = vadd.f32 %v4522, %v9849
        %v9851 = vpop.f32.mrf.mxu0
        %v9852 = vadd.f32 %v4522, %v9851
        %9853 = vmatmul.bf16.gmra.mxu0 %v4454
        %v9854 = vpop.f32.mrf.mxu0
        %v9855 = vadd.f32 %v4522, %v9854
        %v9856 = vpop.f32.mrf.mxu0
        %v9857 = vadd.f32 %v4522, %v9856
        %9858 = vmatmul.bf16.gmra.mxu0 %v4462
        %v9859 = vpop.f32.mrf.mxu0
        %v9860 = vadd.f32 %v4522, %v9859
        %v9861 = vpop.f32.mrf.mxu0
        %v9862 = vadd.f32 %v4522, %v9861
        %9863 = vmatmul.bf16.gmra.mxu0 %v4470
        %v9864 = vpop.f32.mrf.mxu0
        %v9865 = vadd.f32 %v4522, %v9864
        %v9866 = vpop.f32.mrf.mxu0
        %v9867 = vadd.f32 %v4522, %v9866
        %9868 = vmatmul.bf16.gmra.mxu0 %v4478
        %v9869 = vpop.f32.mrf.mxu0
        %v9870 = vadd.f32 %v4522, %v9869
        %v9871 = vpop.f32.mrf.mxu0
        %v9872 = vadd.f32 %v4522, %v9871
        %9873 = vmatmul.bf16.gmra.mxu0 %v4486
        %v9874 = vpop.f32.mrf.mxu0
        %v9875 = vadd.f32 %v4522, %v9874
        %v9876 = vpop.f32.mrf.mxu0
        %v9877 = vadd.f32 %v4522, %v9876
        %9878 = vmatmul.bf16.gmra.mxu0 %v4494
        %v9879 = vpop.f32.mrf.mxu0
        %v9880 = vadd.f32 %v4522, %v9879
        %v9881 = vpop.f32.mrf.mxu0
        %v9882 = vadd.f32 %v4522, %v9881
        %9883 = vdwg.mxu0
        %9884 = vmatpush.bf16.msra.mxu0 %v6194
        %9885 = vmatpush.bf16.msra.mxu0 %v6186
        %9886 = vmatpush.bf16.msra.mxu0 %v6178
        %9887 = vmatpush.bf16.msra.mxu0 %v6170
        %9888 = vmatpush.bf16.msra.mxu0 %v6162
        %9889 = vmatpush.bf16.msra.mxu0 %v6154
        %9890 = vmatpush.bf16.msra.mxu0 %v6146
        %9891 = vmatpush.bf16.msra.mxu0 %v6138
        %9892 = vmatmul.bf16.gmra.mxu0 %v4439
        %v9893 = vpop.f32.mrf.mxu0
        %v9894 = vadd.f32 %v9845, %v9893
        %v9895 = vpop.f32.mrf.mxu0
        %v9896 = vadd.f32 %v9847, %v9895
        %9897 = vmatmul.bf16.gmra.mxu0 %v4447
        %v9898 = vpop.f32.mrf.mxu0
        %v9899 = vadd.f32 %v9850, %v9898
        %v9900 = vpop.f32.mrf.mxu0
        %v9901 = vadd.f32 %v9852, %v9900
        %9902 = vmatmul.bf16.gmra.mxu0 %v4455
        %v9903 = vpop.f32.mrf.mxu0
        %v9904 = vadd.f32 %v9855, %v9903
        %v9905 = vpop.f32.mrf.mxu0
        %v9906 = vadd.f32 %v9857, %v9905
        %9907 = vmatmul.bf16.gmra.mxu0 %v4463
        %v9908 = vpop.f32.mrf.mxu0
        %v9909 = vadd.f32 %v9860, %v9908
        %v9910 = vpop.f32.mrf.mxu0
        %v9911 = vadd.f32 %v9862, %v9910
        %9912 = vmatmul.bf16.gmra.mxu0 %v4471
        %v9913 = vpop.f32.mrf.mxu0
        %v9914 = vadd.f32 %v9865, %v9913
        %v9915 = vpop.f32.mrf.mxu0
        %v9916 = vadd.f32 %v9867, %v9915
        %9917 = vmatmul.bf16.gmra.mxu0 %v4479
        %v9918 = vpop.f32.mrf.mxu0
        %v9919 = vadd.f32 %v9870, %v9918
        %v9920 = vpop.f32.mrf.mxu0
        %v9921 = vadd.f32 %v9872, %v9920
        %9922 = vmatmul.bf16.gmra.mxu0 %v4487
        %v9923 = vpop.f32.mrf.mxu0
        %v9924 = vadd.f32 %v9875, %v9923
        %v9925 = vpop.f32.mrf.mxu0
        %v9926 = vadd.f32 %v9877, %v9925
        %9927 = vmatmul.bf16.gmra.mxu0 %v4495
        %v9928 = vpop.f32.mrf.mxu0
        %v9929 = vadd.f32 %v9880, %v9928
        %v9930 = vpop.f32.mrf.mxu0
        %v9931 = vadd.f32 %v9882, %v9930
        %9932 = vdwg.mxu0
        %9933 = vmatpush.bf16.msra.mxu0 %v6258
        %9934 = vmatpush.bf16.msra.mxu0 %v6250
        %9935 = vmatpush.bf16.msra.mxu0 %v6242
        %9936 = vmatpush.bf16.msra.mxu0 %v6234
        %9937 = vmatpush.bf16.msra.mxu0 %v6226
        %9938 = vmatpush.bf16.msra.mxu0 %v6218
        %9939 = vmatpush.bf16.msra.mxu0 %v6210
        %9940 = vmatpush.bf16.msra.mxu0 %v6202
        %9941 = vmatmul.bf16.gmra.mxu0 %v4440
        %v9942 = vpop.f32.mrf.mxu0
        %v9943 = vadd.f32 %v9894, %v9942
        %v9944 = vpop.f32.mrf.mxu0
        %v9945 = vadd.f32 %v9896, %v9944
        %9946 = vmatmul.bf16.gmra.mxu0 %v4448
        %v9947 = vpop.f32.mrf.mxu0
        %v9948 = vadd.f32 %v9899, %v9947
        %v9949 = vpop.f32.mrf.mxu0
        %v9950 = vadd.f32 %v9901, %v9949
        %9951 = vmatmul.bf16.gmra.mxu0 %v4456
        %v9952 = vpop.f32.mrf.mxu0
        %v9953 = vadd.f32 %v9904, %v9952
        %v9954 = vpop.f32.mrf.mxu0
        %v9955 = vadd.f32 %v9906, %v9954
        %9956 = vmatmul.bf16.gmra.mxu0 %v4464
        %v9957 = vpop.f32.mrf.mxu0
        %v9958 = vadd.f32 %v9909, %v9957
        %v9959 = vpop.f32.mrf.mxu0
        %v9960 = vadd.f32 %v9911, %v9959
        %9961 = vmatmul.bf16.gmra.mxu0 %v4472
        %v9962 = vpop.f32.mrf.mxu0
        %v9963 = vadd.f32 %v9914, %v9962
        %v9964 = vpop.f32.mrf.mxu0
        %v9965 = vadd.f32 %v9916, %v9964
        %9966 = vmatmul.bf16.gmra.mxu0 %v4480
        %v9967 = vpop.f32.mrf.mxu0
        %v9968 = vadd.f32 %v9919, %v9967
        %v9969 = vpop.f32.mrf.mxu0
        %v9970 = vadd.f32 %v9921, %v9969
        %9971 = vmatmul.bf16.gmra.mxu0 %v4488
        %v9972 = vpop.f32.mrf.mxu0
        %v9973 = vadd.f32 %v9924, %v9972
        %v9974 = vpop.f32.mrf.mxu0
        %v9975 = vadd.f32 %v9926, %v9974
        %9976 = vmatmul.bf16.gmra.mxu0 %v4496
        %v9977 = vpop.f32.mrf.mxu0
        %v9978 = vadd.f32 %v9929, %v9977
        %v9979 = vpop.f32.mrf.mxu0
        %v9980 = vadd.f32 %v9931, %v9979
        %9981 = vdwg.mxu0
        %9982 = vmatpush.bf16.msra.mxu0 %v6322
        %9983 = vmatpush.bf16.msra.mxu0 %v6314
        %9984 = vmatpush.bf16.msra.mxu0 %v6306
        %9985 = vmatpush.bf16.msra.mxu0 %v6298
        %9986 = vmatpush.bf16.msra.mxu0 %v6290
        %9987 = vmatpush.bf16.msra.mxu0 %v6282
        %9988 = vmatpush.bf16.msra.mxu0 %v6274
        %9989 = vmatpush.bf16.msra.mxu0 %v6266
        %9990 = vmatmul.bf16.gmra.mxu0 %v4441
        %v9991 = vpop.f32.mrf.mxu0
        %v9992 = vadd.f32 %v9943, %v9991
        %v9993 = vpop.f32.mrf.mxu0
        %v9994 = vadd.f32 %v9945, %v9993
        %9995 = vmatmul.bf16.gmra.mxu0 %v4449
        %v9996 = vpop.f32.mrf.mxu0
        %v9997 = vadd.f32 %v9948, %v9996
        %v9998 = vpop.f32.mrf.mxu0
        %v9999 = vadd.f32 %v9950, %v9998
        %10000 = vmatmul.bf16.gmra.mxu0 %v4457
        %v10001 = vpop.f32.mrf.mxu0
        %v10002 = vadd.f32 %v9953, %v10001
        %v10003 = vpop.f32.mrf.mxu0
        %v10004 = vadd.f32 %v9955, %v10003
        %10005 = vmatmul.bf16.gmra.mxu0 %v4465
        %v10006 = vpop.f32.mrf.mxu0
        %v10007 = vadd.f32 %v9958, %v10006
        %v10008 = vpop.f32.mrf.mxu0
        %v10009 = vadd.f32 %v9960, %v10008
        %10010 = vmatmul.bf16.gmra.mxu0 %v4473
        %v10011 = vpop.f32.mrf.mxu0
        %v10012 = vadd.f32 %v9963, %v10011
        %v10013 = vpop.f32.mrf.mxu0
        %v10014 = vadd.f32 %v9965, %v10013
        %10015 = vmatmul.bf16.gmra.mxu0 %v4481
        %v10016 = vpop.f32.mrf.mxu0
        %v10017 = vadd.f32 %v9968, %v10016
        %v10018 = vpop.f32.mrf.mxu0
        %v10019 = vadd.f32 %v9970, %v10018
        %10020 = vmatmul.bf16.gmra.mxu0 %v4489
        %v10021 = vpop.f32.mrf.mxu0
        %v10022 = vadd.f32 %v9973, %v10021
        %v10023 = vpop.f32.mrf.mxu0
        %v10024 = vadd.f32 %v9975, %v10023
        %10025 = vmatmul.bf16.gmra.mxu0 %v4497
        %v10026 = vpop.f32.mrf.mxu0
        %v10027 = vadd.f32 %v9978, %v10026
        %v10028 = vpop.f32.mrf.mxu0
        %v10029 = vadd.f32 %v9980, %v10028
        %10030 = vdwg.mxu0
        %10031 = vmatpush.bf16.msra.mxu0 %v6386
        %10032 = vmatpush.bf16.msra.mxu0 %v6378
        %10033 = vmatpush.bf16.msra.mxu0 %v6370
        %10034 = vmatpush.bf16.msra.mxu0 %v6362
        %10035 = vmatpush.bf16.msra.mxu0 %v6354
        %10036 = vmatpush.bf16.msra.mxu0 %v6346
        %10037 = vmatpush.bf16.msra.mxu0 %v6338
        %10038 = vmatpush.bf16.msra.mxu0 %v6330
        %10039 = vmatmul.bf16.gmra.mxu0 %v4442
        %v10040 = vpop.f32.mrf.mxu0
        %v10041 = vadd.f32 %v9992, %v10040
        %v10042 = vpop.f32.mrf.mxu0
        %v10043 = vadd.f32 %v9994, %v10042
        %10044 = vmatmul.bf16.gmra.mxu0 %v4450
        %v10045 = vpop.f32.mrf.mxu0
        %v10046 = vadd.f32 %v9997, %v10045
        %v10047 = vpop.f32.mrf.mxu0
        %v10048 = vadd.f32 %v9999, %v10047
        %10049 = vmatmul.bf16.gmra.mxu0 %v4458
        %v10050 = vpop.f32.mrf.mxu0
        %v10051 = vadd.f32 %v10002, %v10050
        %v10052 = vpop.f32.mrf.mxu0
        %v10053 = vadd.f32 %v10004, %v10052
        %10054 = vmatmul.bf16.gmra.mxu0 %v4466
        %v10055 = vpop.f32.mrf.mxu0
        %v10056 = vadd.f32 %v10007, %v10055
        %v10057 = vpop.f32.mrf.mxu0
        %v10058 = vadd.f32 %v10009, %v10057
        %10059 = vmatmul.bf16.gmra.mxu0 %v4474
        %v10060 = vpop.f32.mrf.mxu0
        %v10061 = vadd.f32 %v10012, %v10060
        %v10062 = vpop.f32.mrf.mxu0
        %v10063 = vadd.f32 %v10014, %v10062
        %10064 = vmatmul.bf16.gmra.mxu0 %v4482
        %v10065 = vpop.f32.mrf.mxu0
        %v10066 = vadd.f32 %v10017, %v10065
        %v10067 = vpop.f32.mrf.mxu0
        %v10068 = vadd.f32 %v10019, %v10067
        %10069 = vmatmul.bf16.gmra.mxu0 %v4490
        %v10070 = vpop.f32.mrf.mxu0
        %v10071 = vadd.f32 %v10022, %v10070
        %v10072 = vpop.f32.mrf.mxu0
        %v10073 = vadd.f32 %v10024, %v10072
        %10074 = vmatmul.bf16.gmra.mxu0 %v4498
        %v10075 = vpop.f32.mrf.mxu0
        %v10076 = vadd.f32 %v10027, %v10075
        %v10077 = vpop.f32.mrf.mxu0
        %v10078 = vadd.f32 %v10029, %v10077
        %10079 = vdwg.mxu0
        %10080 = vmatpush.bf16.msra.mxu0 %v6450
        %10081 = vmatpush.bf16.msra.mxu0 %v6442
        %10082 = vmatpush.bf16.msra.mxu0 %v6434
        %10083 = vmatpush.bf16.msra.mxu0 %v6426
        %10084 = vmatpush.bf16.msra.mxu0 %v6418
        %10085 = vmatpush.bf16.msra.mxu0 %v6410
        %10086 = vmatpush.bf16.msra.mxu0 %v6402
        %10087 = vmatpush.bf16.msra.mxu0 %v6394
        %10088 = vmatmul.bf16.gmra.mxu0 %v4443
        %v10089 = vpop.f32.mrf.mxu0
        %v10090 = vadd.f32 %v10041, %v10089
        %v10091 = vpop.f32.mrf.mxu0
        %v10092 = vadd.f32 %v10043, %v10091
        %10093 = vmatmul.bf16.gmra.mxu0 %v4451
        %v10094 = vpop.f32.mrf.mxu0
        %v10095 = vadd.f32 %v10046, %v10094
        %v10096 = vpop.f32.mrf.mxu0
        %v10097 = vadd.f32 %v10048, %v10096
        %10098 = vmatmul.bf16.gmra.mxu0 %v4459
        %v10099 = vpop.f32.mrf.mxu0
        %v10100 = vadd.f32 %v10051, %v10099
        %v10101 = vpop.f32.mrf.mxu0
        %v10102 = vadd.f32 %v10053, %v10101
        %10103 = vmatmul.bf16.gmra.mxu0 %v4467
        %v10104 = vpop.f32.mrf.mxu0
        %v10105 = vadd.f32 %v10056, %v10104
        %v10106 = vpop.f32.mrf.mxu0
        %v10107 = vadd.f32 %v10058, %v10106
        %10108 = vmatmul.bf16.gmra.mxu0 %v4475
        %v10109 = vpop.f32.mrf.mxu0
        %v10110 = vadd.f32 %v10061, %v10109
        %v10111 = vpop.f32.mrf.mxu0
        %v10112 = vadd.f32 %v10063, %v10111
        %10113 = vmatmul.bf16.gmra.mxu0 %v4483
        %v10114 = vpop.f32.mrf.mxu0
        %v10115 = vadd.f32 %v10066, %v10114
        %v10116 = vpop.f32.mrf.mxu0
        %v10117 = vadd.f32 %v10068, %v10116
        %10118 = vmatmul.bf16.gmra.mxu0 %v4491
        %v10119 = vpop.f32.mrf.mxu0
        %v10120 = vadd.f32 %v10071, %v10119
        %v10121 = vpop.f32.mrf.mxu0
        %v10122 = vadd.f32 %v10073, %v10121
        %10123 = vmatmul.bf16.gmra.mxu0 %v4499
        %v10124 = vpop.f32.mrf.mxu0
        %v10125 = vadd.f32 %v10076, %v10124
        %v10126 = vpop.f32.mrf.mxu0
        %v10127 = vadd.f32 %v10078, %v10126
        %10128 = vdwg.mxu0
        %10129 = vmatpush.bf16.msra.mxu0 %v6514
        %10130 = vmatpush.bf16.msra.mxu0 %v6506
        %10131 = vmatpush.bf16.msra.mxu0 %v6498
        %10132 = vmatpush.bf16.msra.mxu0 %v6490
        %10133 = vmatpush.bf16.msra.mxu0 %v6482
        %10134 = vmatpush.bf16.msra.mxu0 %v6474
        %10135 = vmatpush.bf16.msra.mxu0 %v6466
        %10136 = vmatpush.bf16.msra.mxu0 %v6458
        %10137 = vmatmul.bf16.gmra.mxu0 %v4444
        %v10138 = vpop.f32.mrf.mxu0
        %v10139 = vadd.f32 %v10090, %v10138
        %v10140 = vpop.f32.mrf.mxu0
        %v10141 = vadd.f32 %v10092, %v10140
        %10142 = vmatmul.bf16.gmra.mxu0 %v4452
        %v10143 = vpop.f32.mrf.mxu0
        %v10144 = vadd.f32 %v10095, %v10143
        %v10145 = vpop.f32.mrf.mxu0
        %v10146 = vadd.f32 %v10097, %v10145
        %10147 = vmatmul.bf16.gmra.mxu0 %v4460
        %v10148 = vpop.f32.mrf.mxu0
        %v10149 = vadd.f32 %v10100, %v10148
        %v10150 = vpop.f32.mrf.mxu0
        %v10151 = vadd.f32 %v10102, %v10150
        %10152 = vmatmul.bf16.gmra.mxu0 %v4468
        %v10153 = vpop.f32.mrf.mxu0
        %v10154 = vadd.f32 %v10105, %v10153
        %v10155 = vpop.f32.mrf.mxu0
        %v10156 = vadd.f32 %v10107, %v10155
        %10157 = vmatmul.bf16.gmra.mxu0 %v4476
        %v10158 = vpop.f32.mrf.mxu0
        %v10159 = vadd.f32 %v10110, %v10158
        %v10160 = vpop.f32.mrf.mxu0
        %v10161 = vadd.f32 %v10112, %v10160
        %10162 = vmatmul.bf16.gmra.mxu0 %v4484
        %v10163 = vpop.f32.mrf.mxu0
        %v10164 = vadd.f32 %v10115, %v10163
        %v10165 = vpop.f32.mrf.mxu0
        %v10166 = vadd.f32 %v10117, %v10165
        %10167 = vmatmul.bf16.gmra.mxu0 %v4492
        %v10168 = vpop.f32.mrf.mxu0
        %v10169 = vadd.f32 %v10120, %v10168
        %v10170 = vpop.f32.mrf.mxu0
        %v10171 = vadd.f32 %v10122, %v10170
        %10172 = vmatmul.bf16.gmra.mxu0 %v4500
        %v10173 = vpop.f32.mrf.mxu0
        %v10174 = vadd.f32 %v10125, %v10173
        %v10175 = vpop.f32.mrf.mxu0
        %v10176 = vadd.f32 %v10127, %v10175
        %10177 = vdwg.mxu0
        %10178 = vmatpush.bf16.msra.mxu0 %v6578
        %10179 = vmatpush.bf16.msra.mxu0 %v6570
        %10180 = vmatpush.bf16.msra.mxu0 %v6562
        %10181 = vmatpush.bf16.msra.mxu0 %v6554
        %10182 = vmatpush.bf16.msra.mxu0 %v6546
        %10183 = vmatpush.bf16.msra.mxu0 %v6538
        %10184 = vmatpush.bf16.msra.mxu0 %v6530
        %10185 = vmatpush.bf16.msra.mxu0 %v6522
        %10186 = vmatmul.bf16.gmra.mxu0 %v4445
        %v10187 = vpop.f32.mrf.mxu0
        %v10188 = vadd.f32 %v10139, %v10187
        %v10189 = vpop.f32.mrf.mxu0
        %v10190 = vadd.f32 %v10141, %v10189
        %10191 = vmatmul.bf16.gmra.mxu0 %v4453
        %v10192 = vpop.f32.mrf.mxu0
        %v10193 = vadd.f32 %v10144, %v10192
        %v10194 = vpop.f32.mrf.mxu0
        %v10195 = vadd.f32 %v10146, %v10194
        %10196 = vmatmul.bf16.gmra.mxu0 %v4461
        %v10197 = vpop.f32.mrf.mxu0
        %v10198 = vadd.f32 %v10149, %v10197
        %v10199 = vpop.f32.mrf.mxu0
        %v10200 = vadd.f32 %v10151, %v10199
        %10201 = vmatmul.bf16.gmra.mxu0 %v4469
        %v10202 = vpop.f32.mrf.mxu0
        %v10203 = vadd.f32 %v10154, %v10202
        %v10204 = vpop.f32.mrf.mxu0
        %v10205 = vadd.f32 %v10156, %v10204
        %10206 = vmatmul.bf16.gmra.mxu0 %v4477
        %v10207 = vpop.f32.mrf.mxu0
        %v10208 = vadd.f32 %v10159, %v10207
        %v10209 = vpop.f32.mrf.mxu0
        %v10210 = vadd.f32 %v10161, %v10209
        %10211 = vmatmul.bf16.gmra.mxu0 %v4485
        %v10212 = vpop.f32.mrf.mxu0
        %v10213 = vadd.f32 %v10164, %v10212
        %v10214 = vpop.f32.mrf.mxu0
        %v10215 = vadd.f32 %v10166, %v10214
        %10216 = vmatmul.bf16.gmra.mxu0 %v4493
        %v10217 = vpop.f32.mrf.mxu0
        %v10218 = vadd.f32 %v10169, %v10217
        %v10219 = vpop.f32.mrf.mxu0
        %v10220 = vadd.f32 %v10171, %v10219
        %10221 = vmatmul.bf16.gmra.mxu0 %v4501
        %v10222 = vpop.f32.mrf.mxu0
        %v10223 = vadd.f32 %v10174, %v10222
        %v10224 = vpop.f32.mrf.mxu0
        %v10225 = vadd.f32 %v10176, %v10224
        %10226 = vdwg.mxu0
        %v10227 = vadd.f32 %v7444, %v7446
        %v10228 = vadd.f32 %v10227, %v7449
        %v10229 = vadd.f32 %v10228, %v7451
        %v10230 = vadd.f32 %v10229, %v7454
        %v10231 = vadd.f32 %v10230, %v7456
        %v10232 = vadd.f32 %v10231, %v7459
        %v10233 = vadd.f32 %v10232, %v7461
        %v10234 = vadd.f32 %v10233, %v7464
        %v10235 = vadd.f32 %v10234, %v7466
        %v10236 = vadd.f32 %v10235, %v7469
        %v10237 = vadd.f32 %v10236, %v7471
        %v10238 = vadd.f32 %v10237, %v7474
        %v10239 = vadd.f32 %v10238, %v7476
        %v10240 = vadd.f32 %v10239, %v7479
        %v10241 = vadd.f32 %v10240, %v7481
        %v10242 = vrot.slane %v10241, 4
        %v10243 = vadd.f32 %v10241, %v10242
        %v10244 = vrot.slane %v10243, 2
        %v10245 = vadd.f32 %v10243, %v10244
        %v10246 = vrot.slane %v10245, 1
        %v10247 = vadd.f32 %v10245, %v10246
        %v10248 = vadd.f32 %v7836, %v7838
        %v10249 = vadd.f32 %v10248, %v7841
        %v10250 = vadd.f32 %v10249, %v7843
        %v10251 = vadd.f32 %v10250, %v7846
        %v10252 = vadd.f32 %v10251, %v7848
        %v10253 = vadd.f32 %v10252, %v7851
        %v10254 = vadd.f32 %v10253, %v7853
        %v10255 = vadd.f32 %v10254, %v7856
        %v10256 = vadd.f32 %v10255, %v7858
        %v10257 = vadd.f32 %v10256, %v7861
        %v10258 = vadd.f32 %v10257, %v7863
        %v10259 = vadd.f32 %v10258, %v7866
        %v10260 = vadd.f32 %v10259, %v7868
        %v10261 = vadd.f32 %v10260, %v7871
        %v10262 = vadd.f32 %v10261, %v7873
        %v10263 = vrot.slane %v10262, 4
        %v10264 = vadd.f32 %v10262, %v10263
        %v10265 = vrot.slane %v10264, 2
        %v10266 = vadd.f32 %v10264, %v10265
        %v10267 = vrot.slane %v10266, 1
        %v10268 = vadd.f32 %v10266, %v10267
        %v10269 = vadd.f32 %v8228, %v8230
        %v10270 = vadd.f32 %v10269, %v8233
        %v10271 = vadd.f32 %v10270, %v8235
        %v10272 = vadd.f32 %v10271, %v8238
        %v10273 = vadd.f32 %v10272, %v8240
        %v10274 = vadd.f32 %v10273, %v8243
        %v10275 = vadd.f32 %v10274, %v8245
        %v10276 = vadd.f32 %v10275, %v8248
        %v10277 = vadd.f32 %v10276, %v8250
        %v10278 = vadd.f32 %v10277, %v8253
        %v10279 = vadd.f32 %v10278, %v8255
        %v10280 = vadd.f32 %v10279, %v8258
        %v10281 = vadd.f32 %v10280, %v8260
        %v10282 = vadd.f32 %v10281, %v8263
        %v10283 = vadd.f32 %v10282, %v8265
        %v10284 = vrot.slane %v10283, 4
        %v10285 = vadd.f32 %v10283, %v10284
        %v10286 = vrot.slane %v10285, 2
        %v10287 = vadd.f32 %v10285, %v10286
        %v10288 = vrot.slane %v10287, 1
        %v10289 = vadd.f32 %v10287, %v10288
        %v10290 = vadd.f32 %v8620, %v8622
        %v10291 = vadd.f32 %v10290, %v8625
        %v10292 = vadd.f32 %v10291, %v8627
        %v10293 = vadd.f32 %v10292, %v8630
        %v10294 = vadd.f32 %v10293, %v8632
        %v10295 = vadd.f32 %v10294, %v8635
        %v10296 = vadd.f32 %v10295, %v8637
        %v10297 = vadd.f32 %v10296, %v8640
        %v10298 = vadd.f32 %v10297, %v8642
        %v10299 = vadd.f32 %v10298, %v8645
        %v10300 = vadd.f32 %v10299, %v8647
        %v10301 = vadd.f32 %v10300, %v8650
        %v10302 = vadd.f32 %v10301, %v8652
        %v10303 = vadd.f32 %v10302, %v8655
        %v10304 = vadd.f32 %v10303, %v8657
        %v10305 = vrot.slane %v10304, 4
        %v10306 = vadd.f32 %v10304, %v10305
        %v10307 = vrot.slane %v10306, 2
        %v10308 = vadd.f32 %v10306, %v10307
        %v10309 = vrot.slane %v10308, 1
        %v10310 = vadd.f32 %v10308, %v10309
        %v10311 = vadd.f32 %v9012, %v9014
        %v10312 = vadd.f32 %v10311, %v9017
        %v10313 = vadd.f32 %v10312, %v9019
        %v10314 = vadd.f32 %v10313, %v9022
        %v10315 = vadd.f32 %v10314, %v9024
        %v10316 = vadd.f32 %v10315, %v9027
        %v10317 = vadd.f32 %v10316, %v9029
        %v10318 = vadd.f32 %v10317, %v9032
        %v10319 = vadd.f32 %v10318, %v9034
        %v10320 = vadd.f32 %v10319, %v9037
        %v10321 = vadd.f32 %v10320, %v9039
        %v10322 = vadd.f32 %v10321, %v9042
        %v10323 = vadd.f32 %v10322, %v9044
        %v10324 = vadd.f32 %v10323, %v9047
        %v10325 = vadd.f32 %v10324, %v9049
        %v10326 = vrot.slane %v10325, 4
        %v10327 = vadd.f32 %v10325, %v10326
        %v10328 = vrot.slane %v10327, 2
        %v10329 = vadd.f32 %v10327, %v10328
        %v10330 = vrot.slane %v10329, 1
        %v10331 = vadd.f32 %v10329, %v10330
        %v10332 = vadd.f32 %v9404, %v9406
        %v10333 = vadd.f32 %v10332, %v9409
        %v10334 = vadd.f32 %v10333, %v9411
        %v10335 = vadd.f32 %v10334, %v9414
        %v10336 = vadd.f32 %v10335, %v9416
        %v10337 = vadd.f32 %v10336, %v9419
        %v10338 = vadd.f32 %v10337, %v9421
        %v10339 = vadd.f32 %v10338, %v9424
        %v10340 = vadd.f32 %v10339, %v9426
        %v10341 = vadd.f32 %v10340, %v9429
        %v10342 = vadd.f32 %v10341, %v9431
        %v10343 = vadd.f32 %v10342, %v9434
        %v10344 = vadd.f32 %v10343, %v9436
        %v10345 = vadd.f32 %v10344, %v9439
        %v10346 = vadd.f32 %v10345, %v9441
        %v10347 = vrot.slane %v10346, 4
        %v10348 = vadd.f32 %v10346, %v10347
        %v10349 = vrot.slane %v10348, 2
        %v10350 = vadd.f32 %v10348, %v10349
        %v10351 = vrot.slane %v10350, 1
        %v10352 = vadd.f32 %v10350, %v10351
        %v10353 = vadd.f32 %v9796, %v9798
        %v10354 = vadd.f32 %v10353, %v9801
        %v10355 = vadd.f32 %v10354, %v9803
        %v10356 = vadd.f32 %v10355, %v9806
        %v10357 = vadd.f32 %v10356, %v9808
        %v10358 = vadd.f32 %v10357, %v9811
        %v10359 = vadd.f32 %v10358, %v9813
        %v10360 = vadd.f32 %v10359, %v9816
        %v10361 = vadd.f32 %v10360, %v9818
        %v10362 = vadd.f32 %v10361, %v9821
        %v10363 = vadd.f32 %v10362, %v9823
        %v10364 = vadd.f32 %v10363, %v9826
        %v10365 = vadd.f32 %v10364, %v9828
        %v10366 = vadd.f32 %v10365, %v9831
        %v10367 = vadd.f32 %v10366, %v9833
        %v10368 = vrot.slane %v10367, 4
        %v10369 = vadd.f32 %v10367, %v10368
        %v10370 = vrot.slane %v10369, 2
        %v10371 = vadd.f32 %v10369, %v10370
        %v10372 = vrot.slane %v10371, 1
        %v10373 = vadd.f32 %v10371, %v10372
        %v10374 = vadd.f32 %v10188, %v10190
        %v10375 = vadd.f32 %v10374, %v10193
        %v10376 = vadd.f32 %v10375, %v10195
        %v10377 = vadd.f32 %v10376, %v10198
        %v10378 = vadd.f32 %v10377, %v10200
        %v10379 = vadd.f32 %v10378, %v10203
        %v10380 = vadd.f32 %v10379, %v10205
        %v10381 = vadd.f32 %v10380, %v10208
        %v10382 = vadd.f32 %v10381, %v10210
        %v10383 = vadd.f32 %v10382, %v10213
        %v10384 = vadd.f32 %v10383, %v10215
        %v10385 = vadd.f32 %v10384, %v10218
        %v10386 = vadd.f32 %v10385, %v10220
        %v10387 = vadd.f32 %v10386, %v10223
        %v10388 = vadd.f32 %v10387, %v10225
        %v10389 = vrot.slane %v10388, 4
        %v10390 = vadd.f32 %v10388, %v10389
        %v10391 = vrot.slane %v10390, 2
        %v10392 = vadd.f32 %v10390, %v10391
        %v10393 = vrot.slane %v10392, 1
        %v10394 = vadd.f32 %v10392, %v10393
        %v10395 = vmul.f32 %v10247, %v1040
        %v10396 = vmul.f32 %v10268, %v1040
        %v10397 = vmul.f32 %v10289, %v1040
        %v10398 = vmul.f32 %v10310, %v1040
        %v10399 = vmul.f32 %v10331, %v1040
        %v10400 = vmul.f32 %v10352, %v1040
        %v10401 = vmul.f32 %v10373, %v1040
        %v10402 = vmul.f32 %v10394, %v1040
        %v10403 = vmul.f32 %v7444, %v7444
        %v10404 = vmul.f32 %v7836, %v7836
        %v10405 = vmul.f32 %v8228, %v8228
        %v10406 = vmul.f32 %v8620, %v8620
        %v10407 = vmul.f32 %v9012, %v9012
        %v10408 = vmul.f32 %v9404, %v9404
        %v10409 = vmul.f32 %v9796, %v9796
        %v10410 = vmul.f32 %v10188, %v10188
        %v10411 = vmul.f32 %v7446, %v7446
        %v10412 = vmul.f32 %v7838, %v7838
        %v10413 = vmul.f32 %v8230, %v8230
        %v10414 = vmul.f32 %v8622, %v8622
        %v10415 = vmul.f32 %v9014, %v9014
        %v10416 = vmul.f32 %v9406, %v9406
        %v10417 = vmul.f32 %v9798, %v9798
        %v10418 = vmul.f32 %v10190, %v10190
        %v10419 = vmul.f32 %v7449, %v7449
        %v10420 = vmul.f32 %v7841, %v7841
        %v10421 = vmul.f32 %v8233, %v8233
        %v10422 = vmul.f32 %v8625, %v8625
        %v10423 = vmul.f32 %v9017, %v9017
        %v10424 = vmul.f32 %v9409, %v9409
        %v10425 = vmul.f32 %v9801, %v9801
        %v10426 = vmul.f32 %v10193, %v10193
        %v10427 = vmul.f32 %v7451, %v7451
        %v10428 = vmul.f32 %v7843, %v7843
        %v10429 = vmul.f32 %v8235, %v8235
        %v10430 = vmul.f32 %v8627, %v8627
        %v10431 = vmul.f32 %v9019, %v9019
        %v10432 = vmul.f32 %v9411, %v9411
        %v10433 = vmul.f32 %v9803, %v9803
        %v10434 = vmul.f32 %v10195, %v10195
        %v10435 = vmul.f32 %v7454, %v7454
        %v10436 = vmul.f32 %v7846, %v7846
        %v10437 = vmul.f32 %v8238, %v8238
        %v10438 = vmul.f32 %v8630, %v8630
        %v10439 = vmul.f32 %v9022, %v9022
        %v10440 = vmul.f32 %v9414, %v9414
        %v10441 = vmul.f32 %v9806, %v9806
        %v10442 = vmul.f32 %v10198, %v10198
        %v10443 = vmul.f32 %v7456, %v7456
        %v10444 = vmul.f32 %v7848, %v7848
        %v10445 = vmul.f32 %v8240, %v8240
        %v10446 = vmul.f32 %v8632, %v8632
        %v10447 = vmul.f32 %v9024, %v9024
        %v10448 = vmul.f32 %v9416, %v9416
        %v10449 = vmul.f32 %v9808, %v9808
        %v10450 = vmul.f32 %v10200, %v10200
        %v10451 = vmul.f32 %v7459, %v7459
        %v10452 = vmul.f32 %v7851, %v7851
        %v10453 = vmul.f32 %v8243, %v8243
        %v10454 = vmul.f32 %v8635, %v8635
        %v10455 = vmul.f32 %v9027, %v9027
        %v10456 = vmul.f32 %v9419, %v9419
        %v10457 = vmul.f32 %v9811, %v9811
        %v10458 = vmul.f32 %v10203, %v10203
        %v10459 = vmul.f32 %v7461, %v7461
        %v10460 = vmul.f32 %v7853, %v7853
        %v10461 = vmul.f32 %v8245, %v8245
        %v10462 = vmul.f32 %v8637, %v8637
        %v10463 = vmul.f32 %v9029, %v9029
        %v10464 = vmul.f32 %v9421, %v9421
        %v10465 = vmul.f32 %v9813, %v9813
        %v10466 = vmul.f32 %v10205, %v10205
        %v10467 = vmul.f32 %v7464, %v7464
        %v10468 = vmul.f32 %v7856, %v7856
        %v10469 = vmul.f32 %v8248, %v8248
        %v10470 = vmul.f32 %v8640, %v8640
        %v10471 = vmul.f32 %v9032, %v9032
        %v10472 = vmul.f32 %v9424, %v9424
        %v10473 = vmul.f32 %v9816, %v9816
        %v10474 = vmul.f32 %v10208, %v10208
        %v10475 = vmul.f32 %v7466, %v7466
        %v10476 = vmul.f32 %v7858, %v7858
        %v10477 = vmul.f32 %v8250, %v8250
        %v10478 = vmul.f32 %v8642, %v8642
        %v10479 = vmul.f32 %v9034, %v9034
        %v10480 = vmul.f32 %v9426, %v9426
        %v10481 = vmul.f32 %v9818, %v9818
        %v10482 = vmul.f32 %v10210, %v10210
        %v10483 = vmul.f32 %v7469, %v7469
        %v10484 = vmul.f32 %v7861, %v7861
        %v10485 = vmul.f32 %v8253, %v8253
        %v10486 = vmul.f32 %v8645, %v8645
        %v10487 = vmul.f32 %v9037, %v9037
        %v10488 = vmul.f32 %v9429, %v9429
        %v10489 = vmul.f32 %v9821, %v9821
        %v10490 = vmul.f32 %v10213, %v10213
        %v10491 = vmul.f32 %v7471, %v7471
        %v10492 = vmul.f32 %v7863, %v7863
        %v10493 = vmul.f32 %v8255, %v8255
        %v10494 = vmul.f32 %v8647, %v8647
        %v10495 = vmul.f32 %v9039, %v9039
        %v10496 = vmul.f32 %v9431, %v9431
        %v10497 = vmul.f32 %v9823, %v9823
        %v10498 = vmul.f32 %v10215, %v10215
        %v10499 = vmul.f32 %v7474, %v7474
        %v10500 = vmul.f32 %v7866, %v7866
        %v10501 = vmul.f32 %v8258, %v8258
        %v10502 = vmul.f32 %v8650, %v8650
        %v10503 = vmul.f32 %v9042, %v9042
        %v10504 = vmul.f32 %v9434, %v9434
        %v10505 = vmul.f32 %v9826, %v9826
        %v10506 = vmul.f32 %v10218, %v10218
        %v10507 = vmul.f32 %v7476, %v7476
        %v10508 = vmul.f32 %v7868, %v7868
        %v10509 = vmul.f32 %v8260, %v8260
        %v10510 = vmul.f32 %v8652, %v8652
        %v10511 = vmul.f32 %v9044, %v9044
        %v10512 = vmul.f32 %v9436, %v9436
        %v10513 = vmul.f32 %v9828, %v9828
        %v10514 = vmul.f32 %v10220, %v10220
        %v10515 = vmul.f32 %v7479, %v7479
        %v10516 = vmul.f32 %v7871, %v7871
        %v10517 = vmul.f32 %v8263, %v8263
        %v10518 = vmul.f32 %v8655, %v8655
        %v10519 = vmul.f32 %v9047, %v9047
        %v10520 = vmul.f32 %v9439, %v9439
        %v10521 = vmul.f32 %v9831, %v9831
        %v10522 = vmul.f32 %v10223, %v10223
        %v10523 = vmul.f32 %v7481, %v7481
        %v10524 = vmul.f32 %v7873, %v7873
        %v10525 = vmul.f32 %v8265, %v8265
        %v10526 = vmul.f32 %v8657, %v8657
        %v10527 = vmul.f32 %v9049, %v9049
        %v10528 = vmul.f32 %v9441, %v9441
        %v10529 = vmul.f32 %v9833, %v9833
        %v10530 = vmul.f32 %v10225, %v10225
        %v10531 = vadd.f32 %v10403, %v10411
        %v10532 = vadd.f32 %v10531, %v10419
        %v10533 = vadd.f32 %v10532, %v10427
        %v10534 = vadd.f32 %v10533, %v10435
        %v10535 = vadd.f32 %v10534, %v10443
        %v10536 = vadd.f32 %v10535, %v10451
        %v10537 = vadd.f32 %v10536, %v10459
        %v10538 = vadd.f32 %v10537, %v10467
        %v10539 = vadd.f32 %v10538, %v10475
        %v10540 = vadd.f32 %v10539, %v10483
        %v10541 = vadd.f32 %v10540, %v10491
        %v10542 = vadd.f32 %v10541, %v10499
        %v10543 = vadd.f32 %v10542, %v10507
        %v10544 = vadd.f32 %v10543, %v10515
        %v10545 = vadd.f32 %v10544, %v10523
        %v10546 = vrot.slane %v10545, 4
        %v10547 = vadd.f32 %v10545, %v10546
        %v10548 = vrot.slane %v10547, 2
        %v10549 = vadd.f32 %v10547, %v10548
        %v10550 = vrot.slane %v10549, 1
        %v10551 = vadd.f32 %v10549, %v10550
        %v10552 = vadd.f32 %v10404, %v10412
        %v10553 = vadd.f32 %v10552, %v10420
        %v10554 = vadd.f32 %v10553, %v10428
        %v10555 = vadd.f32 %v10554, %v10436
        %v10556 = vadd.f32 %v10555, %v10444
        %v10557 = vadd.f32 %v10556, %v10452
        %v10558 = vadd.f32 %v10557, %v10460
        %v10559 = vadd.f32 %v10558, %v10468
        %v10560 = vadd.f32 %v10559, %v10476
        %v10561 = vadd.f32 %v10560, %v10484
        %v10562 = vadd.f32 %v10561, %v10492
        %v10563 = vadd.f32 %v10562, %v10500
        %v10564 = vadd.f32 %v10563, %v10508
        %v10565 = vadd.f32 %v10564, %v10516
        %v10566 = vadd.f32 %v10565, %v10524
        %v10567 = vrot.slane %v10566, 4
        %v10568 = vadd.f32 %v10566, %v10567
        %v10569 = vrot.slane %v10568, 2
        %v10570 = vadd.f32 %v10568, %v10569
        %v10571 = vrot.slane %v10570, 1
        %v10572 = vadd.f32 %v10570, %v10571
        %v10573 = vadd.f32 %v10405, %v10413
        %v10574 = vadd.f32 %v10573, %v10421
        %v10575 = vadd.f32 %v10574, %v10429
        %v10576 = vadd.f32 %v10575, %v10437
        %v10577 = vadd.f32 %v10576, %v10445
        %v10578 = vadd.f32 %v10577, %v10453
        %v10579 = vadd.f32 %v10578, %v10461
        %v10580 = vadd.f32 %v10579, %v10469
        %v10581 = vadd.f32 %v10580, %v10477
        %v10582 = vadd.f32 %v10581, %v10485
        %v10583 = vadd.f32 %v10582, %v10493
        %v10584 = vadd.f32 %v10583, %v10501
        %v10585 = vadd.f32 %v10584, %v10509
        %v10586 = vadd.f32 %v10585, %v10517
        %v10587 = vadd.f32 %v10586, %v10525
        %v10588 = vrot.slane %v10587, 4
        %v10589 = vadd.f32 %v10587, %v10588
        %v10590 = vrot.slane %v10589, 2
        %v10591 = vadd.f32 %v10589, %v10590
        %v10592 = vrot.slane %v10591, 1
        %v10593 = vadd.f32 %v10591, %v10592
        %v10594 = vadd.f32 %v10406, %v10414
        %v10595 = vadd.f32 %v10594, %v10422
        %v10596 = vadd.f32 %v10595, %v10430
        %v10597 = vadd.f32 %v10596, %v10438
        %v10598 = vadd.f32 %v10597, %v10446
        %v10599 = vadd.f32 %v10598, %v10454
        %v10600 = vadd.f32 %v10599, %v10462
        %v10601 = vadd.f32 %v10600, %v10470
        %v10602 = vadd.f32 %v10601, %v10478
        %v10603 = vadd.f32 %v10602, %v10486
        %v10604 = vadd.f32 %v10603, %v10494
        %v10605 = vadd.f32 %v10604, %v10502
        %v10606 = vadd.f32 %v10605, %v10510
        %v10607 = vadd.f32 %v10606, %v10518
        %v10608 = vadd.f32 %v10607, %v10526
        %v10609 = vrot.slane %v10608, 4
        %v10610 = vadd.f32 %v10608, %v10609
        %v10611 = vrot.slane %v10610, 2
        %v10612 = vadd.f32 %v10610, %v10611
        %v10613 = vrot.slane %v10612, 1
        %v10614 = vadd.f32 %v10612, %v10613
        %v10615 = vadd.f32 %v10407, %v10415
        %v10616 = vadd.f32 %v10615, %v10423
        %v10617 = vadd.f32 %v10616, %v10431
        %v10618 = vadd.f32 %v10617, %v10439
        %v10619 = vadd.f32 %v10618, %v10447
        %v10620 = vadd.f32 %v10619, %v10455
        %v10621 = vadd.f32 %v10620, %v10463
        %v10622 = vadd.f32 %v10621, %v10471
        %v10623 = vadd.f32 %v10622, %v10479
        %v10624 = vadd.f32 %v10623, %v10487
        %v10625 = vadd.f32 %v10624, %v10495
        %v10626 = vadd.f32 %v10625, %v10503
        %v10627 = vadd.f32 %v10626, %v10511
        %v10628 = vadd.f32 %v10627, %v10519
        %v10629 = vadd.f32 %v10628, %v10527
        %v10630 = vrot.slane %v10629, 4
        %v10631 = vadd.f32 %v10629, %v10630
        %v10632 = vrot.slane %v10631, 2
        %v10633 = vadd.f32 %v10631, %v10632
        %v10634 = vrot.slane %v10633, 1
        %v10635 = vadd.f32 %v10633, %v10634
        %v10636 = vadd.f32 %v10408, %v10416
        %v10637 = vadd.f32 %v10636, %v10424
        %v10638 = vadd.f32 %v10637, %v10432
        %v10639 = vadd.f32 %v10638, %v10440
        %v10640 = vadd.f32 %v10639, %v10448
        %v10641 = vadd.f32 %v10640, %v10456
        %v10642 = vadd.f32 %v10641, %v10464
        %v10643 = vadd.f32 %v10642, %v10472
        %v10644 = vadd.f32 %v10643, %v10480
        %v10645 = vadd.f32 %v10644, %v10488
        %v10646 = vadd.f32 %v10645, %v10496
        %v10647 = vadd.f32 %v10646, %v10504
        %v10648 = vadd.f32 %v10647, %v10512
        %v10649 = vadd.f32 %v10648, %v10520
        %v10650 = vadd.f32 %v10649, %v10528
        %v10651 = vrot.slane %v10650, 4
        %v10652 = vadd.f32 %v10650, %v10651
        %v10653 = vrot.slane %v10652, 2
        %v10654 = vadd.f32 %v10652, %v10653
        %v10655 = vrot.slane %v10654, 1
        %v10656 = vadd.f32 %v10654, %v10655
        %v10657 = vadd.f32 %v10409, %v10417
        %v10658 = vadd.f32 %v10657, %v10425
        %v10659 = vadd.f32 %v10658, %v10433
        %v10660 = vadd.f32 %v10659, %v10441
        %v10661 = vadd.f32 %v10660, %v10449
        %v10662 = vadd.f32 %v10661, %v10457
        %v10663 = vadd.f32 %v10662, %v10465
        %v10664 = vadd.f32 %v10663, %v10473
        %v10665 = vadd.f32 %v10664, %v10481
        %v10666 = vadd.f32 %v10665, %v10489
        %v10667 = vadd.f32 %v10666, %v10497
        %v10668 = vadd.f32 %v10667, %v10505
        %v10669 = vadd.f32 %v10668, %v10513
        %v10670 = vadd.f32 %v10669, %v10521
        %v10671 = vadd.f32 %v10670, %v10529
        %v10672 = vrot.slane %v10671, 4
        %v10673 = vadd.f32 %v10671, %v10672
        %v10674 = vrot.slane %v10673, 2
        %v10675 = vadd.f32 %v10673, %v10674
        %v10676 = vrot.slane %v10675, 1
        %v10677 = vadd.f32 %v10675, %v10676
        %v10678 = vadd.f32 %v10410, %v10418
        %v10679 = vadd.f32 %v10678, %v10426
        %v10680 = vadd.f32 %v10679, %v10434
        %v10681 = vadd.f32 %v10680, %v10442
        %v10682 = vadd.f32 %v10681, %v10450
        %v10683 = vadd.f32 %v10682, %v10458
        %v10684 = vadd.f32 %v10683, %v10466
        %v10685 = vadd.f32 %v10684, %v10474
        %v10686 = vadd.f32 %v10685, %v10482
        %v10687 = vadd.f32 %v10686, %v10490
        %v10688 = vadd.f32 %v10687, %v10498
        %v10689 = vadd.f32 %v10688, %v10506
        %v10690 = vadd.f32 %v10689, %v10514
        %v10691 = vadd.f32 %v10690, %v10522
        %v10692 = vadd.f32 %v10691, %v10530
        %v10693 = vrot.slane %v10692, 4
        %v10694 = vadd.f32 %v10692, %v10693
        %v10695 = vrot.slane %v10694, 2
        %v10696 = vadd.f32 %v10694, %v10695
        %v10697 = vrot.slane %v10696, 1
        %v10698 = vadd.f32 %v10696, %v10697
        %v10699 = vmul.f32 %v10551, %v1040
        %v10700 = vmul.f32 %v10572, %v1040
        %v10701 = vmul.f32 %v10593, %v1040
        %v10702 = vmul.f32 %v10614, %v1040
        %v10703 = vmul.f32 %v10635, %v1040
        %v10704 = vmul.f32 %v10656, %v1040
        %v10705 = vmul.f32 %v10677, %v1040
        %v10706 = vmul.f32 %v10698, %v1040
        %v10707 = vmul.f32 %v10395, %v10395
        %v10708 = vmul.f32 %v10396, %v10396
        %v10709 = vmul.f32 %v10397, %v10397
        %v10710 = vmul.f32 %v10398, %v10398
        %v10711 = vmul.f32 %v10399, %v10399
        %v10712 = vmul.f32 %v10400, %v10400
        %v10713 = vmul.f32 %v10401, %v10401
        %v10714 = vmul.f32 %v10402, %v10402
        %v10715 = vsub.f32 %v10699, %v10707
        %v10716 = vsub.f32 %v10700, %v10708
        %v10717 = vsub.f32 %v10701, %v10709
        %v10718 = vsub.f32 %v10702, %v10710
        %v10719 = vsub.f32 %v10703, %v10711
        %v10720 = vsub.f32 %v10704, %v10712
        %v10721 = vsub.f32 %v10705, %v10713
        %v10722 = vsub.f32 %v10706, %v10714
        %v10723 = vadd.f32 %v10715, 1e-05
        %v10724 = vadd.f32 %v10716, 1e-05
        %v10725 = vadd.f32 %v10717, 1e-05
        %v10726 = vadd.f32 %v10718, 1e-05
        %v10727 = vadd.f32 %v10719, 1e-05
        %v10728 = vadd.f32 %v10720, 1e-05
        %v10729 = vadd.f32 %v10721, 1e-05
        %v10730 = vadd.f32 %v10722, 1e-05
        %v10731 = vrsqrt.pop %v10723
        %v10732 = vmul.f32 %v10731, %v10723
        %v10733 = vmul.f32 %v10732, %v10731
        %v10734 = vmul.f32 0.5, %v10733
        %v10735 = vsub.f32 1.5, %v10734
        %v10736 = vmul.f32 %v10731, %v10735
        %vm10737 = vweird.f32 %v10723
        %vm10738 = vweird.f32 %v10731
        %vm10739 = vmor %vm10737, %vm10738
        %v10740 = vsel %vm10739, %v10731, %v10736
        %v10741 = vrsqrt.pop %v10724
        %v10742 = vmul.f32 %v10741, %v10724
        %v10743 = vmul.f32 %v10742, %v10741
        %v10744 = vmul.f32 0.5, %v10743
        %v10745 = vsub.f32 1.5, %v10744
        %v10746 = vmul.f32 %v10741, %v10745
        %vm10747 = vweird.f32 %v10724
        %vm10748 = vweird.f32 %v10741
        %vm10749 = vmor %vm10747, %vm10748
        %v10750 = vsel %vm10749, %v10741, %v10746
        %v10751 = vrsqrt.pop %v10725
        %v10752 = vmul.f32 %v10751, %v10725
        %v10753 = vmul.f32 %v10752, %v10751
        %v10754 = vmul.f32 0.5, %v10753
        %v10755 = vsub.f32 1.5, %v10754
        %v10756 = vmul.f32 %v10751, %v10755
        %vm10757 = vweird.f32 %v10725
        %vm10758 = vweird.f32 %v10751
        %vm10759 = vmor %vm10757, %vm10758
        %v10760 = vsel %vm10759, %v10751, %v10756
        %v10761 = vrsqrt.pop %v10726
        %v10762 = vmul.f32 %v10761, %v10726
        %v10763 = vmul.f32 %v10762, %v10761
        %v10764 = vmul.f32 0.5, %v10763
        %v10765 = vsub.f32 1.5, %v10764
        %v10766 = vmul.f32 %v10761, %v10765
        %vm10767 = vweird.f32 %v10726
        %vm10768 = vweird.f32 %v10761
        %vm10769 = vmor %vm10767, %vm10768
        %v10770 = vsel %vm10769, %v10761, %v10766
        %v10771 = vrsqrt.pop %v10727
        %v10772 = vmul.f32 %v10771, %v10727
        %v10773 = vmul.f32 %v10772, %v10771
        %v10774 = vmul.f32 0.5, %v10773
        %v10775 = vsub.f32 1.5, %v10774
        %v10776 = vmul.f32 %v10771, %v10775
        %vm10777 = vweird.f32 %v10727
        %vm10778 = vweird.f32 %v10771
        %vm10779 = vmor %vm10777, %vm10778
        %v10780 = vsel %vm10779, %v10771, %v10776
        %v10781 = vrsqrt.pop %v10728
        %v10782 = vmul.f32 %v10781, %v10728
        %v10783 = vmul.f32 %v10782, %v10781
        %v10784 = vmul.f32 0.5, %v10783
        %v10785 = vsub.f32 1.5, %v10784
        %v10786 = vmul.f32 %v10781, %v10785
        %vm10787 = vweird.f32 %v10728
        %vm10788 = vweird.f32 %v10781
        %vm10789 = vmor %vm10787, %vm10788
        %v10790 = vsel %vm10789, %v10781, %v10786
        %v10791 = vrsqrt.pop %v10729
        %v10792 = vmul.f32 %v10791, %v10729
        %v10793 = vmul.f32 %v10792, %v10791
        %v10794 = vmul.f32 0.5, %v10793
        %v10795 = vsub.f32 1.5, %v10794
        %v10796 = vmul.f32 %v10791, %v10795
        %vm10797 = vweird.f32 %v10729
        %vm10798 = vweird.f32 %v10791
        %vm10799 = vmor %vm10797, %vm10798
        %v10800 = vsel %vm10799, %v10791, %v10796
        %v10801 = vrsqrt.pop %v10730
        %v10802 = vmul.f32 %v10801, %v10730
        %v10803 = vmul.f32 %v10802, %v10801
        %v10804 = vmul.f32 0.5, %v10803
        %v10805 = vsub.f32 1.5, %v10804
        %v10806 = vmul.f32 %v10801, %v10805
        %vm10807 = vweird.f32 %v10730
        %vm10808 = vweird.f32 %v10801
        %vm10809 = vmor %vm10807, %vm10808
        %v10810 = vsel %vm10809, %v10801, %v10806
        %v10819 = vrot.slane %v10750, 7
        %v10820 = vrot.slane %v10760, 6
        %v10821 = vrot.slane %v10770, 5
        %v10822 = vrot.slane %v10780, 4
        %v10823 = vrot.slane %v10790, 3
        %v10824 = vrot.slane %v10800, 2
        %v10825 = vrot.slane %v10810, 1
        %v10826 = vsel %vm1148, %v10740, %v10819
        %v10827 = vsel %vm3462, %v10820, %v10821
        %v10828 = vsel %vm3464, %v10826, %v10827
        %v10829 = vsel %vm3466, %v10822, %v10823
        %v10830 = vsel %vm3468, %v10824, %v10825
        %v10831 = vsel %vm3470, %v10829, %v10830
        %v10832 = vsel %vm3472, %v10828, %v10831
        %v10834 = vmul.f32 %v4509, %v10832
        %v10836 = vperm.slane %v10834, 0
        %v10837 = vperm.slane %v10834, 1
        %v10838 = vperm.slane %v10834, 2
        %v10839 = vperm.slane %v10834, 3
        %v10840 = vperm.slane %v10834, 4
        %v10841 = vperm.slane %v10834, 5
        %v10842 = vperm.slane %v10834, 6
        %v10843 = vperm.slane %v10834, 7
        %v10852 = vmul.f32 %v10395, %v10836
        %v10853 = vmul.f32 %v10396, %v10837
        %v10854 = vmul.f32 %v10397, %v10838
        %v10855 = vmul.f32 %v10398, %v10839
        %v10856 = vmul.f32 %v10399, %v10840
        %v10857 = vmul.f32 %v10400, %v10841
        %v10858 = vmul.f32 %v10401, %v10842
        %v10859 = vmul.f32 %v10402, %v10843
        %v10868 = vrot.slane %v10853, 7
        %v10869 = vrot.slane %v10854, 6
        %v10870 = vrot.slane %v10855, 5
        %v10871 = vrot.slane %v10856, 4
        %v10872 = vrot.slane %v10857, 3
        %v10873 = vrot.slane %v10858, 2
        %v10874 = vrot.slane %v10859, 1
        %v10875 = vsel %vm1148, %v10852, %v10868
        %v10876 = vsel %vm3462, %v10869, %v10870
        %v10877 = vsel %vm3464, %v10875, %v10876
        %v10878 = vsel %vm3466, %v10871, %v10872
        %v10879 = vsel %vm3468, %v10873, %v10874
        %v10880 = vsel %vm3470, %v10878, %v10879
        %v10881 = vsel %vm3472, %v10877, %v10880
        %v10883 = vsub.f32 %v4513, %v10881
        %v10884 = vmul.f32 %v7444, %v10836
        %v10885 = vmul.f32 %v7836, %v10837
        %v10886 = vmul.f32 %v8228, %v10838
        %v10887 = vmul.f32 %v8620, %v10839
        %v10888 = vmul.f32 %v9012, %v10840
        %v10889 = vmul.f32 %v9404, %v10841
        %v10890 = vmul.f32 %v9796, %v10842
        %v10891 = vmul.f32 %v10188, %v10843
        %v10892 = vmul.f32 %v7446, %v10836
        %v10893 = vmul.f32 %v7838, %v10837
        %v10894 = vmul.f32 %v8230, %v10838
        %v10895 = vmul.f32 %v8622, %v10839
        %v10896 = vmul.f32 %v9014, %v10840
        %v10897 = vmul.f32 %v9406, %v10841
        %v10898 = vmul.f32 %v9798, %v10842
        %v10899 = vmul.f32 %v10190, %v10843
        %v10900 = vmul.f32 %v7449, %v10836
        %v10901 = vmul.f32 %v7841, %v10837
        %v10902 = vmul.f32 %v8233, %v10838
        %v10903 = vmul.f32 %v8625, %v10839
        %v10904 = vmul.f32 %v9017, %v10840
        %v10905 = vmul.f32 %v9409, %v10841
        %v10906 = vmul.f32 %v9801, %v10842
        %v10907 = vmul.f32 %v10193, %v10843
        %v10908 = vmul.f32 %v7451, %v10836
        %v10909 = vmul.f32 %v7843, %v10837
        %v10910 = vmul.f32 %v8235, %v10838
        %v10911 = vmul.f32 %v8627, %v10839
        %v10912 = vmul.f32 %v9019, %v10840
        %v10913 = vmul.f32 %v9411, %v10841
        %v10914 = vmul.f32 %v9803, %v10842
        %v10915 = vmul.f32 %v10195, %v10843
        %v10916 = vmul.f32 %v7454, %v10836
        %v10917 = vmul.f32 %v7846, %v10837
        %v10918 = vmul.f32 %v8238, %v10838
        %v10919 = vmul.f32 %v8630, %v10839
        %v10920 = vmul.f32 %v9022, %v10840
        %v10921 = vmul.f32 %v9414, %v10841
        %v10922 = vmul.f32 %v9806, %v10842
        %v10923 = vmul.f32 %v10198, %v10843
        %v10924 = vmul.f32 %v7456, %v10836
        %v10925 = vmul.f32 %v7848, %v10837
        %v10926 = vmul.f32 %v8240, %v10838
        %v10927 = vmul.f32 %v8632, %v10839
        %v10928 = vmul.f32 %v9024, %v10840
        %v10929 = vmul.f32 %v9416, %v10841
        %v10930 = vmul.f32 %v9808, %v10842
        %v10931 = vmul.f32 %v10200, %v10843
        %v10932 = vmul.f32 %v7459, %v10836
        %v10933 = vmul.f32 %v7851, %v10837
        %v10934 = vmul.f32 %v8243, %v10838
        %v10935 = vmul.f32 %v8635, %v10839
        %v10936 = vmul.f32 %v9027, %v10840
        %v10937 = vmul.f32 %v9419, %v10841
        %v10938 = vmul.f32 %v9811, %v10842
        %v10939 = vmul.f32 %v10203, %v10843
        %v10940 = vmul.f32 %v7461, %v10836
        %v10941 = vmul.f32 %v7853, %v10837
        %v10942 = vmul.f32 %v8245, %v10838
        %v10943 = vmul.f32 %v8637, %v10839
        %v10944 = vmul.f32 %v9029, %v10840
        %v10945 = vmul.f32 %v9421, %v10841
        %v10946 = vmul.f32 %v9813, %v10842
        %v10947 = vmul.f32 %v10205, %v10843
        %v10948 = vmul.f32 %v7464, %v10836
        %v10949 = vmul.f32 %v7856, %v10837
        %v10950 = vmul.f32 %v8248, %v10838
        %v10951 = vmul.f32 %v8640, %v10839
        %v10952 = vmul.f32 %v9032, %v10840
        %v10953 = vmul.f32 %v9424, %v10841
        %v10954 = vmul.f32 %v9816, %v10842
        %v10955 = vmul.f32 %v10208, %v10843
        %v10956 = vmul.f32 %v7466, %v10836
        %v10957 = vmul.f32 %v7858, %v10837
        %v10958 = vmul.f32 %v8250, %v10838
        %v10959 = vmul.f32 %v8642, %v10839
        %v10960 = vmul.f32 %v9034, %v10840
        %v10961 = vmul.f32 %v9426, %v10841
        %v10962 = vmul.f32 %v9818, %v10842
        %v10963 = vmul.f32 %v10210, %v10843
        %v10964 = vmul.f32 %v7469, %v10836
        %v10965 = vmul.f32 %v7861, %v10837
        %v10966 = vmul.f32 %v8253, %v10838
        %v10967 = vmul.f32 %v8645, %v10839
        %v10968 = vmul.f32 %v9037, %v10840
        %v10969 = vmul.f32 %v9429, %v10841
        %v10970 = vmul.f32 %v9821, %v10842
        %v10971 = vmul.f32 %v10213, %v10843
        %v10972 = vmul.f32 %v7471, %v10836
        %v10973 = vmul.f32 %v7863, %v10837
        %v10974 = vmul.f32 %v8255, %v10838
        %v10975 = vmul.f32 %v8647, %v10839
        %v10976 = vmul.f32 %v9039, %v10840
        %v10977 = vmul.f32 %v9431, %v10841
        %v10978 = vmul.f32 %v9823, %v10842
        %v10979 = vmul.f32 %v10215, %v10843
        %v10980 = vmul.f32 %v7474, %v10836
        %v10981 = vmul.f32 %v7866, %v10837
        %v10982 = vmul.f32 %v8258, %v10838
        %v10983 = vmul.f32 %v8650, %v10839
        %v10984 = vmul.f32 %v9042, %v10840
        %v10985 = vmul.f32 %v9434, %v10841
        %v10986 = vmul.f32 %v9826, %v10842
        %v10987 = vmul.f32 %v10218, %v10843
        %v10988 = vmul.f32 %v7476, %v10836
        %v10989 = vmul.f32 %v7868, %v10837
        %v10990 = vmul.f32 %v8260, %v10838
        %v10991 = vmul.f32 %v8652, %v10839
        %v10992 = vmul.f32 %v9044, %v10840
        %v10993 = vmul.f32 %v9436, %v10841
        %v10994 = vmul.f32 %v9828, %v10842
        %v10995 = vmul.f32 %v10220, %v10843
        %v10996 = vmul.f32 %v7479, %v10836
        %v10997 = vmul.f32 %v7871, %v10837
        %v10998 = vmul.f32 %v8263, %v10838
        %v10999 = vmul.f32 %v8655, %v10839
        %v11000 = vmul.f32 %v9047, %v10840
        %v11001 = vmul.f32 %v9439, %v10841
        %v11002 = vmul.f32 %v9831, %v10842
        %v11003 = vmul.f32 %v10223, %v10843
        %v11004 = vmul.f32 %v7481, %v10836
        %v11005 = vmul.f32 %v7873, %v10837
        %v11006 = vmul.f32 %v8265, %v10838
        %v11007 = vmul.f32 %v8657, %v10839
        %v11008 = vmul.f32 %v9049, %v10840
        %v11009 = vmul.f32 %v9441, %v10841
        %v11010 = vmul.f32 %v9833, %v10842
        %v11011 = vmul.f32 %v10225, %v10843
        %v11013 = vperm.slane %v10883, 0
        %v11014 = vperm.slane %v10883, 1
        %v11015 = vperm.slane %v10883, 2
        %v11016 = vperm.slane %v10883, 3
        %v11017 = vperm.slane %v10883, 4
        %v11018 = vperm.slane %v10883, 5
        %v11019 = vperm.slane %v10883, 6
        %v11020 = vperm.slane %v10883, 7
        %v11029 = vadd.f32 %v10884, %v11013
        %v11030 = vadd.f32 %v10885, %v11014
        %v11031 = vadd.f32 %v10886, %v11015
        %v11032 = vadd.f32 %v10887, %v11016
        %v11033 = vadd.f32 %v10888, %v11017
        %v11034 = vadd.f32 %v10889, %v11018
        %v11035 = vadd.f32 %v10890, %v11019
        %v11036 = vadd.f32 %v10891, %v11020
        %v11037 = vadd.f32 %v10892, %v11013
        %v11038 = vadd.f32 %v10893, %v11014
        %v11039 = vadd.f32 %v10894, %v11015
        %v11040 = vadd.f32 %v10895, %v11016
        %v11041 = vadd.f32 %v10896, %v11017
        %v11042 = vadd.f32 %v10897, %v11018
        %v11043 = vadd.f32 %v10898, %v11019
        %v11044 = vadd.f32 %v10899, %v11020
        %v11045 = vadd.f32 %v10900, %v11013
        %v11046 = vadd.f32 %v10901, %v11014
        %v11047 = vadd.f32 %v10902, %v11015
        %v11048 = vadd.f32 %v10903, %v11016
        %v11049 = vadd.f32 %v10904, %v11017
        %v11050 = vadd.f32 %v10905, %v11018
        %v11051 = vadd.f32 %v10906, %v11019
        %v11052 = vadd.f32 %v10907, %v11020
        %v11053 = vadd.f32 %v10908, %v11013
        %v11054 = vadd.f32 %v10909, %v11014
        %v11055 = vadd.f32 %v10910, %v11015
        %v11056 = vadd.f32 %v10911, %v11016
        %v11057 = vadd.f32 %v10912, %v11017
        %v11058 = vadd.f32 %v10913, %v11018
        %v11059 = vadd.f32 %v10914, %v11019
        %v11060 = vadd.f32 %v10915, %v11020
        %v11061 = vadd.f32 %v10916, %v11013
        %v11062 = vadd.f32 %v10917, %v11014
        %v11063 = vadd.f32 %v10918, %v11015
        %v11064 = vadd.f32 %v10919, %v11016
        %v11065 = vadd.f32 %v10920, %v11017
        %v11066 = vadd.f32 %v10921, %v11018
        %v11067 = vadd.f32 %v10922, %v11019
        %v11068 = vadd.f32 %v10923, %v11020
        %v11069 = vadd.f32 %v10924, %v11013
        %v11070 = vadd.f32 %v10925, %v11014
        %v11071 = vadd.f32 %v10926, %v11015
        %v11072 = vadd.f32 %v10927, %v11016
        %v11073 = vadd.f32 %v10928, %v11017
        %v11074 = vadd.f32 %v10929, %v11018
        %v11075 = vadd.f32 %v10930, %v11019
        %v11076 = vadd.f32 %v10931, %v11020
        %v11077 = vadd.f32 %v10932, %v11013
        %v11078 = vadd.f32 %v10933, %v11014
        %v11079 = vadd.f32 %v10934, %v11015
        %v11080 = vadd.f32 %v10935, %v11016
        %v11081 = vadd.f32 %v10936, %v11017
        %v11082 = vadd.f32 %v10937, %v11018
        %v11083 = vadd.f32 %v10938, %v11019
        %v11084 = vadd.f32 %v10939, %v11020
        %v11085 = vadd.f32 %v10940, %v11013
        %v11086 = vadd.f32 %v10941, %v11014
        %v11087 = vadd.f32 %v10942, %v11015
        %v11088 = vadd.f32 %v10943, %v11016
        %v11089 = vadd.f32 %v10944, %v11017
        %v11090 = vadd.f32 %v10945, %v11018
        %v11091 = vadd.f32 %v10946, %v11019
        %v11092 = vadd.f32 %v10947, %v11020
        %v11093 = vadd.f32 %v10948, %v11013
        %v11094 = vadd.f32 %v10949, %v11014
        %v11095 = vadd.f32 %v10950, %v11015
        %v11096 = vadd.f32 %v10951, %v11016
        %v11097 = vadd.f32 %v10952, %v11017
        %v11098 = vadd.f32 %v10953, %v11018
        %v11099 = vadd.f32 %v10954, %v11019
        %v11100 = vadd.f32 %v10955, %v11020
        %v11101 = vadd.f32 %v10956, %v11013
        %v11102 = vadd.f32 %v10957, %v11014
        %v11103 = vadd.f32 %v10958, %v11015
        %v11104 = vadd.f32 %v10959, %v11016
        %v11105 = vadd.f32 %v10960, %v11017
        %v11106 = vadd.f32 %v10961, %v11018
        %v11107 = vadd.f32 %v10962, %v11019
        %v11108 = vadd.f32 %v10963, %v11020
        %v11109 = vadd.f32 %v10964, %v11013
        %v11110 = vadd.f32 %v10965, %v11014
        %v11111 = vadd.f32 %v10966, %v11015
        %v11112 = vadd.f32 %v10967, %v11016
        %v11113 = vadd.f32 %v10968, %v11017
        %v11114 = vadd.f32 %v10969, %v11018
        %v11115 = vadd.f32 %v10970, %v11019
        %v11116 = vadd.f32 %v10971, %v11020
        %v11117 = vadd.f32 %v10972, %v11013
        %v11118 = vadd.f32 %v10973, %v11014
        %v11119 = vadd.f32 %v10974, %v11015
        %v11120 = vadd.f32 %v10975, %v11016
        %v11121 = vadd.f32 %v10976, %v11017
        %v11122 = vadd.f32 %v10977, %v11018
        %v11123 = vadd.f32 %v10978, %v11019
        %v11124 = vadd.f32 %v10979, %v11020
        %v11125 = vadd.f32 %v10980, %v11013
        %v11126 = vadd.f32 %v10981, %v11014
        %v11127 = vadd.f32 %v10982, %v11015
        %v11128 = vadd.f32 %v10983, %v11016
        %v11129 = vadd.f32 %v10984, %v11017
        %v11130 = vadd.f32 %v10985, %v11018
        %v11131 = vadd.f32 %v10986, %v11019
        %v11132 = vadd.f32 %v10987, %v11020
        %v11133 = vadd.f32 %v10988, %v11013
        %v11134 = vadd.f32 %v10989, %v11014
        %v11135 = vadd.f32 %v10990, %v11015
        %v11136 = vadd.f32 %v10991, %v11016
        %v11137 = vadd.f32 %v10992, %v11017
        %v11138 = vadd.f32 %v10993, %v11018
        %v11139 = vadd.f32 %v10994, %v11019
        %v11140 = vadd.f32 %v10995, %v11020
        %v11141 = vadd.f32 %v10996, %v11013
        %v11142 = vadd.f32 %v10997, %v11014
        %v11143 = vadd.f32 %v10998, %v11015
        %v11144 = vadd.f32 %v10999, %v11016
        %v11145 = vadd.f32 %v11000, %v11017
        %v11146 = vadd.f32 %v11001, %v11018
        %v11147 = vadd.f32 %v11002, %v11019
        %v11148 = vadd.f32 %v11003, %v11020
        %v11149 = vadd.f32 %v11004, %v11013
        %v11150 = vadd.f32 %v11005, %v11014
        %v11151 = vadd.f32 %v11006, %v11015
        %v11152 = vadd.f32 %v11007, %v11016
        %v11153 = vadd.f32 %v11008, %v11017
        %v11154 = vadd.f32 %v11009, %v11018
        %v11155 = vadd.f32 %v11010, %v11019
        %v11156 = vadd.f32 %v11011, %v11020
        %v11157 = vmax.f32 %v11029, 0.0
        %v11158 = vmax.f32 %v11030, 0.0
        %v11159 = vmax.f32 %v11031, 0.0
        %v11160 = vmax.f32 %v11032, 0.0
        %v11161 = vmax.f32 %v11033, 0.0
        %v11162 = vmax.f32 %v11034, 0.0
        %v11163 = vmax.f32 %v11035, 0.0
        %v11164 = vmax.f32 %v11036, 0.0
        %v11165 = vmax.f32 %v11037, 0.0
        %v11166 = vmax.f32 %v11038, 0.0
        %v11167 = vmax.f32 %v11039, 0.0
        %v11168 = vmax.f32 %v11040, 0.0
        %v11169 = vmax.f32 %v11041, 0.0
        %v11170 = vmax.f32 %v11042, 0.0
        %v11171 = vmax.f32 %v11043, 0.0
        %v11172 = vmax.f32 %v11044, 0.0
        %v11173 = vmax.f32 %v11045, 0.0
        %v11174 = vmax.f32 %v11046, 0.0
        %v11175 = vmax.f32 %v11047, 0.0
        %v11176 = vmax.f32 %v11048, 0.0
        %v11177 = vmax.f32 %v11049, 0.0
        %v11178 = vmax.f32 %v11050, 0.0
        %v11179 = vmax.f32 %v11051, 0.0
        %v11180 = vmax.f32 %v11052, 0.0
        %v11181 = vmax.f32 %v11053, 0.0
        %v11182 = vmax.f32 %v11054, 0.0
        %v11183 = vmax.f32 %v11055, 0.0
        %v11184 = vmax.f32 %v11056, 0.0
        %v11185 = vmax.f32 %v11057, 0.0
        %v11186 = vmax.f32 %v11058, 0.0
        %v11187 = vmax.f32 %v11059, 0.0
        %v11188 = vmax.f32 %v11060, 0.0
        %v11189 = vmax.f32 %v11061, 0.0
        %v11190 = vmax.f32 %v11062, 0.0
        %v11191 = vmax.f32 %v11063, 0.0
        %v11192 = vmax.f32 %v11064, 0.0
        %v11193 = vmax.f32 %v11065, 0.0
        %v11194 = vmax.f32 %v11066, 0.0
        %v11195 = vmax.f32 %v11067, 0.0
        %v11196 = vmax.f32 %v11068, 0.0
        %v11197 = vmax.f32 %v11069, 0.0
        %v11198 = vmax.f32 %v11070, 0.0
        %v11199 = vmax.f32 %v11071, 0.0
        %v11200 = vmax.f32 %v11072, 0.0
        %v11201 = vmax.f32 %v11073, 0.0
        %v11202 = vmax.f32 %v11074, 0.0
        %v11203 = vmax.f32 %v11075, 0.0
        %v11204 = vmax.f32 %v11076, 0.0
        %v11205 = vmax.f32 %v11077, 0.0
        %v11206 = vmax.f32 %v11078, 0.0
        %v11207 = vmax.f32 %v11079, 0.0
        %v11208 = vmax.f32 %v11080, 0.0
        %v11209 = vmax.f32 %v11081, 0.0
        %v11210 = vmax.f32 %v11082, 0.0
        %v11211 = vmax.f32 %v11083, 0.0
        %v11212 = vmax.f32 %v11084, 0.0
        %v11213 = vmax.f32 %v11085, 0.0
        %v11214 = vmax.f32 %v11086, 0.0
        %v11215 = vmax.f32 %v11087, 0.0
        %v11216 = vmax.f32 %v11088, 0.0
        %v11217 = vmax.f32 %v11089, 0.0
        %v11218 = vmax.f32 %v11090, 0.0
        %v11219 = vmax.f32 %v11091, 0.0
        %v11220 = vmax.f32 %v11092, 0.0
        %v11221 = vmax.f32 %v11093, 0.0
        %v11222 = vmax.f32 %v11094, 0.0
        %v11223 = vmax.f32 %v11095, 0.0
        %v11224 = vmax.f32 %v11096, 0.0
        %v11225 = vmax.f32 %v11097, 0.0
        %v11226 = vmax.f32 %v11098, 0.0
        %v11227 = vmax.f32 %v11099, 0.0
        %v11228 = vmax.f32 %v11100, 0.0
        %v11229 = vmax.f32 %v11101, 0.0
        %v11230 = vmax.f32 %v11102, 0.0
        %v11231 = vmax.f32 %v11103, 0.0
        %v11232 = vmax.f32 %v11104, 0.0
        %v11233 = vmax.f32 %v11105, 0.0
        %v11234 = vmax.f32 %v11106, 0.0
        %v11235 = vmax.f32 %v11107, 0.0
        %v11236 = vmax.f32 %v11108, 0.0
        %v11237 = vmax.f32 %v11109, 0.0
        %v11238 = vmax.f32 %v11110, 0.0
        %v11239 = vmax.f32 %v11111, 0.0
        %v11240 = vmax.f32 %v11112, 0.0
        %v11241 = vmax.f32 %v11113, 0.0
        %v11242 = vmax.f32 %v11114, 0.0
        %v11243 = vmax.f32 %v11115, 0.0
        %v11244 = vmax.f32 %v11116, 0.0
        %v11245 = vmax.f32 %v11117, 0.0
        %v11246 = vmax.f32 %v11118, 0.0
        %v11247 = vmax.f32 %v11119, 0.0
        %v11248 = vmax.f32 %v11120, 0.0
        %v11249 = vmax.f32 %v11121, 0.0
        %v11250 = vmax.f32 %v11122, 0.0
        %v11251 = vmax.f32 %v11123, 0.0
        %v11252 = vmax.f32 %v11124, 0.0
        %v11253 = vmax.f32 %v11125, 0.0
        %v11254 = vmax.f32 %v11126, 0.0
        %v11255 = vmax.f32 %v11127, 0.0
        %v11256 = vmax.f32 %v11128, 0.0
        %v11257 = vmax.f32 %v11129, 0.0
        %v11258 = vmax.f32 %v11130, 0.0
        %v11259 = vmax.f32 %v11131, 0.0
        %v11260 = vmax.f32 %v11132, 0.0
        %v11261 = vmax.f32 %v11133, 0.0
        %v11262 = vmax.f32 %v11134, 0.0
        %v11263 = vmax.f32 %v11135, 0.0
        %v11264 = vmax.f32 %v11136, 0.0
        %v11265 = vmax.f32 %v11137, 0.0
        %v11266 = vmax.f32 %v11138, 0.0
        %v11267 = vmax.f32 %v11139, 0.0
        %v11268 = vmax.f32 %v11140, 0.0
        %v11269 = vmax.f32 %v11141, 0.0
        %v11270 = vmax.f32 %v11142, 0.0
        %v11271 = vmax.f32 %v11143, 0.0
        %v11272 = vmax.f32 %v11144, 0.0
        %v11273 = vmax.f32 %v11145, 0.0
        %v11274 = vmax.f32 %v11146, 0.0
        %v11275 = vmax.f32 %v11147, 0.0
        %v11276 = vmax.f32 %v11148, 0.0
        %v11277 = vmax.f32 %v11149, 0.0
        %v11278 = vmax.f32 %v11150, 0.0
        %v11279 = vmax.f32 %v11151, 0.0
        %v11280 = vmax.f32 %v11152, 0.0
        %v11281 = vmax.f32 %v11153, 0.0
        %v11282 = vmax.f32 %v11154, 0.0
        %v11283 = vmax.f32 %v11155, 0.0
        %v11284 = vmax.f32 %v11156, 0.0
        %v11285 = vld [vmem:[#allocation8] sm:$0xf]
        %v11286 = vld [vmem:[#allocation8 + $0x4] sm:$0xf]
        %v11287 = vld [vmem:[#allocation8 + $0x8] sm:$0xf]
        %v11288 = vld [vmem:[#allocation8 + $0xc] sm:$0xf]
        %v11289 = vld [vmem:[#allocation8 + $0x10] sm:$0xf]
        %v11290 = vld [vmem:[#allocation8 + $0x14] sm:$0xf]
        %v11291 = vld [vmem:[#allocation8 + $0x18] sm:$0xf]
        %v11292 = vld [vmem:[#allocation8 + $0x1c] sm:$0xf]
        %v11293 = vld [vmem:[#allocation8 + $0x20] sm:$0xf]
        %v11294 = vld [vmem:[#allocation8 + $0x24] sm:$0xf]
        %v11295 = vld [vmem:[#allocation8 + $0x28] sm:$0xf]
        %v11296 = vld [vmem:[#allocation8 + $0x2c] sm:$0xf]
        %v11297 = vld [vmem:[#allocation8 + $0x30] sm:$0xf]
        %v11298 = vld [vmem:[#allocation8 + $0x34] sm:$0xf]
        %v11299 = vld [vmem:[#allocation8 + $0x38] sm:$0xf]
        %v11300 = vld [vmem:[#allocation8 + $0x3c] sm:$0xf]
        %v11301 = vld [vmem:[#allocation8 + $0x40] sm:$0xf]
        %v11302 = vld [vmem:[#allocation8 + $0x44] sm:$0xf]
        %v11303 = vld [vmem:[#allocation8 + $0x48] sm:$0xf]
        %v11304 = vld [vmem:[#allocation8 + $0x4c] sm:$0xf]
        %v11305 = vld [vmem:[#allocation8 + $0x50] sm:$0xf]
        %v11306 = vld [vmem:[#allocation8 + $0x54] sm:$0xf]
        %v11307 = vld [vmem:[#allocation8 + $0x58] sm:$0xf]
        %v11308 = vld [vmem:[#allocation8 + $0x5c] sm:$0xf]
        %v11309 = vld [vmem:[#allocation8 + $0x60] sm:$0xf]
        %v11310 = vld [vmem:[#allocation8 + $0x64] sm:$0xf]
        %v11311 = vld [vmem:[#allocation8 + $0x68] sm:$0xf]
        %v11312 = vld [vmem:[#allocation8 + $0x6c] sm:$0xf]
        %v11313 = vld [vmem:[#allocation8 + $0x70] sm:$0xf]
        %v11314 = vld [vmem:[#allocation8 + $0x74] sm:$0xf]
        %v11315 = vld [vmem:[#allocation8 + $0x78] sm:$0xf]
        %v11316 = vld [vmem:[#allocation8 + $0x7c] sm:$0xf]
        %v11317 = vld [vmem:[#allocation8 + $0x80] sm:$0xf]
        %v11318 = vld [vmem:[#allocation8 + $0x84] sm:$0xf]
        %v11319 = vld [vmem:[#allocation8 + $0x88] sm:$0xf]
        %v11320 = vld [vmem:[#allocation8 + $0x8c] sm:$0xf]
        %v11321 = vld [vmem:[#allocation8 + $0x90] sm:$0xf]
        %v11322 = vld [vmem:[#allocation8 + $0x94] sm:$0xf]
        %v11323 = vld [vmem:[#allocation8 + $0x98] sm:$0xf]
        %v11324 = vld [vmem:[#allocation8 + $0x9c] sm:$0xf]
        %v11325 = vld [vmem:[#allocation8 + $0xa0] sm:$0xf]
        %v11326 = vld [vmem:[#allocation8 + $0xa4] sm:$0xf]
        %v11327 = vld [vmem:[#allocation8 + $0xa8] sm:$0xf]
        %v11328 = vld [vmem:[#allocation8 + $0xac] sm:$0xf]
        %v11329 = vld [vmem:[#allocation8 + $0xb0] sm:$0xf]
        %v11330 = vld [vmem:[#allocation8 + $0xb4] sm:$0xf]
        %v11331 = vld [vmem:[#allocation8 + $0xb8] sm:$0xf]
        %v11332 = vld [vmem:[#allocation8 + $0xbc] sm:$0xf]
        %v11333 = vld [vmem:[#allocation8 + $0xc0] sm:$0xf]
        %v11334 = vld [vmem:[#allocation8 + $0xc4] sm:$0xf]
        %v11335 = vld [vmem:[#allocation8 + $0xc8] sm:$0xf]
        %v11336 = vld [vmem:[#allocation8 + $0xcc] sm:$0xf]
        %v11337 = vld [vmem:[#allocation8 + $0xd0] sm:$0xf]
        %v11338 = vld [vmem:[#allocation8 + $0xd4] sm:$0xf]
        %v11339 = vld [vmem:[#allocation8 + $0xd8] sm:$0xf]
        %v11340 = vld [vmem:[#allocation8 + $0xdc] sm:$0xf]
        %v11341 = vld [vmem:[#allocation8 + $0xe0] sm:$0xf]
        %v11342 = vld [vmem:[#allocation8 + $0xe4] sm:$0xf]
        %v11343 = vld [vmem:[#allocation8 + $0xe8] sm:$0xf]
        %v11344 = vld [vmem:[#allocation8 + $0xec] sm:$0xf]
        %v11345 = vld [vmem:[#allocation8 + $0xf0] sm:$0xf]
        %v11346 = vld [vmem:[#allocation8 + $0xf4] sm:$0xf]
        %v11347 = vld [vmem:[#allocation8 + $0xf8] sm:$0xf]
        %v11348 = vld [vmem:[#allocation8 + $0xfc] sm:$0xf]
        %v11349 = vld [vmem:[#allocation8 + $0x100] sm:$0xf]
        %v11350 = vld [vmem:[#allocation8 + $0x104] sm:$0xf]
        %v11351 = vld [vmem:[#allocation8 + $0x108] sm:$0xf]
        %v11352 = vld [vmem:[#allocation8 + $0x10c] sm:$0xf]
        %v11353 = vld [vmem:[#allocation8 + $0x110] sm:$0xf]
        %v11354 = vld [vmem:[#allocation8 + $0x114] sm:$0xf]
        %v11355 = vld [vmem:[#allocation8 + $0x118] sm:$0xf]
        %v11356 = vld [vmem:[#allocation8 + $0x11c] sm:$0xf]
        %v11357 = vld [vmem:[#allocation8 + $0x120] sm:$0xf]
        %v11358 = vld [vmem:[#allocation8 + $0x124] sm:$0xf]
        %v11359 = vld [vmem:[#allocation8 + $0x128] sm:$0xf]
        %v11360 = vld [vmem:[#allocation8 + $0x12c] sm:$0xf]
        %v11361 = vld [vmem:[#allocation8 + $0x130] sm:$0xf]
        %v11362 = vld [vmem:[#allocation8 + $0x134] sm:$0xf]
        %v11363 = vld [vmem:[#allocation8 + $0x138] sm:$0xf]
        %v11364 = vld [vmem:[#allocation8 + $0x13c] sm:$0xf]
        %v11365 = vld [vmem:[#allocation8 + $0x140] sm:$0xf]
        %v11366 = vld [vmem:[#allocation8 + $0x144] sm:$0xf]
        %v11367 = vld [vmem:[#allocation8 + $0x148] sm:$0xf]
        %v11368 = vld [vmem:[#allocation8 + $0x14c] sm:$0xf]
        %v11369 = vld [vmem:[#allocation8 + $0x150] sm:$0xf]
        %v11370 = vld [vmem:[#allocation8 + $0x154] sm:$0xf]
        %v11371 = vld [vmem:[#allocation8 + $0x158] sm:$0xf]
        %v11372 = vld [vmem:[#allocation8 + $0x15c] sm:$0xf]
        %v11373 = vld [vmem:[#allocation8 + $0x160] sm:$0xf]
        %v11374 = vld [vmem:[#allocation8 + $0x164] sm:$0xf]
        %v11375 = vld [vmem:[#allocation8 + $0x168] sm:$0xf]
        %v11376 = vld [vmem:[#allocation8 + $0x16c] sm:$0xf]
        %v11377 = vld [vmem:[#allocation8 + $0x170] sm:$0xf]
        %v11378 = vld [vmem:[#allocation8 + $0x174] sm:$0xf]
        %v11379 = vld [vmem:[#allocation8 + $0x178] sm:$0xf]
        %v11380 = vld [vmem:[#allocation8 + $0x17c] sm:$0xf]
        %v11381 = vld [vmem:[#allocation8 + $0x180] sm:$0xf]
        %v11382 = vld [vmem:[#allocation8 + $0x184] sm:$0xf]
        %v11383 = vld [vmem:[#allocation8 + $0x188] sm:$0xf]
        %v11384 = vld [vmem:[#allocation8 + $0x18c] sm:$0xf]
        %v11385 = vld [vmem:[#allocation8 + $0x190] sm:$0xf]
        %v11386 = vld [vmem:[#allocation8 + $0x194] sm:$0xf]
        %v11387 = vld [vmem:[#allocation8 + $0x198] sm:$0xf]
        %v11388 = vld [vmem:[#allocation8 + $0x19c] sm:$0xf]
        %v11389 = vld [vmem:[#allocation8 + $0x1a0] sm:$0xf]
        %v11390 = vld [vmem:[#allocation8 + $0x1a4] sm:$0xf]
        %v11391 = vld [vmem:[#allocation8 + $0x1a8] sm:$0xf]
        %v11392 = vld [vmem:[#allocation8 + $0x1ac] sm:$0xf]
        %v11393 = vld [vmem:[#allocation8 + $0x1b0] sm:$0xf]
        %v11394 = vld [vmem:[#allocation8 + $0x1b4] sm:$0xf]
        %v11395 = vld [vmem:[#allocation8 + $0x1b8] sm:$0xf]
        %v11396 = vld [vmem:[#allocation8 + $0x1bc] sm:$0xf]
        %v11397 = vld [vmem:[#allocation8 + $0x1c0] sm:$0xf]
        %v11398 = vld [vmem:[#allocation8 + $0x1c4] sm:$0xf]
        %v11399 = vld [vmem:[#allocation8 + $0x1c8] sm:$0xf]
        %v11400 = vld [vmem:[#allocation8 + $0x1cc] sm:$0xf]
        %v11401 = vld [vmem:[#allocation8 + $0x1d0] sm:$0xf]
        %v11402 = vld [vmem:[#allocation8 + $0x1d4] sm:$0xf]
        %v11403 = vld [vmem:[#allocation8 + $0x1d8] sm:$0xf]
        %v11404 = vld [vmem:[#allocation8 + $0x1dc] sm:$0xf]
        %v11405 = vld [vmem:[#allocation8 + $0x1e0] sm:$0xf]
        %v11406 = vld [vmem:[#allocation8 + $0x1e4] sm:$0xf]
        %v11407 = vld [vmem:[#allocation8 + $0x1e8] sm:$0xf]
        %v11408 = vld [vmem:[#allocation8 + $0x1ec] sm:$0xf]
        %v11409 = vld [vmem:[#allocation8 + $0x1f0] sm:$0xf]
        %v11410 = vld [vmem:[#allocation8 + $0x1f4] sm:$0xf]
        %v11411 = vld [vmem:[#allocation8 + $0x1f8] sm:$0xf]
        %v11412 = vld [vmem:[#allocation8 + $0x1fc] sm:$0xf]
        %v11413 = vpack.c.bf16 %v11165, %v11157
        %v11414 = vpack.c.bf16 %v11166, %v11158
        %v11415 = vpack.c.bf16 %v11167, %v11159
        %v11416 = vpack.c.bf16 %v11168, %v11160
        %v11417 = vpack.c.bf16 %v11169, %v11161
        %v11418 = vpack.c.bf16 %v11170, %v11162
        %v11419 = vpack.c.bf16 %v11171, %v11163
        %v11420 = vpack.c.bf16 %v11172, %v11164
        %v11421 = vpack.c.bf16 %v11181, %v11173
        %v11422 = vpack.c.bf16 %v11182, %v11174
        %v11423 = vpack.c.bf16 %v11183, %v11175
        %v11424 = vpack.c.bf16 %v11184, %v11176
        %v11425 = vpack.c.bf16 %v11185, %v11177
        %v11426 = vpack.c.bf16 %v11186, %v11178
        %v11427 = vpack.c.bf16 %v11187, %v11179
        %v11428 = vpack.c.bf16 %v11188, %v11180
        %v11429 = vpack.c.bf16 %v11197, %v11189
        %v11430 = vpack.c.bf16 %v11198, %v11190
        %v11431 = vpack.c.bf16 %v11199, %v11191
        %v11432 = vpack.c.bf16 %v11200, %v11192
        %v11433 = vpack.c.bf16 %v11201, %v11193
        %v11434 = vpack.c.bf16 %v11202, %v11194
        %v11435 = vpack.c.bf16 %v11203, %v11195
        %v11436 = vpack.c.bf16 %v11204, %v11196
        %v11437 = vpack.c.bf16 %v11213, %v11205
        %v11438 = vpack.c.bf16 %v11214, %v11206
        %v11439 = vpack.c.bf16 %v11215, %v11207
        %v11440 = vpack.c.bf16 %v11216, %v11208
        %v11441 = vpack.c.bf16 %v11217, %v11209
        %v11442 = vpack.c.bf16 %v11218, %v11210
        %v11443 = vpack.c.bf16 %v11219, %v11211
        %v11444 = vpack.c.bf16 %v11220, %v11212
        %v11445 = vpack.c.bf16 %v11229, %v11221
        %v11446 = vpack.c.bf16 %v11230, %v11222
        %v11447 = vpack.c.bf16 %v11231, %v11223
        %v11448 = vpack.c.bf16 %v11232, %v11224
        %v11449 = vpack.c.bf16 %v11233, %v11225
        %v11450 = vpack.c.bf16 %v11234, %v11226
        %v11451 = vpack.c.bf16 %v11235, %v11227
        %v11452 = vpack.c.bf16 %v11236, %v11228
        %v11453 = vpack.c.bf16 %v11245, %v11237
        %v11454 = vpack.c.bf16 %v11246, %v11238
        %v11455 = vpack.c.bf16 %v11247, %v11239
        %v11456 = vpack.c.bf16 %v11248, %v11240
        %v11457 = vpack.c.bf16 %v11249, %v11241
        %v11458 = vpack.c.bf16 %v11250, %v11242
        %v11459 = vpack.c.bf16 %v11251, %v11243
        %v11460 = vpack.c.bf16 %v11252, %v11244
        %v11461 = vpack.c.bf16 %v11261, %v11253
        %v11462 = vpack.c.bf16 %v11262, %v11254
        %v11463 = vpack.c.bf16 %v11263, %v11255
        %v11464 = vpack.c.bf16 %v11264, %v11256
        %v11465 = vpack.c.bf16 %v11265, %v11257
        %v11466 = vpack.c.bf16 %v11266, %v11258
        %v11467 = vpack.c.bf16 %v11267, %v11259
        %v11468 = vpack.c.bf16 %v11268, %v11260
        %v11469 = vpack.c.bf16 %v11277, %v11269
        %v11470 = vpack.c.bf16 %v11278, %v11270
        %v11471 = vpack.c.bf16 %v11279, %v11271
        %v11472 = vpack.c.bf16 %v11280, %v11272
        %v11473 = vpack.c.bf16 %v11281, %v11273
        %v11474 = vpack.c.bf16 %v11282, %v11274
        %v11475 = vpack.c.bf16 %v11283, %v11275
        %v11476 = vpack.c.bf16 %v11284, %v11276
        %v11477 = vld [vmem:[#allocation13] sm:$0x1]
        %v11479 = vperm.slane %v11477, 0
        %v11609 = vunpack.c.l.b16 %v11285
        %v11610 = vunpack.c.l.b16 %v11286
        %v11611 = vunpack.c.l.b16 %v11287
        %v11612 = vunpack.c.l.b16 %v11288
        %v11613 = vunpack.c.l.b16 %v11289
        %v11614 = vunpack.c.l.b16 %v11290
        %v11615 = vunpack.c.l.b16 %v11291
        %v11616 = vunpack.c.l.b16 %v11292
        %v11617 = vunpack.c.l.b16 %v11293
        %v11618 = vunpack.c.l.b16 %v11294
        %v11619 = vunpack.c.l.b16 %v11295
        %v11620 = vunpack.c.l.b16 %v11296
        %v11621 = vunpack.c.l.b16 %v11297
        %v11622 = vunpack.c.l.b16 %v11298
        %v11623 = vunpack.c.l.b16 %v11299
        %v11624 = vunpack.c.l.b16 %v11300
        %v11625 = vunpack.c.l.b16 %v11301
        %v11626 = vunpack.c.l.b16 %v11302
        %v11627 = vunpack.c.l.b16 %v11303
        %v11628 = vunpack.c.l.b16 %v11304
        %v11629 = vunpack.c.l.b16 %v11305
        %v11630 = vunpack.c.l.b16 %v11306
        %v11631 = vunpack.c.l.b16 %v11307
        %v11632 = vunpack.c.l.b16 %v11308
        %v11633 = vunpack.c.l.b16 %v11309
        %v11634 = vunpack.c.l.b16 %v11310
        %v11635 = vunpack.c.l.b16 %v11311
        %v11636 = vunpack.c.l.b16 %v11312
        %v11637 = vunpack.c.l.b16 %v11313
        %v11638 = vunpack.c.l.b16 %v11314
        %v11639 = vunpack.c.l.b16 %v11315
        %v11640 = vunpack.c.l.b16 %v11316
        %v11641 = vunpack.c.l.b16 %v11317
        %v11642 = vunpack.c.l.b16 %v11318
        %v11643 = vunpack.c.l.b16 %v11319
        %v11644 = vunpack.c.l.b16 %v11320
        %v11645 = vunpack.c.l.b16 %v11321
        %v11646 = vunpack.c.l.b16 %v11322
        %v11647 = vunpack.c.l.b16 %v11323
        %v11648 = vunpack.c.l.b16 %v11324
        %v11649 = vunpack.c.l.b16 %v11325
        %v11650 = vunpack.c.l.b16 %v11326
        %v11651 = vunpack.c.l.b16 %v11327
        %v11652 = vunpack.c.l.b16 %v11328
        %v11653 = vunpack.c.l.b16 %v11329
        %v11654 = vunpack.c.l.b16 %v11330
        %v11655 = vunpack.c.l.b16 %v11331
        %v11656 = vunpack.c.l.b16 %v11332
        %v11657 = vunpack.c.l.b16 %v11333
        %v11658 = vunpack.c.l.b16 %v11334
        %v11659 = vunpack.c.l.b16 %v11335
        %v11660 = vunpack.c.l.b16 %v11336
        %v11661 = vunpack.c.l.b16 %v11337
        %v11662 = vunpack.c.l.b16 %v11338
        %v11663 = vunpack.c.l.b16 %v11339
        %v11664 = vunpack.c.l.b16 %v11340
        %v11665 = vunpack.c.l.b16 %v11341
        %v11666 = vunpack.c.l.b16 %v11342
        %v11667 = vunpack.c.l.b16 %v11343
        %v11668 = vunpack.c.l.b16 %v11344
        %v11669 = vunpack.c.l.b16 %v11345
        %v11670 = vunpack.c.l.b16 %v11346
        %v11671 = vunpack.c.l.b16 %v11347
        %v11672 = vunpack.c.l.b16 %v11348
        %v11673 = vunpack.c.l.b16 %v11349
        %v11674 = vunpack.c.l.b16 %v11350
        %v11675 = vunpack.c.l.b16 %v11351
        %v11676 = vunpack.c.l.b16 %v11352
        %v11677 = vunpack.c.l.b16 %v11353
        %v11678 = vunpack.c.l.b16 %v11354
        %v11679 = vunpack.c.l.b16 %v11355
        %v11680 = vunpack.c.l.b16 %v11356
        %v11681 = vunpack.c.l.b16 %v11357
        %v11682 = vunpack.c.l.b16 %v11358
        %v11683 = vunpack.c.l.b16 %v11359
        %v11684 = vunpack.c.l.b16 %v11360
        %v11685 = vunpack.c.l.b16 %v11361
        %v11686 = vunpack.c.l.b16 %v11362
        %v11687 = vunpack.c.l.b16 %v11363
        %v11688 = vunpack.c.l.b16 %v11364
        %v11689 = vunpack.c.l.b16 %v11365
        %v11690 = vunpack.c.l.b16 %v11366
        %v11691 = vunpack.c.l.b16 %v11367
        %v11692 = vunpack.c.l.b16 %v11368
        %v11693 = vunpack.c.l.b16 %v11369
        %v11694 = vunpack.c.l.b16 %v11370
        %v11695 = vunpack.c.l.b16 %v11371
        %v11696 = vunpack.c.l.b16 %v11372
        %v11697 = vunpack.c.l.b16 %v11373
        %v11698 = vunpack.c.l.b16 %v11374
        %v11699 = vunpack.c.l.b16 %v11375
        %v11700 = vunpack.c.l.b16 %v11376
        %v11701 = vunpack.c.l.b16 %v11377
        %v11702 = vunpack.c.l.b16 %v11378
        %v11703 = vunpack.c.l.b16 %v11379
        %v11704 = vunpack.c.l.b16 %v11380
        %v11705 = vunpack.c.l.b16 %v11381
        %v11706 = vunpack.c.l.b16 %v11382
        %v11707 = vunpack.c.l.b16 %v11383
        %v11708 = vunpack.c.l.b16 %v11384
        %v11709 = vunpack.c.l.b16 %v11385
        %v11710 = vunpack.c.l.b16 %v11386
        %v11711 = vunpack.c.l.b16 %v11387
        %v11712 = vunpack.c.l.b16 %v11388
        %v11713 = vunpack.c.l.b16 %v11389
        %v11714 = vunpack.c.l.b16 %v11390
        %v11715 = vunpack.c.l.b16 %v11391
        %v11716 = vunpack.c.l.b16 %v11392
        %v11717 = vunpack.c.l.b16 %v11393
        %v11718 = vunpack.c.l.b16 %v11394
        %v11719 = vunpack.c.l.b16 %v11395
        %v11720 = vunpack.c.l.b16 %v11396
        %v11721 = vunpack.c.l.b16 %v11397
        %v11722 = vunpack.c.l.b16 %v11398
        %v11723 = vunpack.c.l.b16 %v11399
        %v11724 = vunpack.c.l.b16 %v11400
        %v11725 = vunpack.c.l.b16 %v11401
        %v11726 = vunpack.c.l.b16 %v11402
        %v11727 = vunpack.c.l.b16 %v11403
        %v11728 = vunpack.c.l.b16 %v11404
        %v11729 = vunpack.c.l.b16 %v11405
        %v11730 = vunpack.c.l.b16 %v11406
        %v11731 = vunpack.c.l.b16 %v11407
        %v11732 = vunpack.c.l.b16 %v11408
        %v11733 = vunpack.c.l.b16 %v11409
        %v11734 = vunpack.c.l.b16 %v11410
        %v11735 = vunpack.c.l.b16 %v11411
        %v11736 = vunpack.c.l.b16 %v11412
        %v11737 = vpack.c.b16 %v11610, %v11609
        %v11738 = vpack.c.b16 %v11612, %v11611
        %v11739 = vpack.c.b16 %v11614, %v11613
        %v11740 = vpack.c.b16 %v11616, %v11615
        %v11741 = vpack.c.b16 %v11618, %v11617
        %v11742 = vpack.c.b16 %v11620, %v11619
        %v11743 = vpack.c.b16 %v11622, %v11621
        %v11744 = vpack.c.b16 %v11624, %v11623
        %v11745 = vpack.c.b16 %v11626, %v11625
        %v11746 = vpack.c.b16 %v11628, %v11627
        %v11747 = vpack.c.b16 %v11630, %v11629
        %v11748 = vpack.c.b16 %v11632, %v11631
        %v11749 = vpack.c.b16 %v11634, %v11633
        %v11750 = vpack.c.b16 %v11636, %v11635
        %v11751 = vpack.c.b16 %v11638, %v11637
        %v11752 = vpack.c.b16 %v11640, %v11639
        %v11753 = vpack.c.b16 %v11642, %v11641
        %v11754 = vpack.c.b16 %v11644, %v11643
        %v11755 = vpack.c.b16 %v11646, %v11645
        %v11756 = vpack.c.b16 %v11648, %v11647
        %v11757 = vpack.c.b16 %v11650, %v11649
        %v11758 = vpack.c.b16 %v11652, %v11651
        %v11759 = vpack.c.b16 %v11654, %v11653
        %v11760 = vpack.c.b16 %v11656, %v11655
        %v11761 = vpack.c.b16 %v11658, %v11657
        %v11762 = vpack.c.b16 %v11660, %v11659
        %v11763 = vpack.c.b16 %v11662, %v11661
        %v11764 = vpack.c.b16 %v11664, %v11663
        %v11765 = vpack.c.b16 %v11666, %v11665
        %v11766 = vpack.c.b16 %v11668, %v11667
        %v11767 = vpack.c.b16 %v11670, %v11669
        %v11768 = vpack.c.b16 %v11672, %v11671
        %v11769 = vpack.c.b16 %v11674, %v11673
        %v11770 = vpack.c.b16 %v11676, %v11675
        %v11771 = vpack.c.b16 %v11678, %v11677
        %v11772 = vpack.c.b16 %v11680, %v11679
        %v11773 = vpack.c.b16 %v11682, %v11681
        %v11774 = vpack.c.b16 %v11684, %v11683
        %v11775 = vpack.c.b16 %v11686, %v11685
        %v11776 = vpack.c.b16 %v11688, %v11687
        %v11777 = vpack.c.b16 %v11690, %v11689
        %v11778 = vpack.c.b16 %v11692, %v11691
        %v11779 = vpack.c.b16 %v11694, %v11693
        %v11780 = vpack.c.b16 %v11696, %v11695
        %v11781 = vpack.c.b16 %v11698, %v11697
        %v11782 = vpack.c.b16 %v11700, %v11699
        %v11783 = vpack.c.b16 %v11702, %v11701
        %v11784 = vpack.c.b16 %v11704, %v11703
        %v11785 = vpack.c.b16 %v11706, %v11705
        %v11786 = vpack.c.b16 %v11708, %v11707
        %v11787 = vpack.c.b16 %v11710, %v11709
        %v11788 = vpack.c.b16 %v11712, %v11711
        %v11789 = vpack.c.b16 %v11714, %v11713
        %v11790 = vpack.c.b16 %v11716, %v11715
        %v11791 = vpack.c.b16 %v11718, %v11717
        %v11792 = vpack.c.b16 %v11720, %v11719
        %v11793 = vpack.c.b16 %v11722, %v11721
        %v11794 = vpack.c.b16 %v11724, %v11723
        %v11795 = vpack.c.b16 %v11726, %v11725
        %v11796 = vpack.c.b16 %v11728, %v11727
        %v11797 = vpack.c.b16 %v11730, %v11729
        %v11798 = vpack.c.b16 %v11732, %v11731
        %v11799 = vpack.c.b16 %v11734, %v11733
        %v11800 = vpack.c.b16 %v11736, %v11735
        %11865 = vmatpush.bf16.msra.mxu0 %v11744
        %11866 = vmatpush.bf16.msra.mxu0 %v11743
        %11867 = vmatpush.bf16.msra.mxu0 %v11742
        %11868 = vmatpush.bf16.msra.mxu0 %v11741
        %11869 = vmatpush.bf16.msra.mxu0 %v11740
        %11870 = vmatpush.bf16.msra.mxu0 %v11739
        %11871 = vmatpush.bf16.msra.mxu0 %v11738
        %11872 = vmatpush.bf16.msra.mxu0 %v11737
        %11873 = vmatmul.bf16.gmra.mxu0 %v11413
        %v11874 = vpop.f32.mrf.mxu0
        %v11875 = vadd.f32 %v11479, %v11874
        %v11876 = vpop.f32.mrf.mxu0
        %v11877 = vadd.f32 %v11479, %v11876
        %11878 = vmatmul.bf16.gmra.mxu0 %v11421
        %v11879 = vpop.f32.mrf.mxu0
        %v11880 = vadd.f32 %v11479, %v11879
        %v11881 = vpop.f32.mrf.mxu0
        %v11882 = vadd.f32 %v11479, %v11881
        %11883 = vmatmul.bf16.gmra.mxu0 %v11429
        %v11884 = vpop.f32.mrf.mxu0
        %v11885 = vadd.f32 %v11479, %v11884
        %v11886 = vpop.f32.mrf.mxu0
        %v11887 = vadd.f32 %v11479, %v11886
        %11888 = vmatmul.bf16.gmra.mxu0 %v11437
        %v11889 = vpop.f32.mrf.mxu0
        %v11890 = vadd.f32 %v11479, %v11889
        %v11891 = vpop.f32.mrf.mxu0
        %v11892 = vadd.f32 %v11479, %v11891
        %11893 = vmatmul.bf16.gmra.mxu0 %v11445
        %v11894 = vpop.f32.mrf.mxu0
        %v11895 = vadd.f32 %v11479, %v11894
        %v11896 = vpop.f32.mrf.mxu0
        %v11897 = vadd.f32 %v11479, %v11896
        %11898 = vmatmul.bf16.gmra.mxu0 %v11453
        %v11899 = vpop.f32.mrf.mxu0
        %v11900 = vadd.f32 %v11479, %v11899
        %v11901 = vpop.f32.mrf.mxu0
        %v11902 = vadd.f32 %v11479, %v11901
        %11903 = vmatmul.bf16.gmra.mxu0 %v11461
        %v11904 = vpop.f32.mrf.mxu0
        %v11905 = vadd.f32 %v11479, %v11904
        %v11906 = vpop.f32.mrf.mxu0
        %v11907 = vadd.f32 %v11479, %v11906
        %11908 = vmatmul.bf16.gmra.mxu0 %v11469
        %v11909 = vpop.f32.mrf.mxu0
        %v11910 = vadd.f32 %v11479, %v11909
        %v11911 = vpop.f32.mrf.mxu0
        %v11912 = vadd.f32 %v11479, %v11911
        %11913 = vdwg.mxu0
        %11914 = vmatpush.bf16.msra.mxu0 %v11752
        %11915 = vmatpush.bf16.msra.mxu0 %v11751
        %11916 = vmatpush.bf16.msra.mxu0 %v11750
        %11917 = vmatpush.bf16.msra.mxu0 %v11749
        %11918 = vmatpush.bf16.msra.mxu0 %v11748
        %11919 = vmatpush.bf16.msra.mxu0 %v11747
        %11920 = vmatpush.bf16.msra.mxu0 %v11746
        %11921 = vmatpush.bf16.msra.mxu0 %v11745
        %11922 = vmatmul.bf16.gmra.mxu0 %v11414
        %v11923 = vpop.f32.mrf.mxu0
        %v11924 = vadd.f32 %v11875, %v11923
        %v11925 = vpop.f32.mrf.mxu0
        %v11926 = vadd.f32 %v11877, %v11925
        %11927 = vmatmul.bf16.gmra.mxu0 %v11422
        %v11928 = vpop.f32.mrf.mxu0
        %v11929 = vadd.f32 %v11880, %v11928
        %v11930 = vpop.f32.mrf.mxu0
        %v11931 = vadd.f32 %v11882, %v11930
        %11932 = vmatmul.bf16.gmra.mxu0 %v11430
        %v11933 = vpop.f32.mrf.mxu0
        %v11934 = vadd.f32 %v11885, %v11933
        %v11935 = vpop.f32.mrf.mxu0
        %v11936 = vadd.f32 %v11887, %v11935
        %11937 = vmatmul.bf16.gmra.mxu0 %v11438
        %v11938 = vpop.f32.mrf.mxu0
        %v11939 = vadd.f32 %v11890, %v11938
        %v11940 = vpop.f32.mrf.mxu0
        %v11941 = vadd.f32 %v11892, %v11940
        %11942 = vmatmul.bf16.gmra.mxu0 %v11446
        %v11943 = vpop.f32.mrf.mxu0
        %v11944 = vadd.f32 %v11895, %v11943
        %v11945 = vpop.f32.mrf.mxu0
        %v11946 = vadd.f32 %v11897, %v11945
        %11947 = vmatmul.bf16.gmra.mxu0 %v11454
        %v11948 = vpop.f32.mrf.mxu0
        %v11949 = vadd.f32 %v11900, %v11948
        %v11950 = vpop.f32.mrf.mxu0
        %v11951 = vadd.f32 %v11902, %v11950
        %11952 = vmatmul.bf16.gmra.mxu0 %v11462
        %v11953 = vpop.f32.mrf.mxu0
        %v11954 = vadd.f32 %v11905, %v11953
        %v11955 = vpop.f32.mrf.mxu0
        %v11956 = vadd.f32 %v11907, %v11955
        %11957 = vmatmul.bf16.gmra.mxu0 %v11470
        %v11958 = vpop.f32.mrf.mxu0
        %v11959 = vadd.f32 %v11910, %v11958
        %v11960 = vpop.f32.mrf.mxu0
        %v11961 = vadd.f32 %v11912, %v11960
        %11962 = vdwg.mxu0
        %11963 = vmatpush.bf16.msra.mxu0 %v11760
        %11964 = vmatpush.bf16.msra.mxu0 %v11759
        %11965 = vmatpush.bf16.msra.mxu0 %v11758
        %11966 = vmatpush.bf16.msra.mxu0 %v11757
        %11967 = vmatpush.bf16.msra.mxu0 %v11756
        %11968 = vmatpush.bf16.msra.mxu0 %v11755
        %11969 = vmatpush.bf16.msra.mxu0 %v11754
        %11970 = vmatpush.bf16.msra.mxu0 %v11753
        %11971 = vmatmul.bf16.gmra.mxu0 %v11415
        %v11972 = vpop.f32.mrf.mxu0
        %v11973 = vadd.f32 %v11924, %v11972
        %v11974 = vpop.f32.mrf.mxu0
        %v11975 = vadd.f32 %v11926, %v11974
        %11976 = vmatmul.bf16.gmra.mxu0 %v11423
        %v11977 = vpop.f32.mrf.mxu0
        %v11978 = vadd.f32 %v11929, %v11977
        %v11979 = vpop.f32.mrf.mxu0
        %v11980 = vadd.f32 %v11931, %v11979
        %11981 = vmatmul.bf16.gmra.mxu0 %v11431
        %v11982 = vpop.f32.mrf.mxu0
        %v11983 = vadd.f32 %v11934, %v11982
        %v11984 = vpop.f32.mrf.mxu0
        %v11985 = vadd.f32 %v11936, %v11984
        %11986 = vmatmul.bf16.gmra.mxu0 %v11439
        %v11987 = vpop.f32.mrf.mxu0
        %v11988 = vadd.f32 %v11939, %v11987
        %v11989 = vpop.f32.mrf.mxu0
        %v11990 = vadd.f32 %v11941, %v11989
        %11991 = vmatmul.bf16.gmra.mxu0 %v11447
        %v11992 = vpop.f32.mrf.mxu0
        %v11993 = vadd.f32 %v11944, %v11992
        %v11994 = vpop.f32.mrf.mxu0
        %v11995 = vadd.f32 %v11946, %v11994
        %11996 = vmatmul.bf16.gmra.mxu0 %v11455
        %v11997 = vpop.f32.mrf.mxu0
        %v11998 = vadd.f32 %v11949, %v11997
        %v11999 = vpop.f32.mrf.mxu0
        %v12000 = vadd.f32 %v11951, %v11999
        %12001 = vmatmul.bf16.gmra.mxu0 %v11463
        %v12002 = vpop.f32.mrf.mxu0
        %v12003 = vadd.f32 %v11954, %v12002
        %v12004 = vpop.f32.mrf.mxu0
        %v12005 = vadd.f32 %v11956, %v12004
        %12006 = vmatmul.bf16.gmra.mxu0 %v11471
        %v12007 = vpop.f32.mrf.mxu0
        %v12008 = vadd.f32 %v11959, %v12007
        %v12009 = vpop.f32.mrf.mxu0
        %v12010 = vadd.f32 %v11961, %v12009
        %12011 = vdwg.mxu0
        %12012 = vmatpush.bf16.msra.mxu0 %v11768
        %12013 = vmatpush.bf16.msra.mxu0 %v11767
        %12014 = vmatpush.bf16.msra.mxu0 %v11766
        %12015 = vmatpush.bf16.msra.mxu0 %v11765
        %12016 = vmatpush.bf16.msra.mxu0 %v11764
        %12017 = vmatpush.bf16.msra.mxu0 %v11763
        %12018 = vmatpush.bf16.msra.mxu0 %v11762
        %12019 = vmatpush.bf16.msra.mxu0 %v11761
        %12020 = vmatmul.bf16.gmra.mxu0 %v11416
        %v12021 = vpop.f32.mrf.mxu0
        %v12022 = vadd.f32 %v11973, %v12021
        %v12023 = vpop.f32.mrf.mxu0
        %v12024 = vadd.f32 %v11975, %v12023
        %12025 = vmatmul.bf16.gmra.mxu0 %v11424
        %v12026 = vpop.f32.mrf.mxu0
        %v12027 = vadd.f32 %v11978, %v12026
        %v12028 = vpop.f32.mrf.mxu0
        %v12029 = vadd.f32 %v11980, %v12028
        %12030 = vmatmul.bf16.gmra.mxu0 %v11432
        %v12031 = vpop.f32.mrf.mxu0
        %v12032 = vadd.f32 %v11983, %v12031
        %v12033 = vpop.f32.mrf.mxu0
        %v12034 = vadd.f32 %v11985, %v12033
        %12035 = vmatmul.bf16.gmra.mxu0 %v11440
        %v12036 = vpop.f32.mrf.mxu0
        %v12037 = vadd.f32 %v11988, %v12036
        %v12038 = vpop.f32.mrf.mxu0
        %v12039 = vadd.f32 %v11990, %v12038
        %12040 = vmatmul.bf16.gmra.mxu0 %v11448
        %v12041 = vpop.f32.mrf.mxu0
        %v12042 = vadd.f32 %v11993, %v12041
        %v12043 = vpop.f32.mrf.mxu0
        %v12044 = vadd.f32 %v11995, %v12043
        %12045 = vmatmul.bf16.gmra.mxu0 %v11456
        %v12046 = vpop.f32.mrf.mxu0
        %v12047 = vadd.f32 %v11998, %v12046
        %v12048 = vpop.f32.mrf.mxu0
        %v12049 = vadd.f32 %v12000, %v12048
        %12050 = vmatmul.bf16.gmra.mxu0 %v11464
        %v12051 = vpop.f32.mrf.mxu0
        %v12052 = vadd.f32 %v12003, %v12051
        %v12053 = vpop.f32.mrf.mxu0
        %v12054 = vadd.f32 %v12005, %v12053
        %12055 = vmatmul.bf16.gmra.mxu0 %v11472
        %v12056 = vpop.f32.mrf.mxu0
        %v12057 = vadd.f32 %v12008, %v12056
        %v12058 = vpop.f32.mrf.mxu0
        %v12059 = vadd.f32 %v12010, %v12058
        %12060 = vdwg.mxu0
        %12061 = vmatpush.bf16.msra.mxu0 %v11776
        %12062 = vmatpush.bf16.msra.mxu0 %v11775
        %12063 = vmatpush.bf16.msra.mxu0 %v11774
        %12064 = vmatpush.bf16.msra.mxu0 %v11773
        %12065 = vmatpush.bf16.msra.mxu0 %v11772
        %12066 = vmatpush.bf16.msra.mxu0 %v11771
        %12067 = vmatpush.bf16.msra.mxu0 %v11770
        %12068 = vmatpush.bf16.msra.mxu0 %v11769
        %12069 = vmatmul.bf16.gmra.mxu0 %v11417
        %v12070 = vpop.f32.mrf.mxu0
        %v12071 = vadd.f32 %v12022, %v12070
        %v12072 = vpop.f32.mrf.mxu0
        %v12073 = vadd.f32 %v12024, %v12072
        %12074 = vmatmul.bf16.gmra.mxu0 %v11425
        %v12075 = vpop.f32.mrf.mxu0
        %v12076 = vadd.f32 %v12027, %v12075
        %v12077 = vpop.f32.mrf.mxu0
        %v12078 = vadd.f32 %v12029, %v12077
        %12079 = vmatmul.bf16.gmra.mxu0 %v11433
        %v12080 = vpop.f32.mrf.mxu0
        %v12081 = vadd.f32 %v12032, %v12080
        %v12082 = vpop.f32.mrf.mxu0
        %v12083 = vadd.f32 %v12034, %v12082
        %12084 = vmatmul.bf16.gmra.mxu0 %v11441
        %v12085 = vpop.f32.mrf.mxu0
        %v12086 = vadd.f32 %v12037, %v12085
        %v12087 = vpop.f32.mrf.mxu0
        %v12088 = vadd.f32 %v12039, %v12087
        %12089 = vmatmul.bf16.gmra.mxu0 %v11449
        %v12090 = vpop.f32.mrf.mxu0
        %v12091 = vadd.f32 %v12042, %v12090
        %v12092 = vpop.f32.mrf.mxu0
        %v12093 = vadd.f32 %v12044, %v12092
        %12094 = vmatmul.bf16.gmra.mxu0 %v11457
        %v12095 = vpop.f32.mrf.mxu0
        %v12096 = vadd.f32 %v12047, %v12095
        %v12097 = vpop.f32.mrf.mxu0
        %v12098 = vadd.f32 %v12049, %v12097
        %12099 = vmatmul.bf16.gmra.mxu0 %v11465
        %v12100 = vpop.f32.mrf.mxu0
        %v12101 = vadd.f32 %v12052, %v12100
        %v12102 = vpop.f32.mrf.mxu0
        %v12103 = vadd.f32 %v12054, %v12102
        %12104 = vmatmul.bf16.gmra.mxu0 %v11473
        %v12105 = vpop.f32.mrf.mxu0
        %v12106 = vadd.f32 %v12057, %v12105
        %v12107 = vpop.f32.mrf.mxu0
        %v12108 = vadd.f32 %v12059, %v12107
        %12109 = vdwg.mxu0
        %12110 = vmatpush.bf16.msra.mxu0 %v11784
        %12111 = vmatpush.bf16.msra.mxu0 %v11783
        %12112 = vmatpush.bf16.msra.mxu0 %v11782
        %12113 = vmatpush.bf16.msra.mxu0 %v11781
        %12114 = vmatpush.bf16.msra.mxu0 %v11780
        %12115 = vmatpush.bf16.msra.mxu0 %v11779
        %12116 = vmatpush.bf16.msra.mxu0 %v11778
        %12117 = vmatpush.bf16.msra.mxu0 %v11777
        %12118 = vmatmul.bf16.gmra.mxu0 %v11418
        %v12119 = vpop.f32.mrf.mxu0
        %v12120 = vadd.f32 %v12071, %v12119
        %v12121 = vpop.f32.mrf.mxu0
        %v12122 = vadd.f32 %v12073, %v12121
        %12123 = vmatmul.bf16.gmra.mxu0 %v11426
        %v12124 = vpop.f32.mrf.mxu0
        %v12125 = vadd.f32 %v12076, %v12124
        %v12126 = vpop.f32.mrf.mxu0
        %v12127 = vadd.f32 %v12078, %v12126
        %12128 = vmatmul.bf16.gmra.mxu0 %v11434
        %v12129 = vpop.f32.mrf.mxu0
        %v12130 = vadd.f32 %v12081, %v12129
        %v12131 = vpop.f32.mrf.mxu0
        %v12132 = vadd.f32 %v12083, %v12131
        %12133 = vmatmul.bf16.gmra.mxu0 %v11442
        %v12134 = vpop.f32.mrf.mxu0
        %v12135 = vadd.f32 %v12086, %v12134
        %v12136 = vpop.f32.mrf.mxu0
        %v12137 = vadd.f32 %v12088, %v12136
        %12138 = vmatmul.bf16.gmra.mxu0 %v11450
        %v12139 = vpop.f32.mrf.mxu0
        %v12140 = vadd.f32 %v12091, %v12139
        %v12141 = vpop.f32.mrf.mxu0
        %v12142 = vadd.f32 %v12093, %v12141
        %12143 = vmatmul.bf16.gmra.mxu0 %v11458
        %v12144 = vpop.f32.mrf.mxu0
        %v12145 = vadd.f32 %v12096, %v12144
        %v12146 = vpop.f32.mrf.mxu0
        %v12147 = vadd.f32 %v12098, %v12146
        %12148 = vmatmul.bf16.gmra.mxu0 %v11466
        %v12149 = vpop.f32.mrf.mxu0
        %v12150 = vadd.f32 %v12101, %v12149
        %v12151 = vpop.f32.mrf.mxu0
        %v12152 = vadd.f32 %v12103, %v12151
        %12153 = vmatmul.bf16.gmra.mxu0 %v11474
        %v12154 = vpop.f32.mrf.mxu0
        %v12155 = vadd.f32 %v12106, %v12154
        %v12156 = vpop.f32.mrf.mxu0
        %v12157 = vadd.f32 %v12108, %v12156
        %12158 = vdwg.mxu0
        %12159 = vmatpush.bf16.msra.mxu0 %v11792
        %12160 = vmatpush.bf16.msra.mxu0 %v11791
        %12161 = vmatpush.bf16.msra.mxu0 %v11790
        %12162 = vmatpush.bf16.msra.mxu0 %v11789
        %12163 = vmatpush.bf16.msra.mxu0 %v11788
        %12164 = vmatpush.bf16.msra.mxu0 %v11787
        %12165 = vmatpush.bf16.msra.mxu0 %v11786
        %12166 = vmatpush.bf16.msra.mxu0 %v11785
        %12167 = vmatmul.bf16.gmra.mxu0 %v11419
        %v12168 = vpop.f32.mrf.mxu0
        %v12169 = vadd.f32 %v12120, %v12168
        %v12170 = vpop.f32.mrf.mxu0
        %v12171 = vadd.f32 %v12122, %v12170
        %12172 = vmatmul.bf16.gmra.mxu0 %v11427
        %v12173 = vpop.f32.mrf.mxu0
        %v12174 = vadd.f32 %v12125, %v12173
        %v12175 = vpop.f32.mrf.mxu0
        %v12176 = vadd.f32 %v12127, %v12175
        %12177 = vmatmul.bf16.gmra.mxu0 %v11435
        %v12178 = vpop.f32.mrf.mxu0
        %v12179 = vadd.f32 %v12130, %v12178
        %v12180 = vpop.f32.mrf.mxu0
        %v12181 = vadd.f32 %v12132, %v12180
        %12182 = vmatmul.bf16.gmra.mxu0 %v11443
        %v12183 = vpop.f32.mrf.mxu0
        %v12184 = vadd.f32 %v12135, %v12183
        %v12185 = vpop.f32.mrf.mxu0
        %v12186 = vadd.f32 %v12137, %v12185
        %12187 = vmatmul.bf16.gmra.mxu0 %v11451
        %v12188 = vpop.f32.mrf.mxu0
        %v12189 = vadd.f32 %v12140, %v12188
        %v12190 = vpop.f32.mrf.mxu0
        %v12191 = vadd.f32 %v12142, %v12190
        %12192 = vmatmul.bf16.gmra.mxu0 %v11459
        %v12193 = vpop.f32.mrf.mxu0
        %v12194 = vadd.f32 %v12145, %v12193
        %v12195 = vpop.f32.mrf.mxu0
        %v12196 = vadd.f32 %v12147, %v12195
        %12197 = vmatmul.bf16.gmra.mxu0 %v11467
        %v12198 = vpop.f32.mrf.mxu0
        %v12199 = vadd.f32 %v12150, %v12198
        %v12200 = vpop.f32.mrf.mxu0
        %v12201 = vadd.f32 %v12152, %v12200
        %12202 = vmatmul.bf16.gmra.mxu0 %v11475
        %v12203 = vpop.f32.mrf.mxu0
        %v12204 = vadd.f32 %v12155, %v12203
        %v12205 = vpop.f32.mrf.mxu0
        %v12206 = vadd.f32 %v12157, %v12205
        %12207 = vdwg.mxu0
        %12208 = vmatpush.bf16.msra.mxu0 %v11800
        %12209 = vmatpush.bf16.msra.mxu0 %v11799
        %12210 = vmatpush.bf16.msra.mxu0 %v11798
        %12211 = vmatpush.bf16.msra.mxu0 %v11797
        %12212 = vmatpush.bf16.msra.mxu0 %v11796
        %12213 = vmatpush.bf16.msra.mxu0 %v11795
        %12214 = vmatpush.bf16.msra.mxu0 %v11794
        %12215 = vmatpush.bf16.msra.mxu0 %v11793
        %12216 = vmatmul.bf16.gmra.mxu0 %v11420
        %v12217 = vpop.f32.mrf.mxu0
        %v12218 = vadd.f32 %v12169, %v12217
        %v12219 = vpop.f32.mrf.mxu0
        %v12220 = vadd.f32 %v12171, %v12219
        %12221 = vmatmul.bf16.gmra.mxu0 %v11428
        %v12222 = vpop.f32.mrf.mxu0
        %v12223 = vadd.f32 %v12174, %v12222
        %v12224 = vpop.f32.mrf.mxu0
        %v12225 = vadd.f32 %v12176, %v12224
        %12226 = vmatmul.bf16.gmra.mxu0 %v11436
        %v12227 = vpop.f32.mrf.mxu0
        %v12228 = vadd.f32 %v12179, %v12227
        %v12229 = vpop.f32.mrf.mxu0
        %v12230 = vadd.f32 %v12181, %v12229
        %12231 = vmatmul.bf16.gmra.mxu0 %v11444
        %v12232 = vpop.f32.mrf.mxu0
        %v12233 = vadd.f32 %v12184, %v12232
        %v12234 = vpop.f32.mrf.mxu0
        %v12235 = vadd.f32 %v12186, %v12234
        %12236 = vmatmul.bf16.gmra.mxu0 %v11452
        %v12237 = vpop.f32.mrf.mxu0
        %v12238 = vadd.f32 %v12189, %v12237
        %v12239 = vpop.f32.mrf.mxu0
        %v12240 = vadd.f32 %v12191, %v12239
        %12241 = vmatmul.bf16.gmra.mxu0 %v11460
        %v12242 = vpop.f32.mrf.mxu0
        %v12243 = vadd.f32 %v12194, %v12242
        %v12244 = vpop.f32.mrf.mxu0
        %v12245 = vadd.f32 %v12196, %v12244
        %12246 = vmatmul.bf16.gmra.mxu0 %v11468
        %v12247 = vpop.f32.mrf.mxu0
        %v12248 = vadd.f32 %v12199, %v12247
        %v12249 = vpop.f32.mrf.mxu0
        %v12250 = vadd.f32 %v12201, %v12249
        %12251 = vmatmul.bf16.gmra.mxu0 %v11476
        %v12252 = vpop.f32.mrf.mxu0
        %v12253 = vadd.f32 %v12204, %v12252
        %v12254 = vpop.f32.mrf.mxu0
        %v12255 = vadd.f32 %v12206, %v12254
        %12256 = vdwg.mxu0
        %12257 = vst [vmem:[%s406] sm:$0xff] %v12218
        %12258 = vst [vmem:[%s406 + $0x8] sm:$0xff] %v12220
        %12259 = vst [vmem:[%s406 + $0x10] sm:$0xff] %v12223
        %12260 = vst [vmem:[%s406 + $0x18] sm:$0xff] %v12225
        %12261 = vst [vmem:[%s406 + $0x20] sm:$0xff] %v12228
        %12262 = vst [vmem:[%s406 + $0x28] sm:$0xff] %v12230
        %12263 = vst [vmem:[%s406 + $0x30] sm:$0xff] %v12233
        %12264 = vst [vmem:[%s406 + $0x38] sm:$0xff] %v12235
        %12265 = vst [vmem:[%s406 + $0x40] sm:$0xff] %v12238
        %12266 = vst [vmem:[%s406 + $0x48] sm:$0xff] %v12240
        %12267 = vst [vmem:[%s406 + $0x50] sm:$0xff] %v12243
        %12268 = vst [vmem:[%s406 + $0x58] sm:$0xff] %v12245
        %12269 = vst [vmem:[%s406 + $0x60] sm:$0xff] %v12248
        %12270 = vst [vmem:[%s406 + $0x68] sm:$0xff] %v12250
        %12271 = vst [vmem:[%s406 + $0x70] sm:$0xff] %v12253
        %12272 = vst [vmem:[%s406 + $0x78] sm:$0xff] %v12255
        %s12273 = sand.u32 %s207, 1
        %s12274 = scalar_lea.sflag [#allocation4], %s12273
        %s12275 = sand.u32 %s207, 1
        %s12276 = smul.addr %s12275, 128
        %s12277 = scalar_lea.vmem [#allocation14], %s12276
        // Predicated region
        $region81: #{tpu_custom_call.1} parent=51 // pred_check
          %p12278 = pneg %p217
        $region82: #{tpu_custom_call.1} parent=51 // pred_check_branch
          %12280 = sbr.rel (%p12278) target = $region84
        $region83: #{tpu_custom_call.1} parent=51 // pred_region
          %12282 = vsyncadd %s12274, 0
          %s12283 = smul.addr %s26, 16
          %s12284 = smul.addr %s12283, 8
          %s12285 = scalar_lea.hbm %s8, %s12284
          %s12286 = sshll.u32 %s12277, 4
          %s12287 = int_to_ptr.vmem [resolvable:$true] %s12286
          %s12288 = sshll.u32 %s12285, 4
          %s12289 = int_to_ptr.hbm [resolvable:$true] %s12288
          %12294 = dma.vmem_to_hbm [thread:$0]  %s12287, 2048, %s12289, %s12274, 128, 128, 8
        $region84: #{tpu_custom_call.1} parent=51 // pred_fallthru
          _
      $region52: #{tpu_custom_call.1} parent=5 // pred_fallthru
        _
      %p12295 = scmp.le.s32.totalorder 2, %s21
      // Predicated region
      $region85: #{tpu_custom_call.1} parent=5 // pred_check
        %p12296 = pneg %p12295
      $region86: #{tpu_custom_call.1} parent=5 // pred_check_branch
        %12298 = sbr.rel (%p12296) target = $region88
      $region87: #{tpu_custom_call.1} parent=5 // pred_region
        %s12299 = ssub.s32 %s21, 2
        // Predicated region
        $region89: #{tpu_custom_call.1} parent=87 // pred_check
          %p12300 = pneg %p223
        $region90: #{tpu_custom_call.1} parent=87 // pred_check_branch
          %12302 = sbr.rel (%p12300) target = $region92
        $region91: #{tpu_custom_call.1} parent=87 // pred_region
          %s12303 = sand.u32 %s208, 1
          %s12304 = scalar_lea.sflag [#allocation4], %s12303
          %s12305 = sand.u32 %s208, 1
          %s12306 = smul.addr %s12305, 128
          %s12307 = scalar_lea.vmem [#allocation14], %s12306
          %12309 = dma.done %s12304, 2048
        $region92: #{tpu_custom_call.1} parent=87 // pred_fallthru
          _
      $region88: #{tpu_custom_call.1} parent=5 // pred_fallthru
        _
    $region6: #{tpu_custom_call.1} parent=1 // loop_footer
      %s25 = sadd.s32 1, %s21
    $region7: #{tpu_custom_call.1} parent=1 // loop_footer_branch
      %20 = sbr.rel target = $region3
    $region8: #{tpu_custom_call.1} parent=1 // loop_exit
      _
    %12310 = vsyncpa [#allocation3], 1
    %s12311 = scalar_lea.sflag [#allocation3], 1
    %12312 = vsyncpa %s12311, 1
    %12313 = vsyncpa [#allocation6], 1
    %12314 = vsyncpa [#allocation9], 1
    %12315 = vsyncpa [#allocation12], 1
    %12316 = vsyncpa [#allocation4], 1
    %s12317 = scalar_lea.sflag [#allocation4], 1
    %12318 = vsyncpa %s12317, 1

</llo_original>
